<compile_context>
chip_gen: v6e
topology: v6e:2x2x1
jax: 0.10.0
libtpu: 0.0.40
codegen_flags: <defaults>
</compile_context>

<pallas_src>
import jax
import jax.numpy as jnp
from jax.experimental import pallas as pl
from jax.experimental.pallas import tpu as pltpu

# ---- small, module-consistent configuration -------------------------------
BATCH = 2
IMG = 16          # image_size
PATCH = 2         # patch_size
IN_CH = 3
EMB = 32          # emb_dim
HEADS = 4         # num_head (EMB divisible by HEADS)
LAYERS = 2        # num_layer (kept small)
CLASSES = 10

T = (IMG // PATCH) ** 2              # 64 patch tokens
S = T + 1                            # 65 (= patches + cls token)
S_PAD = ((S + 7) // 8) * 8           # 72: sublane-aligned padded sequence
HEAD_DIM = EMB // HEADS              # 8
MLP = 4 * EMB                        # 128
K_IM2COL = IN_CH * PATCH * PATCH     # 12
K_PAD = 128                          # lane-dense contraction for patch embed
CLS_PAD = 128                        # lane-dense logits slab
CLS_ROWS = 8                         # aligned sublane slab holding the cls row

CIFAR10_MEAN = (0.4914, 0.4822, 0.4465)
CIFAR10_STD = (0.2471, 0.2435, 0.2616)


# ---------------------------------------------------------------------------
# Single fused kernel: normalize + patch embed + transformer stack + head
# ---------------------------------------------------------------------------
def vit_fused_kernel(pcols_ref, mean_ref, istd_ref, wpe_ref, bpe_ref,
                     pos_ref, cls_ref,
                     ln1w_ref, ln1b_ref, qkvw_ref, projw_ref, projb_ref,
                     ln2w_ref, ln2b_ref, fc1w_ref, fc1b_ref, fc2w_ref, fc2b_ref,
                     flnw_ref, flnb_ref, hw_ref, hb_ref,
                     o_ref, seq_ref):
    f32 = jnp.float32
    eps = 1e-5

    def layer_norm(v, w, b):
        mu = jnp.mean(v, axis=-1, keepdims=True)
        var = jnp.mean((v - mu) ** 2, axis=-1, keepdims=True)
        return (v - mu) * jax.lax.rsqrt(var + eps) * w + b

    # ---- 1. CIFAR10 normalization + patch embedding (im2col matmul) ----
    xin = (pcols_ref[...] - mean_ref[...]) * istd_ref[...]              # (B*T, Kp)
    tok = jnp.dot(xin, wpe_ref[...],
                  preferred_element_type=f32) + bpe_ref[...]            # (B*T, C)

    # ---- 2. assemble padded sequence ----
    # rows [0, T) = patch tokens + pos, row T = cls token, rows (T, S_PAD) = 0.
    # Attention is permutation-equivariant and padded keys are masked, so the
    # cls token can live at the sublane-aligned row T instead of row 0.
    seq_ref[...] = jnp.zeros_like(seq_ref)
    pos = pos_ref[...]                                                  # (T, C)
    cls = cls_ref[...]                                                  # (1, C)
    for b in range(BATCH):
        seq_ref[b * S_PAD:b * S_PAD + T, :] = tok[b * T:(b + 1) * T, :] + pos
        seq_ref[b * S_PAD + T:b * S_PAD + T + 1, :] = cls
    x = seq_ref[...]                                                    # (B*SP, C)

    # additive key mask for padded token columns (hoisted out of all loops)
    col = jax.lax.broadcasted_iota(jnp.int32, (1, S_PAD, S_PAD), 2)
    neg = jnp.where(col < S, 0.0, -1e30).astype(f32)                    # (1, SP, SP)

    scale = float(HEAD_DIM) ** -0.5

    # ---- 3. transformer blocks (timm Block: pre-LN attn + pre-LN MLP) ----
    for l in range(LAYERS):
        ln1w, ln1b = ln1w_ref[l], ln1b_ref[l]                           # (1, C)
        ln2w, ln2b = ln2w_ref[l], ln2b_ref[l]
        qkvw = qkvw_ref[l]                                              # (C, 3C)
        projw, projb = projw_ref[l], projb_ref[l]                       # (C, C), (1, C)
        fc1w, fc1b = fc1w_ref[l], fc1b_ref[l]                           # (C, MLP), (1, MLP)
        fc2w, fc2b = fc2w_ref[l], fc2b_ref[l]                           # (MLP, C), (1, C)

        # --- multi-head self attention (qkv_bias=False) ---
        h = layer_norm(x, ln1w, ln1b)                                   # (B*SP, C)
        qkv = jnp.dot(h, qkvw, preferred_element_type=f32)              # (B*SP, 3C)
        qkv3 = qkv.reshape(BATCH, S_PAD, 3 * EMB)                       # aligned split

        proj_acc = jnp.zeros((BATCH * S_PAD, EMB), f32)
        for hh in range(HEADS):                                         # 4x, unrolled
            lo = hh * HEAD_DIM
            q_h = qkv3[:, :, lo:lo + HEAD_DIM] * scale                  # (B, SP, hd)
            k_h = qkv3[:, :, EMB + lo:EMB + lo + HEAD_DIM]
            v_h = qkv3[:, :, 2 * EMB + lo:2 * EMB + lo + HEAD_DIM]
            s_h = jnp.einsum('bsd,btd->bst', q_h, k_h,
                             preferred_element_type=f32) + neg          # (B, SP, SP)
            m_h = jnp.max(s_h, axis=-1, keepdims=True)
            p_h = jnp.exp(s_h - m_h)
            p_h = p_h * pl.reciprocal(jnp.sum(p_h, axis=-1, keepdims=True),
                                      approx=True)
            o_h = jnp.einsum('bst,btd->bsd', p_h, v_h,
                             preferred_element_type=f32)                # (B, SP, hd)
            # output projection folded per head:
            #   concat_h(o_h) @ Wp  ==  sum_h o_h @ Wp[h*hd:(h+1)*hd, :]
            proj_acc = proj_acc + jnp.dot(
                o_h.reshape(BATCH * S_PAD, HEAD_DIM),
                projw[lo:lo + HEAD_DIM, :], preferred_element_type=f32)
        x = x + proj_acc + projb

        # --- MLP ---
        h2 = layer_norm(x, ln2w, ln2b)
        z = jnp.dot(h2, fc1w, preferred_element_type=f32) + fc1b        # (B*SP, MLP)
        # TODO(synk): torch nn.GELU() is exact (erf-based); tanh approximation here.
        z = 0.5 * z * (1.0 + jnp.tanh(0.7978845608028654 *
                                      (z + 0.044715 * z * z * z)))
        x = x + jnp.dot(z, fc2w, preferred_element_type=f32) + fc2b

    # ---- 4. final LayerNorm + F.normalize + linear head on the cls slab ----
    # Operate on the aligned 8-row slab that contains the cls row (row 0 of
    # the slab per batch); padded rows are discarded by the wrapper.
    x3 = x.reshape(BATCH, S_PAD, EMB)
    slab = x3[:, T:T + CLS_ROWS, :].reshape(BATCH * CLS_ROWS, EMB)      # (B*8, C)
    f = layer_norm(slab, flnw_ref[...], flnb_ref[...])
    nrm = jnp.sqrt(jnp.sum(f * f, axis=-1, keepdims=True))
    f = f * pl.reciprocal(jnp.maximum(nrm, 1e-12), approx=True)
    o_ref[...] = jnp.dot(f, hw_ref[...],
                         preferred_element_type=f32) + hb_ref[...]      # (B*8, 128)


def run_vit_fused(pcols, mean_k, istd_k, wpe, bpe, pos2d, cls2d,
                  ln1_w, ln1_b, qkv_wt, proj_wt, proj_b,
                  ln2_w, ln2_b, fc1_wt, fc1_b, fc2_wt, fc2_b,
                  fln_w, fln_b, head_wt, head_b):
    n_in = 22
    return pl.pallas_call(
        vit_fused_kernel,
        out_shape=jax.ShapeDtypeStruct((BATCH * CLS_ROWS, CLS_PAD), jnp.float32),
        in_specs=[pl.BlockSpec(memory_space=pltpu.MemorySpace.VMEM)] * n_in,
        out_specs=pl.BlockSpec(memory_space=pltpu.MemorySpace.VMEM),
        scratch_shapes=[
            pltpu.VMEM((BATCH * S_PAD, EMB), jnp.float32),   # padded token sequence
        ],
    )(pcols, mean_k, istd_k, wpe, bpe, pos2d, cls2d,
      ln1_w, ln1_b, qkv_wt, proj_wt, proj_b,
      ln2_w, ln2_b, fc1_wt, fc1_b, fc2_wt, fc2_b,
      fln_w, fln_b, head_wt, head_b)


# ---------------------------------------------------------------------------
# Parameter init (deterministic, synthetic — shapes follow the module __init__)
# ---------------------------------------------------------------------------
def init_params(key):
    ks = jax.random.split(key, 10)

    def nrm(k, shape, std=0.02):
        return std * jax.random.normal(k, shape, jnp.float32)

    p = {}
    p['cls_token'] = nrm(ks[0], (1, 1, EMB))
    p['pos_embedding'] = nrm(ks[1], (T, 1, EMB))          # torch shape (T, 1, emb)
    p['conv_w'] = nrm(ks[2], (EMB, IN_CH, PATCH, PATCH))
    p['conv_b'] = nrm(ks[3], (EMB,))
    # stacked per-layer transformer params (timm Block: qkv_bias=False)
    p['ln1_w'] = jnp.ones((LAYERS, 1, EMB), jnp.float32)
    p['ln1_b'] = jnp.zeros((LAYERS, 1, EMB), jnp.float32)
    p['qkv_w'] = nrm(ks[4], (LAYERS, 3 * EMB, EMB))
    p['proj_w'] = nrm(ks[5], (LAYERS, EMB, EMB))
    p['proj_b'] = jnp.zeros((LAYERS, 1, EMB), jnp.float32)
    p['ln2_w'] = jnp.ones((LAYERS, 1, EMB), jnp.float32)
    p['ln2_b'] = jnp.zeros((LAYERS, 1, EMB), jnp.float32)
    p['fc1_w'] = nrm(ks[6], (LAYERS, MLP, EMB))
    p['fc1_b'] = jnp.zeros((LAYERS, 1, MLP), jnp.float32)
    p['fc2_w'] = nrm(ks[7], (LAYERS, EMB, MLP))
    p['fc2_b'] = jnp.zeros((LAYERS, 1, EMB), jnp.float32)
    p['final_ln_w'] = jnp.ones((1, EMB), jnp.float32)
    p['final_ln_b'] = jnp.zeros((1, EMB), jnp.float32)
    p['head_w'] = nrm(ks[8], (CLASSES, EMB))
    p['head_b'] = jnp.zeros((CLASSES,), jnp.float32)
    # NOTE: distill_token exists in __init__ but is unused in forward -> omitted.
    return p


# ---------------------------------------------------------------------------
# Forward pass (trace-time layout plumbing in JAX, everything hot in Pallas)
# ---------------------------------------------------------------------------
def vit_classifier_forward(img, p):
    B, Cin, H, W = img.shape
    # im2col for Conv2d(kernel=stride=PATCH): row = token (h-major), col = (c, kh, kw)
    x = img.reshape(B, Cin, H // PATCH, PATCH, W // PATCH, PATCH)
    x = jnp.transpose(x, (0, 2, 4, 1, 3, 5))               # (B, h, w, Cin, p, p)
    pcols = x.reshape(B * T, K_IM2COL).astype(jnp.float32)
    pcols = jnp.pad(pcols, ((0, 0), (0, K_PAD - K_IM2COL)))            # lane-dense K

    mean_k = jnp.repeat(jnp.asarray(CIFAR10_MEAN, jnp.float32), PATCH * PATCH)
    std_k = jnp.repeat(jnp.asarray(CIFAR10_STD, jnp.float32), PATCH * PATCH)
    mean_k = jnp.pad(mean_k, (0, K_PAD - K_IM2COL))[None, :]           # (1, K_PAD)
    istd_k = jnp.pad(1.0 / std_k, (0, K_PAD - K_IM2COL),
                     constant_values=1.0)[None, :]                      # (1, K_PAD)

    wpe = jnp.pad(p['conv_w'].reshape(EMB, K_IM2COL).T,
                  ((0, K_PAD - K_IM2COL), (0, 0)))                      # (K_PAD, EMB)
    bpe = p['conv_b'][None, :]                                          # (1, EMB)

    pos2d = p['pos_embedding'].reshape(T, EMB)
    cls2d = p['cls_token'].reshape(1, EMB)

    # pre-transposed weights for right-multiplication (trace-time layout only)
    qkv_wt = jnp.swapaxes(p['qkv_w'], 1, 2)                # (L, C, 3C)
    proj_wt = jnp.swapaxes(p['proj_w'], 1, 2)              # (L, C, C)
    fc1_wt = jnp.swapaxes(p['fc1_w'], 1, 2)                # (L, C, MLP)
    fc2_wt = jnp.swapaxes(p['fc2_w'], 1, 2)                # (L, MLP, C)

    head_wt = jnp.pad(p['head_w'].T, ((0, 0), (0, CLS_PAD - CLASSES)))  # (EMB, CLS_PAD)
    head_b = jnp.pad(p['head_b'], (0, CLS_PAD - CLASSES))[None, :]      # (1, CLS_PAD)

    logits_pad = run_vit_fused(
        pcols, mean_k, istd_k, wpe, bpe, pos2d, cls2d,
        p['ln1_w'], p['ln1_b'], qkv_wt, proj_wt, p['proj_b'],
        p['ln2_w'], p['ln2_b'], fc1_wt, p['fc1_b'], fc2_wt, p['fc2_b'],
        p['final_ln_w'], p['final_ln_b'], head_wt, head_b)
    # row 0 of each batch's 8-row slab is the cls row; first CLASSES lanes are real
    return logits_pad.reshape(BATCH, CLS_ROWS, CLS_PAD)[:, 0, :CLASSES]


if __name__ == "__main__":
    key = jax.random.PRNGKey(0)
    k_img, k_par = jax.random.split(key)
    img = jax.random.uniform(k_img, (BATCH, IN_CH, IMG, IMG), jnp.float32)
    params = init_params(k_par)

    fwd = jax.jit(vit_classifier_forward)
    logits = jax.block_until_ready(fwd(img, params))

    assert logits.shape == (BATCH, CLASSES), logits.shape
    assert bool(jnp.all(jnp.isfinite(logits)))
    print("KERNEL_OK")
</pallas_src>

<mosaic_0001>
module attributes {stable_mosaic.version = 11 : i64} {
  func.func @vit_fused_kernel(%arg0: memref<128x128xf32, #tpu.memory_space<vmem>>, %arg1: memref<1x128xf32, #tpu.memory_space<vmem>>, %arg2: memref<1x128xf32, #tpu.memory_space<vmem>>, %arg3: memref<128x32xf32, #tpu.memory_space<vmem>>, %arg4: memref<1x32xf32, #tpu.memory_space<vmem>>, %arg5: memref<64x32xf32, #tpu.memory_space<vmem>>, %arg6: memref<1x32xf32, #tpu.memory_space<vmem>>, %arg7: memref<2x1x32xf32, #tpu.memory_space<vmem>>, %arg8: memref<2x1x32xf32, #tpu.memory_space<vmem>>, %arg9: memref<2x32x96xf32, #tpu.memory_space<vmem>>, %arg10: memref<2x32x32xf32, #tpu.memory_space<vmem>>, %arg11: memref<2x1x32xf32, #tpu.memory_space<vmem>>, %arg12: memref<2x1x32xf32, #tpu.memory_space<vmem>>, %arg13: memref<2x1x32xf32, #tpu.memory_space<vmem>>, %arg14: memref<2x32x128xf32, #tpu.memory_space<vmem>>, %arg15: memref<2x1x128xf32, #tpu.memory_space<vmem>>, %arg16: memref<2x128x32xf32, #tpu.memory_space<vmem>>, %arg17: memref<2x1x32xf32, #tpu.memory_space<vmem>>, %arg18: memref<1x32xf32, #tpu.memory_space<vmem>>, %arg19: memref<1x32xf32, #tpu.memory_space<vmem>>, %arg20: memref<32x128xf32, #tpu.memory_space<vmem>>, %arg21: memref<1x128xf32, #tpu.memory_space<vmem>>, %arg22: memref<16x128xf32, #tpu.memory_space<vmem>>, %arg23: memref<144x32xf32, #tpu.memory_space<vmem>>) attributes {dimension_semantics = [], scalar_prefetch = 0 : i64, scratch_operands = 1 : i64, tpu.core_type = #tpu.core_type<tc>} {
    %c0 = arith.constant 0 : index
    %c0_0 = arith.constant 0 : index
    %0 = vector.load %arg0[%c0, %c0_0] : memref<128x128xf32, #tpu.memory_space<vmem>>, vector<128x128xf32>
    %c0_1 = arith.constant 0 : index
    %c0_2 = arith.constant 0 : index
    %1 = vector.load %arg1[%c0_1, %c0_2] : memref<1x128xf32, #tpu.memory_space<vmem>>, vector<1x128xf32>
    %2 = vector.broadcast %1 : vector<1x128xf32> to vector<128x128xf32>
    %3 = arith.subf %0, %2 : vector<128x128xf32>
    %c0_3 = arith.constant 0 : index
    %c0_4 = arith.constant 0 : index
    %4 = vector.load %arg2[%c0_3, %c0_4] : memref<1x128xf32, #tpu.memory_space<vmem>>, vector<1x128xf32>
    %5 = vector.broadcast %4 : vector<1x128xf32> to vector<128x128xf32>
    %6 = arith.mulf %3, %5 : vector<128x128xf32>
    %c0_5 = arith.constant 0 : index
    %c0_6 = arith.constant 0 : index
    %7 = vector.load %arg3[%c0_5, %c0_6] : memref<128x32xf32, #tpu.memory_space<vmem>>, vector<128x32xf32>
    %cst = arith.constant dense<0.000000e+00> : vector<128x32xf32>
    %8 = tpu.matmul %6, %7, %cst {dimension_numbers = #tpu.dot_dimension_numbers<[1], [0], [0], [1], [0, 0, 1, 1], [], []>} : vector<128x128xf32>, vector<128x32xf32>, vector<128x32xf32> -> vector<128x32xf32>
    %c0_7 = arith.constant 0 : index
    %c0_8 = arith.constant 0 : index
    %9 = vector.load %arg4[%c0_7, %c0_8] : memref<1x32xf32, #tpu.memory_space<vmem>>, vector<1x32xf32>
    %10 = vector.broadcast %9 : vector<1x32xf32> to vector<128x32xf32>
    %11 = arith.addf %8, %10 : vector<128x32xf32>
    %cst_9 = arith.constant 0.000000e+00 : f32
    %12 = vector.broadcast %cst_9 : f32 to vector<144x32xf32>
    %c0_10 = arith.constant 0 : index
    %c0_11 = arith.constant 0 : index
    %13 = vector.load %arg23[%c0_10, %c0_11] : memref<144x32xf32, #tpu.memory_space<vmem>>, vector<144x32xf32>
    tpu.vector_store %arg23[%c0_10, %c0_11], %12 {strides = array<i32>} : memref<144x32xf32, #tpu.memory_space<vmem>>, vector<144x32xf32>,
    %c0_12 = arith.constant 0 : index
    %c0_13 = arith.constant 0 : index
    %14 = vector.load %arg5[%c0_12, %c0_13] : memref<64x32xf32, #tpu.memory_space<vmem>>, vector<64x32xf32>
    %c0_14 = arith.constant 0 : index
    %c0_15 = arith.constant 0 : index
    %15 = vector.load %arg6[%c0_14, %c0_15] : memref<1x32xf32, #tpu.memory_space<vmem>>, vector<1x32xf32>
    %16 = vector.extract_strided_slice %11 {offsets = [0, 0], sizes = [64, 32], strides = [1, 1]} : vector<128x32xf32> to vector<64x32xf32>
    %17 = arith.addf %16, %14 : vector<64x32xf32>
    %c0_16 = arith.constant 0 : index
    %c0_17 = arith.constant 0 : index
    %18 = vector.load %arg23[%c0_16, %c0_17] : memref<144x32xf32, #tpu.memory_space<vmem>>, vector<64x32xf32>
    tpu.vector_store %arg23[%c0_16, %c0_17], %17 {strides = array<i32>} : memref<144x32xf32, #tpu.memory_space<vmem>>, vector<64x32xf32>,
    %c64 = arith.constant 64 : index
    %c0_18 = arith.constant 0 : index
    %19 = vector.load %arg23[%c64, %c0_18] : memref<144x32xf32, #tpu.memory_space<vmem>>, vector<1x32xf32>
    tpu.vector_store %arg23[%c64, %c0_18], %15 {strides = array<i32>} : memref<144x32xf32, #tpu.memory_space<vmem>>, vector<1x32xf32>,
    %20 = vector.extract_strided_slice %11 {offsets = [64, 0], sizes = [64, 32], strides = [1, 1]} : vector<128x32xf32> to vector<64x32xf32>
    %21 = arith.addf %20, %14 : vector<64x32xf32>
    %c72 = arith.constant 72 : index
    %c0_19 = arith.constant 0 : index
    %22 = vector.load %arg23[%c72, %c0_19] : memref<144x32xf32, #tpu.memory_space<vmem>>, vector<64x32xf32>
    tpu.vector_store %arg23[%c72, %c0_19], %21 {strides = array<i32>} : memref<144x32xf32, #tpu.memory_space<vmem>>, vector<64x32xf32>,
    %c136 = arith.constant 136 : index
    %c0_20 = arith.constant 0 : index
    %23 = vector.load %arg23[%c136, %c0_20] : memref<144x32xf32, #tpu.memory_space<vmem>>, vector<1x32xf32>
    tpu.vector_store %arg23[%c136, %c0_20], %15 {strides = array<i32>} : memref<144x32xf32, #tpu.memory_space<vmem>>, vector<1x32xf32>,
    %c0_21 = arith.constant 0 : index
    %c0_22 = arith.constant 0 : index
    %24 = vector.load %arg23[%c0_21, %c0_22] : memref<144x32xf32, #tpu.memory_space<vmem>>, vector<144x32xf32>
    %25 = tpu.iota {dimensions = array<i32: 2>} : vector<1x72x72xi32>
    %c65_i32 = arith.constant 65 : i32
    %26 = vector.broadcast %c65_i32 : i32 to vector<1x72x72xi32>
    %27 = arith.cmpi slt, %25, %26 : vector<1x72x72xi32>
    %cst_23 = arith.constant 0.000000e+00 : f32
    %cst_24 = arith.constant -1.000000e+30 : f32
    %28 = vector.broadcast %cst_23 : f32 to vector<1x72x72xf32>
    %29 = vector.broadcast %cst_24 : f32 to vector<1x72x72xf32>
    %30 = arith.select %27, %28, %29 : vector<1x72x72xi1>, vector<1x72x72xf32>
    %c0_25 = arith.constant 0 : index
    %c0_26 = arith.constant 0 : index
    %c0_27 = arith.constant 0 : index
    %31 = vector.load %arg7[%c0_25, %c0_26, %c0_27] : memref<2x1x32xf32, #tpu.memory_space<vmem>>, vector<1x1x32xf32>
    %32 = vector.shape_cast %31 : vector<1x1x32xf32> to vector<1x32xf32>
    %c0_28 = arith.constant 0 : index
    %c0_29 = arith.constant 0 : index
    %c0_30 = arith.constant 0 : index
    %33 = vector.load %arg8[%c0_28, %c0_29, %c0_30] : memref<2x1x32xf32, #tpu.memory_space<vmem>>, vector<1x1x32xf32>
    %34 = vector.shape_cast %33 : vector<1x1x32xf32> to vector<1x32xf32>
    %c0_31 = arith.constant 0 : index
    %c0_32 = arith.constant 0 : index
    %c0_33 = arith.constant 0 : index
    %35 = vector.load %arg12[%c0_31, %c0_32, %c0_33] : memref<2x1x32xf32, #tpu.memory_space<vmem>>, vector<1x1x32xf32>
    %36 = vector.shape_cast %35 : vector<1x1x32xf32> to vector<1x32xf32>
    %c0_34 = arith.constant 0 : index
    %c0_35 = arith.constant 0 : index
    %c0_36 = arith.constant 0 : index
    %37 = vector.load %arg13[%c0_34, %c0_35, %c0_36] : memref<2x1x32xf32, #tpu.memory_space<vmem>>, vector<1x1x32xf32>
    %38 = vector.shape_cast %37 : vector<1x1x32xf32> to vector<1x32xf32>
    %c0_37 = arith.constant 0 : index
    %c0_38 = arith.constant 0 : index
    %c0_39 = arith.constant 0 : index
    %39 = vector.load %arg9[%c0_37, %c0_38, %c0_39] : memref<2x32x96xf32, #tpu.memory_space<vmem>>, vector<1x32x96xf32>
    %40 = vector.shape_cast %39 : vector<1x32x96xf32> to vector<32x96xf32>
    %c0_40 = arith.constant 0 : index
    %c0_41 = arith.constant 0 : index
    %c0_42 = arith.constant 0 : index
    %41 = vector.load %arg10[%c0_40, %c0_41, %c0_42] : memref<2x32x32xf32, #tpu.memory_space<vmem>>, vector<1x32x32xf32>
    %42 = vector.shape_cast %41 : vector<1x32x32xf32> to vector<32x32xf32>
    %c0_43 = arith.constant 0 : index
    %c0_44 = arith.constant 0 : index
    %c0_45 = arith.constant 0 : index
    %43 = vector.load %arg11[%c0_43, %c0_44, %c0_45] : memref<2x1x32xf32, #tpu.memory_space<vmem>>, vector<1x1x32xf32>
    %44 = vector.shape_cast %43 : vector<1x1x32xf32> to vector<1x32xf32>
    %c0_46 = arith.constant 0 : index
    %c0_47 = arith.constant 0 : index
    %c0_48 = arith.constant 0 : index
    %45 = vector.load %arg14[%c0_46, %c0_47, %c0_48] : memref<2x32x128xf32, #tpu.memory_space<vmem>>, vector<1x32x128xf32>
    %46 = vector.shape_cast %45 : vector<1x32x128xf32> to vector<32x128xf32>
    %c0_49 = arith.constant 0 : index
    %c0_50 = arith.constant 0 : index
    %c0_51 = arith.constant 0 : index
    %47 = vector.load %arg15[%c0_49, %c0_50, %c0_51] : memref<2x1x128xf32, #tpu.memory_space<vmem>>, vector<1x1x128xf32>
    %48 = vector.shape_cast %47 : vector<1x1x128xf32> to vector<1x128xf32>
    %c0_52 = arith.constant 0 : index
    %c0_53 = arith.constant 0 : index
    %c0_54 = arith.constant 0 : index
    %49 = vector.load %arg16[%c0_52, %c0_53, %c0_54] : memref<2x128x32xf32, #tpu.memory_space<vmem>>, vector<1x128x32xf32>
    %50 = vector.shape_cast %49 : vector<1x128x32xf32> to vector<128x32xf32>
    %c0_55 = arith.constant 0 : index
    %c0_56 = arith.constant 0 : index
    %c0_57 = arith.constant 0 : index
    %51 = vector.load %arg17[%c0_55, %c0_56, %c0_57] : memref<2x1x32xf32, #tpu.memory_space<vmem>>, vector<1x1x32xf32>
    %52 = vector.shape_cast %51 : vector<1x1x32xf32> to vector<1x32xf32>
    %cst_58 = arith.constant dense<0.000000e+00> : vector<144xf32>
    %53 = vector.multi_reduction <add>, %24, %cst_58 [1] : vector<144x32xf32> to vector<144xf32>
    %54 = vector.shape_cast %53 : vector<144xf32> to vector<144x1xf32>
    %cst_59 = arith.constant 3.200000e+01 : f32
    %55 = vector.broadcast %cst_59 : f32 to vector<144x1xf32>
    %56 = arith.divf %54, %55 : vector<144x1xf32>
    %57 = vector.broadcast %56 : vector<144x1xf32> to vector<144x32xf32>
    %58 = arith.subf %24, %57 : vector<144x32xf32>
    %59 = arith.mulf %58, %58 : vector<144x32xf32>
    %cst_60 = arith.constant dense<0.000000e+00> : vector<144xf32>
    %60 = vector.multi_reduction <add>, %59, %cst_60 [1] : vector<144x32xf32> to vector<144xf32>
    %61 = vector.shape_cast %60 : vector<144xf32> to vector<144x1xf32>
    %cst_61 = arith.constant 3.200000e+01 : f32
    %62 = vector.broadcast %cst_61 : f32 to vector<144x1xf32>
    %63 = arith.divf %61, %62 : vector<144x1xf32>
    %64 = vector.broadcast %56 : vector<144x1xf32> to vector<144x32xf32>
    %65 = arith.subf %24, %64 : vector<144x32xf32>
    %cst_62 = arith.constant 9.99999974E-6 : f32
    %66 = vector.broadcast %cst_62 : f32 to vector<144x1xf32>
    %67 = arith.addf %63, %66 : vector<144x1xf32>
    %68 = math.rsqrt %67 : vector<144x1xf32>
    %69 = vector.broadcast %68 : vector<144x1xf32> to vector<144x32xf32>
    %70 = arith.mulf %65, %69 : vector<144x32xf32>
    %71 = vector.broadcast %32 : vector<1x32xf32> to vector<144x32xf32>
    %72 = arith.mulf %70, %71 : vector<144x32xf32>
    %73 = vector.broadcast %34 : vector<1x32xf32> to vector<144x32xf32>
    %74 = arith.addf %72, %73 : vector<144x32xf32>
    %cst_63 = arith.constant dense<0.000000e+00> : vector<144x96xf32>
    %75 = tpu.matmul %74, %40, %cst_63 {dimension_numbers = #tpu.dot_dimension_numbers<[1], [0], [0], [1], [0, 0, 1, 1], [], []>} : vector<144x32xf32>, vector<32x96xf32>, vector<144x96xf32> -> vector<144x96xf32>
    %76 = vector.shape_cast %75 : vector<144x96xf32> to vector<2x72x96xf32>
    %cst_64 = arith.constant 0.000000e+00 : f32
    %77 = vector.broadcast %cst_64 : f32 to vector<144x32xf32>
    %78 = vector.extract_strided_slice %76 {offsets = [0, 0, 0], sizes = [2, 72, 8], strides = [1, 1, 1]} : vector<2x72x96xf32> to vector<2x72x8xf32>
    %cst_65 = arith.constant 0.353553385 : f32
    %79 = vector.broadcast %cst_65 : f32 to vector<2x72x8xf32>
    %80 = arith.mulf %78, %79 : vector<2x72x8xf32>
    %81 = vector.extract_strided_slice %76 {offsets = [0, 0, 32], sizes = [2, 72, 8], strides = [1, 1, 1]} : vector<2x72x96xf32> to vector<2x72x8xf32>
    %82 = vector.extract_strided_slice %76 {offsets = [0, 0, 64], sizes = [2, 72, 8], strides = [1, 1, 1]} : vector<2x72x96xf32> to vector<2x72x8xf32>
    "tpu.trace_start"() <{level = 10 : i32, message = "bsd,btd->bst"}> : () -> ()
    %cst_66 = arith.constant dense<0.000000e+00> : vector<2x72x72xf32>
    %83 = tpu.matmul %80, %81, %cst_66 {dimension_numbers = #tpu.dot_dimension_numbers<[2], [2], [1], [1], [0, 0, 0, 1, 1, 1], [0], [0]>} : vector<2x72x8xf32>, vector<2x72x8xf32>, vector<2x72x72xf32> -> vector<2x72x72xf32>
    "tpu.trace_stop"() : () -> ()
    %84 = vector.broadcast %30 : vector<1x72x72xf32> to vector<2x72x72xf32>
    %85 = arith.addf %83, %84 : vector<2x72x72xf32>
    %cst_67 = arith.constant dense<0xFF800000> : vector<2x72xf32>
    %86 = vector.multi_reduction <maximumf>, %85, %cst_67 [2] : vector<2x72x72xf32> to vector<2x72xf32>
    %87 = vector.shape_cast %86 : vector<2x72xf32> to vector<2x72x1xf32>
    %88 = vector.broadcast %87 : vector<2x72x1xf32> to vector<2x72x72xf32>
    %89 = arith.subf %85, %88 : vector<2x72x72xf32>
    %90 = math.exp %89 : vector<2x72x72xf32>
    %cst_68 = arith.constant dense<0.000000e+00> : vector<2x72xf32>
    %91 = vector.multi_reduction <add>, %90, %cst_68 [2] : vector<2x72x72xf32> to vector<2x72xf32>
    %92 = vector.shape_cast %91 : vector<2x72xf32> to vector<2x72x1xf32>
    %93 = tpu.reciprocal %92 {approx = true} : vector<2x72x1xf32> -> vector<2x72x1xf32>
    %94 = vector.broadcast %93 : vector<2x72x1xf32> to vector<2x72x72xf32>
    %95 = arith.mulf %90, %94 : vector<2x72x72xf32>
    "tpu.trace_start"() <{level = 10 : i32, message = "bst,btd->bsd"}> : () -> ()
    %cst_69 = arith.constant dense<0.000000e+00> : vector<2x72x8xf32>
    %96 = tpu.matmul %95, %82, %cst_69 {dimension_numbers = #tpu.dot_dimension_numbers<[2], [1], [1], [2], [0, 0, 0, 1, 1, 2], [0], [0]>} : vector<2x72x72xf32>, vector<2x72x8xf32>, vector<2x72x8xf32> -> vector<2x72x8xf32>
    "tpu.trace_stop"() : () -> ()
    %97 = vector.shape_cast %96 : vector<2x72x8xf32> to vector<144x8xf32>
    %98 = vector.extract_strided_slice %42 {offsets = [0, 0], sizes = [8, 32], strides = [1, 1]} : vector<32x32xf32> to vector<8x32xf32>
    %cst_70 = arith.constant dense<0.000000e+00> : vector<144x32xf32>
    %99 = tpu.matmul %97, %98, %cst_70 {dimension_numbers = #tpu.dot_dimension_numbers<[1], [0], [0], [1], [0, 0, 1, 1], [], []>} : vector<144x8xf32>, vector<8x32xf32>, vector<144x32xf32> -> vector<144x32xf32>
    %100 = arith.addf %77, %99 : vector<144x32xf32>
    %101 = vector.extract_strided_slice %76 {offsets = [0, 0, 8], sizes = [2, 72, 8], strides = [1, 1, 1]} : vector<2x72x96xf32> to vector<2x72x8xf32>
    %cst_71 = arith.constant 0.353553385 : f32
    %102 = vector.broadcast %cst_71 : f32 to vector<2x72x8xf32>
    %103 = arith.mulf %101, %102 : vector<2x72x8xf32>
    %104 = vector.extract_strided_slice %76 {offsets = [0, 0, 40], sizes = [2, 72, 8], strides = [1, 1, 1]} : vector<2x72x96xf32> to vector<2x72x8xf32>
    %105 = vector.extract_strided_slice %76 {offsets = [0, 0, 72], sizes = [2, 72, 8], strides = [1, 1, 1]} : vector<2x72x96xf32> to vector<2x72x8xf32>
    "tpu.trace_start"() <{level = 10 : i32, message = "bsd,btd->bst"}> : () -> ()
    %cst_72 = arith.constant dense<0.000000e+00> : vector<2x72x72xf32>
    %106 = tpu.matmul %103, %104, %cst_72 {dimension_numbers = #tpu.dot_dimension_numbers<[2], [2], [1], [1], [0, 0, 0, 1, 1, 1], [0], [0]>} : vector<2x72x8xf32>, vector<2x72x8xf32>, vector<2x72x72xf32> -> vector<2x72x72xf32>
    "tpu.trace_stop"() : () -> ()
    %107 = vector.broadcast %30 : vector<1x72x72xf32> to vector<2x72x72xf32>
    %108 = arith.addf %106, %107 : vector<2x72x72xf32>
    %cst_73 = arith.constant dense<0xFF800000> : vector<2x72xf32>
    %109 = vector.multi_reduction <maximumf>, %108, %cst_73 [2] : vector<2x72x72xf32> to vector<2x72xf32>
    %110 = vector.shape_cast %109 : vector<2x72xf32> to vector<2x72x1xf32>
    %111 = vector.broadcast %110 : vector<2x72x1xf32> to vector<2x72x72xf32>
    %112 = arith.subf %108, %111 : vector<2x72x72xf32>
    %113 = math.exp %112 : vector<2x72x72xf32>
    %cst_74 = arith.constant dense<0.000000e+00> : vector<2x72xf32>
    %114 = vector.multi_reduction <add>, %113, %cst_74 [2] : vector<2x72x72xf32> to vector<2x72xf32>
    %115 = vector.shape_cast %114 : vector<2x72xf32> to vector<2x72x1xf32>
    %116 = tpu.reciprocal %115 {approx = true} : vector<2x72x1xf32> -> vector<2x72x1xf32>
    %117 = vector.broadcast %116 : vector<2x72x1xf32> to vector<2x72x72xf32>
    %118 = arith.mulf %113, %117 : vector<2x72x72xf32>
    "tpu.trace_start"() <{level = 10 : i32, message = "bst,btd->bsd"}> : () -> ()
    %cst_75 = arith.constant dense<0.000000e+00> : vector<2x72x8xf32>
    %119 = tpu.matmul %118, %105, %cst_75 {dimension_numbers = #tpu.dot_dimension_numbers<[2], [1], [1], [2], [0, 0, 0, 1, 1, 2], [0], [0]>} : vector<2x72x72xf32>, vector<2x72x8xf32>, vector<2x72x8xf32> -> vector<2x72x8xf32>
    "tpu.trace_stop"() : () -> ()
    %120 = vector.shape_cast %119 : vector<2x72x8xf32> to vector<144x8xf32>
    %121 = vector.extract_strided_slice %42 {offsets = [8, 0], sizes = [8, 32], strides = [1, 1]} : vector<32x32xf32> to vector<8x32xf32>
    %cst_76 = arith.constant dense<0.000000e+00> : vector<144x32xf32>
    %122 = tpu.matmul %120, %121, %cst_76 {dimension_numbers = #tpu.dot_dimension_numbers<[1], [0], [0], [1], [0, 0, 1, 1], [], []>} : vector<144x8xf32>, vector<8x32xf32>, vector<144x32xf32> -> vector<144x32xf32>
    %123 = arith.addf %100, %122 : vector<144x32xf32>
    %124 = vector.extract_strided_slice %76 {offsets = [0, 0, 16], sizes = [2, 72, 8], strides = [1, 1, 1]} : vector<2x72x96xf32> to vector<2x72x8xf32>
    %cst_77 = arith.constant 0.353553385 : f32
    %125 = vector.broadcast %cst_77 : f32 to vector<2x72x8xf32>
    %126 = arith.mulf %124, %125 : vector<2x72x8xf32>
    %127 = vector.extract_strided_slice %76 {offsets = [0, 0, 48], sizes = [2, 72, 8], strides = [1, 1, 1]} : vector<2x72x96xf32> to vector<2x72x8xf32>
    %128 = vector.extract_strided_slice %76 {offsets = [0, 0, 80], sizes = [2, 72, 8], strides = [1, 1, 1]} : vector<2x72x96xf32> to vector<2x72x8xf32>
    "tpu.trace_start"() <{level = 10 : i32, message = "bsd,btd->bst"}> : () -> ()
    %cst_78 = arith.constant dense<0.000000e+00> : vector<2x72x72xf32>
    %129 = tpu.matmul %126, %127, %cst_78 {dimension_numbers = #tpu.dot_dimension_numbers<[2], [2], [1], [1], [0, 0, 0, 1, 1, 1], [0], [0]>} : vector<2x72x8xf32>, vector<2x72x8xf32>, vector<2x72x72xf32> -> vector<2x72x72xf32>
    "tpu.trace_stop"() : () -> ()
    %130 = vector.broadcast %30 : vector<1x72x72xf32> to vector<2x72x72xf32>
    %131 = arith.addf %129, %130 : vector<2x72x72xf32>
    %cst_79 = arith.constant dense<0xFF800000> : vector<2x72xf32>
    %132 = vector.multi_reduction <maximumf>, %131, %cst_79 [2] : vector<2x72x72xf32> to vector<2x72xf32>
    %133 = vector.shape_cast %132 : vector<2x72xf32> to vector<2x72x1xf32>
    %134 = vector.broadcast %133 : vector<2x72x1xf32> to vector<2x72x72xf32>
    %135 = arith.subf %131, %134 : vector<2x72x72xf32>
    %136 = math.exp %135 : vector<2x72x72xf32>
    %cst_80 = arith.constant dense<0.000000e+00> : vector<2x72xf32>
    %137 = vector.multi_reduction <add>, %136, %cst_80 [2] : vector<2x72x72xf32> to vector<2x72xf32>
    %138 = vector.shape_cast %137 : vector<2x72xf32> to vector<2x72x1xf32>
    %139 = tpu.reciprocal %138 {approx = true} : vector<2x72x1xf32> -> vector<2x72x1xf32>
    %140 = vector.broadcast %139 : vector<2x72x1xf32> to vector<2x72x72xf32>
    %141 = arith.mulf %136, %140 : vector<2x72x72xf32>
    "tpu.trace_start"() <{level = 10 : i32, message = "bst,btd->bsd"}> : () -> ()
    %cst_81 = arith.constant dense<0.000000e+00> : vector<2x72x8xf32>
    %142 = tpu.matmul %141, %128, %cst_81 {dimension_numbers = #tpu.dot_dimension_numbers<[2], [1], [1], [2], [0, 0, 0, 1, 1, 2], [0], [0]>} : vector<2x72x72xf32>, vector<2x72x8xf32>, vector<2x72x8xf32> -> vector<2x72x8xf32>
    "tpu.trace_stop"() : () -> ()
    %143 = vector.shape_cast %142 : vector<2x72x8xf32> to vector<144x8xf32>
    %144 = vector.extract_strided_slice %42 {offsets = [16, 0], sizes = [8, 32], strides = [1, 1]} : vector<32x32xf32> to vector<8x32xf32>
    %cst_82 = arith.constant dense<0.000000e+00> : vector<144x32xf32>
    %145 = tpu.matmul %143, %144, %cst_82 {dimension_numbers = #tpu.dot_dimension_numbers<[1], [0], [0], [1], [0, 0, 1, 1], [], []>} : vector<144x8xf32>, vector<8x32xf32>, vector<144x32xf32> -> vector<144x32xf32>
    %146 = arith.addf %123, %145 : vector<144x32xf32>
    %147 = vector.extract_strided_slice %76 {offsets = [0, 0, 24], sizes = [2, 72, 8], strides = [1, 1, 1]} : vector<2x72x96xf32> to vector<2x72x8xf32>
    %cst_83 = arith.constant 0.353553385 : f32
    %148 = vector.broadcast %cst_83 : f32 to vector<2x72x8xf32>
    %149 = arith.mulf %147, %148 : vector<2x72x8xf32>
    %150 = vector.extract_strided_slice %76 {offsets = [0, 0, 56], sizes = [2, 72, 8], strides = [1, 1, 1]} : vector<2x72x96xf32> to vector<2x72x8xf32>
    %151 = vector.extract_strided_slice %76 {offsets = [0, 0, 88], sizes = [2, 72, 8], strides = [1, 1, 1]} : vector<2x72x96xf32> to vector<2x72x8xf32>
    "tpu.trace_start"() <{level = 10 : i32, message = "bsd,btd->bst"}> : () -> ()
    %cst_84 = arith.constant dense<0.000000e+00> : vector<2x72x72xf32>
    %152 = tpu.matmul %149, %150, %cst_84 {dimension_numbers = #tpu.dot_dimension_numbers<[2], [2], [1], [1], [0, 0, 0, 1, 1, 1], [0], [0]>} : vector<2x72x8xf32>, vector<2x72x8xf32>, vector<2x72x72xf32> -> vector<2x72x72xf32>
    "tpu.trace_stop"() : () -> ()
    %153 = vector.broadcast %30 : vector<1x72x72xf32> to vector<2x72x72xf32>
    %154 = arith.addf %152, %153 : vector<2x72x72xf32>
    %cst_85 = arith.constant dense<0xFF800000> : vector<2x72xf32>
    %155 = vector.multi_reduction <maximumf>, %154, %cst_85 [2] : vector<2x72x72xf32> to vector<2x72xf32>
    %156 = vector.shape_cast %155 : vector<2x72xf32> to vector<2x72x1xf32>
    %157 = vector.broadcast %156 : vector<2x72x1xf32> to vector<2x72x72xf32>
    %158 = arith.subf %154, %157 : vector<2x72x72xf32>
    %159 = math.exp %158 : vector<2x72x72xf32>
    %cst_86 = arith.constant dense<0.000000e+00> : vector<2x72xf32>
    %160 = vector.multi_reduction <add>, %159, %cst_86 [2] : vector<2x72x72xf32> to vector<2x72xf32>
    %161 = vector.shape_cast %160 : vector<2x72xf32> to vector<2x72x1xf32>
    %162 = tpu.reciprocal %161 {approx = true} : vector<2x72x1xf32> -> vector<2x72x1xf32>
    %163 = vector.broadcast %162 : vector<2x72x1xf32> to vector<2x72x72xf32>
    %164 = arith.mulf %159, %163 : vector<2x72x72xf32>
    "tpu.trace_start"() <{level = 10 : i32, message = "bst,btd->bsd"}> : () -> ()
    %cst_87 = arith.constant dense<0.000000e+00> : vector<2x72x8xf32>
    %165 = tpu.matmul %164, %151, %cst_87 {dimension_numbers = #tpu.dot_dimension_numbers<[2], [1], [1], [2], [0, 0, 0, 1, 1, 2], [0], [0]>} : vector<2x72x72xf32>, vector<2x72x8xf32>, vector<2x72x8xf32> -> vector<2x72x8xf32>
    "tpu.trace_stop"() : () -> ()
    %166 = vector.shape_cast %165 : vector<2x72x8xf32> to vector<144x8xf32>
    %167 = vector.extract_strided_slice %42 {offsets = [24, 0], sizes = [8, 32], strides = [1, 1]} : vector<32x32xf32> to vector<8x32xf32>
    %cst_88 = arith.constant dense<0.000000e+00> : vector<144x32xf32>
    %168 = tpu.matmul %166, %167, %cst_88 {dimension_numbers = #tpu.dot_dimension_numbers<[1], [0], [0], [1], [0, 0, 1, 1], [], []>} : vector<144x8xf32>, vector<8x32xf32>, vector<144x32xf32> -> vector<144x32xf32>
    %169 = arith.addf %146, %168 : vector<144x32xf32>
    %170 = arith.addf %24, %169 : vector<144x32xf32>
    %171 = vector.broadcast %44 : vector<1x32xf32> to vector<144x32xf32>
    %172 = arith.addf %170, %171 : vector<144x32xf32>
    %cst_89 = arith.constant dense<0.000000e+00> : vector<144xf32>
    %173 = vector.multi_reduction <add>, %172, %cst_89 [1] : vector<144x32xf32> to vector<144xf32>
    %174 = vector.shape_cast %173 : vector<144xf32> to vector<144x1xf32>
    %cst_90 = arith.constant 3.200000e+01 : f32
    %175 = vector.broadcast %cst_90 : f32 to vector<144x1xf32>
    %176 = arith.divf %174, %175 : vector<144x1xf32>
    %177 = vector.broadcast %176 : vector<144x1xf32> to vector<144x32xf32>
    %178 = arith.subf %172, %177 : vector<144x32xf32>
    %179 = arith.mulf %178, %178 : vector<144x32xf32>
    %cst_91 = arith.constant dense<0.000000e+00> : vector<144xf32>
    %180 = vector.multi_reduction <add>, %179, %cst_91 [1] : vector<144x32xf32> to vector<144xf32>
    %181 = vector.shape_cast %180 : vector<144xf32> to vector<144x1xf32>
    %cst_92 = arith.constant 3.200000e+01 : f32
    %182 = vector.broadcast %cst_92 : f32 to vector<144x1xf32>
    %183 = arith.divf %181, %182 : vector<144x1xf32>
    %184 = vector.broadcast %176 : vector<144x1xf32> to vector<144x32xf32>
    %185 = arith.subf %172, %184 : vector<144x32xf32>
    %cst_93 = arith.constant 9.99999974E-6 : f32
    %186 = vector.broadcast %cst_93 : f32 to vector<144x1xf32>
    %187 = arith.addf %183, %186 : vector<144x1xf32>
    %188 = math.rsqrt %187 : vector<144x1xf32>
    %189 = vector.broadcast %188 : vector<144x1xf32> to vector<144x32xf32>
    %190 = arith.mulf %185, %189 : vector<144x32xf32>
    %191 = vector.broadcast %36 : vector<1x32xf32> to vector<144x32xf32>
    %192 = arith.mulf %190, %191 : vector<144x32xf32>
    %193 = vector.broadcast %38 : vector<1x32xf32> to vector<144x32xf32>
    %194 = arith.addf %192, %193 : vector<144x32xf32>
    %cst_94 = arith.constant dense<0.000000e+00> : vector<144x128xf32>
    %195 = tpu.matmul %194, %46, %cst_94 {dimension_numbers = #tpu.dot_dimension_numbers<[1], [0], [0], [1], [0, 0, 1, 1], [], []>} : vector<144x32xf32>, vector<32x128xf32>, vector<144x128xf32> -> vector<144x128xf32>
    %196 = vector.broadcast %48 : vector<1x128xf32> to vector<144x128xf32>
    %197 = arith.addf %195, %196 : vector<144x128xf32>
    %cst_95 = arith.constant 5.000000e-01 : f32
    %198 = vector.broadcast %cst_95 : f32 to vector<144x128xf32>
    %199 = arith.mulf %198, %197 : vector<144x128xf32>
    %cst_96 = arith.constant 4.471500e-02 : f32
    %200 = vector.broadcast %cst_96 : f32 to vector<144x128xf32>
    %201 = arith.mulf %200, %197 : vector<144x128xf32>
    %202 = arith.mulf %201, %197 : vector<144x128xf32>
    %203 = arith.mulf %202, %197 : vector<144x128xf32>
    %204 = arith.addf %197, %203 : vector<144x128xf32>
    %cst_97 = arith.constant 0.797884583 : f32
    %205 = vector.broadcast %cst_97 : f32 to vector<144x128xf32>
    %206 = arith.mulf %205, %204 : vector<144x128xf32>
    %207 = math.tanh %206 : vector<144x128xf32>
    %cst_98 = arith.constant 1.000000e+00 : f32
    %208 = vector.broadcast %cst_98 : f32 to vector<144x128xf32>
    %209 = arith.addf %208, %207 : vector<144x128xf32>
    %210 = arith.mulf %199, %209 : vector<144x128xf32>
    %cst_99 = arith.constant dense<0.000000e+00> : vector<144x32xf32>
    %211 = tpu.matmul %210, %50, %cst_99 {dimension_numbers = #tpu.dot_dimension_numbers<[1], [0], [0], [1], [0, 0, 1, 1], [], []>} : vector<144x128xf32>, vector<128x32xf32>, vector<144x32xf32> -> vector<144x32xf32>
    %212 = arith.addf %172, %211 : vector<144x32xf32>
    %213 = vector.broadcast %52 : vector<1x32xf32> to vector<144x32xf32>
    %214 = arith.addf %212, %213 : vector<144x32xf32>
    %c1 = arith.constant 1 : index
    %c0_100 = arith.constant 0 : index
    %c0_101 = arith.constant 0 : index
    %215 = vector.load %arg7[%c1, %c0_100, %c0_101] : memref<2x1x32xf32, #tpu.memory_space<vmem>>, vector<1x1x32xf32>
    %216 = vector.shape_cast %215 : vector<1x1x32xf32> to vector<1x32xf32>
    %c1_102 = arith.constant 1 : index
    %c0_103 = arith.constant 0 : index
    %c0_104 = arith.constant 0 : index
    %217 = vector.load %arg8[%c1_102, %c0_103, %c0_104] : memref<2x1x32xf32, #tpu.memory_space<vmem>>, vector<1x1x32xf32>
    %218 = vector.shape_cast %217 : vector<1x1x32xf32> to vector<1x32xf32>
    %c1_105 = arith.constant 1 : index
    %c0_106 = arith.constant 0 : index
    %c0_107 = arith.constant 0 : index
    %219 = vector.load %arg12[%c1_105, %c0_106, %c0_107] : memref<2x1x32xf32, #tpu.memory_space<vmem>>, vector<1x1x32xf32>
    %220 = vector.shape_cast %219 : vector<1x1x32xf32> to vector<1x32xf32>
    %c1_108 = arith.constant 1 : index
    %c0_109 = arith.constant 0 : index
    %c0_110 = arith.constant 0 : index
    %221 = vector.load %arg13[%c1_108, %c0_109, %c0_110] : memref<2x1x32xf32, #tpu.memory_space<vmem>>, vector<1x1x32xf32>
    %222 = vector.shape_cast %221 : vector<1x1x32xf32> to vector<1x32xf32>
    %c1_111 = arith.constant 1 : index
    %c0_112 = arith.constant 0 : index
    %c0_113 = arith.constant 0 : index
    %223 = vector.load %arg9[%c1_111, %c0_112, %c0_113] : memref<2x32x96xf32, #tpu.memory_space<vmem>>, vector<1x32x96xf32>
    %224 = vector.shape_cast %223 : vector<1x32x96xf32> to vector<32x96xf32>
    %c1_114 = arith.constant 1 : index
    %c0_115 = arith.constant 0 : index
    %c0_116 = arith.constant 0 : index
    %225 = vector.load %arg10[%c1_114, %c0_115, %c0_116] : memref<2x32x32xf32, #tpu.memory_space<vmem>>, vector<1x32x32xf32>
    %226 = vector.shape_cast %225 : vector<1x32x32xf32> to vector<32x32xf32>
    %c1_117 = arith.constant 1 : index
    %c0_118 = arith.constant 0 : index
    %c0_119 = arith.constant 0 : index
    %227 = vector.load %arg11[%c1_117, %c0_118, %c0_119] : memref<2x1x32xf32, #tpu.memory_space<vmem>>, vector<1x1x32xf32>
    %228 = vector.shape_cast %227 : vector<1x1x32xf32> to vector<1x32xf32>
    %c1_120 = arith.constant 1 : index
    %c0_121 = arith.constant 0 : index
    %c0_122 = arith.constant 0 : index
    %229 = vector.load %arg14[%c1_120, %c0_121, %c0_122] : memref<2x32x128xf32, #tpu.memory_space<vmem>>, vector<1x32x128xf32>
    %230 = vector.shape_cast %229 : vector<1x32x128xf32> to vector<32x128xf32>
    %c1_123 = arith.constant 1 : index
    %c0_124 = arith.constant 0 : index
    %c0_125 = arith.constant 0 : index
    %231 = vector.load %arg15[%c1_123, %c0_124, %c0_125] : memref<2x1x128xf32, #tpu.memory_space<vmem>>, vector<1x1x128xf32>
    %232 = vector.shape_cast %231 : vector<1x1x128xf32> to vector<1x128xf32>
    %c1_126 = arith.constant 1 : index
    %c0_127 = arith.constant 0 : index
    %c0_128 = arith.constant 0 : index
    %233 = vector.load %arg16[%c1_126, %c0_127, %c0_128] : memref<2x128x32xf32, #tpu.memory_space<vmem>>, vector<1x128x32xf32>
    %234 = vector.shape_cast %233 : vector<1x128x32xf32> to vector<128x32xf32>
    %c1_129 = arith.constant 1 : index
    %c0_130 = arith.constant 0 : index
    %c0_131 = arith.constant 0 : index
    %235 = vector.load %arg17[%c1_129, %c0_130, %c0_131] : memref<2x1x32xf32, #tpu.memory_space<vmem>>, vector<1x1x32xf32>
    %236 = vector.shape_cast %235 : vector<1x1x32xf32> to vector<1x32xf32>
    %cst_132 = arith.constant dense<0.000000e+00> : vector<144xf32>
    %237 = vector.multi_reduction <add>, %214, %cst_132 [1] : vector<144x32xf32> to vector<144xf32>
    %238 = vector.shape_cast %237 : vector<144xf32> to vector<144x1xf32>
    %cst_133 = arith.constant 3.200000e+01 : f32
    %239 = vector.broadcast %cst_133 : f32 to vector<144x1xf32>
    %240 = arith.divf %238, %239 : vector<144x1xf32>
    %241 = vector.broadcast %240 : vector<144x1xf32> to vector<144x32xf32>
    %242 = arith.subf %214, %241 : vector<144x32xf32>
    %243 = arith.mulf %242, %242 : vector<144x32xf32>
    %cst_134 = arith.constant dense<0.000000e+00> : vector<144xf32>
    %244 = vector.multi_reduction <add>, %243, %cst_134 [1] : vector<144x32xf32> to vector<144xf32>
    %245 = vector.shape_cast %244 : vector<144xf32> to vector<144x1xf32>
    %cst_135 = arith.constant 3.200000e+01 : f32
    %246 = vector.broadcast %cst_135 : f32 to vector<144x1xf32>
    %247 = arith.divf %245, %246 : vector<144x1xf32>
    %248 = vector.broadcast %240 : vector<144x1xf32> to vector<144x32xf32>
    %249 = arith.subf %214, %248 : vector<144x32xf32>
    %cst_136 = arith.constant 9.99999974E-6 : f32
    %250 = vector.broadcast %cst_136 : f32 to vector<144x1xf32>
    %251 = arith.addf %247, %250 : vector<144x1xf32>
    %252 = math.rsqrt %251 : vector<144x1xf32>
    %253 = vector.broadcast %252 : vector<144x1xf32> to vector<144x32xf32>
    %254 = arith.mulf %249, %253 : vector<144x32xf32>
    %255 = vector.broadcast %216 : vector<1x32xf32> to vector<144x32xf32>
    %256 = arith.mulf %254, %255 : vector<144x32xf32>
    %257 = vector.broadcast %218 : vector<1x32xf32> to vector<144x32xf32>
    %258 = arith.addf %256, %257 : vector<144x32xf32>
    %cst_137 = arith.constant dense<0.000000e+00> : vector<144x96xf32>
    %259 = tpu.matmul %258, %224, %cst_137 {dimension_numbers = #tpu.dot_dimension_numbers<[1], [0], [0], [1], [0, 0, 1, 1], [], []>} : vector<144x32xf32>, vector<32x96xf32>, vector<144x96xf32> -> vector<144x96xf32>
    %260 = vector.shape_cast %259 : vector<144x96xf32> to vector<2x72x96xf32>
    %cst_138 = arith.constant 0.000000e+00 : f32
    %261 = vector.broadcast %cst_138 : f32 to vector<144x32xf32>
    %262 = vector.extract_strided_slice %260 {offsets = [0, 0, 0], sizes = [2, 72, 8], strides = [1, 1, 1]} : vector<2x72x96xf32> to vector<2x72x8xf32>
    %cst_139 = arith.constant 0.353553385 : f32
    %263 = vector.broadcast %cst_139 : f32 to vector<2x72x8xf32>
    %264 = arith.mulf %262, %263 : vector<2x72x8xf32>
    %265 = vector.extract_strided_slice %260 {offsets = [0, 0, 32], sizes = [2, 72, 8], strides = [1, 1, 1]} : vector<2x72x96xf32> to vector<2x72x8xf32>
    %266 = vector.extract_strided_slice %260 {offsets = [0, 0, 64], sizes = [2, 72, 8], strides = [1, 1, 1]} : vector<2x72x96xf32> to vector<2x72x8xf32>
    "tpu.trace_start"() <{level = 10 : i32, message = "bsd,btd->bst"}> : () -> ()
    %cst_140 = arith.constant dense<0.000000e+00> : vector<2x72x72xf32>
    %267 = tpu.matmul %264, %265, %cst_140 {dimension_numbers = #tpu.dot_dimension_numbers<[2], [2], [1], [1], [0, 0, 0, 1, 1, 1], [0], [0]>} : vector<2x72x8xf32>, vector<2x72x8xf32>, vector<2x72x72xf32> -> vector<2x72x72xf32>
    "tpu.trace_stop"() : () -> ()
    %268 = vector.broadcast %30 : vector<1x72x72xf32> to vector<2x72x72xf32>
    %269 = arith.addf %267, %268 : vector<2x72x72xf32>
    %cst_141 = arith.constant dense<0xFF800000> : vector<2x72xf32>
    %270 = vector.multi_reduction <maximumf>, %269, %cst_141 [2] : vector<2x72x72xf32> to vector<2x72xf32>
    %271 = vector.shape_cast %270 : vector<2x72xf32> to vector<2x72x1xf32>
    %272 = vector.broadcast %271 : vector<2x72x1xf32> to vector<2x72x72xf32>
    %273 = arith.subf %269, %272 : vector<2x72x72xf32>
    %274 = math.exp %273 : vector<2x72x72xf32>
    %cst_142 = arith.constant dense<0.000000e+00> : vector<2x72xf32>
    %275 = vector.multi_reduction <add>, %274, %cst_142 [2] : vector<2x72x72xf32> to vector<2x72xf32>
    %276 = vector.shape_cast %275 : vector<2x72xf32> to vector<2x72x1xf32>
    %277 = tpu.reciprocal %276 {approx = true} : vector<2x72x1xf32> -> vector<2x72x1xf32>
    %278 = vector.broadcast %277 : vector<2x72x1xf32> to vector<2x72x72xf32>
    %279 = arith.mulf %274, %278 : vector<2x72x72xf32>
    "tpu.trace_start"() <{level = 10 : i32, message = "bst,btd->bsd"}> : () -> ()
    %cst_143 = arith.constant dense<0.000000e+00> : vector<2x72x8xf32>
    %280 = tpu.matmul %279, %266, %cst_143 {dimension_numbers = #tpu.dot_dimension_numbers<[2], [1], [1], [2], [0, 0, 0, 1, 1, 2], [0], [0]>} : vector<2x72x72xf32>, vector<2x72x8xf32>, vector<2x72x8xf32> -> vector<2x72x8xf32>
    "tpu.trace_stop"() : () -> ()
    %281 = vector.shape_cast %280 : vector<2x72x8xf32> to vector<144x8xf32>
    %282 = vector.extract_strided_slice %226 {offsets = [0, 0], sizes = [8, 32], strides = [1, 1]} : vector<32x32xf32> to vector<8x32xf32>
    %cst_144 = arith.constant dense<0.000000e+00> : vector<144x32xf32>
    %283 = tpu.matmul %281, %282, %cst_144 {dimension_numbers = #tpu.dot_dimension_numbers<[1], [0], [0], [1], [0, 0, 1, 1], [], []>} : vector<144x8xf32>, vector<8x32xf32>, vector<144x32xf32> -> vector<144x32xf32>
    %284 = arith.addf %261, %283 : vector<144x32xf32>
    %285 = vector.extract_strided_slice %260 {offsets = [0, 0, 8], sizes = [2, 72, 8], strides = [1, 1, 1]} : vector<2x72x96xf32> to vector<2x72x8xf32>
    %cst_145 = arith.constant 0.353553385 : f32
    %286 = vector.broadcast %cst_145 : f32 to vector<2x72x8xf32>
    %287 = arith.mulf %285, %286 : vector<2x72x8xf32>
    %288 = vector.extract_strided_slice %260 {offsets = [0, 0, 40], sizes = [2, 72, 8], strides = [1, 1, 1]} : vector<2x72x96xf32> to vector<2x72x8xf32>
    %289 = vector.extract_strided_slice %260 {offsets = [0, 0, 72], sizes = [2, 72, 8], strides = [1, 1, 1]} : vector<2x72x96xf32> to vector<2x72x8xf32>
    "tpu.trace_start"() <{level = 10 : i32, message = "bsd,btd->bst"}> : () -> ()
    %cst_146 = arith.constant dense<0.000000e+00> : vector<2x72x72xf32>
    %290 = tpu.matmul %287, %288, %cst_146 {dimension_numbers = #tpu.dot_dimension_numbers<[2], [2], [1], [1], [0, 0, 0, 1, 1, 1], [0], [0]>} : vector<2x72x8xf32>, vector<2x72x8xf32>, vector<2x72x72xf32> -> vector<2x72x72xf32>
    "tpu.trace_stop"() : () -> ()
    %291 = vector.broadcast %30 : vector<1x72x72xf32> to vector<2x72x72xf32>
    %292 = arith.addf %290, %291 : vector<2x72x72xf32>
    %cst_147 = arith.constant dense<0xFF800000> : vector<2x72xf32>
    %293 = vector.multi_reduction <maximumf>, %292, %cst_147 [2] : vector<2x72x72xf32> to vector<2x72xf32>
    %294 = vector.shape_cast %293 : vector<2x72xf32> to vector<2x72x1xf32>
    %295 = vector.broadcast %294 : vector<2x72x1xf32> to vector<2x72x72xf32>
    %296 = arith.subf %292, %295 : vector<2x72x72xf32>
    %297 = math.exp %296 : vector<2x72x72xf32>
    %cst_148 = arith.constant dense<0.000000e+00> : vector<2x72xf32>
    %298 = vector.multi_reduction <add>, %297, %cst_148 [2] : vector<2x72x72xf32> to vector<2x72xf32>
    %299 = vector.shape_cast %298 : vector<2x72xf32> to vector<2x72x1xf32>
    %300 = tpu.reciprocal %299 {approx = true} : vector<2x72x1xf32> -> vector<2x72x1xf32>
    %301 = vector.broadcast %300 : vector<2x72x1xf32> to vector<2x72x72xf32>
    %302 = arith.mulf %297, %301 : vector<2x72x72xf32>
    "tpu.trace_start"() <{level = 10 : i32, message = "bst,btd->bsd"}> : () -> ()
    %cst_149 = arith.constant dense<0.000000e+00> : vector<2x72x8xf32>
    %303 = tpu.matmul %302, %289, %cst_149 {dimension_numbers = #tpu.dot_dimension_numbers<[2], [1], [1], [2], [0, 0, 0, 1, 1, 2], [0], [0]>} : vector<2x72x72xf32>, vector<2x72x8xf32>, vector<2x72x8xf32> -> vector<2x72x8xf32>
    "tpu.trace_stop"() : () -> ()
    %304 = vector.shape_cast %303 : vector<2x72x8xf32> to vector<144x8xf32>
    %305 = vector.extract_strided_slice %226 {offsets = [8, 0], sizes = [8, 32], strides = [1, 1]} : vector<32x32xf32> to vector<8x32xf32>
    %cst_150 = arith.constant dense<0.000000e+00> : vector<144x32xf32>
    %306 = tpu.matmul %304, %305, %cst_150 {dimension_numbers = #tpu.dot_dimension_numbers<[1], [0], [0], [1], [0, 0, 1, 1], [], []>} : vector<144x8xf32>, vector<8x32xf32>, vector<144x32xf32> -> vector<144x32xf32>
    %307 = arith.addf %284, %306 : vector<144x32xf32>
    %308 = vector.extract_strided_slice %260 {offsets = [0, 0, 16], sizes = [2, 72, 8], strides = [1, 1, 1]} : vector<2x72x96xf32> to vector<2x72x8xf32>
    %cst_151 = arith.constant 0.353553385 : f32
    %309 = vector.broadcast %cst_151 : f32 to vector<2x72x8xf32>
    %310 = arith.mulf %308, %309 : vector<2x72x8xf32>
    %311 = vector.extract_strided_slice %260 {offsets = [0, 0, 48], sizes = [2, 72, 8], strides = [1, 1, 1]} : vector<2x72x96xf32> to vector<2x72x8xf32>
    %312 = vector.extract_strided_slice %260 {offsets = [0, 0, 80], sizes = [2, 72, 8], strides = [1, 1, 1]} : vector<2x72x96xf32> to vector<2x72x8xf32>
    "tpu.trace_start"() <{level = 10 : i32, message = "bsd,btd->bst"}> : () -> ()
    %cst_152 = arith.constant dense<0.000000e+00> : vector<2x72x72xf32>
    %313 = tpu.matmul %310, %311, %cst_152 {dimension_numbers = #tpu.dot_dimension_numbers<[2], [2], [1], [1], [0, 0, 0, 1, 1, 1], [0], [0]>} : vector<2x72x8xf32>, vector<2x72x8xf32>, vector<2x72x72xf32> -> vector<2x72x72xf32>
    "tpu.trace_stop"() : () -> ()
    %314 = vector.broadcast %30 : vector<1x72x72xf32> to vector<2x72x72xf32>
    %315 = arith.addf %313, %314 : vector<2x72x72xf32>
    %cst_153 = arith.constant dense<0xFF800000> : vector<2x72xf32>
    %316 = vector.multi_reduction <maximumf>, %315, %cst_153 [2] : vector<2x72x72xf32> to vector<2x72xf32>
    %317 = vector.shape_cast %316 : vector<2x72xf32> to vector<2x72x1xf32>
    %318 = vector.broadcast %317 : vector<2x72x1xf32> to vector<2x72x72xf32>
    %319 = arith.subf %315, %318 : vector<2x72x72xf32>
    %320 = math.exp %319 : vector<2x72x72xf32>
    %cst_154 = arith.constant dense<0.000000e+00> : vector<2x72xf32>
    %321 = vector.multi_reduction <add>, %320, %cst_154 [2] : vector<2x72x72xf32> to vector<2x72xf32>
    %322 = vector.shape_cast %321 : vector<2x72xf32> to vector<2x72x1xf32>
    %323 = tpu.reciprocal %322 {approx = true} : vector<2x72x1xf32> -> vector<2x72x1xf32>
    %324 = vector.broadcast %323 : vector<2x72x1xf32> to vector<2x72x72xf32>
    %325 = arith.mulf %320, %324 : vector<2x72x72xf32>
    "tpu.trace_start"() <{level = 10 : i32, message = "bst,btd->bsd"}> : () -> ()
    %cst_155 = arith.constant dense<0.000000e+00> : vector<2x72x8xf32>
    %326 = tpu.matmul %325, %312, %cst_155 {dimension_numbers = #tpu.dot_dimension_numbers<[2], [1], [1], [2], [0, 0, 0, 1, 1, 2], [0], [0]>} : vector<2x72x72xf32>, vector<2x72x8xf32>, vector<2x72x8xf32> -> vector<2x72x8xf32>
    "tpu.trace_stop"() : () -> ()
    %327 = vector.shape_cast %326 : vector<2x72x8xf32> to vector<144x8xf32>
    %328 = vector.extract_strided_slice %226 {offsets = [16, 0], sizes = [8, 32], strides = [1, 1]} : vector<32x32xf32> to vector<8x32xf32>
    %cst_156 = arith.constant dense<0.000000e+00> : vector<144x32xf32>
    %329 = tpu.matmul %327, %328, %cst_156 {dimension_numbers = #tpu.dot_dimension_numbers<[1], [0], [0], [1], [0, 0, 1, 1], [], []>} : vector<144x8xf32>, vector<8x32xf32>, vector<144x32xf32> -> vector<144x32xf32>
    %330 = arith.addf %307, %329 : vector<144x32xf32>
    %331 = vector.extract_strided_slice %260 {offsets = [0, 0, 24], sizes = [2, 72, 8], strides = [1, 1, 1]} : vector<2x72x96xf32> to vector<2x72x8xf32>
    %cst_157 = arith.constant 0.353553385 : f32
    %332 = vector.broadcast %cst_157 : f32 to vector<2x72x8xf32>
    %333 = arith.mulf %331, %332 : vector<2x72x8xf32>
    %334 = vector.extract_strided_slice %260 {offsets = [0, 0, 56], sizes = [2, 72, 8], strides = [1, 1, 1]} : vector<2x72x96xf32> to vector<2x72x8xf32>
    %335 = vector.extract_strided_slice %260 {offsets = [0, 0, 88], sizes = [2, 72, 8], strides = [1, 1, 1]} : vector<2x72x96xf32> to vector<2x72x8xf32>
    "tpu.trace_start"() <{level = 10 : i32, message = "bsd,btd->bst"}> : () -> ()
    %cst_158 = arith.constant dense<0.000000e+00> : vector<2x72x72xf32>
    %336 = tpu.matmul %333, %334, %cst_158 {dimension_numbers = #tpu.dot_dimension_numbers<[2], [2], [1], [1], [0, 0, 0, 1, 1, 1], [0], [0]>} : vector<2x72x8xf32>, vector<2x72x8xf32>, vector<2x72x72xf32> -> vector<2x72x72xf32>
    "tpu.trace_stop"() : () -> ()
    %337 = vector.broadcast %30 : vector<1x72x72xf32> to vector<2x72x72xf32>
    %338 = arith.addf %336, %337 : vector<2x72x72xf32>
    %cst_159 = arith.constant dense<0xFF800000> : vector<2x72xf32>
    %339 = vector.multi_reduction <maximumf>, %338, %cst_159 [2] : vector<2x72x72xf32> to vector<2x72xf32>
    %340 = vector.shape_cast %339 : vector<2x72xf32> to vector<2x72x1xf32>
    %341 = vector.broadcast %340 : vector<2x72x1xf32> to vector<2x72x72xf32>
    %342 = arith.subf %338, %341 : vector<2x72x72xf32>
    %343 = math.exp %342 : vector<2x72x72xf32>
    %cst_160 = arith.constant dense<0.000000e+00> : vector<2x72xf32>
    %344 = vector.multi_reduction <add>, %343, %cst_160 [2] : vector<2x72x72xf32> to vector<2x72xf32>
    %345 = vector.shape_cast %344 : vector<2x72xf32> to vector<2x72x1xf32>
    %346 = tpu.reciprocal %345 {approx = true} : vector<2x72x1xf32> -> vector<2x72x1xf32>
    %347 = vector.broadcast %346 : vector<2x72x1xf32> to vector<2x72x72xf32>
    %348 = arith.mulf %343, %347 : vector<2x72x72xf32>
    "tpu.trace_start"() <{level = 10 : i32, message = "bst,btd->bsd"}> : () -> ()
    %cst_161 = arith.constant dense<0.000000e+00> : vector<2x72x8xf32>
    %349 = tpu.matmul %348, %335, %cst_161 {dimension_numbers = #tpu.dot_dimension_numbers<[2], [1], [1], [2], [0, 0, 0, 1, 1, 2], [0], [0]>} : vector<2x72x72xf32>, vector<2x72x8xf32>, vector<2x72x8xf32> -> vector<2x72x8xf32>
    "tpu.trace_stop"() : () -> ()
    %350 = vector.shape_cast %349 : vector<2x72x8xf32> to vector<144x8xf32>
    %351 = vector.extract_strided_slice %226 {offsets = [24, 0], sizes = [8, 32], strides = [1, 1]} : vector<32x32xf32> to vector<8x32xf32>
    %cst_162 = arith.constant dense<0.000000e+00> : vector<144x32xf32>
    %352 = tpu.matmul %350, %351, %cst_162 {dimension_numbers = #tpu.dot_dimension_numbers<[1], [0], [0], [1], [0, 0, 1, 1], [], []>} : vector<144x8xf32>, vector<8x32xf32>, vector<144x32xf32> -> vector<144x32xf32>
    %353 = arith.addf %330, %352 : vector<144x32xf32>
    %354 = arith.addf %214, %353 : vector<144x32xf32>
    %355 = vector.broadcast %228 : vector<1x32xf32> to vector<144x32xf32>
    %356 = arith.addf %354, %355 : vector<144x32xf32>
    %cst_163 = arith.constant dense<0.000000e+00> : vector<144xf32>
    %357 = vector.multi_reduction <add>, %356, %cst_163 [1] : vector<144x32xf32> to vector<144xf32>
    %358 = vector.shape_cast %357 : vector<144xf32> to vector<144x1xf32>
    %cst_164 = arith.constant 3.200000e+01 : f32
    %359 = vector.broadcast %cst_164 : f32 to vector<144x1xf32>
    %360 = arith.divf %358, %359 : vector<144x1xf32>
    %361 = vector.broadcast %360 : vector<144x1xf32> to vector<144x32xf32>
    %362 = arith.subf %356, %361 : vector<144x32xf32>
    %363 = arith.mulf %362, %362 : vector<144x32xf32>
    %cst_165 = arith.constant dense<0.000000e+00> : vector<144xf32>
    %364 = vector.multi_reduction <add>, %363, %cst_165 [1] : vector<144x32xf32> to vector<144xf32>
    %365 = vector.shape_cast %364 : vector<144xf32> to vector<144x1xf32>
    %cst_166 = arith.constant 3.200000e+01 : f32
    %366 = vector.broadcast %cst_166 : f32 to vector<144x1xf32>
    %367 = arith.divf %365, %366 : vector<144x1xf32>
    %368 = vector.broadcast %360 : vector<144x1xf32> to vector<144x32xf32>
    %369 = arith.subf %356, %368 : vector<144x32xf32>
    %cst_167 = arith.constant 9.99999974E-6 : f32
    %370 = vector.broadcast %cst_167 : f32 to vector<144x1xf32>
    %371 = arith.addf %367, %370 : vector<144x1xf32>
    %372 = math.rsqrt %371 : vector<144x1xf32>
    %373 = vector.broadcast %372 : vector<144x1xf32> to vector<144x32xf32>
    %374 = arith.mulf %369, %373 : vector<144x32xf32>
    %375 = vector.broadcast %220 : vector<1x32xf32> to vector<144x32xf32>
    %376 = arith.mulf %374, %375 : vector<144x32xf32>
    %377 = vector.broadcast %222 : vector<1x32xf32> to vector<144x32xf32>
    %378 = arith.addf %376, %377 : vector<144x32xf32>
    %cst_168 = arith.constant dense<0.000000e+00> : vector<144x128xf32>
    %379 = tpu.matmul %378, %230, %cst_168 {dimension_numbers = #tpu.dot_dimension_numbers<[1], [0], [0], [1], [0, 0, 1, 1], [], []>} : vector<144x32xf32>, vector<32x128xf32>, vector<144x128xf32> -> vector<144x128xf32>
    %380 = vector.broadcast %232 : vector<1x128xf32> to vector<144x128xf32>
    %381 = arith.addf %379, %380 : vector<144x128xf32>
    %cst_169 = arith.constant 5.000000e-01 : f32
    %382 = vector.broadcast %cst_169 : f32 to vector<144x128xf32>
    %383 = arith.mulf %382, %381 : vector<144x128xf32>
    %cst_170 = arith.constant 4.471500e-02 : f32
    %384 = vector.broadcast %cst_170 : f32 to vector<144x128xf32>
    %385 = arith.mulf %384, %381 : vector<144x128xf32>
    %386 = arith.mulf %385, %381 : vector<144x128xf32>
    %387 = arith.mulf %386, %381 : vector<144x128xf32>
    %388 = arith.addf %381, %387 : vector<144x128xf32>
    %cst_171 = arith.constant 0.797884583 : f32
    %389 = vector.broadcast %cst_171 : f32 to vector<144x128xf32>
    %390 = arith.mulf %389, %388 : vector<144x128xf32>
    %391 = math.tanh %390 : vector<144x128xf32>
    %cst_172 = arith.constant 1.000000e+00 : f32
    %392 = vector.broadcast %cst_172 : f32 to vector<144x128xf32>
    %393 = arith.addf %392, %391 : vector<144x128xf32>
    %394 = arith.mulf %383, %393 : vector<144x128xf32>
    %cst_173 = arith.constant dense<0.000000e+00> : vector<144x32xf32>
    %395 = tpu.matmul %394, %234, %cst_173 {dimension_numbers = #tpu.dot_dimension_numbers<[1], [0], [0], [1], [0, 0, 1, 1], [], []>} : vector<144x128xf32>, vector<128x32xf32>, vector<144x32xf32> -> vector<144x32xf32>
    %396 = arith.addf %356, %395 : vector<144x32xf32>
    %397 = vector.broadcast %236 : vector<1x32xf32> to vector<144x32xf32>
    %398 = arith.addf %396, %397 : vector<144x32xf32>
    %399 = vector.shape_cast %398 : vector<144x32xf32> to vector<2x72x32xf32>
    %400 = vector.extract_strided_slice %399 {offsets = [0, 64, 0], sizes = [2, 8, 32], strides = [1, 1, 1]} : vector<2x72x32xf32> to vector<2x8x32xf32>
    %401 = vector.shape_cast %400 : vector<2x8x32xf32> to vector<16x32xf32>
    %c0_174 = arith.constant 0 : index
    %c0_175 = arith.constant 0 : index
    %402 = vector.load %arg18[%c0_174, %c0_175] : memref<1x32xf32, #tpu.memory_space<vmem>>, vector<1x32xf32>
    %c0_176 = arith.constant 0 : index
    %c0_177 = arith.constant 0 : index
    %403 = vector.load %arg19[%c0_176, %c0_177] : memref<1x32xf32, #tpu.memory_space<vmem>>, vector<1x32xf32>
    %cst_178 = arith.constant dense<0.000000e+00> : vector<16xf32>
    %404 = vector.multi_reduction <add>, %401, %cst_178 [1] : vector<16x32xf32> to vector<16xf32>
    %405 = vector.shape_cast %404 : vector<16xf32> to vector<16x1xf32>
    %cst_179 = arith.constant 3.200000e+01 : f32
    %406 = vector.broadcast %cst_179 : f32 to vector<16x1xf32>
    %407 = arith.divf %405, %406 : vector<16x1xf32>
    %408 = vector.broadcast %407 : vector<16x1xf32> to vector<16x32xf32>
    %409 = arith.subf %401, %408 : vector<16x32xf32>
    %410 = arith.mulf %409, %409 : vector<16x32xf32>
    %cst_180 = arith.constant dense<0.000000e+00> : vector<16xf32>
    %411 = vector.multi_reduction <add>, %410, %cst_180 [1] : vector<16x32xf32> to vector<16xf32>
    %412 = vector.shape_cast %411 : vector<16xf32> to vector<16x1xf32>
    %cst_181 = arith.constant 3.200000e+01 : f32
    %413 = vector.broadcast %cst_181 : f32 to vector<16x1xf32>
    %414 = arith.divf %412, %413 : vector<16x1xf32>
    %415 = vector.broadcast %407 : vector<16x1xf32> to vector<16x32xf32>
    %416 = arith.subf %401, %415 : vector<16x32xf32>
    %cst_182 = arith.constant 9.99999974E-6 : f32
    %417 = vector.broadcast %cst_182 : f32 to vector<16x1xf32>
    %418 = arith.addf %414, %417 : vector<16x1xf32>
    %419 = math.rsqrt %418 : vector<16x1xf32>
    %420 = vector.broadcast %419 : vector<16x1xf32> to vector<16x32xf32>
    %421 = arith.mulf %416, %420 : vector<16x32xf32>
    %422 = vector.broadcast %402 : vector<1x32xf32> to vector<16x32xf32>
    %423 = arith.mulf %421, %422 : vector<16x32xf32>
    %424 = vector.broadcast %403 : vector<1x32xf32> to vector<16x32xf32>
    %425 = arith.addf %423, %424 : vector<16x32xf32>
    %426 = arith.mulf %425, %425 : vector<16x32xf32>
    %cst_183 = arith.constant dense<0.000000e+00> : vector<16xf32>
    %427 = vector.multi_reduction <add>, %426, %cst_183 [1] : vector<16x32xf32> to vector<16xf32>
    %428 = vector.shape_cast %427 : vector<16xf32> to vector<16x1xf32>
    %429 = math.sqrt %428 : vector<16x1xf32>
    %cst_184 = arith.constant 9.99999996E-13 : f32
    %430 = vector.broadcast %cst_184 : f32 to vector<16x1xf32>
    %431 = arith.maximumf %429, %430 : vector<16x1xf32>
    %432 = tpu.reciprocal %431 {approx = true} : vector<16x1xf32> -> vector<16x1xf32>
    %433 = vector.broadcast %432 : vector<16x1xf32> to vector<16x32xf32>
    %434 = arith.mulf %425, %433 : vector<16x32xf32>
    %c0_185 = arith.constant 0 : index
    %c0_186 = arith.constant 0 : index
    %435 = vector.load %arg20[%c0_185, %c0_186] : memref<32x128xf32, #tpu.memory_space<vmem>>, vector<32x128xf32>
    %cst_187 = arith.constant dense<0.000000e+00> : vector<16x128xf32>
    %436 = tpu.matmul %434, %435, %cst_187 {dimension_numbers = #tpu.dot_dimension_numbers<[1], [0], [0], [1], [0, 0, 1, 1], [], []>} : vector<16x32xf32>, vector<32x128xf32>, vector<16x128xf32> -> vector<16x128xf32>
    %c0_188 = arith.constant 0 : index
    %c0_189 = arith.constant 0 : index
    %437 = vector.load %arg21[%c0_188, %c0_189] : memref<1x128xf32, #tpu.memory_space<vmem>>, vector<1x128xf32>
    %438 = vector.broadcast %437 : vector<1x128xf32> to vector<16x128xf32>
    %439 = arith.addf %436, %438 : vector<16x128xf32>
    %c0_190 = arith.constant 0 : index
    %c0_191 = arith.constant 0 : index
    %440 = vector.load %arg22[%c0_190, %c0_191] : memref<16x128xf32, #tpu.memory_space<vmem>>, vector<16x128xf32>
    tpu.vector_store %arg22[%c0_190, %c0_191], %439 {strides = array<i32>} : memref<16x128xf32, #tpu.memory_space<vmem>>, vector<16x128xf32>,
    return
  }
}

</mosaic_0001>

<llo_original>
// kernel: vit_classifier_forward.1
$region0: #{vit_classifier_forward.1}
  #allocation0 [shape = 'u32[]', space=smem, size = 0x4, offset = 0x4, fixed_abs, tag = 'smem constant byte address 0x4 - core index']
  #allocation1 [shape = 'u32[144,128]{1,0:T(1,128)}', space=vmem, size = 0x12000, scoped, tag = 'internal scratch']
  #allocation2 [shape = 'f32[144,32]{1,0:T(8,128)}', space=vmem, size = 0x12000, scoped, tag = 'scratch operand']
  %s0 = inlined_call_operand.vmem [shape: f32[128,128], index: 0, kind: input, shape index: {}]
  %s1 = inlined_call_operand.vmem [shape: f32[1,128], index: 1, kind: input, shape index: {}]
  %s2 = inlined_call_operand.vmem [shape: f32[1,128], index: 2, kind: input, shape index: {}]
  %s3 = inlined_call_operand.vmem [shape: f32[128,32], index: 3, kind: input, shape index: {}]
  %s4 = inlined_call_operand.vmem [shape: f32[1,32], index: 4, kind: input, shape index: {}]
  %s5 = inlined_call_operand.vmem [shape: f32[64,32], index: 5, kind: input, shape index: {}]
  %s6 = inlined_call_operand.vmem [shape: f32[1,32], index: 6, kind: input, shape index: {}]
  %s7 = inlined_call_operand.vmem [shape: f32[2,1,32], index: 7, kind: input, shape index: {}]
  %s8 = inlined_call_operand.vmem [shape: f32[2,1,32], index: 8, kind: input, shape index: {}]
  %s9 = inlined_call_operand.vmem [shape: f32[2,32,96], index: 9, kind: input, shape index: {}]
  %s10 = inlined_call_operand.vmem [shape: f32[2,32,32], index: 10, kind: input, shape index: {}]
  %s11 = inlined_call_operand.vmem [shape: f32[2,1,32], index: 11, kind: input, shape index: {}]
  %s12 = inlined_call_operand.vmem [shape: f32[2,1,32], index: 12, kind: input, shape index: {}]
  %s13 = inlined_call_operand.vmem [shape: f32[2,1,32], index: 13, kind: input, shape index: {}]
  %s14 = inlined_call_operand.vmem [shape: f32[2,32,128], index: 14, kind: input, shape index: {}]
  %s15 = inlined_call_operand.vmem [shape: f32[2,1,128], index: 15, kind: input, shape index: {}]
  %s16 = inlined_call_operand.vmem [shape: f32[2,128,32], index: 16, kind: input, shape index: {}]
  %s17 = inlined_call_operand.vmem [shape: f32[2,1,32], index: 17, kind: input, shape index: {}]
  %s18 = inlined_call_operand.vmem [shape: f32[1,32], index: 18, kind: input, shape index: {}]
  %s19 = inlined_call_operand.vmem [shape: f32[1,32], index: 19, kind: input, shape index: {}]
  %s20 = inlined_call_operand.vmem [shape: f32[32,128], index: 20, kind: input, shape index: {}]
  %s21 = inlined_call_operand.vmem [shape: f32[1,128], index: 21, kind: input, shape index: {}]
  %s22 = inlined_call_operand.vmem [shape: f32[16,128], index: 22, kind: output, shape index: {}]
  %s23 = sld [smem:[#allocation0]]
  $region98: #{vit_classifier_forward.1} parent=0
    _
  %s25 = ssub.s32 1, %s23
  %s26 = scalar_select 0, %s25, %s23
  // Predicated region
  $region2: #{vit_classifier_forward.1} parent=0 // pred_check
    _
  $region3: #{vit_classifier_forward.1} parent=0 // pred_check_branch
    %28 = sbr.rel (0) target = $region5
  $region4: #{vit_classifier_forward.1} parent=0 // pred_region
    _
  $region5: #{vit_classifier_forward.1} parent=0 // pred_fallthru
    _
  // Predicated region
  $region6: #{vit_classifier_forward.1} parent=0 // pred_check
    _
  $region7: #{vit_classifier_forward.1} parent=0 // pred_check_branch
    %30 = sbr.rel (0) target = $region9
  $region8: #{vit_classifier_forward.1} parent=0 // pred_region
    _
  $region9: #{vit_classifier_forward.1} parent=0 // pred_fallthru
    _
  // Predicated region
  $region10: #{vit_classifier_forward.1} parent=0 // pred_check
    _
  $region11: #{vit_classifier_forward.1} parent=0 // pred_check_branch
    %32 = sbr.rel (0) target = $region13
  $region12: #{vit_classifier_forward.1} parent=0 // pred_region
    _
  $region13: #{vit_classifier_forward.1} parent=0 // pred_fallthru
    _
  // Predicated region
  $region14: #{vit_classifier_forward.1} parent=0 // pred_check
    _
  $region15: #{vit_classifier_forward.1} parent=0 // pred_check_branch
    %34 = sbr.rel (0) target = $region17
  $region16: #{vit_classifier_forward.1} parent=0 // pred_region
    _
  $region17: #{vit_classifier_forward.1} parent=0 // pred_fallthru
    _
  // Predicated region
  $region18: #{vit_classifier_forward.1} parent=0 // pred_check
    _
  $region19: #{vit_classifier_forward.1} parent=0 // pred_check_branch
    %36 = sbr.rel (0) target = $region21
  $region20: #{vit_classifier_forward.1} parent=0 // pred_region
    _
  $region21: #{vit_classifier_forward.1} parent=0 // pred_fallthru
    _
  // Predicated region
  $region22: #{vit_classifier_forward.1} parent=0 // pred_check
    _
  $region23: #{vit_classifier_forward.1} parent=0 // pred_check_branch
    %38 = sbr.rel (0) target = $region25
  $region24: #{vit_classifier_forward.1} parent=0 // pred_region
    _
  $region25: #{vit_classifier_forward.1} parent=0 // pred_fallthru
    _
  // Predicated region
  $region26: #{vit_classifier_forward.1} parent=0 // pred_check
    _
  $region27: #{vit_classifier_forward.1} parent=0 // pred_check_branch
    %40 = sbr.rel (0) target = $region29
  $region28: #{vit_classifier_forward.1} parent=0 // pred_region
    _
  $region29: #{vit_classifier_forward.1} parent=0 // pred_fallthru
    _
  // Predicated region
  $region30: #{vit_classifier_forward.1} parent=0 // pred_check
    _
  $region31: #{vit_classifier_forward.1} parent=0 // pred_check_branch
    %42 = sbr.rel (0) target = $region33
  $region32: #{vit_classifier_forward.1} parent=0 // pred_region
    _
  $region33: #{vit_classifier_forward.1} parent=0 // pred_fallthru
    _
  // Predicated region
  $region34: #{vit_classifier_forward.1} parent=0 // pred_check
    _
  $region35: #{vit_classifier_forward.1} parent=0 // pred_check_branch
    %44 = sbr.rel (0) target = $region37
  $region36: #{vit_classifier_forward.1} parent=0 // pred_region
    _
  $region37: #{vit_classifier_forward.1} parent=0 // pred_fallthru
    _
  // Predicated region
  $region38: #{vit_classifier_forward.1} parent=0 // pred_check
    _
  $region39: #{vit_classifier_forward.1} parent=0 // pred_check_branch
    %46 = sbr.rel (0) target = $region41
  $region40: #{vit_classifier_forward.1} parent=0 // pred_region
    _
  $region41: #{vit_classifier_forward.1} parent=0 // pred_fallthru
    _
  // Predicated region
  $region42: #{vit_classifier_forward.1} parent=0 // pred_check
    _
  $region43: #{vit_classifier_forward.1} parent=0 // pred_check_branch
    %48 = sbr.rel (0) target = $region45
  $region44: #{vit_classifier_forward.1} parent=0 // pred_region
    _
  $region45: #{vit_classifier_forward.1} parent=0 // pred_fallthru
    _
  // Predicated region
  $region46: #{vit_classifier_forward.1} parent=0 // pred_check
    _
  $region47: #{vit_classifier_forward.1} parent=0 // pred_check_branch
    %50 = sbr.rel (0) target = $region49
  $region48: #{vit_classifier_forward.1} parent=0 // pred_region
    _
  $region49: #{vit_classifier_forward.1} parent=0 // pred_fallthru
    _
  // Predicated region
  $region50: #{vit_classifier_forward.1} parent=0 // pred_check
    _
  $region51: #{vit_classifier_forward.1} parent=0 // pred_check_branch
    %52 = sbr.rel (0) target = $region53
  $region52: #{vit_classifier_forward.1} parent=0 // pred_region
    _
  $region53: #{vit_classifier_forward.1} parent=0 // pred_fallthru
    _
  // Predicated region
  $region54: #{vit_classifier_forward.1} parent=0 // pred_check
    _
  $region55: #{vit_classifier_forward.1} parent=0 // pred_check_branch
    %54 = sbr.rel (0) target = $region57
  $region56: #{vit_classifier_forward.1} parent=0 // pred_region
    _
  $region57: #{vit_classifier_forward.1} parent=0 // pred_fallthru
    _
  // Predicated region
  $region58: #{vit_classifier_forward.1} parent=0 // pred_check
    _
  $region59: #{vit_classifier_forward.1} parent=0 // pred_check_branch
    %56 = sbr.rel (0) target = $region61
  $region60: #{vit_classifier_forward.1} parent=0 // pred_region
    _
  $region61: #{vit_classifier_forward.1} parent=0 // pred_fallthru
    _
  // Predicated region
  $region62: #{vit_classifier_forward.1} parent=0 // pred_check
    _
  $region63: #{vit_classifier_forward.1} parent=0 // pred_check_branch
    %58 = sbr.rel (0) target = $region65
  $region64: #{vit_classifier_forward.1} parent=0 // pred_region
    _
  $region65: #{vit_classifier_forward.1} parent=0 // pred_fallthru
    _
  // Predicated region
  $region66: #{vit_classifier_forward.1} parent=0 // pred_check
    _
  $region67: #{vit_classifier_forward.1} parent=0 // pred_check_branch
    %60 = sbr.rel (0) target = $region69
  $region68: #{vit_classifier_forward.1} parent=0 // pred_region
    _
  $region69: #{vit_classifier_forward.1} parent=0 // pred_fallthru
    _
  // Predicated region
  $region70: #{vit_classifier_forward.1} parent=0 // pred_check
    _
  $region71: #{vit_classifier_forward.1} parent=0 // pred_check_branch
    %62 = sbr.rel (0) target = $region73
  $region72: #{vit_classifier_forward.1} parent=0 // pred_region
    _
  $region73: #{vit_classifier_forward.1} parent=0 // pred_fallthru
    _
  // Predicated region
  $region74: #{vit_classifier_forward.1} parent=0 // pred_check
    _
  $region75: #{vit_classifier_forward.1} parent=0 // pred_check_branch
    %64 = sbr.rel (0) target = $region77
  $region76: #{vit_classifier_forward.1} parent=0 // pred_region
    _
  $region77: #{vit_classifier_forward.1} parent=0 // pred_fallthru
    _
  // Predicated region
  $region78: #{vit_classifier_forward.1} parent=0 // pred_check
    _
  $region79: #{vit_classifier_forward.1} parent=0 // pred_check_branch
    %66 = sbr.rel (0) target = $region81
  $region80: #{vit_classifier_forward.1} parent=0 // pred_region
    _
  $region81: #{vit_classifier_forward.1} parent=0 // pred_fallthru
    _
  // Predicated region
  $region82: #{vit_classifier_forward.1} parent=0 // pred_check
    _
  $region83: #{vit_classifier_forward.1} parent=0 // pred_check_branch
    %68 = sbr.rel (0) target = $region85
  $region84: #{vit_classifier_forward.1} parent=0 // pred_region
    _
  $region85: #{vit_classifier_forward.1} parent=0 // pred_fallthru
    _
  // Predicated region
  $region86: #{vit_classifier_forward.1} parent=0 // pred_check
    _
  $region87: #{vit_classifier_forward.1} parent=0 // pred_check_branch
    %70 = sbr.rel (0) target = $region89
  $region88: #{vit_classifier_forward.1} parent=0 // pred_region
    _
  $region89: #{vit_classifier_forward.1} parent=0 // pred_fallthru
    _
  %v71 = vld [vmem:[%s0] sm:$0xff]
  %v72 = vld [vmem:[%s0 + $0x8] sm:$0xff]
  %v73 = vld [vmem:[%s0 + $0x10] sm:$0xff]
  %v74 = vld [vmem:[%s0 + $0x18] sm:$0xff]
  %v75 = vld [vmem:[%s0 + $0x20] sm:$0xff]
  %v76 = vld [vmem:[%s0 + $0x28] sm:$0xff]
  %v77 = vld [vmem:[%s0 + $0x30] sm:$0xff]
  %v78 = vld [vmem:[%s0 + $0x38] sm:$0xff]
  %v79 = vld [vmem:[%s0 + $0x40] sm:$0xff]
  %v80 = vld [vmem:[%s0 + $0x48] sm:$0xff]
  %v81 = vld [vmem:[%s0 + $0x50] sm:$0xff]
  %v82 = vld [vmem:[%s0 + $0x58] sm:$0xff]
  %v83 = vld [vmem:[%s0 + $0x60] sm:$0xff]
  %v84 = vld [vmem:[%s0 + $0x68] sm:$0xff]
  %v85 = vld [vmem:[%s0 + $0x70] sm:$0xff]
  %v86 = vld [vmem:[%s0 + $0x78] sm:$0xff]
  %v87 = vld [vmem:[%s1] sm:$0x1]
  %v89 = vlaneseq
  %v90 = vshrl.u32 %v89, 7
  %v91 = vsub.s32 0, %v90
  %v92 = vrot.slane %v87, %v91
  %v94 = vsub.f32 %v71, %v92
  %v95 = vsub.f32 %v72, %v92
  %v96 = vsub.f32 %v73, %v92
  %v97 = vsub.f32 %v74, %v92
  %v98 = vsub.f32 %v75, %v92
  %v99 = vsub.f32 %v76, %v92
  %v100 = vsub.f32 %v77, %v92
  %v101 = vsub.f32 %v78, %v92
  %v102 = vsub.f32 %v79, %v92
  %v103 = vsub.f32 %v80, %v92
  %v104 = vsub.f32 %v81, %v92
  %v105 = vsub.f32 %v82, %v92
  %v106 = vsub.f32 %v83, %v92
  %v107 = vsub.f32 %v84, %v92
  %v108 = vsub.f32 %v85, %v92
  %v109 = vsub.f32 %v86, %v92
  %v110 = vld [vmem:[%s2] sm:$0x1]
  %v112 = vlaneseq
  %v113 = vshrl.u32 %v112, 7
  %v114 = vsub.s32 0, %v113
  %v115 = vrot.slane %v110, %v114
  %v117 = vmul.f32 %v94, %v115
  %v118 = vmul.f32 %v95, %v115
  %v119 = vmul.f32 %v96, %v115
  %v120 = vmul.f32 %v97, %v115
  %v121 = vmul.f32 %v98, %v115
  %v122 = vmul.f32 %v99, %v115
  %v123 = vmul.f32 %v100, %v115
  %v124 = vmul.f32 %v101, %v115
  %v125 = vmul.f32 %v102, %v115
  %v126 = vmul.f32 %v103, %v115
  %v127 = vmul.f32 %v104, %v115
  %v128 = vmul.f32 %v105, %v115
  %v129 = vmul.f32 %v106, %v115
  %v130 = vmul.f32 %v107, %v115
  %v131 = vmul.f32 %v108, %v115
  %v132 = vmul.f32 %v109, %v115
  %v133 = vld [vmem:[%s3] sm:$0xff]
  %v134 = vld [vmem:[%s3 + $0x8] sm:$0xff]
  %v135 = vld [vmem:[%s3 + $0x10] sm:$0xff]
  %v136 = vld [vmem:[%s3 + $0x18] sm:$0xff]
  %v137 = vld [vmem:[%s3 + $0x20] sm:$0xff]
  %v138 = vld [vmem:[%s3 + $0x28] sm:$0xff]
  %v139 = vld [vmem:[%s3 + $0x30] sm:$0xff]
  %v140 = vld [vmem:[%s3 + $0x38] sm:$0xff]
  %v141 = vld [vmem:[%s3 + $0x40] sm:$0xff]
  %v142 = vld [vmem:[%s3 + $0x48] sm:$0xff]
  %v143 = vld [vmem:[%s3 + $0x50] sm:$0xff]
  %v144 = vld [vmem:[%s3 + $0x58] sm:$0xff]
  %v145 = vld [vmem:[%s3 + $0x60] sm:$0xff]
  %v146 = vld [vmem:[%s3 + $0x68] sm:$0xff]
  %v147 = vld [vmem:[%s3 + $0x70] sm:$0xff]
  %v148 = vld [vmem:[%s3 + $0x78] sm:$0xff]
  %v149 = vld [vmem:[%s4] sm:$0x1]
  %v151 = vlaneseq
  %v152 = vshrl.u32 %v151, 7
  %v153 = vsub.s32 0, %v152
  %v154 = vrot.slane %v149, %v153
  %156 = vmatprep.subr.mxu0 0.0
  %157 = vmatpush1.msra.mxu0 %v148
  %158 = vmatprep.subr.mxu0 0.0
  %159 = vmatpush1.msra.mxu0 %v147
  %160 = vmatprep.subr.mxu0 0.0
  %161 = vmatpush1.msra.mxu0 %v146
  %162 = vmatprep.subr.mxu0 0.0
  %163 = vmatpush1.msra.mxu0 %v145
  %164 = vmatprep.subr.mxu0 0.0
  %165 = vmatpush1.msra.mxu0 %v144
  %166 = vmatprep.subr.mxu0 0.0
  %167 = vmatpush1.msra.mxu0 %v143
  %168 = vmatprep.subr.mxu0 0.0
  %169 = vmatpush1.msra.mxu0 %v142
  %170 = vmatprep.subr.mxu0 0.0
  %171 = vmatpush1.msra.mxu0 %v141
  %172 = vmatprep.subr.mxu0 0.0
  %173 = vmatpush1.msra.mxu0 %v140
  %174 = vmatprep.subr.mxu0 0.0
  %175 = vmatpush1.msra.mxu0 %v139
  %176 = vmatprep.subr.mxu0 0.0
  %177 = vmatpush1.msra.mxu0 %v138
  %178 = vmatprep.subr.mxu0 0.0
  %179 = vmatpush1.msra.mxu0 %v137
  %180 = vmatprep.subr.mxu0 0.0
  %181 = vmatpush1.msra.mxu0 %v136
  %182 = vmatprep.subr.mxu0 0.0
  %183 = vmatpush1.msra.mxu0 %v135
  %184 = vmatprep.subr.mxu0 0.0
  %185 = vmatpush1.msra.mxu0 %v134
  %186 = vmatprep.subr.mxu0 0.0
  %187 = vmatpush1.msra.mxu0 %v133
  %188 = vmatprep.subr.mxu0 0.0
  %189 = vmatpush2.msra.mxu0 0.0
  %190 = vmatprep.subr.mxu0 0.0
  %191 = vmatpush2.msra.mxu0 0.0
  %192 = vmatprep.subr.mxu0 0.0
  %193 = vmatpush2.msra.mxu0 0.0
  %194 = vmatprep.subr.mxu0 0.0
  %195 = vmatpush2.msra.mxu0 0.0
  %196 = vmatprep.subr.mxu0 0.0
  %197 = vmatpush2.msra.mxu0 0.0
  %198 = vmatprep.subr.mxu0 0.0
  %199 = vmatpush2.msra.mxu0 0.0
  %200 = vmatprep.subr.mxu0 0.0
  %201 = vmatpush2.msra.mxu0 0.0
  %202 = vmatprep.subr.mxu0 0.0
  %203 = vmatpush2.msra.mxu0 0.0
  %204 = vmatprep.subr.mxu0 0.0
  %205 = vmatpush2.msra.mxu0 0.0
  %206 = vmatprep.subr.mxu0 0.0
  %207 = vmatpush2.msra.mxu0 0.0
  %208 = vmatprep.subr.mxu0 0.0
  %209 = vmatpush2.msra.mxu0 0.0
  %210 = vmatprep.subr.mxu0 0.0
  %211 = vmatpush2.msra.mxu0 0.0
  %212 = vmatprep.subr.mxu0 0.0
  %213 = vmatpush2.msra.mxu0 0.0
  %214 = vmatprep.subr.mxu0 0.0
  %215 = vmatpush2.msra.mxu0 0.0
  %216 = vmatprep.subr.mxu0 0.0
  %217 = vmatpush2.msra.mxu0 0.0
  %218 = vmatprep.subr.mxu0 0.0
  %219 = vmatpush2.msra.mxu0 0.0
  %220 = vmatprep.mubr.f32.mxu0 0.0
  %221 = vmatmul.mubr.f32.gmra.mxu0 %v117
  %v222 = vpop.f32.mrf.mxu0
  %v223 = vadd.f32 %v154, %v222
  %v224 = vpop.f32.mrf.mxu0
  %225 = vmatprep.mubr.f32.mxu0 0.0
  %226 = vmatmul.mubr.f32.gmra.mxu0 %v118
  %v227 = vpop.f32.mrf.mxu0
  %v228 = vadd.f32 %v154, %v227
  %v229 = vpop.f32.mrf.mxu0
  %230 = vmatprep.mubr.f32.mxu0 0.0
  %231 = vmatmul.mubr.f32.gmra.mxu0 %v119
  %v232 = vpop.f32.mrf.mxu0
  %v233 = vadd.f32 %v154, %v232
  %v234 = vpop.f32.mrf.mxu0
  %235 = vmatprep.mubr.f32.mxu0 0.0
  %236 = vmatmul.mubr.f32.gmra.mxu0 %v120
  %v237 = vpop.f32.mrf.mxu0
  %v238 = vadd.f32 %v154, %v237
  %v239 = vpop.f32.mrf.mxu0
  %240 = vmatprep.mubr.f32.mxu0 0.0
  %241 = vmatmul.mubr.f32.gmra.mxu0 %v121
  %v242 = vpop.f32.mrf.mxu0
  %v243 = vadd.f32 %v154, %v242
  %v244 = vpop.f32.mrf.mxu0
  %245 = vmatprep.mubr.f32.mxu0 0.0
  %246 = vmatmul.mubr.f32.gmra.mxu0 %v122
  %v247 = vpop.f32.mrf.mxu0
  %v248 = vadd.f32 %v154, %v247
  %v249 = vpop.f32.mrf.mxu0
  %250 = vmatprep.mubr.f32.mxu0 0.0
  %251 = vmatmul.mubr.f32.gmra.mxu0 %v123
  %v252 = vpop.f32.mrf.mxu0
  %v253 = vadd.f32 %v154, %v252
  %v254 = vpop.f32.mrf.mxu0
  %255 = vmatprep.mubr.f32.mxu0 0.0
  %256 = vmatmul.mubr.f32.gmra.mxu0 %v124
  %v257 = vpop.f32.mrf.mxu0
  %v258 = vadd.f32 %v154, %v257
  %v259 = vpop.f32.mrf.mxu0
  %260 = vmatprep.mubr.f32.mxu0 0.0
  %261 = vmatmul.mubr.f32.gmra.mxu0 %v125
  %v262 = vpop.f32.mrf.mxu0
  %v263 = vadd.f32 %v154, %v262
  %v264 = vpop.f32.mrf.mxu0
  %265 = vmatprep.mubr.f32.mxu0 0.0
  %266 = vmatmul.mubr.f32.gmra.mxu0 %v126
  %v267 = vpop.f32.mrf.mxu0
  %v268 = vadd.f32 %v154, %v267
  %v269 = vpop.f32.mrf.mxu0
  %270 = vmatprep.mubr.f32.mxu0 0.0
  %271 = vmatmul.mubr.f32.gmra.mxu0 %v127
  %v272 = vpop.f32.mrf.mxu0
  %v273 = vadd.f32 %v154, %v272
  %v274 = vpop.f32.mrf.mxu0
  %275 = vmatprep.mubr.f32.mxu0 0.0
  %276 = vmatmul.mubr.f32.gmra.mxu0 %v128
  %v277 = vpop.f32.mrf.mxu0
  %v278 = vadd.f32 %v154, %v277
  %v279 = vpop.f32.mrf.mxu0
  %280 = vmatprep.mubr.f32.mxu0 0.0
  %281 = vmatmul.mubr.f32.gmra.mxu0 %v129
  %v282 = vpop.f32.mrf.mxu0
  %v283 = vadd.f32 %v154, %v282
  %v284 = vpop.f32.mrf.mxu0
  %285 = vmatprep.mubr.f32.mxu0 0.0
  %286 = vmatmul.mubr.f32.gmra.mxu0 %v130
  %v287 = vpop.f32.mrf.mxu0
  %v288 = vadd.f32 %v154, %v287
  %v289 = vpop.f32.mrf.mxu0
  %290 = vmatprep.mubr.f32.mxu0 0.0
  %291 = vmatmul.mubr.f32.gmra.mxu0 %v131
  %v292 = vpop.f32.mrf.mxu0
  %v293 = vadd.f32 %v154, %v292
  %v294 = vpop.f32.mrf.mxu0
  %295 = vmatprep.mubr.f32.mxu0 0.0
  %296 = vmatmul.mubr.f32.gmra.mxu0 %v132
  %v297 = vpop.f32.mrf.mxu0
  %v298 = vadd.f32 %v154, %v297
  %v299 = vpop.f32.mrf.mxu0
  %300 = vdwg.mxu0
  %vm301 = vcmask 261120
  %302 = vst.msk [vmem:[#allocation2] sm:$0xff] %vm301, 0.0
  %303 = vst.msk [vmem:[#allocation2 + $0x8] sm:$0xff] %vm301, 0.0
  %304 = vst.msk [vmem:[#allocation2 + $0x10] sm:$0xff] %vm301, 0.0
  %305 = vst.msk [vmem:[#allocation2 + $0x18] sm:$0xff] %vm301, 0.0
  %306 = vst.msk [vmem:[#allocation2 + $0x20] sm:$0xff] %vm301, 0.0
  %307 = vst.msk [vmem:[#allocation2 + $0x28] sm:$0xff] %vm301, 0.0
  %308 = vst.msk [vmem:[#allocation2 + $0x30] sm:$0xff] %vm301, 0.0
  %309 = vst.msk [vmem:[#allocation2 + $0x38] sm:$0xff] %vm301, 0.0
  %310 = vst.msk [vmem:[#allocation2 + $0x40] sm:$0xff] %vm301, 0.0
  %311 = vst.msk [vmem:[#allocation2 + $0x48] sm:$0xff] %vm301, 0.0
  %312 = vst.msk [vmem:[#allocation2 + $0x50] sm:$0xff] %vm301, 0.0
  %313 = vst.msk [vmem:[#allocation2 + $0x58] sm:$0xff] %vm301, 0.0
  %314 = vst.msk [vmem:[#allocation2 + $0x60] sm:$0xff] %vm301, 0.0
  %315 = vst.msk [vmem:[#allocation2 + $0x68] sm:$0xff] %vm301, 0.0
  %316 = vst.msk [vmem:[#allocation2 + $0x70] sm:$0xff] %vm301, 0.0
  %317 = vst.msk [vmem:[#allocation2 + $0x78] sm:$0xff] %vm301, 0.0
  %318 = vst.msk [vmem:[#allocation2 + $0x80] sm:$0xff] %vm301, 0.0
  %319 = vst.msk [vmem:[#allocation2 + $0x88] sm:$0xff] %vm301, 0.0
  %v320 = vld [vmem:[%s5] sm:$0xff]
  %v321 = vld [vmem:[%s5 + $0x8] sm:$0xff]
  %v322 = vld [vmem:[%s5 + $0x10] sm:$0xff]
  %v323 = vld [vmem:[%s5 + $0x18] sm:$0xff]
  %v324 = vld [vmem:[%s5 + $0x20] sm:$0xff]
  %v325 = vld [vmem:[%s5 + $0x28] sm:$0xff]
  %v326 = vld [vmem:[%s5 + $0x30] sm:$0xff]
  %v327 = vld [vmem:[%s5 + $0x38] sm:$0xff]
  %v328 = vld [vmem:[%s6] sm:$0x1]
  %v329 = vadd.f32 %v223, %v320
  %v330 = vadd.f32 %v228, %v321
  %v331 = vadd.f32 %v233, %v322
  %v332 = vadd.f32 %v238, %v323
  %v333 = vadd.f32 %v243, %v324
  %v334 = vadd.f32 %v248, %v325
  %v335 = vadd.f32 %v253, %v326
  %v336 = vadd.f32 %v258, %v327
  %337 = vst.msk [vmem:[#allocation2] sm:$0xff] %vm301, %v329
  %338 = vst.msk [vmem:[#allocation2 + $0x8] sm:$0xff] %vm301, %v330
  %339 = vst.msk [vmem:[#allocation2 + $0x10] sm:$0xff] %vm301, %v331
  %340 = vst.msk [vmem:[#allocation2 + $0x18] sm:$0xff] %vm301, %v332
  %341 = vst.msk [vmem:[#allocation2 + $0x20] sm:$0xff] %vm301, %v333
  %342 = vst.msk [vmem:[#allocation2 + $0x28] sm:$0xff] %vm301, %v334
  %343 = vst.msk [vmem:[#allocation2 + $0x30] sm:$0xff] %vm301, %v335
  %344 = vst.msk [vmem:[#allocation2 + $0x38] sm:$0xff] %vm301, %v336
  %vm345 = vcmask 253952
  %346 = vst.msk [vmem:[#allocation2 + $0x40] sm:$0x1] %vm345, %v328
  %v347 = vadd.f32 %v263, %v320
  %v348 = vadd.f32 %v268, %v321
  %v349 = vadd.f32 %v273, %v322
  %v350 = vadd.f32 %v278, %v323
  %v351 = vadd.f32 %v283, %v324
  %v352 = vadd.f32 %v288, %v325
  %v353 = vadd.f32 %v293, %v326
  %v354 = vadd.f32 %v298, %v327
  %355 = vst.msk [vmem:[#allocation2 + $0x48] sm:$0xff] %vm301, %v347
  %356 = vst.msk [vmem:[#allocation2 + $0x50] sm:$0xff] %vm301, %v348
  %357 = vst.msk [vmem:[#allocation2 + $0x58] sm:$0xff] %vm301, %v349
  %358 = vst.msk [vmem:[#allocation2 + $0x60] sm:$0xff] %vm301, %v350
  %359 = vst.msk [vmem:[#allocation2 + $0x68] sm:$0xff] %vm301, %v351
  %360 = vst.msk [vmem:[#allocation2 + $0x70] sm:$0xff] %vm301, %v352
  %361 = vst.msk [vmem:[#allocation2 + $0x78] sm:$0xff] %vm301, %v353
  %362 = vst.msk [vmem:[#allocation2 + $0x80] sm:$0xff] %vm301, %v354
  %363 = vst.msk [vmem:[#allocation2 + $0x88] sm:$0x1] %vm345, %v328
  %v364 = vld [vmem:[#allocation2] sm:$0xff]
  %v365 = vld [vmem:[#allocation2 + $0x8] sm:$0xff]
  %v366 = vld [vmem:[#allocation2 + $0x10] sm:$0xff]
  %v367 = vld [vmem:[#allocation2 + $0x18] sm:$0xff]
  %v368 = vld [vmem:[#allocation2 + $0x20] sm:$0xff]
  %v369 = vld [vmem:[#allocation2 + $0x28] sm:$0xff]
  %v370 = vld [vmem:[#allocation2 + $0x30] sm:$0xff]
  %v371 = vld [vmem:[#allocation2 + $0x38] sm:$0xff]
  %v372 = vld [vmem:[#allocation2 + $0x40] sm:$0xff]
  %v373 = vld [vmem:[#allocation2 + $0x48] sm:$0xff]
  %v374 = vld [vmem:[#allocation2 + $0x50] sm:$0xff]
  %v375 = vld [vmem:[#allocation2 + $0x58] sm:$0xff]
  %v376 = vld [vmem:[#allocation2 + $0x60] sm:$0xff]
  %v377 = vld [vmem:[#allocation2 + $0x68] sm:$0xff]
  %v378 = vld [vmem:[#allocation2 + $0x70] sm:$0xff]
  %v379 = vld [vmem:[#allocation2 + $0x78] sm:$0xff]
  %v380 = vld [vmem:[#allocation2 + $0x80] sm:$0xff]
  %v381 = vld [vmem:[#allocation2 + $0x88] sm:$0xff]
  %v382 = vlaneseq
  %v383 = vand.u32 %v382, 127
  %vm384 = vcmp.lt.s32.totalorder %v383, 65
  %v385 = vsel %vm384, 0.0, -1e+30
  %v386 = vld [vmem:[%s7] sm:$0x1]
  %v387 = vld [vmem:[%s8] sm:$0x1]
  %v388 = vld [vmem:[%s12] sm:$0x1]
  %v389 = vld [vmem:[%s13] sm:$0x1]
  %v390 = vld [vmem:[%s9] sm:$0xff]
  %v391 = vld [vmem:[%s9 + $0x8] sm:$0xff]
  %v392 = vld [vmem:[%s9 + $0x10] sm:$0xff]
  %v393 = vld [vmem:[%s9 + $0x18] sm:$0xff]
  %v394 = vld [vmem:[%s10] sm:$0xff]
  %v395 = vld [vmem:[%s10 + $0x8] sm:$0xff]
  %v396 = vld [vmem:[%s10 + $0x10] sm:$0xff]
  %v397 = vld [vmem:[%s10 + $0x18] sm:$0xff]
  %v398 = vld [vmem:[%s11] sm:$0x1]
  %v399 = vld [vmem:[%s14] sm:$0xff]
  %v400 = vld [vmem:[%s14 + $0x8] sm:$0xff]
  %v401 = vld [vmem:[%s14 + $0x10] sm:$0xff]
  %v402 = vld [vmem:[%s14 + $0x18] sm:$0xff]
  %v403 = vld [vmem:[%s15] sm:$0x1]
  %v404 = vld [vmem:[%s16] sm:$0xff]
  %v405 = vld [vmem:[%s16 + $0x8] sm:$0xff]
  %v406 = vld [vmem:[%s16 + $0x10] sm:$0xff]
  %v407 = vld [vmem:[%s16 + $0x18] sm:$0xff]
  %v408 = vld [vmem:[%s16 + $0x20] sm:$0xff]
  %v409 = vld [vmem:[%s16 + $0x28] sm:$0xff]
  %v410 = vld [vmem:[%s16 + $0x30] sm:$0xff]
  %v411 = vld [vmem:[%s16 + $0x38] sm:$0xff]
  %v412 = vld [vmem:[%s16 + $0x40] sm:$0xff]
  %v413 = vld [vmem:[%s16 + $0x48] sm:$0xff]
  %v414 = vld [vmem:[%s16 + $0x50] sm:$0xff]
  %v415 = vld [vmem:[%s16 + $0x58] sm:$0xff]
  %v416 = vld [vmem:[%s16 + $0x60] sm:$0xff]
  %v417 = vld [vmem:[%s16 + $0x68] sm:$0xff]
  %v418 = vld [vmem:[%s16 + $0x70] sm:$0xff]
  %v419 = vld [vmem:[%s16 + $0x78] sm:$0xff]
  %v420 = vld [vmem:[%s17] sm:$0x1]
  %v421 = vsel %vm301, %v364, 0.0
  %422 = vadd.xlane.f32.xlu0 %v421
  %v423 = vpop.xlane.xlu0 %422
  %v424 = vsel %vm301, %v365, 0.0
  %425 = vadd.xlane.f32.xlu0 %v424
  %v426 = vpop.xlane.xlu0 %425
  %v427 = vsel %vm301, %v366, 0.0
  %428 = vadd.xlane.f32.xlu0 %v427
  %v429 = vpop.xlane.xlu0 %428
  %v430 = vsel %vm301, %v367, 0.0
  %431 = vadd.xlane.f32.xlu0 %v430
  %v432 = vpop.xlane.xlu0 %431
  %v433 = vsel %vm301, %v368, 0.0
  %434 = vadd.xlane.f32.xlu0 %v433
  %v435 = vpop.xlane.xlu0 %434
  %v436 = vsel %vm301, %v369, 0.0
  %437 = vadd.xlane.f32.xlu0 %v436
  %v438 = vpop.xlane.xlu0 %437
  %v439 = vsel %vm301, %v370, 0.0
  %440 = vadd.xlane.f32.xlu0 %v439
  %v441 = vpop.xlane.xlu0 %440
  %v442 = vsel %vm301, %v371, 0.0
  %443 = vadd.xlane.f32.xlu0 %v442
  %v444 = vpop.xlane.xlu0 %443
  %v445 = vsel %vm301, %v372, 0.0
  %446 = vadd.xlane.f32.xlu0 %v445
  %v447 = vpop.xlane.xlu0 %446
  %v448 = vsel %vm301, %v373, 0.0
  %449 = vadd.xlane.f32.xlu0 %v448
  %v450 = vpop.xlane.xlu0 %449
  %v451 = vsel %vm301, %v374, 0.0
  %452 = vadd.xlane.f32.xlu0 %v451
  %v453 = vpop.xlane.xlu0 %452
  %v454 = vsel %vm301, %v375, 0.0
  %455 = vadd.xlane.f32.xlu0 %v454
  %v456 = vpop.xlane.xlu0 %455
  %v457 = vsel %vm301, %v376, 0.0
  %458 = vadd.xlane.f32.xlu0 %v457
  %v459 = vpop.xlane.xlu0 %458
  %v460 = vsel %vm301, %v377, 0.0
  %461 = vadd.xlane.f32.xlu0 %v460
  %v462 = vpop.xlane.xlu0 %461
  %v463 = vsel %vm301, %v378, 0.0
  %464 = vadd.xlane.f32.xlu0 %v463
  %v465 = vpop.xlane.xlu0 %464
  %v466 = vsel %vm301, %v379, 0.0
  %467 = vadd.xlane.f32.xlu0 %v466
  %v468 = vpop.xlane.xlu0 %467
  %v469 = vsel %vm301, %v380, 0.0
  %470 = vadd.xlane.f32.xlu0 %v469
  %v471 = vpop.xlane.xlu0 %470
  %v472 = vsel %vm301, %v381, 0.0
  %473 = vadd.xlane.f32.xlu0 %v472
  %v474 = vpop.xlane.xlu0 %473
  %v475 = vrcp.pop 32.0
  %v476 = vmul.f32 %v423, %v475
  %v477 = vmul.f32 %v426, %v475
  %v478 = vmul.f32 %v429, %v475
  %v479 = vmul.f32 %v432, %v475
  %v480 = vmul.f32 %v435, %v475
  %v481 = vmul.f32 %v438, %v475
  %v482 = vmul.f32 %v441, %v475
  %v483 = vmul.f32 %v444, %v475
  %v484 = vmul.f32 %v447, %v475
  %v485 = vmul.f32 %v450, %v475
  %v486 = vmul.f32 %v453, %v475
  %v487 = vmul.f32 %v456, %v475
  %v488 = vmul.f32 %v459, %v475
  %v489 = vmul.f32 %v462, %v475
  %v490 = vmul.f32 %v465, %v475
  %v491 = vmul.f32 %v468, %v475
  %v492 = vmul.f32 %v471, %v475
  %v493 = vmul.f32 %v474, %v475
  %v494 = vsub.f32 %v364, %v476
  %v495 = vsub.f32 %v365, %v477
  %v496 = vsub.f32 %v366, %v478
  %v497 = vsub.f32 %v367, %v479
  %v498 = vsub.f32 %v368, %v480
  %v499 = vsub.f32 %v369, %v481
  %v500 = vsub.f32 %v370, %v482
  %v501 = vsub.f32 %v371, %v483
  %v502 = vsub.f32 %v372, %v484
  %v503 = vsub.f32 %v373, %v485
  %v504 = vsub.f32 %v374, %v486
  %v505 = vsub.f32 %v375, %v487
  %v506 = vsub.f32 %v376, %v488
  %v507 = vsub.f32 %v377, %v489
  %v508 = vsub.f32 %v378, %v490
  %v509 = vsub.f32 %v379, %v491
  %v510 = vsub.f32 %v380, %v492
  %v511 = vsub.f32 %v381, %v493
  %v512 = vmul.f32 %v494, %v494
  %v513 = vmul.f32 %v495, %v495
  %v514 = vmul.f32 %v496, %v496
  %v515 = vmul.f32 %v497, %v497
  %v516 = vmul.f32 %v498, %v498
  %v517 = vmul.f32 %v499, %v499
  %v518 = vmul.f32 %v500, %v500
  %v519 = vmul.f32 %v501, %v501
  %v520 = vmul.f32 %v502, %v502
  %v521 = vmul.f32 %v503, %v503
  %v522 = vmul.f32 %v504, %v504
  %v523 = vmul.f32 %v505, %v505
  %v524 = vmul.f32 %v506, %v506
  %v525 = vmul.f32 %v507, %v507
  %v526 = vmul.f32 %v508, %v508
  %v527 = vmul.f32 %v509, %v509
  %v528 = vmul.f32 %v510, %v510
  %v529 = vmul.f32 %v511, %v511
  %v530 = vsel %vm301, %v512, 0.0
  %531 = vadd.xlane.f32.xlu0 %v530
  %v532 = vpop.xlane.xlu0 %531
  %v533 = vsel %vm301, %v513, 0.0
  %534 = vadd.xlane.f32.xlu0 %v533
  %v535 = vpop.xlane.xlu0 %534
  %v536 = vsel %vm301, %v514, 0.0
  %537 = vadd.xlane.f32.xlu0 %v536
  %v538 = vpop.xlane.xlu0 %537
  %v539 = vsel %vm301, %v515, 0.0
  %540 = vadd.xlane.f32.xlu0 %v539
  %v541 = vpop.xlane.xlu0 %540
  %v542 = vsel %vm301, %v516, 0.0
  %543 = vadd.xlane.f32.xlu0 %v542
  %v544 = vpop.xlane.xlu0 %543
  %v545 = vsel %vm301, %v517, 0.0
  %546 = vadd.xlane.f32.xlu0 %v545
  %v547 = vpop.xlane.xlu0 %546
  %v548 = vsel %vm301, %v518, 0.0
  %549 = vadd.xlane.f32.xlu0 %v548
  %v550 = vpop.xlane.xlu0 %549
  %v551 = vsel %vm301, %v519, 0.0
  %552 = vadd.xlane.f32.xlu0 %v551
  %v553 = vpop.xlane.xlu0 %552
  %v554 = vsel %vm301, %v520, 0.0
  %555 = vadd.xlane.f32.xlu0 %v554
  %v556 = vpop.xlane.xlu0 %555
  %v557 = vsel %vm301, %v521, 0.0
  %558 = vadd.xlane.f32.xlu0 %v557
  %v559 = vpop.xlane.xlu0 %558
  %v560 = vsel %vm301, %v522, 0.0
  %561 = vadd.xlane.f32.xlu0 %v560
  %v562 = vpop.xlane.xlu0 %561
  %v563 = vsel %vm301, %v523, 0.0
  %564 = vadd.xlane.f32.xlu0 %v563
  %v565 = vpop.xlane.xlu0 %564
  %v566 = vsel %vm301, %v524, 0.0
  %567 = vadd.xlane.f32.xlu0 %v566
  %v568 = vpop.xlane.xlu0 %567
  %v569 = vsel %vm301, %v525, 0.0
  %570 = vadd.xlane.f32.xlu0 %v569
  %v571 = vpop.xlane.xlu0 %570
  %v572 = vsel %vm301, %v526, 0.0
  %573 = vadd.xlane.f32.xlu0 %v572
  %v574 = vpop.xlane.xlu0 %573
  %v575 = vsel %vm301, %v527, 0.0
  %576 = vadd.xlane.f32.xlu0 %v575
  %v577 = vpop.xlane.xlu0 %576
  %v578 = vsel %vm301, %v528, 0.0
  %579 = vadd.xlane.f32.xlu0 %v578
  %v580 = vpop.xlane.xlu0 %579
  %v581 = vsel %vm301, %v529, 0.0
  %582 = vadd.xlane.f32.xlu0 %v581
  %v583 = vpop.xlane.xlu0 %582
  %v584 = vmul.f32 %v532, %v475
  %v585 = vmul.f32 %v535, %v475
  %v586 = vmul.f32 %v538, %v475
  %v587 = vmul.f32 %v541, %v475
  %v588 = vmul.f32 %v544, %v475
  %v589 = vmul.f32 %v547, %v475
  %v590 = vmul.f32 %v550, %v475
  %v591 = vmul.f32 %v553, %v475
  %v592 = vmul.f32 %v556, %v475
  %v593 = vmul.f32 %v559, %v475
  %v594 = vmul.f32 %v562, %v475
  %v595 = vmul.f32 %v565, %v475
  %v596 = vmul.f32 %v568, %v475
  %v597 = vmul.f32 %v571, %v475
  %v598 = vmul.f32 %v574, %v475
  %v599 = vmul.f32 %v577, %v475
  %v600 = vmul.f32 %v580, %v475
  %v601 = vmul.f32 %v583, %v475
  %v602 = vadd.f32 %v584, 1e-05
  %v603 = vadd.f32 %v585, 1e-05
  %v604 = vadd.f32 %v586, 1e-05
  %v605 = vadd.f32 %v587, 1e-05
  %v606 = vadd.f32 %v588, 1e-05
  %v607 = vadd.f32 %v589, 1e-05
  %v608 = vadd.f32 %v590, 1e-05
  %v609 = vadd.f32 %v591, 1e-05
  %v610 = vadd.f32 %v592, 1e-05
  %v611 = vadd.f32 %v593, 1e-05
  %v612 = vadd.f32 %v594, 1e-05
  %v613 = vadd.f32 %v595, 1e-05
  %v614 = vadd.f32 %v596, 1e-05
  %v615 = vadd.f32 %v597, 1e-05
  %v616 = vadd.f32 %v598, 1e-05
  %v617 = vadd.f32 %v599, 1e-05
  %v618 = vadd.f32 %v600, 1e-05
  %v619 = vadd.f32 %v601, 1e-05
  %v620 = vrsqrt.pop %v602
  %v621 = vrsqrt.pop %v603
  %v622 = vrsqrt.pop %v604
  %v623 = vrsqrt.pop %v605
  %v624 = vrsqrt.pop %v606
  %v625 = vrsqrt.pop %v607
  %v626 = vrsqrt.pop %v608
  %v627 = vrsqrt.pop %v609
  %v628 = vrsqrt.pop %v610
  %v629 = vrsqrt.pop %v611
  %v630 = vrsqrt.pop %v612
  %v631 = vrsqrt.pop %v613
  %v632 = vrsqrt.pop %v614
  %v633 = vrsqrt.pop %v615
  %v634 = vrsqrt.pop %v616
  %v635 = vrsqrt.pop %v617
  %v636 = vrsqrt.pop %v618
  %v637 = vrsqrt.pop %v619
  %v638 = vmul.f32 %v494, %v620
  %v639 = vmul.f32 %v495, %v621
  %v640 = vmul.f32 %v496, %v622
  %v641 = vmul.f32 %v497, %v623
  %v642 = vmul.f32 %v498, %v624
  %v643 = vmul.f32 %v499, %v625
  %v644 = vmul.f32 %v500, %v626
  %v645 = vmul.f32 %v501, %v627
  %v646 = vmul.f32 %v502, %v628
  %v647 = vmul.f32 %v503, %v629
  %v648 = vmul.f32 %v504, %v630
  %v649 = vmul.f32 %v505, %v631
  %v650 = vmul.f32 %v506, %v632
  %v651 = vmul.f32 %v507, %v633
  %v652 = vmul.f32 %v508, %v634
  %v653 = vmul.f32 %v509, %v635
  %v654 = vmul.f32 %v510, %v636
  %v655 = vmul.f32 %v511, %v637
  %v657 = vlaneseq
  %v658 = vshrl.u32 %v657, 7
  %v659 = vsub.s32 0, %v658
  %v660 = vrot.slane %v386, %v659
  %v662 = vmul.f32 %v638, %v660
  %v663 = vmul.f32 %v639, %v660
  %v664 = vmul.f32 %v640, %v660
  %v665 = vmul.f32 %v641, %v660
  %v666 = vmul.f32 %v642, %v660
  %v667 = vmul.f32 %v643, %v660
  %v668 = vmul.f32 %v644, %v660
  %v669 = vmul.f32 %v645, %v660
  %v670 = vmul.f32 %v646, %v660
  %v671 = vmul.f32 %v647, %v660
  %v672 = vmul.f32 %v648, %v660
  %v673 = vmul.f32 %v649, %v660
  %v674 = vmul.f32 %v650, %v660
  %v675 = vmul.f32 %v651, %v660
  %v676 = vmul.f32 %v652, %v660
  %v677 = vmul.f32 %v653, %v660
  %v678 = vmul.f32 %v654, %v660
  %v679 = vmul.f32 %v655, %v660
  %v681 = vlaneseq
  %v682 = vshrl.u32 %v681, 7
  %v683 = vsub.s32 0, %v682
  %v684 = vrot.slane %v387, %v683
  %v686 = vadd.f32 %v662, %v684
  %v687 = vadd.f32 %v663, %v684
  %v688 = vadd.f32 %v664, %v684
  %v689 = vadd.f32 %v665, %v684
  %v690 = vadd.f32 %v666, %v684
  %v691 = vadd.f32 %v667, %v684
  %v692 = vadd.f32 %v668, %v684
  %v693 = vadd.f32 %v669, %v684
  %v694 = vadd.f32 %v670, %v684
  %v695 = vadd.f32 %v671, %v684
  %v696 = vadd.f32 %v672, %v684
  %v697 = vadd.f32 %v673, %v684
  %v698 = vadd.f32 %v674, %v684
  %v699 = vadd.f32 %v675, %v684
  %v700 = vadd.f32 %v676, %v684
  %v701 = vadd.f32 %v677, %v684
  %v702 = vadd.f32 %v678, %v684
  %v703 = vadd.f32 %v679, %v684
  %v705 = vsel %vm301, %v686, 0
  %v708 = vsel %vm301, %v687, 0
  %v711 = vsel %vm301, %v688, 0
  %v714 = vsel %vm301, %v689, 0
  %v717 = vsel %vm301, %v690, 0
  %v720 = vsel %vm301, %v691, 0
  %v723 = vsel %vm301, %v692, 0
  %v726 = vsel %vm301, %v693, 0
  %v729 = vsel %vm301, %v694, 0
  %v732 = vsel %vm301, %v695, 0
  %v735 = vsel %vm301, %v696, 0
  %v738 = vsel %vm301, %v697, 0
  %v741 = vsel %vm301, %v698, 0
  %v744 = vsel %vm301, %v699, 0
  %v747 = vsel %vm301, %v700, 0
  %v750 = vsel %vm301, %v701, 0
  %v753 = vsel %vm301, %v702, 0
  %v756 = vsel %vm301, %v703, 0
  %758 = vmatprep.subr.mxu0 0.0
  %759 = vmatpush1.msra.mxu0 0.0
  %760 = vmatprep.subr.mxu0 0.0
  %761 = vmatpush1.msra.mxu0 0.0
  %762 = vmatprep.subr.mxu0 0.0
  %763 = vmatpush1.msra.mxu0 0.0
  %764 = vmatprep.subr.mxu0 0.0
  %765 = vmatpush1.msra.mxu0 0.0
  %766 = vmatprep.subr.mxu0 0.0
  %767 = vmatpush1.msra.mxu0 0.0
  %768 = vmatprep.subr.mxu0 0.0
  %769 = vmatpush1.msra.mxu0 0.0
  %770 = vmatprep.subr.mxu0 0.0
  %771 = vmatpush1.msra.mxu0 0.0
  %772 = vmatprep.subr.mxu0 0.0
  %773 = vmatpush1.msra.mxu0 0.0
  %774 = vmatprep.subr.mxu0 0.0
  %775 = vmatpush1.msra.mxu0 0.0
  %776 = vmatprep.subr.mxu0 0.0
  %777 = vmatpush1.msra.mxu0 0.0
  %778 = vmatprep.subr.mxu0 0.0
  %779 = vmatpush1.msra.mxu0 0.0
  %780 = vmatprep.subr.mxu0 0.0
  %781 = vmatpush1.msra.mxu0 0.0
  %782 = vmatprep.subr.mxu0 0.0
  %783 = vmatpush1.msra.mxu0 %v393
  %784 = vmatprep.subr.mxu0 0.0
  %785 = vmatpush1.msra.mxu0 %v392
  %786 = vmatprep.subr.mxu0 0.0
  %787 = vmatpush1.msra.mxu0 %v391
  %788 = vmatprep.subr.mxu0 0.0
  %789 = vmatpush1.msra.mxu0 %v390
  %790 = vmatprep.subr.mxu0 0.0
  %791 = vmatpush2.msra.mxu0 0.0
  %792 = vmatprep.subr.mxu0 0.0
  %793 = vmatpush2.msra.mxu0 0.0
  %794 = vmatprep.subr.mxu0 0.0
  %795 = vmatpush2.msra.mxu0 0.0
  %796 = vmatprep.subr.mxu0 0.0
  %797 = vmatpush2.msra.mxu0 0.0
  %798 = vmatprep.subr.mxu0 0.0
  %799 = vmatpush2.msra.mxu0 0.0
  %800 = vmatprep.subr.mxu0 0.0
  %801 = vmatpush2.msra.mxu0 0.0
  %802 = vmatprep.subr.mxu0 0.0
  %803 = vmatpush2.msra.mxu0 0.0
  %804 = vmatprep.subr.mxu0 0.0
  %805 = vmatpush2.msra.mxu0 0.0
  %806 = vmatprep.subr.mxu0 0.0
  %807 = vmatpush2.msra.mxu0 0.0
  %808 = vmatprep.subr.mxu0 0.0
  %809 = vmatpush2.msra.mxu0 0.0
  %810 = vmatprep.subr.mxu0 0.0
  %811 = vmatpush2.msra.mxu0 0.0
  %812 = vmatprep.subr.mxu0 0.0
  %813 = vmatpush2.msra.mxu0 0.0
  %814 = vmatprep.subr.mxu0 0.0
  %815 = vmatpush2.msra.mxu0 0.0
  %816 = vmatprep.subr.mxu0 0.0
  %817 = vmatpush2.msra.mxu0 0.0
  %818 = vmatprep.subr.mxu0 0.0
  %819 = vmatpush2.msra.mxu0 0.0
  %820 = vmatprep.subr.mxu0 0.0
  %821 = vmatpush2.msra.mxu0 0.0
  %822 = vmatprep.mubr.f32.mxu0 0.0
  %823 = vmatmul.mubr.f32.gmra.mxu0 %v705
  %v824 = vpop.f32.mrf.mxu0
  %v825 = vadd.f32 0.0, %v824
  %v826 = vpop.f32.mrf.mxu0
  %827 = vmatprep.mubr.f32.mxu0 0.0
  %828 = vmatmul.mubr.f32.gmra.mxu0 %v708
  %v829 = vpop.f32.mrf.mxu0
  %v830 = vadd.f32 0.0, %v829
  %v831 = vpop.f32.mrf.mxu0
  %832 = vmatprep.mubr.f32.mxu0 0.0
  %833 = vmatmul.mubr.f32.gmra.mxu0 %v711
  %v834 = vpop.f32.mrf.mxu0
  %v835 = vadd.f32 0.0, %v834
  %v836 = vpop.f32.mrf.mxu0
  %837 = vmatprep.mubr.f32.mxu0 0.0
  %838 = vmatmul.mubr.f32.gmra.mxu0 %v714
  %v839 = vpop.f32.mrf.mxu0
  %v840 = vadd.f32 0.0, %v839
  %v841 = vpop.f32.mrf.mxu0
  %842 = vmatprep.mubr.f32.mxu0 0.0
  %843 = vmatmul.mubr.f32.gmra.mxu0 %v717
  %v844 = vpop.f32.mrf.mxu0
  %v845 = vadd.f32 0.0, %v844
  %v846 = vpop.f32.mrf.mxu0
  %847 = vmatprep.mubr.f32.mxu0 0.0
  %848 = vmatmul.mubr.f32.gmra.mxu0 %v720
  %v849 = vpop.f32.mrf.mxu0
  %v850 = vadd.f32 0.0, %v849
  %v851 = vpop.f32.mrf.mxu0
  %852 = vmatprep.mubr.f32.mxu0 0.0
  %853 = vmatmul.mubr.f32.gmra.mxu0 %v723
  %v854 = vpop.f32.mrf.mxu0
  %v855 = vadd.f32 0.0, %v854
  %v856 = vpop.f32.mrf.mxu0
  %857 = vmatprep.mubr.f32.mxu0 0.0
  %858 = vmatmul.mubr.f32.gmra.mxu0 %v726
  %v859 = vpop.f32.mrf.mxu0
  %v860 = vadd.f32 0.0, %v859
  %v861 = vpop.f32.mrf.mxu0
  %862 = vmatprep.mubr.f32.mxu0 0.0
  %863 = vmatmul.mubr.f32.gmra.mxu0 %v729
  %v864 = vpop.f32.mrf.mxu0
  %v865 = vadd.f32 0.0, %v864
  %v866 = vpop.f32.mrf.mxu0
  %867 = vmatprep.mubr.f32.mxu0 0.0
  %868 = vmatmul.mubr.f32.gmra.mxu0 %v732
  %v869 = vpop.f32.mrf.mxu0
  %v870 = vadd.f32 0.0, %v869
  %v871 = vpop.f32.mrf.mxu0
  %872 = vmatprep.mubr.f32.mxu0 0.0
  %873 = vmatmul.mubr.f32.gmra.mxu0 %v735
  %v874 = vpop.f32.mrf.mxu0
  %v875 = vadd.f32 0.0, %v874
  %v876 = vpop.f32.mrf.mxu0
  %877 = vmatprep.mubr.f32.mxu0 0.0
  %878 = vmatmul.mubr.f32.gmra.mxu0 %v738
  %v879 = vpop.f32.mrf.mxu0
  %v880 = vadd.f32 0.0, %v879
  %v881 = vpop.f32.mrf.mxu0
  %882 = vmatprep.mubr.f32.mxu0 0.0
  %883 = vmatmul.mubr.f32.gmra.mxu0 %v741
  %v884 = vpop.f32.mrf.mxu0
  %v885 = vadd.f32 0.0, %v884
  %v886 = vpop.f32.mrf.mxu0
  %887 = vmatprep.mubr.f32.mxu0 0.0
  %888 = vmatmul.mubr.f32.gmra.mxu0 %v744
  %v889 = vpop.f32.mrf.mxu0
  %v890 = vadd.f32 0.0, %v889
  %v891 = vpop.f32.mrf.mxu0
  %892 = vmatprep.mubr.f32.mxu0 0.0
  %893 = vmatmul.mubr.f32.gmra.mxu0 %v747
  %v894 = vpop.f32.mrf.mxu0
  %v895 = vadd.f32 0.0, %v894
  %v896 = vpop.f32.mrf.mxu0
  %897 = vmatprep.mubr.f32.mxu0 0.0
  %898 = vmatmul.mubr.f32.gmra.mxu0 %v750
  %v899 = vpop.f32.mrf.mxu0
  %v900 = vadd.f32 0.0, %v899
  %v901 = vpop.f32.mrf.mxu0
  %902 = vmatprep.mubr.f32.mxu0 0.0
  %903 = vmatmul.mubr.f32.gmra.mxu0 %v753
  %v904 = vpop.f32.mrf.mxu0
  %v905 = vadd.f32 0.0, %v904
  %v906 = vpop.f32.mrf.mxu0
  %907 = vmatprep.mubr.f32.mxu0 0.0
  %908 = vmatmul.mubr.f32.gmra.mxu0 %v756
  %v909 = vpop.f32.mrf.mxu0
  %v910 = vadd.f32 0.0, %v909
  %v911 = vpop.f32.mrf.mxu0
  %912 = vdwg.mxu0
  %v913 = vmul.f32 %v825, 0.35355338
  %v914 = vmul.f32 %v830, 0.35355338
  %v915 = vmul.f32 %v835, 0.35355338
  %v916 = vmul.f32 %v840, 0.35355338
  %v917 = vmul.f32 %v845, 0.35355338
  %v918 = vmul.f32 %v850, 0.35355338
  %v919 = vmul.f32 %v855, 0.35355338
  %v920 = vmul.f32 %v860, 0.35355338
  %v921 = vmul.f32 %v865, 0.35355338
  %v922 = vmul.f32 %v870, 0.35355338
  %v923 = vmul.f32 %v875, 0.35355338
  %v924 = vmul.f32 %v880, 0.35355338
  %v925 = vmul.f32 %v885, 0.35355338
  %v926 = vmul.f32 %v890, 0.35355338
  %v927 = vmul.f32 %v895, 0.35355338
  %v928 = vmul.f32 %v900, 0.35355338
  %v929 = vmul.f32 %v905, 0.35355338
  %v930 = vmul.f32 %v910, 0.35355338
  %940 = vrot.lane.b32.xlu0 %v825, 96
  %v941 = vpop.permute.xlu0 %940
  %942 = vrot.lane.b32.xlu0 %v830, 96
  %v943 = vpop.permute.xlu0 %942
  %944 = vrot.lane.b32.xlu0 %v835, 96
  %v945 = vpop.permute.xlu0 %944
  %946 = vrot.lane.b32.xlu0 %v840, 96
  %v947 = vpop.permute.xlu0 %946
  %948 = vrot.lane.b32.xlu0 %v845, 96
  %v949 = vpop.permute.xlu0 %948
  %950 = vrot.lane.b32.xlu0 %v850, 96
  %v951 = vpop.permute.xlu0 %950
  %952 = vrot.lane.b32.xlu0 %v855, 96
  %v953 = vpop.permute.xlu0 %952
  %954 = vrot.lane.b32.xlu0 %v860, 96
  %v955 = vpop.permute.xlu0 %954
  %956 = vrot.lane.b32.xlu0 %v865, 96
  %v957 = vpop.permute.xlu0 %956
  %vm958 = vcmask 64512
  %v960 = vsel %vm958, %v913, 0
  %v963 = vsel %vm958, %v914, 0
  %v966 = vsel %vm958, %v915, 0
  %v969 = vsel %vm958, %v916, 0
  %v972 = vsel %vm958, %v917, 0
  %v975 = vsel %vm958, %v918, 0
  %v978 = vsel %vm958, %v919, 0
  %v981 = vsel %vm958, %v920, 0
  %v984 = vsel %vm958, %v921, 0
  %v986 = vsel %vm958, %v941, 0
  %v988 = vsel %vm958, %v943, 0
  %v990 = vsel %vm958, %v945, 0
  %v992 = vsel %vm958, %v947, 0
  %v994 = vsel %vm958, %v949, 0
  %v996 = vsel %vm958, %v951, 0
  %v998 = vsel %vm958, %v953, 0
  %v1000 = vsel %vm958, %v955, 0
  %v1002 = vsel %vm958, %v957, 0
  %1004 = vmatprep.subr.mxu0 0.0
  %1005 = vmatpush1.xpose.msra.mxu0 0.0
  %1006 = vmatprep.subr.mxu0 0.0
  %1007 = vmatpush1.xpose.msra.mxu0 0.0
  %1008 = vmatprep.subr.mxu0 0.0
  %1009 = vmatpush1.xpose.msra.mxu0 0.0
  %1010 = vmatprep.subr.mxu0 0.0
  %1011 = vmatpush1.xpose.msra.mxu0 0.0
  %1012 = vmatprep.subr.mxu0 0.0
  %1013 = vmatpush1.xpose.msra.mxu0 0.0
  %1014 = vmatprep.subr.mxu0 0.0
  %1015 = vmatpush1.xpose.msra.mxu0 0.0
  %1016 = vmatprep.subr.mxu0 0.0
  %1017 = vmatpush1.xpose.msra.mxu0 0.0
  %1018 = vmatprep.subr.mxu0 0.0
  %1019 = vmatpush1.xpose.msra.mxu0 %v1002
  %1020 = vmatprep.subr.mxu0 0.0
  %1021 = vmatpush1.xpose.msra.mxu0 %v1000
  %1022 = vmatprep.subr.mxu0 0.0
  %1023 = vmatpush1.xpose.msra.mxu0 %v998
  %1024 = vmatprep.subr.mxu0 0.0
  %1025 = vmatpush1.xpose.msra.mxu0 %v996
  %1026 = vmatprep.subr.mxu0 0.0
  %1027 = vmatpush1.xpose.msra.mxu0 %v994
  %1028 = vmatprep.subr.mxu0 0.0
  %1029 = vmatpush1.xpose.msra.mxu0 %v992
  %1030 = vmatprep.subr.mxu0 0.0
  %1031 = vmatpush1.xpose.msra.mxu0 %v990
  %1032 = vmatprep.subr.mxu0 0.0
  %1033 = vmatpush1.xpose.msra.mxu0 %v988
  %1034 = vmatprep.subr.mxu0 0.0
  %1035 = vmatpush1.xpose.msra.mxu0 %v986
  %1036 = vmatprep.subr.mxu0 0.0
  %1037 = vmatpush2.xpose.msra.mxu0 0.0
  %1038 = vmatprep.subr.mxu0 0.0
  %1039 = vmatpush2.xpose.msra.mxu0 0.0
  %1040 = vmatprep.subr.mxu0 0.0
  %1041 = vmatpush2.xpose.msra.mxu0 0.0
  %1042 = vmatprep.subr.mxu0 0.0
  %1043 = vmatpush2.xpose.msra.mxu0 0.0
  %1044 = vmatprep.subr.mxu0 0.0
  %1045 = vmatpush2.xpose.msra.mxu0 0.0
  %1046 = vmatprep.subr.mxu0 0.0
  %1047 = vmatpush2.xpose.msra.mxu0 0.0
  %1048 = vmatprep.subr.mxu0 0.0
  %1049 = vmatpush2.xpose.msra.mxu0 0.0
  %1050 = vmatprep.subr.mxu0 0.0
  %1051 = vmatpush2.xpose.msra.mxu0 0.0
  %1052 = vmatprep.subr.mxu0 0.0
  %1053 = vmatpush2.xpose.msra.mxu0 0.0
  %1054 = vmatprep.subr.mxu0 0.0
  %1055 = vmatpush2.xpose.msra.mxu0 0.0
  %1056 = vmatprep.subr.mxu0 0.0
  %1057 = vmatpush2.xpose.msra.mxu0 0.0
  %1058 = vmatprep.subr.mxu0 0.0
  %1059 = vmatpush2.xpose.msra.mxu0 0.0
  %1060 = vmatprep.subr.mxu0 0.0
  %1061 = vmatpush2.xpose.msra.mxu0 0.0
  %1062 = vmatprep.subr.mxu0 0.0
  %1063 = vmatpush2.xpose.msra.mxu0 0.0
  %1064 = vmatprep.subr.mxu0 0.0
  %1065 = vmatpush2.xpose.msra.mxu0 0.0
  %1066 = vmatprep.subr.mxu0 0.0
  %1067 = vmatpush2.xpose.msra.mxu0 0.0
  %1068 = vmatprep.mubr.f32.mxu0 0.0
  %1069 = vmatmul.mubr.f32.gmra.mxu0 %v960
  %v1070 = vpop.f32.mrf.mxu0
  %v1071 = vadd.f32 %v385, %v1070
  %v1072 = vpop.f32.mrf.mxu0
  %1073 = vmatprep.mubr.f32.mxu0 0.0
  %1074 = vmatmul.mubr.f32.gmra.mxu0 %v963
  %v1075 = vpop.f32.mrf.mxu0
  %v1076 = vadd.f32 %v385, %v1075
  %v1077 = vpop.f32.mrf.mxu0
  %1078 = vmatprep.mubr.f32.mxu0 0.0
  %1079 = vmatmul.mubr.f32.gmra.mxu0 %v966
  %v1080 = vpop.f32.mrf.mxu0
  %v1081 = vadd.f32 %v385, %v1080
  %v1082 = vpop.f32.mrf.mxu0
  %1083 = vmatprep.mubr.f32.mxu0 0.0
  %1084 = vmatmul.mubr.f32.gmra.mxu0 %v969
  %v1085 = vpop.f32.mrf.mxu0
  %v1086 = vadd.f32 %v385, %v1085
  %v1087 = vpop.f32.mrf.mxu0
  %1088 = vmatprep.mubr.f32.mxu0 0.0
  %1089 = vmatmul.mubr.f32.gmra.mxu0 %v972
  %v1090 = vpop.f32.mrf.mxu0
  %v1091 = vadd.f32 %v385, %v1090
  %v1092 = vpop.f32.mrf.mxu0
  %1093 = vmatprep.mubr.f32.mxu0 0.0
  %1094 = vmatmul.mubr.f32.gmra.mxu0 %v975
  %v1095 = vpop.f32.mrf.mxu0
  %v1096 = vadd.f32 %v385, %v1095
  %v1097 = vpop.f32.mrf.mxu0
  %1098 = vmatprep.mubr.f32.mxu0 0.0
  %1099 = vmatmul.mubr.f32.gmra.mxu0 %v978
  %v1100 = vpop.f32.mrf.mxu0
  %v1101 = vadd.f32 %v385, %v1100
  %v1102 = vpop.f32.mrf.mxu0
  %1103 = vmatprep.mubr.f32.mxu0 0.0
  %1104 = vmatmul.mubr.f32.gmra.mxu0 %v981
  %v1105 = vpop.f32.mrf.mxu0
  %v1106 = vadd.f32 %v385, %v1105
  %v1107 = vpop.f32.mrf.mxu0
  %1108 = vmatprep.mubr.f32.mxu0 0.0
  %1109 = vmatmul.mubr.f32.gmra.mxu0 %v984
  %v1110 = vpop.f32.mrf.mxu0
  %v1111 = vadd.f32 %v385, %v1110
  %v1112 = vpop.f32.mrf.mxu0
  %1113 = vdwg.mxu0
  %1123 = vrot.lane.b32.xlu0 %v870, 96
  %v1124 = vpop.permute.xlu0 %1123
  %1125 = vrot.lane.b32.xlu0 %v875, 96
  %v1126 = vpop.permute.xlu0 %1125
  %1127 = vrot.lane.b32.xlu0 %v880, 96
  %v1128 = vpop.permute.xlu0 %1127
  %1129 = vrot.lane.b32.xlu0 %v885, 96
  %v1130 = vpop.permute.xlu0 %1129
  %1131 = vrot.lane.b32.xlu0 %v890, 96
  %v1132 = vpop.permute.xlu0 %1131
  %1133 = vrot.lane.b32.xlu0 %v895, 96
  %v1134 = vpop.permute.xlu0 %1133
  %1135 = vrot.lane.b32.xlu0 %v900, 96
  %v1136 = vpop.permute.xlu0 %1135
  %1137 = vrot.lane.b32.xlu0 %v905, 96
  %v1138 = vpop.permute.xlu0 %1137
  %1139 = vrot.lane.b32.xlu0 %v910, 96
  %v1140 = vpop.permute.xlu0 %1139
  %v1142 = vsel %vm958, %v922, 0
  %v1145 = vsel %vm958, %v923, 0
  %v1148 = vsel %vm958, %v924, 0
  %v1151 = vsel %vm958, %v925, 0
  %v1154 = vsel %vm958, %v926, 0
  %v1157 = vsel %vm958, %v927, 0
  %v1160 = vsel %vm958, %v928, 0
  %v1163 = vsel %vm958, %v929, 0
  %v1166 = vsel %vm958, %v930, 0
  %v1168 = vsel %vm958, %v1124, 0
  %v1170 = vsel %vm958, %v1126, 0
  %v1172 = vsel %vm958, %v1128, 0
  %v1174 = vsel %vm958, %v1130, 0
  %v1176 = vsel %vm958, %v1132, 0
  %v1178 = vsel %vm958, %v1134, 0
  %v1180 = vsel %vm958, %v1136, 0
  %v1182 = vsel %vm958, %v1138, 0
  %v1184 = vsel %vm958, %v1140, 0
  %1186 = vmatprep.subr.mxu0 0.0
  %1187 = vmatpush1.xpose.msra.mxu0 0.0
  %1188 = vmatprep.subr.mxu0 0.0
  %1189 = vmatpush1.xpose.msra.mxu0 0.0
  %1190 = vmatprep.subr.mxu0 0.0
  %1191 = vmatpush1.xpose.msra.mxu0 0.0
  %1192 = vmatprep.subr.mxu0 0.0
  %1193 = vmatpush1.xpose.msra.mxu0 0.0
  %1194 = vmatprep.subr.mxu0 0.0
  %1195 = vmatpush1.xpose.msra.mxu0 0.0
  %1196 = vmatprep.subr.mxu0 0.0
  %1197 = vmatpush1.xpose.msra.mxu0 0.0
  %1198 = vmatprep.subr.mxu0 0.0
  %1199 = vmatpush1.xpose.msra.mxu0 0.0
  %1200 = vmatprep.subr.mxu0 0.0
  %1201 = vmatpush1.xpose.msra.mxu0 %v1184
  %1202 = vmatprep.subr.mxu0 0.0
  %1203 = vmatpush1.xpose.msra.mxu0 %v1182
  %1204 = vmatprep.subr.mxu0 0.0
  %1205 = vmatpush1.xpose.msra.mxu0 %v1180
  %1206 = vmatprep.subr.mxu0 0.0
  %1207 = vmatpush1.xpose.msra.mxu0 %v1178
  %1208 = vmatprep.subr.mxu0 0.0
  %1209 = vmatpush1.xpose.msra.mxu0 %v1176
  %1210 = vmatprep.subr.mxu0 0.0
  %1211 = vmatpush1.xpose.msra.mxu0 %v1174
  %1212 = vmatprep.subr.mxu0 0.0
  %1213 = vmatpush1.xpose.msra.mxu0 %v1172
  %1214 = vmatprep.subr.mxu0 0.0
  %1215 = vmatpush1.xpose.msra.mxu0 %v1170
  %1216 = vmatprep.subr.mxu0 0.0
  %1217 = vmatpush1.xpose.msra.mxu0 %v1168
  %1218 = vmatprep.subr.mxu0 0.0
  %1219 = vmatpush2.xpose.msra.mxu0 0.0
  %1220 = vmatprep.subr.mxu0 0.0
  %1221 = vmatpush2.xpose.msra.mxu0 0.0
  %1222 = vmatprep.subr.mxu0 0.0
  %1223 = vmatpush2.xpose.msra.mxu0 0.0
  %1224 = vmatprep.subr.mxu0 0.0
  %1225 = vmatpush2.xpose.msra.mxu0 0.0
  %1226 = vmatprep.subr.mxu0 0.0
  %1227 = vmatpush2.xpose.msra.mxu0 0.0
  %1228 = vmatprep.subr.mxu0 0.0
  %1229 = vmatpush2.xpose.msra.mxu0 0.0
  %1230 = vmatprep.subr.mxu0 0.0
  %1231 = vmatpush2.xpose.msra.mxu0 0.0
  %1232 = vmatprep.subr.mxu0 0.0
  %1233 = vmatpush2.xpose.msra.mxu0 0.0
  %1234 = vmatprep.subr.mxu0 0.0
  %1235 = vmatpush2.xpose.msra.mxu0 0.0
  %1236 = vmatprep.subr.mxu0 0.0
  %1237 = vmatpush2.xpose.msra.mxu0 0.0
  %1238 = vmatprep.subr.mxu0 0.0
  %1239 = vmatpush2.xpose.msra.mxu0 0.0
  %1240 = vmatprep.subr.mxu0 0.0
  %1241 = vmatpush2.xpose.msra.mxu0 0.0
  %1242 = vmatprep.subr.mxu0 0.0
  %1243 = vmatpush2.xpose.msra.mxu0 0.0
  %1244 = vmatprep.subr.mxu0 0.0
  %1245 = vmatpush2.xpose.msra.mxu0 0.0
  %1246 = vmatprep.subr.mxu0 0.0
  %1247 = vmatpush2.xpose.msra.mxu0 0.0
  %1248 = vmatprep.subr.mxu0 0.0
  %1249 = vmatpush2.xpose.msra.mxu0 0.0
  %1250 = vmatprep.mubr.f32.mxu0 0.0
  %1251 = vmatmul.mubr.f32.gmra.mxu0 %v1142
  %v1252 = vpop.f32.mrf.mxu0
  %v1253 = vadd.f32 %v385, %v1252
  %v1254 = vpop.f32.mrf.mxu0
  %1255 = vmatprep.mubr.f32.mxu0 0.0
  %1256 = vmatmul.mubr.f32.gmra.mxu0 %v1145
  %v1257 = vpop.f32.mrf.mxu0
  %v1258 = vadd.f32 %v385, %v1257
  %v1259 = vpop.f32.mrf.mxu0
  %1260 = vmatprep.mubr.f32.mxu0 0.0
  %1261 = vmatmul.mubr.f32.gmra.mxu0 %v1148
  %v1262 = vpop.f32.mrf.mxu0
  %v1263 = vadd.f32 %v385, %v1262
  %v1264 = vpop.f32.mrf.mxu0
  %1265 = vmatprep.mubr.f32.mxu0 0.0
  %1266 = vmatmul.mubr.f32.gmra.mxu0 %v1151
  %v1267 = vpop.f32.mrf.mxu0
  %v1268 = vadd.f32 %v385, %v1267
  %v1269 = vpop.f32.mrf.mxu0
  %1270 = vmatprep.mubr.f32.mxu0 0.0
  %1271 = vmatmul.mubr.f32.gmra.mxu0 %v1154
  %v1272 = vpop.f32.mrf.mxu0
  %v1273 = vadd.f32 %v385, %v1272
  %v1274 = vpop.f32.mrf.mxu0
  %1275 = vmatprep.mubr.f32.mxu0 0.0
  %1276 = vmatmul.mubr.f32.gmra.mxu0 %v1157
  %v1277 = vpop.f32.mrf.mxu0
  %v1278 = vadd.f32 %v385, %v1277
  %v1279 = vpop.f32.mrf.mxu0
  %1280 = vmatprep.mubr.f32.mxu0 0.0
  %1281 = vmatmul.mubr.f32.gmra.mxu0 %v1160
  %v1282 = vpop.f32.mrf.mxu0
  %v1283 = vadd.f32 %v385, %v1282
  %v1284 = vpop.f32.mrf.mxu0
  %1285 = vmatprep.mubr.f32.mxu0 0.0
  %1286 = vmatmul.mubr.f32.gmra.mxu0 %v1163
  %v1287 = vpop.f32.mrf.mxu0
  %v1288 = vadd.f32 %v385, %v1287
  %v1289 = vpop.f32.mrf.mxu0
  %1290 = vmatprep.mubr.f32.mxu0 0.0
  %1291 = vmatmul.mubr.f32.gmra.mxu0 %v1166
  %v1292 = vpop.f32.mrf.mxu0
  %v1293 = vadd.f32 %v385, %v1292
  %v1294 = vpop.f32.mrf.mxu0
  %1295 = vdwg.mxu0
  %vm1296 = vcmask 588800
  %v1297 = vsel %vm1296, %v1071, -inf
  %1298 = vmax.xlane.f32.xlu0 %v1297
  %v1299 = vpop.xlane.xlu0 %1298
  %v1300 = vsel %vm1296, %v1076, -inf
  %1301 = vmax.xlane.f32.xlu0 %v1300
  %v1302 = vpop.xlane.xlu0 %1301
  %v1303 = vsel %vm1296, %v1081, -inf
  %1304 = vmax.xlane.f32.xlu0 %v1303
  %v1305 = vpop.xlane.xlu0 %1304
  %v1306 = vsel %vm1296, %v1086, -inf
  %1307 = vmax.xlane.f32.xlu0 %v1306
  %v1308 = vpop.xlane.xlu0 %1307
  %v1309 = vsel %vm1296, %v1091, -inf
  %1310 = vmax.xlane.f32.xlu0 %v1309
  %v1311 = vpop.xlane.xlu0 %1310
  %v1312 = vsel %vm1296, %v1096, -inf
  %1313 = vmax.xlane.f32.xlu0 %v1312
  %v1314 = vpop.xlane.xlu0 %1313
  %v1315 = vsel %vm1296, %v1101, -inf
  %1316 = vmax.xlane.f32.xlu0 %v1315
  %v1317 = vpop.xlane.xlu0 %1316
  %v1318 = vsel %vm1296, %v1106, -inf
  %1319 = vmax.xlane.f32.xlu0 %v1318
  %v1320 = vpop.xlane.xlu0 %1319
  %v1321 = vsel %vm1296, %v1111, -inf
  %1322 = vmax.xlane.f32.xlu0 %v1321
  %v1323 = vpop.xlane.xlu0 %1322
  %v1324 = vsel %vm1296, %v1253, -inf
  %1325 = vmax.xlane.f32.xlu0 %v1324
  %v1326 = vpop.xlane.xlu0 %1325
  %v1327 = vsel %vm1296, %v1258, -inf
  %1328 = vmax.xlane.f32.xlu0 %v1327
  %v1329 = vpop.xlane.xlu0 %1328
  %v1330 = vsel %vm1296, %v1263, -inf
  %1331 = vmax.xlane.f32.xlu0 %v1330
  %v1332 = vpop.xlane.xlu0 %1331
  %v1333 = vsel %vm1296, %v1268, -inf
  %1334 = vmax.xlane.f32.xlu0 %v1333
  %v1335 = vpop.xlane.xlu0 %1334
  %v1336 = vsel %vm1296, %v1273, -inf
  %1337 = vmax.xlane.f32.xlu0 %v1336
  %v1338 = vpop.xlane.xlu0 %1337
  %v1339 = vsel %vm1296, %v1278, -inf
  %1340 = vmax.xlane.f32.xlu0 %v1339
  %v1341 = vpop.xlane.xlu0 %1340
  %v1342 = vsel %vm1296, %v1283, -inf
  %1343 = vmax.xlane.f32.xlu0 %v1342
  %v1344 = vpop.xlane.xlu0 %1343
  %v1345 = vsel %vm1296, %v1288, -inf
  %1346 = vmax.xlane.f32.xlu0 %v1345
  %v1347 = vpop.xlane.xlu0 %1346
  %v1348 = vsel %vm1296, %v1293, -inf
  %1349 = vmax.xlane.f32.xlu0 %v1348
  %v1350 = vpop.xlane.xlu0 %1349
  %v1351 = vsub.f32 %v1071, %v1299
  %v1352 = vsub.f32 %v1076, %v1302
  %v1353 = vsub.f32 %v1081, %v1305
  %v1354 = vsub.f32 %v1086, %v1308
  %v1355 = vsub.f32 %v1091, %v1311
  %v1356 = vsub.f32 %v1096, %v1314
  %v1357 = vsub.f32 %v1101, %v1317
  %v1358 = vsub.f32 %v1106, %v1320
  %v1359 = vsub.f32 %v1111, %v1323
  %v1360 = vsub.f32 %v1253, %v1326
  %v1361 = vsub.f32 %v1258, %v1329
  %v1362 = vsub.f32 %v1263, %v1332
  %v1363 = vsub.f32 %v1268, %v1335
  %v1364 = vsub.f32 %v1273, %v1338
  %v1365 = vsub.f32 %v1278, %v1341
  %v1366 = vsub.f32 %v1283, %v1344
  %v1367 = vsub.f32 %v1288, %v1347
  %v1368 = vsub.f32 %v1293, %v1350
  %v1369 = vmul.f32 %v1351, 1.442695
  %v1370 = vpow.pop %v1369
  %v1371 = vmul.f32 %v1352, 1.442695
  %v1372 = vpow.pop %v1371
  %v1373 = vmul.f32 %v1353, 1.442695
  %v1374 = vpow.pop %v1373
  %v1375 = vmul.f32 %v1354, 1.442695
  %v1376 = vpow.pop %v1375
  %v1377 = vmul.f32 %v1355, 1.442695
  %v1378 = vpow.pop %v1377
  %v1379 = vmul.f32 %v1356, 1.442695
  %v1380 = vpow.pop %v1379
  %v1381 = vmul.f32 %v1357, 1.442695
  %v1382 = vpow.pop %v1381
  %v1383 = vmul.f32 %v1358, 1.442695
  %v1384 = vpow.pop %v1383
  %v1385 = vmul.f32 %v1359, 1.442695
  %v1386 = vpow.pop %v1385
  %v1387 = vmul.f32 %v1360, 1.442695
  %v1388 = vpow.pop %v1387
  %v1389 = vmul.f32 %v1361, 1.442695
  %v1390 = vpow.pop %v1389
  %v1391 = vmul.f32 %v1362, 1.442695
  %v1392 = vpow.pop %v1391
  %v1393 = vmul.f32 %v1363, 1.442695
  %v1394 = vpow.pop %v1393
  %v1395 = vmul.f32 %v1364, 1.442695
  %v1396 = vpow.pop %v1395
  %v1397 = vmul.f32 %v1365, 1.442695
  %v1398 = vpow.pop %v1397
  %v1399 = vmul.f32 %v1366, 1.442695
  %v1400 = vpow.pop %v1399
  %v1401 = vmul.f32 %v1367, 1.442695
  %v1402 = vpow.pop %v1401
  %v1403 = vmul.f32 %v1368, 1.442695
  %v1404 = vpow.pop %v1403
  %v1405 = vsel %vm1296, %v1370, 0.0
  %1406 = vadd.xlane.f32.xlu0 %v1405
  %v1407 = vpop.xlane.xlu0 %1406
  %v1408 = vsel %vm1296, %v1372, 0.0
  %1409 = vadd.xlane.f32.xlu0 %v1408
  %v1410 = vpop.xlane.xlu0 %1409
  %v1411 = vsel %vm1296, %v1374, 0.0
  %1412 = vadd.xlane.f32.xlu0 %v1411
  %v1413 = vpop.xlane.xlu0 %1412
  %v1414 = vsel %vm1296, %v1376, 0.0
  %1415 = vadd.xlane.f32.xlu0 %v1414
  %v1416 = vpop.xlane.xlu0 %1415
  %v1417 = vsel %vm1296, %v1378, 0.0
  %1418 = vadd.xlane.f32.xlu0 %v1417
  %v1419 = vpop.xlane.xlu0 %1418
  %v1420 = vsel %vm1296, %v1380, 0.0
  %1421 = vadd.xlane.f32.xlu0 %v1420
  %v1422 = vpop.xlane.xlu0 %1421
  %v1423 = vsel %vm1296, %v1382, 0.0
  %1424 = vadd.xlane.f32.xlu0 %v1423
  %v1425 = vpop.xlane.xlu0 %1424
  %v1426 = vsel %vm1296, %v1384, 0.0
  %1427 = vadd.xlane.f32.xlu0 %v1426
  %v1428 = vpop.xlane.xlu0 %1427
  %v1429 = vsel %vm1296, %v1386, 0.0
  %1430 = vadd.xlane.f32.xlu0 %v1429
  %v1431 = vpop.xlane.xlu0 %1430
  %v1432 = vsel %vm1296, %v1388, 0.0
  %1433 = vadd.xlane.f32.xlu0 %v1432
  %v1434 = vpop.xlane.xlu0 %1433
  %v1435 = vsel %vm1296, %v1390, 0.0
  %1436 = vadd.xlane.f32.xlu0 %v1435
  %v1437 = vpop.xlane.xlu0 %1436
  %v1438 = vsel %vm1296, %v1392, 0.0
  %1439 = vadd.xlane.f32.xlu0 %v1438
  %v1440 = vpop.xlane.xlu0 %1439
  %v1441 = vsel %vm1296, %v1394, 0.0
  %1442 = vadd.xlane.f32.xlu0 %v1441
  %v1443 = vpop.xlane.xlu0 %1442
  %v1444 = vsel %vm1296, %v1396, 0.0
  %1445 = vadd.xlane.f32.xlu0 %v1444
  %v1446 = vpop.xlane.xlu0 %1445
  %v1447 = vsel %vm1296, %v1398, 0.0
  %1448 = vadd.xlane.f32.xlu0 %v1447
  %v1449 = vpop.xlane.xlu0 %1448
  %v1450 = vsel %vm1296, %v1400, 0.0
  %1451 = vadd.xlane.f32.xlu0 %v1450
  %v1452 = vpop.xlane.xlu0 %1451
  %v1453 = vsel %vm1296, %v1402, 0.0
  %1454 = vadd.xlane.f32.xlu0 %v1453
  %v1455 = vpop.xlane.xlu0 %1454
  %v1456 = vsel %vm1296, %v1404, 0.0
  %1457 = vadd.xlane.f32.xlu0 %v1456
  %v1458 = vpop.xlane.xlu0 %1457
  %v1459 = vrcp.pop %v1407
  %v1460 = vrcp.pop %v1410
  %v1461 = vrcp.pop %v1413
  %v1462 = vrcp.pop %v1416
  %v1463 = vrcp.pop %v1419
  %v1464 = vrcp.pop %v1422
  %v1465 = vrcp.pop %v1425
  %v1466 = vrcp.pop %v1428
  %v1467 = vrcp.pop %v1431
  %v1468 = vrcp.pop %v1434
  %v1469 = vrcp.pop %v1437
  %v1470 = vrcp.pop %v1440
  %v1471 = vrcp.pop %v1443
  %v1472 = vrcp.pop %v1446
  %v1473 = vrcp.pop %v1449
  %v1474 = vrcp.pop %v1452
  %v1475 = vrcp.pop %v1455
  %v1476 = vrcp.pop %v1458
  %v1477 = vmul.f32 %v1370, %v1459
  %v1478 = vmul.f32 %v1372, %v1460
  %v1479 = vmul.f32 %v1374, %v1461
  %v1480 = vmul.f32 %v1376, %v1462
  %v1481 = vmul.f32 %v1378, %v1463
  %v1482 = vmul.f32 %v1380, %v1464
  %v1483 = vmul.f32 %v1382, %v1465
  %v1484 = vmul.f32 %v1384, %v1466
  %v1485 = vmul.f32 %v1386, %v1467
  %v1486 = vmul.f32 %v1388, %v1468
  %v1487 = vmul.f32 %v1390, %v1469
  %v1488 = vmul.f32 %v1392, %v1470
  %v1489 = vmul.f32 %v1394, %v1471
  %v1490 = vmul.f32 %v1396, %v1472
  %v1491 = vmul.f32 %v1398, %v1473
  %v1492 = vmul.f32 %v1400, %v1474
  %v1493 = vmul.f32 %v1402, %v1475
  %v1494 = vmul.f32 %v1404, %v1476
  %1495 = vrot.lane.b32.xlu0 %v825, 64
  %v1496 = vpop.permute.xlu0 %1495
  %1497 = vrot.lane.b32.xlu0 %v830, 64
  %v1498 = vpop.permute.xlu0 %1497
  %1499 = vrot.lane.b32.xlu0 %v835, 64
  %v1500 = vpop.permute.xlu0 %1499
  %1501 = vrot.lane.b32.xlu0 %v840, 64
  %v1502 = vpop.permute.xlu0 %1501
  %1503 = vrot.lane.b32.xlu0 %v845, 64
  %v1504 = vpop.permute.xlu0 %1503
  %1505 = vrot.lane.b32.xlu0 %v850, 64
  %v1506 = vpop.permute.xlu0 %1505
  %1507 = vrot.lane.b32.xlu0 %v855, 64
  %v1508 = vpop.permute.xlu0 %1507
  %1509 = vrot.lane.b32.xlu0 %v860, 64
  %v1510 = vpop.permute.xlu0 %1509
  %1511 = vrot.lane.b32.xlu0 %v865, 64
  %v1512 = vpop.permute.xlu0 %1511
  %v1523 = vsel %vm1296, %v1477, 0
  %v1526 = vsel %vm1296, %v1478, 0
  %v1529 = vsel %vm1296, %v1479, 0
  %v1532 = vsel %vm1296, %v1480, 0
  %v1535 = vsel %vm1296, %v1481, 0
  %v1538 = vsel %vm1296, %v1482, 0
  %v1541 = vsel %vm1296, %v1483, 0
  %v1544 = vsel %vm1296, %v1484, 0
  %v1547 = vsel %vm1296, %v1485, 0
  %1549 = vmatprep.subr.mxu0 0.0
  %1550 = vmatpush1.msra.mxu0 0.0
  %1551 = vmatprep.subr.mxu0 0.0
  %1552 = vmatpush1.msra.mxu0 0.0
  %1553 = vmatprep.subr.mxu0 0.0
  %1554 = vmatpush1.msra.mxu0 0.0
  %1555 = vmatprep.subr.mxu0 0.0
  %1556 = vmatpush1.msra.mxu0 0.0
  %1557 = vmatprep.subr.mxu0 0.0
  %1558 = vmatpush1.msra.mxu0 0.0
  %1559 = vmatprep.subr.mxu0 0.0
  %1560 = vmatpush1.msra.mxu0 0.0
  %1561 = vmatprep.subr.mxu0 0.0
  %1562 = vmatpush1.msra.mxu0 0.0
  %1563 = vmatprep.subr.mxu0 0.0
  %1564 = vmatpush1.msra.mxu0 %v1512
  %1565 = vmatprep.subr.mxu0 0.0
  %1566 = vmatpush1.msra.mxu0 %v1510
  %1567 = vmatprep.subr.mxu0 0.0
  %1568 = vmatpush1.msra.mxu0 %v1508
  %1569 = vmatprep.subr.mxu0 0.0
  %1570 = vmatpush1.msra.mxu0 %v1506
  %1571 = vmatprep.subr.mxu0 0.0
  %1572 = vmatpush1.msra.mxu0 %v1504
  %1573 = vmatprep.subr.mxu0 0.0
  %1574 = vmatpush1.msra.mxu0 %v1502
  %1575 = vmatprep.subr.mxu0 0.0
  %1576 = vmatpush1.msra.mxu0 %v1500
  %1577 = vmatprep.subr.mxu0 0.0
  %1578 = vmatpush1.msra.mxu0 %v1498
  %1579 = vmatprep.subr.mxu0 0.0
  %1580 = vmatpush1.msra.mxu0 %v1496
  %1581 = vmatprep.subr.mxu0 0.0
  %1582 = vmatpush2.msra.mxu0 0.0
  %1583 = vmatprep.subr.mxu0 0.0
  %1584 = vmatpush2.msra.mxu0 0.0
  %1585 = vmatprep.subr.mxu0 0.0
  %1586 = vmatpush2.msra.mxu0 0.0
  %1587 = vmatprep.subr.mxu0 0.0
  %1588 = vmatpush2.msra.mxu0 0.0
  %1589 = vmatprep.subr.mxu0 0.0
  %1590 = vmatpush2.msra.mxu0 0.0
  %1591 = vmatprep.subr.mxu0 0.0
  %1592 = vmatpush2.msra.mxu0 0.0
  %1593 = vmatprep.subr.mxu0 0.0
  %1594 = vmatpush2.msra.mxu0 0.0
  %1595 = vmatprep.subr.mxu0 0.0
  %1596 = vmatpush2.msra.mxu0 0.0
  %1597 = vmatprep.subr.mxu0 0.0
  %1598 = vmatpush2.msra.mxu0 0.0
  %1599 = vmatprep.subr.mxu0 0.0
  %1600 = vmatpush2.msra.mxu0 0.0
  %1601 = vmatprep.subr.mxu0 0.0
  %1602 = vmatpush2.msra.mxu0 0.0
  %1603 = vmatprep.subr.mxu0 0.0
  %1604 = vmatpush2.msra.mxu0 0.0
  %1605 = vmatprep.subr.mxu0 0.0
  %1606 = vmatpush2.msra.mxu0 0.0
  %1607 = vmatprep.subr.mxu0 0.0
  %1608 = vmatpush2.msra.mxu0 0.0
  %1609 = vmatprep.subr.mxu0 0.0
  %1610 = vmatpush2.msra.mxu0 0.0
  %1611 = vmatprep.subr.mxu0 0.0
  %1612 = vmatpush2.msra.mxu0 0.0
  %1613 = vmatprep.mubr.f32.mxu0 0.0
  %1614 = vmatmul.mubr.f32.gmra.mxu0 %v1523
  %v1615 = vpop.f32.mrf.mxu0
  %v1616 = vadd.f32 0.0, %v1615
  %v1617 = vpop.f32.mrf.mxu0
  %1618 = vmatprep.mubr.f32.mxu0 0.0
  %1619 = vmatmul.mubr.f32.gmra.mxu0 %v1526
  %v1620 = vpop.f32.mrf.mxu0
  %v1621 = vadd.f32 0.0, %v1620
  %v1622 = vpop.f32.mrf.mxu0
  %1623 = vmatprep.mubr.f32.mxu0 0.0
  %1624 = vmatmul.mubr.f32.gmra.mxu0 %v1529
  %v1625 = vpop.f32.mrf.mxu0
  %v1626 = vadd.f32 0.0, %v1625
  %v1627 = vpop.f32.mrf.mxu0
  %1628 = vmatprep.mubr.f32.mxu0 0.0
  %1629 = vmatmul.mubr.f32.gmra.mxu0 %v1532
  %v1630 = vpop.f32.mrf.mxu0
  %v1631 = vadd.f32 0.0, %v1630
  %v1632 = vpop.f32.mrf.mxu0
  %1633 = vmatprep.mubr.f32.mxu0 0.0
  %1634 = vmatmul.mubr.f32.gmra.mxu0 %v1535
  %v1635 = vpop.f32.mrf.mxu0
  %v1636 = vadd.f32 0.0, %v1635
  %v1637 = vpop.f32.mrf.mxu0
  %1638 = vmatprep.mubr.f32.mxu0 0.0
  %1639 = vmatmul.mubr.f32.gmra.mxu0 %v1538
  %v1640 = vpop.f32.mrf.mxu0
  %v1641 = vadd.f32 0.0, %v1640
  %v1642 = vpop.f32.mrf.mxu0
  %1643 = vmatprep.mubr.f32.mxu0 0.0
  %1644 = vmatmul.mubr.f32.gmra.mxu0 %v1541
  %v1645 = vpop.f32.mrf.mxu0
  %v1646 = vadd.f32 0.0, %v1645
  %v1647 = vpop.f32.mrf.mxu0
  %1648 = vmatprep.mubr.f32.mxu0 0.0
  %1649 = vmatmul.mubr.f32.gmra.mxu0 %v1544
  %v1650 = vpop.f32.mrf.mxu0
  %v1651 = vadd.f32 0.0, %v1650
  %v1652 = vpop.f32.mrf.mxu0
  %1653 = vmatprep.mubr.f32.mxu0 0.0
  %1654 = vmatmul.mubr.f32.gmra.mxu0 %v1547
  %v1655 = vpop.f32.mrf.mxu0
  %v1656 = vadd.f32 0.0, %v1655
  %v1657 = vpop.f32.mrf.mxu0
  %1658 = vdwg.mxu0
  %1659 = vrot.lane.b32.xlu0 %v870, 64
  %v1660 = vpop.permute.xlu0 %1659
  %1661 = vrot.lane.b32.xlu0 %v875, 64
  %v1662 = vpop.permute.xlu0 %1661
  %1663 = vrot.lane.b32.xlu0 %v880, 64
  %v1664 = vpop.permute.xlu0 %1663
  %1665 = vrot.lane.b32.xlu0 %v885, 64
  %v1666 = vpop.permute.xlu0 %1665
  %1667 = vrot.lane.b32.xlu0 %v890, 64
  %v1668 = vpop.permute.xlu0 %1667
  %1669 = vrot.lane.b32.xlu0 %v895, 64
  %v1670 = vpop.permute.xlu0 %1669
  %1671 = vrot.lane.b32.xlu0 %v900, 64
  %v1672 = vpop.permute.xlu0 %1671
  %1673 = vrot.lane.b32.xlu0 %v905, 64
  %v1674 = vpop.permute.xlu0 %1673
  %1675 = vrot.lane.b32.xlu0 %v910, 64
  %v1676 = vpop.permute.xlu0 %1675
  %v1687 = vsel %vm1296, %v1486, 0
  %v1690 = vsel %vm1296, %v1487, 0
  %v1693 = vsel %vm1296, %v1488, 0
  %v1696 = vsel %vm1296, %v1489, 0
  %v1699 = vsel %vm1296, %v1490, 0
  %v1702 = vsel %vm1296, %v1491, 0
  %v1705 = vsel %vm1296, %v1492, 0
  %v1708 = vsel %vm1296, %v1493, 0
  %v1711 = vsel %vm1296, %v1494, 0
  %1713 = vmatprep.subr.mxu0 0.0
  %1714 = vmatpush1.msra.mxu0 0.0
  %1715 = vmatprep.subr.mxu0 0.0
  %1716 = vmatpush1.msra.mxu0 0.0
  %1717 = vmatprep.subr.mxu0 0.0
  %1718 = vmatpush1.msra.mxu0 0.0
  %1719 = vmatprep.subr.mxu0 0.0
  %1720 = vmatpush1.msra.mxu0 0.0
  %1721 = vmatprep.subr.mxu0 0.0
  %1722 = vmatpush1.msra.mxu0 0.0
  %1723 = vmatprep.subr.mxu0 0.0
  %1724 = vmatpush1.msra.mxu0 0.0
  %1725 = vmatprep.subr.mxu0 0.0
  %1726 = vmatpush1.msra.mxu0 0.0
  %1727 = vmatprep.subr.mxu0 0.0
  %1728 = vmatpush1.msra.mxu0 %v1676
  %1729 = vmatprep.subr.mxu0 0.0
  %1730 = vmatpush1.msra.mxu0 %v1674
  %1731 = vmatprep.subr.mxu0 0.0
  %1732 = vmatpush1.msra.mxu0 %v1672
  %1733 = vmatprep.subr.mxu0 0.0
  %1734 = vmatpush1.msra.mxu0 %v1670
  %1735 = vmatprep.subr.mxu0 0.0
  %1736 = vmatpush1.msra.mxu0 %v1668
  %1737 = vmatprep.subr.mxu0 0.0
  %1738 = vmatpush1.msra.mxu0 %v1666
  %1739 = vmatprep.subr.mxu0 0.0
  %1740 = vmatpush1.msra.mxu0 %v1664
  %1741 = vmatprep.subr.mxu0 0.0
  %1742 = vmatpush1.msra.mxu0 %v1662
  %1743 = vmatprep.subr.mxu0 0.0
  %1744 = vmatpush1.msra.mxu0 %v1660
  %1745 = vmatprep.subr.mxu0 0.0
  %1746 = vmatpush2.msra.mxu0 0.0
  %1747 = vmatprep.subr.mxu0 0.0
  %1748 = vmatpush2.msra.mxu0 0.0
  %1749 = vmatprep.subr.mxu0 0.0
  %1750 = vmatpush2.msra.mxu0 0.0
  %1751 = vmatprep.subr.mxu0 0.0
  %1752 = vmatpush2.msra.mxu0 0.0
  %1753 = vmatprep.subr.mxu0 0.0
  %1754 = vmatpush2.msra.mxu0 0.0
  %1755 = vmatprep.subr.mxu0 0.0
  %1756 = vmatpush2.msra.mxu0 0.0
  %1757 = vmatprep.subr.mxu0 0.0
  %1758 = vmatpush2.msra.mxu0 0.0
  %1759 = vmatprep.subr.mxu0 0.0
  %1760 = vmatpush2.msra.mxu0 0.0
  %1761 = vmatprep.subr.mxu0 0.0
  %1762 = vmatpush2.msra.mxu0 0.0
  %1763 = vmatprep.subr.mxu0 0.0
  %1764 = vmatpush2.msra.mxu0 0.0
  %1765 = vmatprep.subr.mxu0 0.0
  %1766 = vmatpush2.msra.mxu0 0.0
  %1767 = vmatprep.subr.mxu0 0.0
  %1768 = vmatpush2.msra.mxu0 0.0
  %1769 = vmatprep.subr.mxu0 0.0
  %1770 = vmatpush2.msra.mxu0 0.0
  %1771 = vmatprep.subr.mxu0 0.0
  %1772 = vmatpush2.msra.mxu0 0.0
  %1773 = vmatprep.subr.mxu0 0.0
  %1774 = vmatpush2.msra.mxu0 0.0
  %1775 = vmatprep.subr.mxu0 0.0
  %1776 = vmatpush2.msra.mxu0 0.0
  %1777 = vmatprep.mubr.f32.mxu0 0.0
  %1778 = vmatmul.mubr.f32.gmra.mxu0 %v1687
  %v1779 = vpop.f32.mrf.mxu0
  %v1780 = vadd.f32 0.0, %v1779
  %v1781 = vpop.f32.mrf.mxu0
  %1782 = vmatprep.mubr.f32.mxu0 0.0
  %1783 = vmatmul.mubr.f32.gmra.mxu0 %v1690
  %v1784 = vpop.f32.mrf.mxu0
  %v1785 = vadd.f32 0.0, %v1784
  %v1786 = vpop.f32.mrf.mxu0
  %1787 = vmatprep.mubr.f32.mxu0 0.0
  %1788 = vmatmul.mubr.f32.gmra.mxu0 %v1693
  %v1789 = vpop.f32.mrf.mxu0
  %v1790 = vadd.f32 0.0, %v1789
  %v1791 = vpop.f32.mrf.mxu0
  %1792 = vmatprep.mubr.f32.mxu0 0.0
  %1793 = vmatmul.mubr.f32.gmra.mxu0 %v1696
  %v1794 = vpop.f32.mrf.mxu0
  %v1795 = vadd.f32 0.0, %v1794
  %v1796 = vpop.f32.mrf.mxu0
  %1797 = vmatprep.mubr.f32.mxu0 0.0
  %1798 = vmatmul.mubr.f32.gmra.mxu0 %v1699
  %v1799 = vpop.f32.mrf.mxu0
  %v1800 = vadd.f32 0.0, %v1799
  %v1801 = vpop.f32.mrf.mxu0
  %1802 = vmatprep.mubr.f32.mxu0 0.0
  %1803 = vmatmul.mubr.f32.gmra.mxu0 %v1702
  %v1804 = vpop.f32.mrf.mxu0
  %v1805 = vadd.f32 0.0, %v1804
  %v1806 = vpop.f32.mrf.mxu0
  %1807 = vmatprep.mubr.f32.mxu0 0.0
  %1808 = vmatmul.mubr.f32.gmra.mxu0 %v1705
  %v1809 = vpop.f32.mrf.mxu0
  %v1810 = vadd.f32 0.0, %v1809
  %v1811 = vpop.f32.mrf.mxu0
  %1812 = vmatprep.mubr.f32.mxu0 0.0
  %1813 = vmatmul.mubr.f32.gmra.mxu0 %v1708
  %v1814 = vpop.f32.mrf.mxu0
  %v1815 = vadd.f32 0.0, %v1814
  %v1816 = vpop.f32.mrf.mxu0
  %1817 = vmatprep.mubr.f32.mxu0 0.0
  %1818 = vmatmul.mubr.f32.gmra.mxu0 %v1711
  %v1819 = vpop.f32.mrf.mxu0
  %v1820 = vadd.f32 0.0, %v1819
  %v1821 = vpop.f32.mrf.mxu0
  %1822 = vdwg.mxu0
  %1823 = vrot.lane.b32.xlu0 %v913, 120
  %v1824 = vpop.permute.xlu0 %1823
  %1825 = vrot.lane.b32.xlu0 %v914, 120
  %v1826 = vpop.permute.xlu0 %1825
  %1827 = vrot.lane.b32.xlu0 %v915, 120
  %v1828 = vpop.permute.xlu0 %1827
  %1829 = vrot.lane.b32.xlu0 %v916, 120
  %v1830 = vpop.permute.xlu0 %1829
  %1831 = vrot.lane.b32.xlu0 %v917, 120
  %v1832 = vpop.permute.xlu0 %1831
  %1833 = vrot.lane.b32.xlu0 %v918, 120
  %v1834 = vpop.permute.xlu0 %1833
  %1835 = vrot.lane.b32.xlu0 %v919, 120
  %v1836 = vpop.permute.xlu0 %1835
  %1837 = vrot.lane.b32.xlu0 %v920, 120
  %v1838 = vpop.permute.xlu0 %1837
  %1839 = vrot.lane.b32.xlu0 %v921, 120
  %v1840 = vpop.permute.xlu0 %1839
  %1841 = vrot.lane.b32.xlu0 %v825, 88
  %v1842 = vpop.permute.xlu0 %1841
  %1843 = vrot.lane.b32.xlu0 %v830, 88
  %v1844 = vpop.permute.xlu0 %1843
  %1845 = vrot.lane.b32.xlu0 %v835, 88
  %v1846 = vpop.permute.xlu0 %1845
  %1847 = vrot.lane.b32.xlu0 %v840, 88
  %v1848 = vpop.permute.xlu0 %1847
  %1849 = vrot.lane.b32.xlu0 %v845, 88
  %v1850 = vpop.permute.xlu0 %1849
  %1851 = vrot.lane.b32.xlu0 %v850, 88
  %v1852 = vpop.permute.xlu0 %1851
  %1853 = vrot.lane.b32.xlu0 %v855, 88
  %v1854 = vpop.permute.xlu0 %1853
  %1855 = vrot.lane.b32.xlu0 %v860, 88
  %v1856 = vpop.permute.xlu0 %1855
  %1857 = vrot.lane.b32.xlu0 %v865, 88
  %v1858 = vpop.permute.xlu0 %1857
  %v1859 = vsel %vm958, %v1824, 0
  %v1861 = vsel %vm958, %v1826, 0
  %v1863 = vsel %vm958, %v1828, 0
  %v1865 = vsel %vm958, %v1830, 0
  %v1867 = vsel %vm958, %v1832, 0
  %v1869 = vsel %vm958, %v1834, 0
  %v1871 = vsel %vm958, %v1836, 0
  %v1873 = vsel %vm958, %v1838, 0
  %v1875 = vsel %vm958, %v1840, 0
  %v1877 = vsel %vm958, %v1842, 0
  %v1879 = vsel %vm958, %v1844, 0
  %v1881 = vsel %vm958, %v1846, 0
  %v1883 = vsel %vm958, %v1848, 0
  %v1885 = vsel %vm958, %v1850, 0
  %v1887 = vsel %vm958, %v1852, 0
  %v1889 = vsel %vm958, %v1854, 0
  %v1891 = vsel %vm958, %v1856, 0
  %v1893 = vsel %vm958, %v1858, 0
  %1895 = vmatprep.subr.mxu0 0.0
  %1896 = vmatpush1.xpose.msra.mxu0 0.0
  %1897 = vmatprep.subr.mxu0 0.0
  %1898 = vmatpush1.xpose.msra.mxu0 0.0
  %1899 = vmatprep.subr.mxu0 0.0
  %1900 = vmatpush1.xpose.msra.mxu0 0.0
  %1901 = vmatprep.subr.mxu0 0.0
  %1902 = vmatpush1.xpose.msra.mxu0 0.0
  %1903 = vmatprep.subr.mxu0 0.0
  %1904 = vmatpush1.xpose.msra.mxu0 0.0
  %1905 = vmatprep.subr.mxu0 0.0
  %1906 = vmatpush1.xpose.msra.mxu0 0.0
  %1907 = vmatprep.subr.mxu0 0.0
  %1908 = vmatpush1.xpose.msra.mxu0 0.0
  %1909 = vmatprep.subr.mxu0 0.0
  %1910 = vmatpush1.xpose.msra.mxu0 %v1893
  %1911 = vmatprep.subr.mxu0 0.0
  %1912 = vmatpush1.xpose.msra.mxu0 %v1891
  %1913 = vmatprep.subr.mxu0 0.0
  %1914 = vmatpush1.xpose.msra.mxu0 %v1889
  %1915 = vmatprep.subr.mxu0 0.0
  %1916 = vmatpush1.xpose.msra.mxu0 %v1887
  %1917 = vmatprep.subr.mxu0 0.0
  %1918 = vmatpush1.xpose.msra.mxu0 %v1885
  %1919 = vmatprep.subr.mxu0 0.0
  %1920 = vmatpush1.xpose.msra.mxu0 %v1883
  %1921 = vmatprep.subr.mxu0 0.0
  %1922 = vmatpush1.xpose.msra.mxu0 %v1881
  %1923 = vmatprep.subr.mxu0 0.0
  %1924 = vmatpush1.xpose.msra.mxu0 %v1879
  %1925 = vmatprep.subr.mxu0 0.0
  %1926 = vmatpush1.xpose.msra.mxu0 %v1877
  %1927 = vmatprep.subr.mxu0 0.0
  %1928 = vmatpush2.xpose.msra.mxu0 0.0
  %1929 = vmatprep.subr.mxu0 0.0
  %1930 = vmatpush2.xpose.msra.mxu0 0.0
  %1931 = vmatprep.subr.mxu0 0.0
  %1932 = vmatpush2.xpose.msra.mxu0 0.0
  %1933 = vmatprep.subr.mxu0 0.0
  %1934 = vmatpush2.xpose.msra.mxu0 0.0
  %1935 = vmatprep.subr.mxu0 0.0
  %1936 = vmatpush2.xpose.msra.mxu0 0.0
  %1937 = vmatprep.subr.mxu0 0.0
  %1938 = vmatpush2.xpose.msra.mxu0 0.0
  %1939 = vmatprep.subr.mxu0 0.0
  %1940 = vmatpush2.xpose.msra.mxu0 0.0
  %1941 = vmatprep.subr.mxu0 0.0
  %1942 = vmatpush2.xpose.msra.mxu0 0.0
  %1943 = vmatprep.subr.mxu0 0.0
  %1944 = vmatpush2.xpose.msra.mxu0 0.0
  %1945 = vmatprep.subr.mxu0 0.0
  %1946 = vmatpush2.xpose.msra.mxu0 0.0
  %1947 = vmatprep.subr.mxu0 0.0
  %1948 = vmatpush2.xpose.msra.mxu0 0.0
  %1949 = vmatprep.subr.mxu0 0.0
  %1950 = vmatpush2.xpose.msra.mxu0 0.0
  %1951 = vmatprep.subr.mxu0 0.0
  %1952 = vmatpush2.xpose.msra.mxu0 0.0
  %1953 = vmatprep.subr.mxu0 0.0
  %1954 = vmatpush2.xpose.msra.mxu0 0.0
  %1955 = vmatprep.subr.mxu0 0.0
  %1956 = vmatpush2.xpose.msra.mxu0 0.0
  %1957 = vmatprep.subr.mxu0 0.0
  %1958 = vmatpush2.xpose.msra.mxu0 0.0
  %1959 = vmatprep.mubr.f32.mxu0 0.0
  %1960 = vmatmul.mubr.f32.gmra.mxu0 %v1859
  %v1961 = vpop.f32.mrf.mxu0
  %v1962 = vadd.f32 %v385, %v1961
  %v1963 = vpop.f32.mrf.mxu0
  %1964 = vmatprep.mubr.f32.mxu0 0.0
  %1965 = vmatmul.mubr.f32.gmra.mxu0 %v1861
  %v1966 = vpop.f32.mrf.mxu0
  %v1967 = vadd.f32 %v385, %v1966
  %v1968 = vpop.f32.mrf.mxu0
  %1969 = vmatprep.mubr.f32.mxu0 0.0
  %1970 = vmatmul.mubr.f32.gmra.mxu0 %v1863
  %v1971 = vpop.f32.mrf.mxu0
  %v1972 = vadd.f32 %v385, %v1971
  %v1973 = vpop.f32.mrf.mxu0
  %1974 = vmatprep.mubr.f32.mxu0 0.0
  %1975 = vmatmul.mubr.f32.gmra.mxu0 %v1865
  %v1976 = vpop.f32.mrf.mxu0
  %v1977 = vadd.f32 %v385, %v1976
  %v1978 = vpop.f32.mrf.mxu0
  %1979 = vmatprep.mubr.f32.mxu0 0.0
  %1980 = vmatmul.mubr.f32.gmra.mxu0 %v1867
  %v1981 = vpop.f32.mrf.mxu0
  %v1982 = vadd.f32 %v385, %v1981
  %v1983 = vpop.f32.mrf.mxu0
  %1984 = vmatprep.mubr.f32.mxu0 0.0
  %1985 = vmatmul.mubr.f32.gmra.mxu0 %v1869
  %v1986 = vpop.f32.mrf.mxu0
  %v1987 = vadd.f32 %v385, %v1986
  %v1988 = vpop.f32.mrf.mxu0
  %1989 = vmatprep.mubr.f32.mxu0 0.0
  %1990 = vmatmul.mubr.f32.gmra.mxu0 %v1871
  %v1991 = vpop.f32.mrf.mxu0
  %v1992 = vadd.f32 %v385, %v1991
  %v1993 = vpop.f32.mrf.mxu0
  %1994 = vmatprep.mubr.f32.mxu0 0.0
  %1995 = vmatmul.mubr.f32.gmra.mxu0 %v1873
  %v1996 = vpop.f32.mrf.mxu0
  %v1997 = vadd.f32 %v385, %v1996
  %v1998 = vpop.f32.mrf.mxu0
  %1999 = vmatprep.mubr.f32.mxu0 0.0
  %2000 = vmatmul.mubr.f32.gmra.mxu0 %v1875
  %v2001 = vpop.f32.mrf.mxu0
  %v2002 = vadd.f32 %v385, %v2001
  %v2003 = vpop.f32.mrf.mxu0
  %2004 = vdwg.mxu0
  %2005 = vrot.lane.b32.xlu0 %v922, 120
  %v2006 = vpop.permute.xlu0 %2005
  %2007 = vrot.lane.b32.xlu0 %v923, 120
  %v2008 = vpop.permute.xlu0 %2007
  %2009 = vrot.lane.b32.xlu0 %v924, 120
  %v2010 = vpop.permute.xlu0 %2009
  %2011 = vrot.lane.b32.xlu0 %v925, 120
  %v2012 = vpop.permute.xlu0 %2011
  %2013 = vrot.lane.b32.xlu0 %v926, 120
  %v2014 = vpop.permute.xlu0 %2013
  %2015 = vrot.lane.b32.xlu0 %v927, 120
  %v2016 = vpop.permute.xlu0 %2015
  %2017 = vrot.lane.b32.xlu0 %v928, 120
  %v2018 = vpop.permute.xlu0 %2017
  %2019 = vrot.lane.b32.xlu0 %v929, 120
  %v2020 = vpop.permute.xlu0 %2019
  %2021 = vrot.lane.b32.xlu0 %v930, 120
  %v2022 = vpop.permute.xlu0 %2021
  %2023 = vrot.lane.b32.xlu0 %v870, 88
  %v2024 = vpop.permute.xlu0 %2023
  %2025 = vrot.lane.b32.xlu0 %v875, 88
  %v2026 = vpop.permute.xlu0 %2025
  %2027 = vrot.lane.b32.xlu0 %v880, 88
  %v2028 = vpop.permute.xlu0 %2027
  %2029 = vrot.lane.b32.xlu0 %v885, 88
  %v2030 = vpop.permute.xlu0 %2029
  %2031 = vrot.lane.b32.xlu0 %v890, 88
  %v2032 = vpop.permute.xlu0 %2031
  %2033 = vrot.lane.b32.xlu0 %v895, 88
  %v2034 = vpop.permute.xlu0 %2033
  %2035 = vrot.lane.b32.xlu0 %v900, 88
  %v2036 = vpop.permute.xlu0 %2035
  %2037 = vrot.lane.b32.xlu0 %v905, 88
  %v2038 = vpop.permute.xlu0 %2037
  %2039 = vrot.lane.b32.xlu0 %v910, 88
  %v2040 = vpop.permute.xlu0 %2039
  %v2041 = vsel %vm958, %v2006, 0
  %v2043 = vsel %vm958, %v2008, 0
  %v2045 = vsel %vm958, %v2010, 0
  %v2047 = vsel %vm958, %v2012, 0
  %v2049 = vsel %vm958, %v2014, 0
  %v2051 = vsel %vm958, %v2016, 0
  %v2053 = vsel %vm958, %v2018, 0
  %v2055 = vsel %vm958, %v2020, 0
  %v2057 = vsel %vm958, %v2022, 0
  %v2059 = vsel %vm958, %v2024, 0
  %v2061 = vsel %vm958, %v2026, 0
  %v2063 = vsel %vm958, %v2028, 0
  %v2065 = vsel %vm958, %v2030, 0
  %v2067 = vsel %vm958, %v2032, 0
  %v2069 = vsel %vm958, %v2034, 0
  %v2071 = vsel %vm958, %v2036, 0
  %v2073 = vsel %vm958, %v2038, 0
  %v2075 = vsel %vm958, %v2040, 0
  %2077 = vmatprep.subr.mxu0 0.0
  %2078 = vmatpush1.xpose.msra.mxu0 0.0
  %2079 = vmatprep.subr.mxu0 0.0
  %2080 = vmatpush1.xpose.msra.mxu0 0.0
  %2081 = vmatprep.subr.mxu0 0.0
  %2082 = vmatpush1.xpose.msra.mxu0 0.0
  %2083 = vmatprep.subr.mxu0 0.0
  %2084 = vmatpush1.xpose.msra.mxu0 0.0
  %2085 = vmatprep.subr.mxu0 0.0
  %2086 = vmatpush1.xpose.msra.mxu0 0.0
  %2087 = vmatprep.subr.mxu0 0.0
  %2088 = vmatpush1.xpose.msra.mxu0 0.0
  %2089 = vmatprep.subr.mxu0 0.0
  %2090 = vmatpush1.xpose.msra.mxu0 0.0
  %2091 = vmatprep.subr.mxu0 0.0
  %2092 = vmatpush1.xpose.msra.mxu0 %v2075
  %2093 = vmatprep.subr.mxu0 0.0
  %2094 = vmatpush1.xpose.msra.mxu0 %v2073
  %2095 = vmatprep.subr.mxu0 0.0
  %2096 = vmatpush1.xpose.msra.mxu0 %v2071
  %2097 = vmatprep.subr.mxu0 0.0
  %2098 = vmatpush1.xpose.msra.mxu0 %v2069
  %2099 = vmatprep.subr.mxu0 0.0
  %2100 = vmatpush1.xpose.msra.mxu0 %v2067
  %2101 = vmatprep.subr.mxu0 0.0
  %2102 = vmatpush1.xpose.msra.mxu0 %v2065
  %2103 = vmatprep.subr.mxu0 0.0
  %2104 = vmatpush1.xpose.msra.mxu0 %v2063
  %2105 = vmatprep.subr.mxu0 0.0
  %2106 = vmatpush1.xpose.msra.mxu0 %v2061
  %2107 = vmatprep.subr.mxu0 0.0
  %2108 = vmatpush1.xpose.msra.mxu0 %v2059
  %2109 = vmatprep.subr.mxu0 0.0
  %2110 = vmatpush2.xpose.msra.mxu0 0.0
  %2111 = vmatprep.subr.mxu0 0.0
  %2112 = vmatpush2.xpose.msra.mxu0 0.0
  %2113 = vmatprep.subr.mxu0 0.0
  %2114 = vmatpush2.xpose.msra.mxu0 0.0
  %2115 = vmatprep.subr.mxu0 0.0
  %2116 = vmatpush2.xpose.msra.mxu0 0.0
  %2117 = vmatprep.subr.mxu0 0.0
  %2118 = vmatpush2.xpose.msra.mxu0 0.0
  %2119 = vmatprep.subr.mxu0 0.0
  %2120 = vmatpush2.xpose.msra.mxu0 0.0
  %2121 = vmatprep.subr.mxu0 0.0
  %2122 = vmatpush2.xpose.msra.mxu0 0.0
  %2123 = vmatprep.subr.mxu0 0.0
  %2124 = vmatpush2.xpose.msra.mxu0 0.0
  %2125 = vmatprep.subr.mxu0 0.0
  %2126 = vmatpush2.xpose.msra.mxu0 0.0
  %2127 = vmatprep.subr.mxu0 0.0
  %2128 = vmatpush2.xpose.msra.mxu0 0.0
  %2129 = vmatprep.subr.mxu0 0.0
  %2130 = vmatpush2.xpose.msra.mxu0 0.0
  %2131 = vmatprep.subr.mxu0 0.0
  %2132 = vmatpush2.xpose.msra.mxu0 0.0
  %2133 = vmatprep.subr.mxu0 0.0
  %2134 = vmatpush2.xpose.msra.mxu0 0.0
  %2135 = vmatprep.subr.mxu0 0.0
  %2136 = vmatpush2.xpose.msra.mxu0 0.0
  %2137 = vmatprep.subr.mxu0 0.0
  %2138 = vmatpush2.xpose.msra.mxu0 0.0
  %2139 = vmatprep.subr.mxu0 0.0
  %2140 = vmatpush2.xpose.msra.mxu0 0.0
  %2141 = vmatprep.mubr.f32.mxu0 0.0
  %2142 = vmatmul.mubr.f32.gmra.mxu0 %v2041
  %v2143 = vpop.f32.mrf.mxu0
  %v2144 = vadd.f32 %v385, %v2143
  %v2145 = vpop.f32.mrf.mxu0
  %2146 = vmatprep.mubr.f32.mxu0 0.0
  %2147 = vmatmul.mubr.f32.gmra.mxu0 %v2043
  %v2148 = vpop.f32.mrf.mxu0
  %v2149 = vadd.f32 %v385, %v2148
  %v2150 = vpop.f32.mrf.mxu0
  %2151 = vmatprep.mubr.f32.mxu0 0.0
  %2152 = vmatmul.mubr.f32.gmra.mxu0 %v2045
  %v2153 = vpop.f32.mrf.mxu0
  %v2154 = vadd.f32 %v385, %v2153
  %v2155 = vpop.f32.mrf.mxu0
  %2156 = vmatprep.mubr.f32.mxu0 0.0
  %2157 = vmatmul.mubr.f32.gmra.mxu0 %v2047
  %v2158 = vpop.f32.mrf.mxu0
  %v2159 = vadd.f32 %v385, %v2158
  %v2160 = vpop.f32.mrf.mxu0
  %2161 = vmatprep.mubr.f32.mxu0 0.0
  %2162 = vmatmul.mubr.f32.gmra.mxu0 %v2049
  %v2163 = vpop.f32.mrf.mxu0
  %v2164 = vadd.f32 %v385, %v2163
  %v2165 = vpop.f32.mrf.mxu0
  %2166 = vmatprep.mubr.f32.mxu0 0.0
  %2167 = vmatmul.mubr.f32.gmra.mxu0 %v2051
  %v2168 = vpop.f32.mrf.mxu0
  %v2169 = vadd.f32 %v385, %v2168
  %v2170 = vpop.f32.mrf.mxu0
  %2171 = vmatprep.mubr.f32.mxu0 0.0
  %2172 = vmatmul.mubr.f32.gmra.mxu0 %v2053
  %v2173 = vpop.f32.mrf.mxu0
  %v2174 = vadd.f32 %v385, %v2173
  %v2175 = vpop.f32.mrf.mxu0
  %2176 = vmatprep.mubr.f32.mxu0 0.0
  %2177 = vmatmul.mubr.f32.gmra.mxu0 %v2055
  %v2178 = vpop.f32.mrf.mxu0
  %v2179 = vadd.f32 %v385, %v2178
  %v2180 = vpop.f32.mrf.mxu0
  %2181 = vmatprep.mubr.f32.mxu0 0.0
  %2182 = vmatmul.mubr.f32.gmra.mxu0 %v2057
  %v2183 = vpop.f32.mrf.mxu0
  %v2184 = vadd.f32 %v385, %v2183
  %v2185 = vpop.f32.mrf.mxu0
  %2186 = vdwg.mxu0
  %v2187 = vsel %vm1296, %v1962, -inf
  %2188 = vmax.xlane.f32.xlu0 %v2187
  %v2189 = vpop.xlane.xlu0 %2188
  %v2190 = vsel %vm1296, %v1967, -inf
  %2191 = vmax.xlane.f32.xlu0 %v2190
  %v2192 = vpop.xlane.xlu0 %2191
  %v2193 = vsel %vm1296, %v1972, -inf
  %2194 = vmax.xlane.f32.xlu0 %v2193
  %v2195 = vpop.xlane.xlu0 %2194
  %v2196 = vsel %vm1296, %v1977, -inf
  %2197 = vmax.xlane.f32.xlu0 %v2196
  %v2198 = vpop.xlane.xlu0 %2197
  %v2199 = vsel %vm1296, %v1982, -inf
  %2200 = vmax.xlane.f32.xlu0 %v2199
  %v2201 = vpop.xlane.xlu0 %2200
  %v2202 = vsel %vm1296, %v1987, -inf
  %2203 = vmax.xlane.f32.xlu0 %v2202
  %v2204 = vpop.xlane.xlu0 %2203
  %v2205 = vsel %vm1296, %v1992, -inf
  %2206 = vmax.xlane.f32.xlu0 %v2205
  %v2207 = vpop.xlane.xlu0 %2206
  %v2208 = vsel %vm1296, %v1997, -inf
  %2209 = vmax.xlane.f32.xlu0 %v2208
  %v2210 = vpop.xlane.xlu0 %2209
  %v2211 = vsel %vm1296, %v2002, -inf
  %2212 = vmax.xlane.f32.xlu0 %v2211
  %v2213 = vpop.xlane.xlu0 %2212
  %v2214 = vsel %vm1296, %v2144, -inf
  %2215 = vmax.xlane.f32.xlu0 %v2214
  %v2216 = vpop.xlane.xlu0 %2215
  %v2217 = vsel %vm1296, %v2149, -inf
  %2218 = vmax.xlane.f32.xlu0 %v2217
  %v2219 = vpop.xlane.xlu0 %2218
  %v2220 = vsel %vm1296, %v2154, -inf
  %2221 = vmax.xlane.f32.xlu0 %v2220
  %v2222 = vpop.xlane.xlu0 %2221
  %v2223 = vsel %vm1296, %v2159, -inf
  %2224 = vmax.xlane.f32.xlu0 %v2223
  %v2225 = vpop.xlane.xlu0 %2224
  %v2226 = vsel %vm1296, %v2164, -inf
  %2227 = vmax.xlane.f32.xlu0 %v2226
  %v2228 = vpop.xlane.xlu0 %2227
  %v2229 = vsel %vm1296, %v2169, -inf
  %2230 = vmax.xlane.f32.xlu0 %v2229
  %v2231 = vpop.xlane.xlu0 %2230
  %v2232 = vsel %vm1296, %v2174, -inf
  %2233 = vmax.xlane.f32.xlu0 %v2232
  %v2234 = vpop.xlane.xlu0 %2233
  %v2235 = vsel %vm1296, %v2179, -inf
  %2236 = vmax.xlane.f32.xlu0 %v2235
  %v2237 = vpop.xlane.xlu0 %2236
  %v2238 = vsel %vm1296, %v2184, -inf
  %2239 = vmax.xlane.f32.xlu0 %v2238
  %v2240 = vpop.xlane.xlu0 %2239
  %v2241 = vsub.f32 %v1962, %v2189
  %v2242 = vsub.f32 %v1967, %v2192
  %v2243 = vsub.f32 %v1972, %v2195
  %v2244 = vsub.f32 %v1977, %v2198
  %v2245 = vsub.f32 %v1982, %v2201
  %v2246 = vsub.f32 %v1987, %v2204
  %v2247 = vsub.f32 %v1992, %v2207
  %v2248 = vsub.f32 %v1997, %v2210
  %v2249 = vsub.f32 %v2002, %v2213
  %v2250 = vsub.f32 %v2144, %v2216
  %v2251 = vsub.f32 %v2149, %v2219
  %v2252 = vsub.f32 %v2154, %v2222
  %v2253 = vsub.f32 %v2159, %v2225
  %v2254 = vsub.f32 %v2164, %v2228
  %v2255 = vsub.f32 %v2169, %v2231
  %v2256 = vsub.f32 %v2174, %v2234
  %v2257 = vsub.f32 %v2179, %v2237
  %v2258 = vsub.f32 %v2184, %v2240
  %v2259 = vmul.f32 %v2241, 1.442695
  %v2260 = vpow.pop %v2259
  %v2261 = vmul.f32 %v2242, 1.442695
  %v2262 = vpow.pop %v2261
  %v2263 = vmul.f32 %v2243, 1.442695
  %v2264 = vpow.pop %v2263
  %v2265 = vmul.f32 %v2244, 1.442695
  %v2266 = vpow.pop %v2265
  %v2267 = vmul.f32 %v2245, 1.442695
  %v2268 = vpow.pop %v2267
  %v2269 = vmul.f32 %v2246, 1.442695
  %v2270 = vpow.pop %v2269
  %v2271 = vmul.f32 %v2247, 1.442695
  %v2272 = vpow.pop %v2271
  %v2273 = vmul.f32 %v2248, 1.442695
  %v2274 = vpow.pop %v2273
  %v2275 = vmul.f32 %v2249, 1.442695
  %v2276 = vpow.pop %v2275
  %v2277 = vmul.f32 %v2250, 1.442695
  %v2278 = vpow.pop %v2277
  %v2279 = vmul.f32 %v2251, 1.442695
  %v2280 = vpow.pop %v2279
  %v2281 = vmul.f32 %v2252, 1.442695
  %v2282 = vpow.pop %v2281
  %v2283 = vmul.f32 %v2253, 1.442695
  %v2284 = vpow.pop %v2283
  %v2285 = vmul.f32 %v2254, 1.442695
  %v2286 = vpow.pop %v2285
  %v2287 = vmul.f32 %v2255, 1.442695
  %v2288 = vpow.pop %v2287
  %v2289 = vmul.f32 %v2256, 1.442695
  %v2290 = vpow.pop %v2289
  %v2291 = vmul.f32 %v2257, 1.442695
  %v2292 = vpow.pop %v2291
  %v2293 = vmul.f32 %v2258, 1.442695
  %v2294 = vpow.pop %v2293
  %v2295 = vsel %vm1296, %v2260, 0.0
  %2296 = vadd.xlane.f32.xlu0 %v2295
  %v2297 = vpop.xlane.xlu0 %2296
  %v2298 = vsel %vm1296, %v2262, 0.0
  %2299 = vadd.xlane.f32.xlu0 %v2298
  %v2300 = vpop.xlane.xlu0 %2299
  %v2301 = vsel %vm1296, %v2264, 0.0
  %2302 = vadd.xlane.f32.xlu0 %v2301
  %v2303 = vpop.xlane.xlu0 %2302
  %v2304 = vsel %vm1296, %v2266, 0.0
  %2305 = vadd.xlane.f32.xlu0 %v2304
  %v2306 = vpop.xlane.xlu0 %2305
  %v2307 = vsel %vm1296, %v2268, 0.0
  %2308 = vadd.xlane.f32.xlu0 %v2307
  %v2309 = vpop.xlane.xlu0 %2308
  %v2310 = vsel %vm1296, %v2270, 0.0
  %2311 = vadd.xlane.f32.xlu0 %v2310
  %v2312 = vpop.xlane.xlu0 %2311
  %v2313 = vsel %vm1296, %v2272, 0.0
  %2314 = vadd.xlane.f32.xlu0 %v2313
  %v2315 = vpop.xlane.xlu0 %2314
  %v2316 = vsel %vm1296, %v2274, 0.0
  %2317 = vadd.xlane.f32.xlu0 %v2316
  %v2318 = vpop.xlane.xlu0 %2317
  %v2319 = vsel %vm1296, %v2276, 0.0
  %2320 = vadd.xlane.f32.xlu0 %v2319
  %v2321 = vpop.xlane.xlu0 %2320
  %v2322 = vsel %vm1296, %v2278, 0.0
  %2323 = vadd.xlane.f32.xlu0 %v2322
  %v2324 = vpop.xlane.xlu0 %2323
  %v2325 = vsel %vm1296, %v2280, 0.0
  %2326 = vadd.xlane.f32.xlu0 %v2325
  %v2327 = vpop.xlane.xlu0 %2326
  %v2328 = vsel %vm1296, %v2282, 0.0
  %2329 = vadd.xlane.f32.xlu0 %v2328
  %v2330 = vpop.xlane.xlu0 %2329
  %v2331 = vsel %vm1296, %v2284, 0.0
  %2332 = vadd.xlane.f32.xlu0 %v2331
  %v2333 = vpop.xlane.xlu0 %2332
  %v2334 = vsel %vm1296, %v2286, 0.0
  %2335 = vadd.xlane.f32.xlu0 %v2334
  %v2336 = vpop.xlane.xlu0 %2335
  %v2337 = vsel %vm1296, %v2288, 0.0
  %2338 = vadd.xlane.f32.xlu0 %v2337
  %v2339 = vpop.xlane.xlu0 %2338
  %v2340 = vsel %vm1296, %v2290, 0.0
  %2341 = vadd.xlane.f32.xlu0 %v2340
  %v2342 = vpop.xlane.xlu0 %2341
  %v2343 = vsel %vm1296, %v2292, 0.0
  %2344 = vadd.xlane.f32.xlu0 %v2343
  %v2345 = vpop.xlane.xlu0 %2344
  %v2346 = vsel %vm1296, %v2294, 0.0
  %2347 = vadd.xlane.f32.xlu0 %v2346
  %v2348 = vpop.xlane.xlu0 %2347
  %v2349 = vrcp.pop %v2297
  %v2350 = vrcp.pop %v2300
  %v2351 = vrcp.pop %v2303
  %v2352 = vrcp.pop %v2306
  %v2353 = vrcp.pop %v2309
  %v2354 = vrcp.pop %v2312
  %v2355 = vrcp.pop %v2315
  %v2356 = vrcp.pop %v2318
  %v2357 = vrcp.pop %v2321
  %v2358 = vrcp.pop %v2324
  %v2359 = vrcp.pop %v2327
  %v2360 = vrcp.pop %v2330
  %v2361 = vrcp.pop %v2333
  %v2362 = vrcp.pop %v2336
  %v2363 = vrcp.pop %v2339
  %v2364 = vrcp.pop %v2342
  %v2365 = vrcp.pop %v2345
  %v2366 = vrcp.pop %v2348
  %v2367 = vmul.f32 %v2260, %v2349
  %v2368 = vmul.f32 %v2262, %v2350
  %v2369 = vmul.f32 %v2264, %v2351
  %v2370 = vmul.f32 %v2266, %v2352
  %v2371 = vmul.f32 %v2268, %v2353
  %v2372 = vmul.f32 %v2270, %v2354
  %v2373 = vmul.f32 %v2272, %v2355
  %v2374 = vmul.f32 %v2274, %v2356
  %v2375 = vmul.f32 %v2276, %v2357
  %v2376 = vmul.f32 %v2278, %v2358
  %v2377 = vmul.f32 %v2280, %v2359
  %v2378 = vmul.f32 %v2282, %v2360
  %v2379 = vmul.f32 %v2284, %v2361
  %v2380 = vmul.f32 %v2286, %v2362
  %v2381 = vmul.f32 %v2288, %v2363
  %v2382 = vmul.f32 %v2290, %v2364
  %v2383 = vmul.f32 %v2292, %v2365
  %v2384 = vmul.f32 %v2294, %v2366
  %2385 = vrot.lane.b32.xlu0 %v825, 56
  %v2386 = vpop.permute.xlu0 %2385
  %2387 = vrot.lane.b32.xlu0 %v830, 56
  %v2388 = vpop.permute.xlu0 %2387
  %2389 = vrot.lane.b32.xlu0 %v835, 56
  %v2390 = vpop.permute.xlu0 %2389
  %2391 = vrot.lane.b32.xlu0 %v840, 56
  %v2392 = vpop.permute.xlu0 %2391
  %2393 = vrot.lane.b32.xlu0 %v845, 56
  %v2394 = vpop.permute.xlu0 %2393
  %2395 = vrot.lane.b32.xlu0 %v850, 56
  %v2396 = vpop.permute.xlu0 %2395
  %2397 = vrot.lane.b32.xlu0 %v855, 56
  %v2398 = vpop.permute.xlu0 %2397
  %2399 = vrot.lane.b32.xlu0 %v860, 56
  %v2400 = vpop.permute.xlu0 %2399
  %2401 = vrot.lane.b32.xlu0 %v865, 56
  %v2402 = vpop.permute.xlu0 %2401
  %v2413 = vsel %vm1296, %v2367, 0
  %v2416 = vsel %vm1296, %v2368, 0
  %v2419 = vsel %vm1296, %v2369, 0
  %v2422 = vsel %vm1296, %v2370, 0
  %v2425 = vsel %vm1296, %v2371, 0
  %v2428 = vsel %vm1296, %v2372, 0
  %v2431 = vsel %vm1296, %v2373, 0
  %v2434 = vsel %vm1296, %v2374, 0
  %v2437 = vsel %vm1296, %v2375, 0
  %2439 = vmatprep.subr.mxu0 0.0
  %2440 = vmatpush1.msra.mxu0 0.0
  %2441 = vmatprep.subr.mxu0 0.0
  %2442 = vmatpush1.msra.mxu0 0.0
  %2443 = vmatprep.subr.mxu0 0.0
  %2444 = vmatpush1.msra.mxu0 0.0
  %2445 = vmatprep.subr.mxu0 0.0
  %2446 = vmatpush1.msra.mxu0 0.0
  %2447 = vmatprep.subr.mxu0 0.0
  %2448 = vmatpush1.msra.mxu0 0.0
  %2449 = vmatprep.subr.mxu0 0.0
  %2450 = vmatpush1.msra.mxu0 0.0
  %2451 = vmatprep.subr.mxu0 0.0
  %2452 = vmatpush1.msra.mxu0 0.0
  %2453 = vmatprep.subr.mxu0 0.0
  %2454 = vmatpush1.msra.mxu0 %v2402
  %2455 = vmatprep.subr.mxu0 0.0
  %2456 = vmatpush1.msra.mxu0 %v2400
  %2457 = vmatprep.subr.mxu0 0.0
  %2458 = vmatpush1.msra.mxu0 %v2398
  %2459 = vmatprep.subr.mxu0 0.0
  %2460 = vmatpush1.msra.mxu0 %v2396
  %2461 = vmatprep.subr.mxu0 0.0
  %2462 = vmatpush1.msra.mxu0 %v2394
  %2463 = vmatprep.subr.mxu0 0.0
  %2464 = vmatpush1.msra.mxu0 %v2392
  %2465 = vmatprep.subr.mxu0 0.0
  %2466 = vmatpush1.msra.mxu0 %v2390
  %2467 = vmatprep.subr.mxu0 0.0
  %2468 = vmatpush1.msra.mxu0 %v2388
  %2469 = vmatprep.subr.mxu0 0.0
  %2470 = vmatpush1.msra.mxu0 %v2386
  %2471 = vmatprep.subr.mxu0 0.0
  %2472 = vmatpush2.msra.mxu0 0.0
  %2473 = vmatprep.subr.mxu0 0.0
  %2474 = vmatpush2.msra.mxu0 0.0
  %2475 = vmatprep.subr.mxu0 0.0
  %2476 = vmatpush2.msra.mxu0 0.0
  %2477 = vmatprep.subr.mxu0 0.0
  %2478 = vmatpush2.msra.mxu0 0.0
  %2479 = vmatprep.subr.mxu0 0.0
  %2480 = vmatpush2.msra.mxu0 0.0
  %2481 = vmatprep.subr.mxu0 0.0
  %2482 = vmatpush2.msra.mxu0 0.0
  %2483 = vmatprep.subr.mxu0 0.0
  %2484 = vmatpush2.msra.mxu0 0.0
  %2485 = vmatprep.subr.mxu0 0.0
  %2486 = vmatpush2.msra.mxu0 0.0
  %2487 = vmatprep.subr.mxu0 0.0
  %2488 = vmatpush2.msra.mxu0 0.0
  %2489 = vmatprep.subr.mxu0 0.0
  %2490 = vmatpush2.msra.mxu0 0.0
  %2491 = vmatprep.subr.mxu0 0.0
  %2492 = vmatpush2.msra.mxu0 0.0
  %2493 = vmatprep.subr.mxu0 0.0
  %2494 = vmatpush2.msra.mxu0 0.0
  %2495 = vmatprep.subr.mxu0 0.0
  %2496 = vmatpush2.msra.mxu0 0.0
  %2497 = vmatprep.subr.mxu0 0.0
  %2498 = vmatpush2.msra.mxu0 0.0
  %2499 = vmatprep.subr.mxu0 0.0
  %2500 = vmatpush2.msra.mxu0 0.0
  %2501 = vmatprep.subr.mxu0 0.0
  %2502 = vmatpush2.msra.mxu0 0.0
  %2503 = vmatprep.mubr.f32.mxu0 0.0
  %2504 = vmatmul.mubr.f32.gmra.mxu0 %v2413
  %v2505 = vpop.f32.mrf.mxu0
  %v2506 = vadd.f32 0.0, %v2505
  %v2507 = vpop.f32.mrf.mxu0
  %2508 = vmatprep.mubr.f32.mxu0 0.0
  %2509 = vmatmul.mubr.f32.gmra.mxu0 %v2416
  %v2510 = vpop.f32.mrf.mxu0
  %v2511 = vadd.f32 0.0, %v2510
  %v2512 = vpop.f32.mrf.mxu0
  %2513 = vmatprep.mubr.f32.mxu0 0.0
  %2514 = vmatmul.mubr.f32.gmra.mxu0 %v2419
  %v2515 = vpop.f32.mrf.mxu0
  %v2516 = vadd.f32 0.0, %v2515
  %v2517 = vpop.f32.mrf.mxu0
  %2518 = vmatprep.mubr.f32.mxu0 0.0
  %2519 = vmatmul.mubr.f32.gmra.mxu0 %v2422
  %v2520 = vpop.f32.mrf.mxu0
  %v2521 = vadd.f32 0.0, %v2520
  %v2522 = vpop.f32.mrf.mxu0
  %2523 = vmatprep.mubr.f32.mxu0 0.0
  %2524 = vmatmul.mubr.f32.gmra.mxu0 %v2425
  %v2525 = vpop.f32.mrf.mxu0
  %v2526 = vadd.f32 0.0, %v2525
  %v2527 = vpop.f32.mrf.mxu0
  %2528 = vmatprep.mubr.f32.mxu0 0.0
  %2529 = vmatmul.mubr.f32.gmra.mxu0 %v2428
  %v2530 = vpop.f32.mrf.mxu0
  %v2531 = vadd.f32 0.0, %v2530
  %v2532 = vpop.f32.mrf.mxu0
  %2533 = vmatprep.mubr.f32.mxu0 0.0
  %2534 = vmatmul.mubr.f32.gmra.mxu0 %v2431
  %v2535 = vpop.f32.mrf.mxu0
  %v2536 = vadd.f32 0.0, %v2535
  %v2537 = vpop.f32.mrf.mxu0
  %2538 = vmatprep.mubr.f32.mxu0 0.0
  %2539 = vmatmul.mubr.f32.gmra.mxu0 %v2434
  %v2540 = vpop.f32.mrf.mxu0
  %v2541 = vadd.f32 0.0, %v2540
  %v2542 = vpop.f32.mrf.mxu0
  %2543 = vmatprep.mubr.f32.mxu0 0.0
  %2544 = vmatmul.mubr.f32.gmra.mxu0 %v2437
  %v2545 = vpop.f32.mrf.mxu0
  %v2546 = vadd.f32 0.0, %v2545
  %v2547 = vpop.f32.mrf.mxu0
  %2548 = vdwg.mxu0
  %2549 = vrot.lane.b32.xlu0 %v870, 56
  %v2550 = vpop.permute.xlu0 %2549
  %2551 = vrot.lane.b32.xlu0 %v875, 56
  %v2552 = vpop.permute.xlu0 %2551
  %2553 = vrot.lane.b32.xlu0 %v880, 56
  %v2554 = vpop.permute.xlu0 %2553
  %2555 = vrot.lane.b32.xlu0 %v885, 56
  %v2556 = vpop.permute.xlu0 %2555
  %2557 = vrot.lane.b32.xlu0 %v890, 56
  %v2558 = vpop.permute.xlu0 %2557
  %2559 = vrot.lane.b32.xlu0 %v895, 56
  %v2560 = vpop.permute.xlu0 %2559
  %2561 = vrot.lane.b32.xlu0 %v900, 56
  %v2562 = vpop.permute.xlu0 %2561
  %2563 = vrot.lane.b32.xlu0 %v905, 56
  %v2564 = vpop.permute.xlu0 %2563
  %2565 = vrot.lane.b32.xlu0 %v910, 56
  %v2566 = vpop.permute.xlu0 %2565
  %v2577 = vsel %vm1296, %v2376, 0
  %v2580 = vsel %vm1296, %v2377, 0
  %v2583 = vsel %vm1296, %v2378, 0
  %v2586 = vsel %vm1296, %v2379, 0
  %v2589 = vsel %vm1296, %v2380, 0
  %v2592 = vsel %vm1296, %v2381, 0
  %v2595 = vsel %vm1296, %v2382, 0
  %v2598 = vsel %vm1296, %v2383, 0
  %v2601 = vsel %vm1296, %v2384, 0
  %2603 = vmatprep.subr.mxu0 0.0
  %2604 = vmatpush1.msra.mxu0 0.0
  %2605 = vmatprep.subr.mxu0 0.0
  %2606 = vmatpush1.msra.mxu0 0.0
  %2607 = vmatprep.subr.mxu0 0.0
  %2608 = vmatpush1.msra.mxu0 0.0
  %2609 = vmatprep.subr.mxu0 0.0
  %2610 = vmatpush1.msra.mxu0 0.0
  %2611 = vmatprep.subr.mxu0 0.0
  %2612 = vmatpush1.msra.mxu0 0.0
  %2613 = vmatprep.subr.mxu0 0.0
  %2614 = vmatpush1.msra.mxu0 0.0
  %2615 = vmatprep.subr.mxu0 0.0
  %2616 = vmatpush1.msra.mxu0 0.0
  %2617 = vmatprep.subr.mxu0 0.0
  %2618 = vmatpush1.msra.mxu0 %v2566
  %2619 = vmatprep.subr.mxu0 0.0
  %2620 = vmatpush1.msra.mxu0 %v2564
  %2621 = vmatprep.subr.mxu0 0.0
  %2622 = vmatpush1.msra.mxu0 %v2562
  %2623 = vmatprep.subr.mxu0 0.0
  %2624 = vmatpush1.msra.mxu0 %v2560
  %2625 = vmatprep.subr.mxu0 0.0
  %2626 = vmatpush1.msra.mxu0 %v2558
  %2627 = vmatprep.subr.mxu0 0.0
  %2628 = vmatpush1.msra.mxu0 %v2556
  %2629 = vmatprep.subr.mxu0 0.0
  %2630 = vmatpush1.msra.mxu0 %v2554
  %2631 = vmatprep.subr.mxu0 0.0
  %2632 = vmatpush1.msra.mxu0 %v2552
  %2633 = vmatprep.subr.mxu0 0.0
  %2634 = vmatpush1.msra.mxu0 %v2550
  %2635 = vmatprep.subr.mxu0 0.0
  %2636 = vmatpush2.msra.mxu0 0.0
  %2637 = vmatprep.subr.mxu0 0.0
  %2638 = vmatpush2.msra.mxu0 0.0
  %2639 = vmatprep.subr.mxu0 0.0
  %2640 = vmatpush2.msra.mxu0 0.0
  %2641 = vmatprep.subr.mxu0 0.0
  %2642 = vmatpush2.msra.mxu0 0.0
  %2643 = vmatprep.subr.mxu0 0.0
  %2644 = vmatpush2.msra.mxu0 0.0
  %2645 = vmatprep.subr.mxu0 0.0
  %2646 = vmatpush2.msra.mxu0 0.0
  %2647 = vmatprep.subr.mxu0 0.0
  %2648 = vmatpush2.msra.mxu0 0.0
  %2649 = vmatprep.subr.mxu0 0.0
  %2650 = vmatpush2.msra.mxu0 0.0
  %2651 = vmatprep.subr.mxu0 0.0
  %2652 = vmatpush2.msra.mxu0 0.0
  %2653 = vmatprep.subr.mxu0 0.0
  %2654 = vmatpush2.msra.mxu0 0.0
  %2655 = vmatprep.subr.mxu0 0.0
  %2656 = vmatpush2.msra.mxu0 0.0
  %2657 = vmatprep.subr.mxu0 0.0
  %2658 = vmatpush2.msra.mxu0 0.0
  %2659 = vmatprep.subr.mxu0 0.0
  %2660 = vmatpush2.msra.mxu0 0.0
  %2661 = vmatprep.subr.mxu0 0.0
  %2662 = vmatpush2.msra.mxu0 0.0
  %2663 = vmatprep.subr.mxu0 0.0
  %2664 = vmatpush2.msra.mxu0 0.0
  %2665 = vmatprep.subr.mxu0 0.0
  %2666 = vmatpush2.msra.mxu0 0.0
  %2667 = vmatprep.mubr.f32.mxu0 0.0
  %2668 = vmatmul.mubr.f32.gmra.mxu0 %v2577
  %v2669 = vpop.f32.mrf.mxu0
  %v2670 = vadd.f32 0.0, %v2669
  %v2671 = vpop.f32.mrf.mxu0
  %2672 = vmatprep.mubr.f32.mxu0 0.0
  %2673 = vmatmul.mubr.f32.gmra.mxu0 %v2580
  %v2674 = vpop.f32.mrf.mxu0
  %v2675 = vadd.f32 0.0, %v2674
  %v2676 = vpop.f32.mrf.mxu0
  %2677 = vmatprep.mubr.f32.mxu0 0.0
  %2678 = vmatmul.mubr.f32.gmra.mxu0 %v2583
  %v2679 = vpop.f32.mrf.mxu0
  %v2680 = vadd.f32 0.0, %v2679
  %v2681 = vpop.f32.mrf.mxu0
  %2682 = vmatprep.mubr.f32.mxu0 0.0
  %2683 = vmatmul.mubr.f32.gmra.mxu0 %v2586
  %v2684 = vpop.f32.mrf.mxu0
  %v2685 = vadd.f32 0.0, %v2684
  %v2686 = vpop.f32.mrf.mxu0
  %2687 = vmatprep.mubr.f32.mxu0 0.0
  %2688 = vmatmul.mubr.f32.gmra.mxu0 %v2589
  %v2689 = vpop.f32.mrf.mxu0
  %v2690 = vadd.f32 0.0, %v2689
  %v2691 = vpop.f32.mrf.mxu0
  %2692 = vmatprep.mubr.f32.mxu0 0.0
  %2693 = vmatmul.mubr.f32.gmra.mxu0 %v2592
  %v2694 = vpop.f32.mrf.mxu0
  %v2695 = vadd.f32 0.0, %v2694
  %v2696 = vpop.f32.mrf.mxu0
  %2697 = vmatprep.mubr.f32.mxu0 0.0
  %2698 = vmatmul.mubr.f32.gmra.mxu0 %v2595
  %v2699 = vpop.f32.mrf.mxu0
  %v2700 = vadd.f32 0.0, %v2699
  %v2701 = vpop.f32.mrf.mxu0
  %2702 = vmatprep.mubr.f32.mxu0 0.0
  %2703 = vmatmul.mubr.f32.gmra.mxu0 %v2598
  %v2704 = vpop.f32.mrf.mxu0
  %v2705 = vadd.f32 0.0, %v2704
  %v2706 = vpop.f32.mrf.mxu0
  %2707 = vmatprep.mubr.f32.mxu0 0.0
  %2708 = vmatmul.mubr.f32.gmra.mxu0 %v2601
  %v2709 = vpop.f32.mrf.mxu0
  %v2710 = vadd.f32 0.0, %v2709
  %v2711 = vpop.f32.mrf.mxu0
  %2712 = vdwg.mxu0
  %v2714 = vsel %vm958, %v2506, 0
  %v2717 = vsel %vm958, %v2511, 0
  %v2720 = vsel %vm958, %v2516, 0
  %v2723 = vsel %vm958, %v2521, 0
  %v2726 = vsel %vm958, %v2526, 0
  %v2729 = vsel %vm958, %v2531, 0
  %v2732 = vsel %vm958, %v2536, 0
  %v2735 = vsel %vm958, %v2541, 0
  %v2738 = vsel %vm958, %v2546, 0
  %v2741 = vsel %vm958, %v2670, 0
  %v2744 = vsel %vm958, %v2675, 0
  %v2747 = vsel %vm958, %v2680, 0
  %v2750 = vsel %vm958, %v2685, 0
  %v2753 = vsel %vm958, %v2690, 0
  %v2756 = vsel %vm958, %v2695, 0
  %v2759 = vsel %vm958, %v2700, 0
  %v2762 = vsel %vm958, %v2705, 0
  %v2765 = vsel %vm958, %v2710, 0
  %2767 = vmatprep.subr.mxu0 0.0
  %2768 = vmatpush1.msra.mxu0 0.0
  %2769 = vmatprep.subr.mxu0 0.0
  %2770 = vmatpush1.msra.mxu0 0.0
  %2771 = vmatprep.subr.mxu0 0.0
  %2772 = vmatpush1.msra.mxu0 0.0
  %2773 = vmatprep.subr.mxu0 0.0
  %2774 = vmatpush1.msra.mxu0 0.0
  %2775 = vmatprep.subr.mxu0 0.0
  %2776 = vmatpush1.msra.mxu0 0.0
  %2777 = vmatprep.subr.mxu0 0.0
  %2778 = vmatpush1.msra.mxu0 0.0
  %2779 = vmatprep.subr.mxu0 0.0
  %2780 = vmatpush1.msra.mxu0 0.0
  %2781 = vmatprep.subr.mxu0 0.0
  %2782 = vmatpush1.msra.mxu0 0.0
  %2783 = vmatprep.subr.mxu0 0.0
  %2784 = vmatpush1.msra.mxu0 0.0
  %2785 = vmatprep.subr.mxu0 0.0
  %2786 = vmatpush1.msra.mxu0 0.0
  %2787 = vmatprep.subr.mxu0 0.0
  %2788 = vmatpush1.msra.mxu0 0.0
  %2789 = vmatprep.subr.mxu0 0.0
  %2790 = vmatpush1.msra.mxu0 0.0
  %2791 = vmatprep.subr.mxu0 0.0
  %2792 = vmatpush1.msra.mxu0 0.0
  %2793 = vmatprep.subr.mxu0 0.0
  %2794 = vmatpush1.msra.mxu0 0.0
  %2795 = vmatprep.subr.mxu0 0.0
  %2796 = vmatpush1.msra.mxu0 0.0
  %2797 = vmatprep.subr.mxu0 0.0
  %2798 = vmatpush1.msra.mxu0 %v395
  %2799 = vmatprep.subr.mxu0 0.0
  %2800 = vmatpush2.msra.mxu0 0.0
  %2801 = vmatprep.subr.mxu0 0.0
  %2802 = vmatpush2.msra.mxu0 0.0
  %2803 = vmatprep.subr.mxu0 0.0
  %2804 = vmatpush2.msra.mxu0 0.0
  %2805 = vmatprep.subr.mxu0 0.0
  %2806 = vmatpush2.msra.mxu0 0.0
  %2807 = vmatprep.subr.mxu0 0.0
  %2808 = vmatpush2.msra.mxu0 0.0
  %2809 = vmatprep.subr.mxu0 0.0
  %2810 = vmatpush2.msra.mxu0 0.0
  %2811 = vmatprep.subr.mxu0 0.0
  %2812 = vmatpush2.msra.mxu0 0.0
  %2813 = vmatprep.subr.mxu0 0.0
  %2814 = vmatpush2.msra.mxu0 0.0
  %2815 = vmatprep.subr.mxu0 0.0
  %2816 = vmatpush2.msra.mxu0 0.0
  %2817 = vmatprep.subr.mxu0 0.0
  %2818 = vmatpush2.msra.mxu0 0.0
  %2819 = vmatprep.subr.mxu0 0.0
  %2820 = vmatpush2.msra.mxu0 0.0
  %2821 = vmatprep.subr.mxu0 0.0
  %2822 = vmatpush2.msra.mxu0 0.0
  %2823 = vmatprep.subr.mxu0 0.0
  %2824 = vmatpush2.msra.mxu0 0.0
  %2825 = vmatprep.subr.mxu0 0.0
  %2826 = vmatpush2.msra.mxu0 0.0
  %2827 = vmatprep.subr.mxu0 0.0
  %2828 = vmatpush2.msra.mxu0 0.0
  %2829 = vmatprep.subr.mxu0 0.0
  %2830 = vmatpush2.msra.mxu0 0.0
  %2831 = vmatprep.mubr.f32.mxu0 0.0
  %2832 = vmatmul.mubr.f32.gmra.mxu0 %v2714
  %v2833 = vpop.f32.mrf.mxu0
  %v2834 = vadd.f32 0.0, %v2833
  %v2835 = vpop.f32.mrf.mxu0
  %2836 = vmatprep.mubr.f32.mxu0 0.0
  %2837 = vmatmul.mubr.f32.gmra.mxu0 %v2717
  %v2838 = vpop.f32.mrf.mxu0
  %v2839 = vadd.f32 0.0, %v2838
  %v2840 = vpop.f32.mrf.mxu0
  %2841 = vmatprep.mubr.f32.mxu0 0.0
  %2842 = vmatmul.mubr.f32.gmra.mxu0 %v2720
  %v2843 = vpop.f32.mrf.mxu0
  %v2844 = vadd.f32 0.0, %v2843
  %v2845 = vpop.f32.mrf.mxu0
  %2846 = vmatprep.mubr.f32.mxu0 0.0
  %2847 = vmatmul.mubr.f32.gmra.mxu0 %v2723
  %v2848 = vpop.f32.mrf.mxu0
  %v2849 = vadd.f32 0.0, %v2848
  %v2850 = vpop.f32.mrf.mxu0
  %2851 = vmatprep.mubr.f32.mxu0 0.0
  %2852 = vmatmul.mubr.f32.gmra.mxu0 %v2726
  %v2853 = vpop.f32.mrf.mxu0
  %v2854 = vadd.f32 0.0, %v2853
  %v2855 = vpop.f32.mrf.mxu0
  %2856 = vmatprep.mubr.f32.mxu0 0.0
  %2857 = vmatmul.mubr.f32.gmra.mxu0 %v2729
  %v2858 = vpop.f32.mrf.mxu0
  %v2859 = vadd.f32 0.0, %v2858
  %v2860 = vpop.f32.mrf.mxu0
  %2861 = vmatprep.mubr.f32.mxu0 0.0
  %2862 = vmatmul.mubr.f32.gmra.mxu0 %v2732
  %v2863 = vpop.f32.mrf.mxu0
  %v2864 = vadd.f32 0.0, %v2863
  %v2865 = vpop.f32.mrf.mxu0
  %2866 = vmatprep.mubr.f32.mxu0 0.0
  %2867 = vmatmul.mubr.f32.gmra.mxu0 %v2735
  %v2868 = vpop.f32.mrf.mxu0
  %v2869 = vadd.f32 0.0, %v2868
  %v2870 = vpop.f32.mrf.mxu0
  %2871 = vmatprep.mubr.f32.mxu0 0.0
  %2872 = vmatmul.mubr.f32.gmra.mxu0 %v2738
  %v2873 = vpop.f32.mrf.mxu0
  %v2874 = vadd.f32 0.0, %v2873
  %v2875 = vpop.f32.mrf.mxu0
  %2876 = vmatprep.mubr.f32.mxu0 0.0
  %2877 = vmatmul.mubr.f32.gmra.mxu0 %v2741
  %v2878 = vpop.f32.mrf.mxu0
  %v2879 = vadd.f32 0.0, %v2878
  %v2880 = vpop.f32.mrf.mxu0
  %2881 = vmatprep.mubr.f32.mxu0 0.0
  %2882 = vmatmul.mubr.f32.gmra.mxu0 %v2744
  %v2883 = vpop.f32.mrf.mxu0
  %v2884 = vadd.f32 0.0, %v2883
  %v2885 = vpop.f32.mrf.mxu0
  %2886 = vmatprep.mubr.f32.mxu0 0.0
  %2887 = vmatmul.mubr.f32.gmra.mxu0 %v2747
  %v2888 = vpop.f32.mrf.mxu0
  %v2889 = vadd.f32 0.0, %v2888
  %v2890 = vpop.f32.mrf.mxu0
  %2891 = vmatprep.mubr.f32.mxu0 0.0
  %2892 = vmatmul.mubr.f32.gmra.mxu0 %v2750
  %v2893 = vpop.f32.mrf.mxu0
  %v2894 = vadd.f32 0.0, %v2893
  %v2895 = vpop.f32.mrf.mxu0
  %2896 = vmatprep.mubr.f32.mxu0 0.0
  %2897 = vmatmul.mubr.f32.gmra.mxu0 %v2753
  %v2898 = vpop.f32.mrf.mxu0
  %v2899 = vadd.f32 0.0, %v2898
  %v2900 = vpop.f32.mrf.mxu0
  %2901 = vmatprep.mubr.f32.mxu0 0.0
  %2902 = vmatmul.mubr.f32.gmra.mxu0 %v2756
  %v2903 = vpop.f32.mrf.mxu0
  %v2904 = vadd.f32 0.0, %v2903
  %v2905 = vpop.f32.mrf.mxu0
  %2906 = vmatprep.mubr.f32.mxu0 0.0
  %2907 = vmatmul.mubr.f32.gmra.mxu0 %v2759
  %v2908 = vpop.f32.mrf.mxu0
  %v2909 = vadd.f32 0.0, %v2908
  %v2910 = vpop.f32.mrf.mxu0
  %2911 = vmatprep.mubr.f32.mxu0 0.0
  %2912 = vmatmul.mubr.f32.gmra.mxu0 %v2762
  %v2913 = vpop.f32.mrf.mxu0
  %v2914 = vadd.f32 0.0, %v2913
  %v2915 = vpop.f32.mrf.mxu0
  %2916 = vmatprep.mubr.f32.mxu0 0.0
  %2917 = vmatmul.mubr.f32.gmra.mxu0 %v2765
  %v2918 = vpop.f32.mrf.mxu0
  %v2919 = vadd.f32 0.0, %v2918
  %v2920 = vpop.f32.mrf.mxu0
  %2921 = vdwg.mxu0
  %v2923 = vsel %vm958, %v1616, 0
  %v2926 = vsel %vm958, %v1621, 0
  %v2929 = vsel %vm958, %v1626, 0
  %v2932 = vsel %vm958, %v1631, 0
  %v2935 = vsel %vm958, %v1636, 0
  %v2938 = vsel %vm958, %v1641, 0
  %v2941 = vsel %vm958, %v1646, 0
  %v2944 = vsel %vm958, %v1651, 0
  %v2947 = vsel %vm958, %v1656, 0
  %v2950 = vsel %vm958, %v1780, 0
  %v2953 = vsel %vm958, %v1785, 0
  %v2956 = vsel %vm958, %v1790, 0
  %v2959 = vsel %vm958, %v1795, 0
  %v2962 = vsel %vm958, %v1800, 0
  %v2965 = vsel %vm958, %v1805, 0
  %v2968 = vsel %vm958, %v1810, 0
  %v2971 = vsel %vm958, %v1815, 0
  %v2974 = vsel %vm958, %v1820, 0
  %2976 = vmatprep.subr.mxu0 0.0
  %2977 = vmatpush1.msra.mxu0 0.0
  %2978 = vmatprep.subr.mxu0 0.0
  %2979 = vmatpush1.msra.mxu0 0.0
  %2980 = vmatprep.subr.mxu0 0.0
  %2981 = vmatpush1.msra.mxu0 0.0
  %2982 = vmatprep.subr.mxu0 0.0
  %2983 = vmatpush1.msra.mxu0 0.0
  %2984 = vmatprep.subr.mxu0 0.0
  %2985 = vmatpush1.msra.mxu0 0.0
  %2986 = vmatprep.subr.mxu0 0.0
  %2987 = vmatpush1.msra.mxu0 0.0
  %2988 = vmatprep.subr.mxu0 0.0
  %2989 = vmatpush1.msra.mxu0 0.0
  %2990 = vmatprep.subr.mxu0 0.0
  %2991 = vmatpush1.msra.mxu0 0.0
  %2992 = vmatprep.subr.mxu0 0.0
  %2993 = vmatpush1.msra.mxu0 0.0
  %2994 = vmatprep.subr.mxu0 0.0
  %2995 = vmatpush1.msra.mxu0 0.0
  %2996 = vmatprep.subr.mxu0 0.0
  %2997 = vmatpush1.msra.mxu0 0.0
  %2998 = vmatprep.subr.mxu0 0.0
  %2999 = vmatpush1.msra.mxu0 0.0
  %3000 = vmatprep.subr.mxu0 0.0
  %3001 = vmatpush1.msra.mxu0 0.0
  %3002 = vmatprep.subr.mxu0 0.0
  %3003 = vmatpush1.msra.mxu0 0.0
  %3004 = vmatprep.subr.mxu0 0.0
  %3005 = vmatpush1.msra.mxu0 0.0
  %3006 = vmatprep.subr.mxu0 0.0
  %3007 = vmatpush1.msra.mxu0 %v394
  %3008 = vmatprep.subr.mxu0 0.0
  %3009 = vmatpush2.msra.mxu0 0.0
  %3010 = vmatprep.subr.mxu0 0.0
  %3011 = vmatpush2.msra.mxu0 0.0
  %3012 = vmatprep.subr.mxu0 0.0
  %3013 = vmatpush2.msra.mxu0 0.0
  %3014 = vmatprep.subr.mxu0 0.0
  %3015 = vmatpush2.msra.mxu0 0.0
  %3016 = vmatprep.subr.mxu0 0.0
  %3017 = vmatpush2.msra.mxu0 0.0
  %3018 = vmatprep.subr.mxu0 0.0
  %3019 = vmatpush2.msra.mxu0 0.0
  %3020 = vmatprep.subr.mxu0 0.0
  %3021 = vmatpush2.msra.mxu0 0.0
  %3022 = vmatprep.subr.mxu0 0.0
  %3023 = vmatpush2.msra.mxu0 0.0
  %3024 = vmatprep.subr.mxu0 0.0
  %3025 = vmatpush2.msra.mxu0 0.0
  %3026 = vmatprep.subr.mxu0 0.0
  %3027 = vmatpush2.msra.mxu0 0.0
  %3028 = vmatprep.subr.mxu0 0.0
  %3029 = vmatpush2.msra.mxu0 0.0
  %3030 = vmatprep.subr.mxu0 0.0
  %3031 = vmatpush2.msra.mxu0 0.0
  %3032 = vmatprep.subr.mxu0 0.0
  %3033 = vmatpush2.msra.mxu0 0.0
  %3034 = vmatprep.subr.mxu0 0.0
  %3035 = vmatpush2.msra.mxu0 0.0
  %3036 = vmatprep.subr.mxu0 0.0
  %3037 = vmatpush2.msra.mxu0 0.0
  %3038 = vmatprep.subr.mxu0 0.0
  %3039 = vmatpush2.msra.mxu0 0.0
  %3040 = vmatprep.mubr.f32.mxu0 0.0
  %3041 = vmatmul.mubr.f32.gmra.mxu0 %v2923
  %v3042 = vpop.f32.mrf.mxu0
  %v3043 = vadd.f32 %v2834, %v3042
  %v3044 = vpop.f32.mrf.mxu0
  %3045 = vmatprep.mubr.f32.mxu0 0.0
  %3046 = vmatmul.mubr.f32.gmra.mxu0 %v2926
  %v3047 = vpop.f32.mrf.mxu0
  %v3048 = vadd.f32 %v2839, %v3047
  %v3049 = vpop.f32.mrf.mxu0
  %3050 = vmatprep.mubr.f32.mxu0 0.0
  %3051 = vmatmul.mubr.f32.gmra.mxu0 %v2929
  %v3052 = vpop.f32.mrf.mxu0
  %v3053 = vadd.f32 %v2844, %v3052
  %v3054 = vpop.f32.mrf.mxu0
  %3055 = vmatprep.mubr.f32.mxu0 0.0
  %3056 = vmatmul.mubr.f32.gmra.mxu0 %v2932
  %v3057 = vpop.f32.mrf.mxu0
  %v3058 = vadd.f32 %v2849, %v3057
  %v3059 = vpop.f32.mrf.mxu0
  %3060 = vmatprep.mubr.f32.mxu0 0.0
  %3061 = vmatmul.mubr.f32.gmra.mxu0 %v2935
  %v3062 = vpop.f32.mrf.mxu0
  %v3063 = vadd.f32 %v2854, %v3062
  %v3064 = vpop.f32.mrf.mxu0
  %3065 = vmatprep.mubr.f32.mxu0 0.0
  %3066 = vmatmul.mubr.f32.gmra.mxu0 %v2938
  %v3067 = vpop.f32.mrf.mxu0
  %v3068 = vadd.f32 %v2859, %v3067
  %v3069 = vpop.f32.mrf.mxu0
  %3070 = vmatprep.mubr.f32.mxu0 0.0
  %3071 = vmatmul.mubr.f32.gmra.mxu0 %v2941
  %v3072 = vpop.f32.mrf.mxu0
  %v3073 = vadd.f32 %v2864, %v3072
  %v3074 = vpop.f32.mrf.mxu0
  %3075 = vmatprep.mubr.f32.mxu0 0.0
  %3076 = vmatmul.mubr.f32.gmra.mxu0 %v2944
  %v3077 = vpop.f32.mrf.mxu0
  %v3078 = vadd.f32 %v2869, %v3077
  %v3079 = vpop.f32.mrf.mxu0
  %3080 = vmatprep.mubr.f32.mxu0 0.0
  %3081 = vmatmul.mubr.f32.gmra.mxu0 %v2947
  %v3082 = vpop.f32.mrf.mxu0
  %v3083 = vadd.f32 %v2874, %v3082
  %v3084 = vpop.f32.mrf.mxu0
  %3085 = vmatprep.mubr.f32.mxu0 0.0
  %3086 = vmatmul.mubr.f32.gmra.mxu0 %v2950
  %v3087 = vpop.f32.mrf.mxu0
  %v3088 = vadd.f32 %v2879, %v3087
  %v3089 = vpop.f32.mrf.mxu0
  %3090 = vmatprep.mubr.f32.mxu0 0.0
  %3091 = vmatmul.mubr.f32.gmra.mxu0 %v2953
  %v3092 = vpop.f32.mrf.mxu0
  %v3093 = vadd.f32 %v2884, %v3092
  %v3094 = vpop.f32.mrf.mxu0
  %3095 = vmatprep.mubr.f32.mxu0 0.0
  %3096 = vmatmul.mubr.f32.gmra.mxu0 %v2956
  %v3097 = vpop.f32.mrf.mxu0
  %v3098 = vadd.f32 %v2889, %v3097
  %v3099 = vpop.f32.mrf.mxu0
  %3100 = vmatprep.mubr.f32.mxu0 0.0
  %3101 = vmatmul.mubr.f32.gmra.mxu0 %v2959
  %v3102 = vpop.f32.mrf.mxu0
  %v3103 = vadd.f32 %v2894, %v3102
  %v3104 = vpop.f32.mrf.mxu0
  %3105 = vmatprep.mubr.f32.mxu0 0.0
  %3106 = vmatmul.mubr.f32.gmra.mxu0 %v2962
  %v3107 = vpop.f32.mrf.mxu0
  %v3108 = vadd.f32 %v2899, %v3107
  %v3109 = vpop.f32.mrf.mxu0
  %3110 = vmatprep.mubr.f32.mxu0 0.0
  %3111 = vmatmul.mubr.f32.gmra.mxu0 %v2965
  %v3112 = vpop.f32.mrf.mxu0
  %v3113 = vadd.f32 %v2904, %v3112
  %v3114 = vpop.f32.mrf.mxu0
  %3115 = vmatprep.mubr.f32.mxu0 0.0
  %3116 = vmatmul.mubr.f32.gmra.mxu0 %v2968
  %v3117 = vpop.f32.mrf.mxu0
  %v3118 = vadd.f32 %v2909, %v3117
  %v3119 = vpop.f32.mrf.mxu0
  %3120 = vmatprep.mubr.f32.mxu0 0.0
  %3121 = vmatmul.mubr.f32.gmra.mxu0 %v2971
  %v3122 = vpop.f32.mrf.mxu0
  %v3123 = vadd.f32 %v2914, %v3122
  %v3124 = vpop.f32.mrf.mxu0
  %3125 = vmatprep.mubr.f32.mxu0 0.0
  %3126 = vmatmul.mubr.f32.gmra.mxu0 %v2974
  %v3127 = vpop.f32.mrf.mxu0
  %v3128 = vadd.f32 %v2919, %v3127
  %v3129 = vpop.f32.mrf.mxu0
  %3130 = vdwg.mxu0
  %3131 = vrot.lane.b32.xlu0 %v913, 112
  %v3132 = vpop.permute.xlu0 %3131
  %3133 = vrot.lane.b32.xlu0 %v914, 112
  %v3134 = vpop.permute.xlu0 %3133
  %3135 = vrot.lane.b32.xlu0 %v915, 112
  %v3136 = vpop.permute.xlu0 %3135
  %3137 = vrot.lane.b32.xlu0 %v916, 112
  %v3138 = vpop.permute.xlu0 %3137
  %3139 = vrot.lane.b32.xlu0 %v917, 112
  %v3140 = vpop.permute.xlu0 %3139
  %3141 = vrot.lane.b32.xlu0 %v918, 112
  %v3142 = vpop.permute.xlu0 %3141
  %3143 = vrot.lane.b32.xlu0 %v919, 112
  %v3144 = vpop.permute.xlu0 %3143
  %3145 = vrot.lane.b32.xlu0 %v920, 112
  %v3146 = vpop.permute.xlu0 %3145
  %3147 = vrot.lane.b32.xlu0 %v921, 112
  %v3148 = vpop.permute.xlu0 %3147
  %3149 = vrot.lane.b32.xlu0 %v825, 80
  %v3150 = vpop.permute.xlu0 %3149
  %3151 = vrot.lane.b32.xlu0 %v830, 80
  %v3152 = vpop.permute.xlu0 %3151
  %3153 = vrot.lane.b32.xlu0 %v835, 80
  %v3154 = vpop.permute.xlu0 %3153
  %3155 = vrot.lane.b32.xlu0 %v840, 80
  %v3156 = vpop.permute.xlu0 %3155
  %3157 = vrot.lane.b32.xlu0 %v845, 80
  %v3158 = vpop.permute.xlu0 %3157
  %3159 = vrot.lane.b32.xlu0 %v850, 80
  %v3160 = vpop.permute.xlu0 %3159
  %3161 = vrot.lane.b32.xlu0 %v855, 80
  %v3162 = vpop.permute.xlu0 %3161
  %3163 = vrot.lane.b32.xlu0 %v860, 80
  %v3164 = vpop.permute.xlu0 %3163
  %3165 = vrot.lane.b32.xlu0 %v865, 80
  %v3166 = vpop.permute.xlu0 %3165
  %v3167 = vsel %vm958, %v3132, 0
  %v3169 = vsel %vm958, %v3134, 0
  %v3171 = vsel %vm958, %v3136, 0
  %v3173 = vsel %vm958, %v3138, 0
  %v3175 = vsel %vm958, %v3140, 0
  %v3177 = vsel %vm958, %v3142, 0
  %v3179 = vsel %vm958, %v3144, 0
  %v3181 = vsel %vm958, %v3146, 0
  %v3183 = vsel %vm958, %v3148, 0
  %v3185 = vsel %vm958, %v3150, 0
  %v3187 = vsel %vm958, %v3152, 0
  %v3189 = vsel %vm958, %v3154, 0
  %v3191 = vsel %vm958, %v3156, 0
  %v3193 = vsel %vm958, %v3158, 0
  %v3195 = vsel %vm958, %v3160, 0
  %v3197 = vsel %vm958, %v3162, 0
  %v3199 = vsel %vm958, %v3164, 0
  %v3201 = vsel %vm958, %v3166, 0
  %3203 = vmatprep.subr.mxu0 0.0
  %3204 = vmatpush1.xpose.msra.mxu0 0.0
  %3205 = vmatprep.subr.mxu0 0.0
  %3206 = vmatpush1.xpose.msra.mxu0 0.0
  %3207 = vmatprep.subr.mxu0 0.0
  %3208 = vmatpush1.xpose.msra.mxu0 0.0
  %3209 = vmatprep.subr.mxu0 0.0
  %3210 = vmatpush1.xpose.msra.mxu0 0.0
  %3211 = vmatprep.subr.mxu0 0.0
  %3212 = vmatpush1.xpose.msra.mxu0 0.0
  %3213 = vmatprep.subr.mxu0 0.0
  %3214 = vmatpush1.xpose.msra.mxu0 0.0
  %3215 = vmatprep.subr.mxu0 0.0
  %3216 = vmatpush1.xpose.msra.mxu0 0.0
  %3217 = vmatprep.subr.mxu0 0.0
  %3218 = vmatpush1.xpose.msra.mxu0 %v3201
  %3219 = vmatprep.subr.mxu0 0.0
  %3220 = vmatpush1.xpose.msra.mxu0 %v3199
  %3221 = vmatprep.subr.mxu0 0.0
  %3222 = vmatpush1.xpose.msra.mxu0 %v3197
  %3223 = vmatprep.subr.mxu0 0.0
  %3224 = vmatpush1.xpose.msra.mxu0 %v3195
  %3225 = vmatprep.subr.mxu0 0.0
  %3226 = vmatpush1.xpose.msra.mxu0 %v3193
  %3227 = vmatprep.subr.mxu0 0.0
  %3228 = vmatpush1.xpose.msra.mxu0 %v3191
  %3229 = vmatprep.subr.mxu0 0.0
  %3230 = vmatpush1.xpose.msra.mxu0 %v3189
  %3231 = vmatprep.subr.mxu0 0.0
  %3232 = vmatpush1.xpose.msra.mxu0 %v3187
  %3233 = vmatprep.subr.mxu0 0.0
  %3234 = vmatpush1.xpose.msra.mxu0 %v3185
  %3235 = vmatprep.subr.mxu0 0.0
  %3236 = vmatpush2.xpose.msra.mxu0 0.0
  %3237 = vmatprep.subr.mxu0 0.0
  %3238 = vmatpush2.xpose.msra.mxu0 0.0
  %3239 = vmatprep.subr.mxu0 0.0
  %3240 = vmatpush2.xpose.msra.mxu0 0.0
  %3241 = vmatprep.subr.mxu0 0.0
  %3242 = vmatpush2.xpose.msra.mxu0 0.0
  %3243 = vmatprep.subr.mxu0 0.0
  %3244 = vmatpush2.xpose.msra.mxu0 0.0
  %3245 = vmatprep.subr.mxu0 0.0
  %3246 = vmatpush2.xpose.msra.mxu0 0.0
  %3247 = vmatprep.subr.mxu0 0.0
  %3248 = vmatpush2.xpose.msra.mxu0 0.0
  %3249 = vmatprep.subr.mxu0 0.0
  %3250 = vmatpush2.xpose.msra.mxu0 0.0
  %3251 = vmatprep.subr.mxu0 0.0
  %3252 = vmatpush2.xpose.msra.mxu0 0.0
  %3253 = vmatprep.subr.mxu0 0.0
  %3254 = vmatpush2.xpose.msra.mxu0 0.0
  %3255 = vmatprep.subr.mxu0 0.0
  %3256 = vmatpush2.xpose.msra.mxu0 0.0
  %3257 = vmatprep.subr.mxu0 0.0
  %3258 = vmatpush2.xpose.msra.mxu0 0.0
  %3259 = vmatprep.subr.mxu0 0.0
  %3260 = vmatpush2.xpose.msra.mxu0 0.0
  %3261 = vmatprep.subr.mxu0 0.0
  %3262 = vmatpush2.xpose.msra.mxu0 0.0
  %3263 = vmatprep.subr.mxu0 0.0
  %3264 = vmatpush2.xpose.msra.mxu0 0.0
  %3265 = vmatprep.subr.mxu0 0.0
  %3266 = vmatpush2.xpose.msra.mxu0 0.0
  %3267 = vmatprep.mubr.f32.mxu0 0.0
  %3268 = vmatmul.mubr.f32.gmra.mxu0 %v3167
  %v3269 = vpop.f32.mrf.mxu0
  %v3270 = vadd.f32 %v385, %v3269
  %v3271 = vpop.f32.mrf.mxu0
  %3272 = vmatprep.mubr.f32.mxu0 0.0
  %3273 = vmatmul.mubr.f32.gmra.mxu0 %v3169
  %v3274 = vpop.f32.mrf.mxu0
  %v3275 = vadd.f32 %v385, %v3274
  %v3276 = vpop.f32.mrf.mxu0
  %3277 = vmatprep.mubr.f32.mxu0 0.0
  %3278 = vmatmul.mubr.f32.gmra.mxu0 %v3171
  %v3279 = vpop.f32.mrf.mxu0
  %v3280 = vadd.f32 %v385, %v3279
  %v3281 = vpop.f32.mrf.mxu0
  %3282 = vmatprep.mubr.f32.mxu0 0.0
  %3283 = vmatmul.mubr.f32.gmra.mxu0 %v3173
  %v3284 = vpop.f32.mrf.mxu0
  %v3285 = vadd.f32 %v385, %v3284
  %v3286 = vpop.f32.mrf.mxu0
  %3287 = vmatprep.mubr.f32.mxu0 0.0
  %3288 = vmatmul.mubr.f32.gmra.mxu0 %v3175
  %v3289 = vpop.f32.mrf.mxu0
  %v3290 = vadd.f32 %v385, %v3289
  %v3291 = vpop.f32.mrf.mxu0
  %3292 = vmatprep.mubr.f32.mxu0 0.0
  %3293 = vmatmul.mubr.f32.gmra.mxu0 %v3177
  %v3294 = vpop.f32.mrf.mxu0
  %v3295 = vadd.f32 %v385, %v3294
  %v3296 = vpop.f32.mrf.mxu0
  %3297 = vmatprep.mubr.f32.mxu0 0.0
  %3298 = vmatmul.mubr.f32.gmra.mxu0 %v3179
  %v3299 = vpop.f32.mrf.mxu0
  %v3300 = vadd.f32 %v385, %v3299
  %v3301 = vpop.f32.mrf.mxu0
  %3302 = vmatprep.mubr.f32.mxu0 0.0
  %3303 = vmatmul.mubr.f32.gmra.mxu0 %v3181
  %v3304 = vpop.f32.mrf.mxu0
  %v3305 = vadd.f32 %v385, %v3304
  %v3306 = vpop.f32.mrf.mxu0
  %3307 = vmatprep.mubr.f32.mxu0 0.0
  %3308 = vmatmul.mubr.f32.gmra.mxu0 %v3183
  %v3309 = vpop.f32.mrf.mxu0
  %v3310 = vadd.f32 %v385, %v3309
  %v3311 = vpop.f32.mrf.mxu0
  %3312 = vdwg.mxu0
  %3313 = vrot.lane.b32.xlu0 %v922, 112
  %v3314 = vpop.permute.xlu0 %3313
  %3315 = vrot.lane.b32.xlu0 %v923, 112
  %v3316 = vpop.permute.xlu0 %3315
  %3317 = vrot.lane.b32.xlu0 %v924, 112
  %v3318 = vpop.permute.xlu0 %3317
  %3319 = vrot.lane.b32.xlu0 %v925, 112
  %v3320 = vpop.permute.xlu0 %3319
  %3321 = vrot.lane.b32.xlu0 %v926, 112
  %v3322 = vpop.permute.xlu0 %3321
  %3323 = vrot.lane.b32.xlu0 %v927, 112
  %v3324 = vpop.permute.xlu0 %3323
  %3325 = vrot.lane.b32.xlu0 %v928, 112
  %v3326 = vpop.permute.xlu0 %3325
  %3327 = vrot.lane.b32.xlu0 %v929, 112
  %v3328 = vpop.permute.xlu0 %3327
  %3329 = vrot.lane.b32.xlu0 %v930, 112
  %v3330 = vpop.permute.xlu0 %3329
  %3331 = vrot.lane.b32.xlu0 %v870, 80
  %v3332 = vpop.permute.xlu0 %3331
  %3333 = vrot.lane.b32.xlu0 %v875, 80
  %v3334 = vpop.permute.xlu0 %3333
  %3335 = vrot.lane.b32.xlu0 %v880, 80
  %v3336 = vpop.permute.xlu0 %3335
  %3337 = vrot.lane.b32.xlu0 %v885, 80
  %v3338 = vpop.permute.xlu0 %3337
  %3339 = vrot.lane.b32.xlu0 %v890, 80
  %v3340 = vpop.permute.xlu0 %3339
  %3341 = vrot.lane.b32.xlu0 %v895, 80
  %v3342 = vpop.permute.xlu0 %3341
  %3343 = vrot.lane.b32.xlu0 %v900, 80
  %v3344 = vpop.permute.xlu0 %3343
  %3345 = vrot.lane.b32.xlu0 %v905, 80
  %v3346 = vpop.permute.xlu0 %3345
  %3347 = vrot.lane.b32.xlu0 %v910, 80
  %v3348 = vpop.permute.xlu0 %3347
  %v3349 = vsel %vm958, %v3314, 0
  %v3351 = vsel %vm958, %v3316, 0
  %v3353 = vsel %vm958, %v3318, 0
  %v3355 = vsel %vm958, %v3320, 0
  %v3357 = vsel %vm958, %v3322, 0
  %v3359 = vsel %vm958, %v3324, 0
  %v3361 = vsel %vm958, %v3326, 0
  %v3363 = vsel %vm958, %v3328, 0
  %v3365 = vsel %vm958, %v3330, 0
  %v3367 = vsel %vm958, %v3332, 0
  %v3369 = vsel %vm958, %v3334, 0
  %v3371 = vsel %vm958, %v3336, 0
  %v3373 = vsel %vm958, %v3338, 0
  %v3375 = vsel %vm958, %v3340, 0
  %v3377 = vsel %vm958, %v3342, 0
  %v3379 = vsel %vm958, %v3344, 0
  %v3381 = vsel %vm958, %v3346, 0
  %v3383 = vsel %vm958, %v3348, 0
  %3385 = vmatprep.subr.mxu0 0.0
  %3386 = vmatpush1.xpose.msra.mxu0 0.0
  %3387 = vmatprep.subr.mxu0 0.0
  %3388 = vmatpush1.xpose.msra.mxu0 0.0
  %3389 = vmatprep.subr.mxu0 0.0
  %3390 = vmatpush1.xpose.msra.mxu0 0.0
  %3391 = vmatprep.subr.mxu0 0.0
  %3392 = vmatpush1.xpose.msra.mxu0 0.0
  %3393 = vmatprep.subr.mxu0 0.0
  %3394 = vmatpush1.xpose.msra.mxu0 0.0
  %3395 = vmatprep.subr.mxu0 0.0
  %3396 = vmatpush1.xpose.msra.mxu0 0.0
  %3397 = vmatprep.subr.mxu0 0.0
  %3398 = vmatpush1.xpose.msra.mxu0 0.0
  %3399 = vmatprep.subr.mxu0 0.0
  %3400 = vmatpush1.xpose.msra.mxu0 %v3383
  %3401 = vmatprep.subr.mxu0 0.0
  %3402 = vmatpush1.xpose.msra.mxu0 %v3381
  %3403 = vmatprep.subr.mxu0 0.0
  %3404 = vmatpush1.xpose.msra.mxu0 %v3379
  %3405 = vmatprep.subr.mxu0 0.0
  %3406 = vmatpush1.xpose.msra.mxu0 %v3377
  %3407 = vmatprep.subr.mxu0 0.0
  %3408 = vmatpush1.xpose.msra.mxu0 %v3375
  %3409 = vmatprep.subr.mxu0 0.0
  %3410 = vmatpush1.xpose.msra.mxu0 %v3373
  %3411 = vmatprep.subr.mxu0 0.0
  %3412 = vmatpush1.xpose.msra.mxu0 %v3371
  %3413 = vmatprep.subr.mxu0 0.0
  %3414 = vmatpush1.xpose.msra.mxu0 %v3369
  %3415 = vmatprep.subr.mxu0 0.0
  %3416 = vmatpush1.xpose.msra.mxu0 %v3367
  %3417 = vmatprep.subr.mxu0 0.0
  %3418 = vmatpush2.xpose.msra.mxu0 0.0
  %3419 = vmatprep.subr.mxu0 0.0
  %3420 = vmatpush2.xpose.msra.mxu0 0.0
  %3421 = vmatprep.subr.mxu0 0.0
  %3422 = vmatpush2.xpose.msra.mxu0 0.0
  %3423 = vmatprep.subr.mxu0 0.0
  %3424 = vmatpush2.xpose.msra.mxu0 0.0
  %3425 = vmatprep.subr.mxu0 0.0
  %3426 = vmatpush2.xpose.msra.mxu0 0.0
  %3427 = vmatprep.subr.mxu0 0.0
  %3428 = vmatpush2.xpose.msra.mxu0 0.0
  %3429 = vmatprep.subr.mxu0 0.0
  %3430 = vmatpush2.xpose.msra.mxu0 0.0
  %3431 = vmatprep.subr.mxu0 0.0
  %3432 = vmatpush2.xpose.msra.mxu0 0.0
  %3433 = vmatprep.subr.mxu0 0.0
  %3434 = vmatpush2.xpose.msra.mxu0 0.0
  %3435 = vmatprep.subr.mxu0 0.0
  %3436 = vmatpush2.xpose.msra.mxu0 0.0
  %3437 = vmatprep.subr.mxu0 0.0
  %3438 = vmatpush2.xpose.msra.mxu0 0.0
  %3439 = vmatprep.subr.mxu0 0.0
  %3440 = vmatpush2.xpose.msra.mxu0 0.0
  %3441 = vmatprep.subr.mxu0 0.0
  %3442 = vmatpush2.xpose.msra.mxu0 0.0
  %3443 = vmatprep.subr.mxu0 0.0
  %3444 = vmatpush2.xpose.msra.mxu0 0.0
  %3445 = vmatprep.subr.mxu0 0.0
  %3446 = vmatpush2.xpose.msra.mxu0 0.0
  %3447 = vmatprep.subr.mxu0 0.0
  %3448 = vmatpush2.xpose.msra.mxu0 0.0
  %3449 = vmatprep.mubr.f32.mxu0 0.0
  %3450 = vmatmul.mubr.f32.gmra.mxu0 %v3349
  %v3451 = vpop.f32.mrf.mxu0
  %v3452 = vadd.f32 %v385, %v3451
  %v3453 = vpop.f32.mrf.mxu0
  %3454 = vmatprep.mubr.f32.mxu0 0.0
  %3455 = vmatmul.mubr.f32.gmra.mxu0 %v3351
  %v3456 = vpop.f32.mrf.mxu0
  %v3457 = vadd.f32 %v385, %v3456
  %v3458 = vpop.f32.mrf.mxu0
  %3459 = vmatprep.mubr.f32.mxu0 0.0
  %3460 = vmatmul.mubr.f32.gmra.mxu0 %v3353
  %v3461 = vpop.f32.mrf.mxu0
  %v3462 = vadd.f32 %v385, %v3461
  %v3463 = vpop.f32.mrf.mxu0
  %3464 = vmatprep.mubr.f32.mxu0 0.0
  %3465 = vmatmul.mubr.f32.gmra.mxu0 %v3355
  %v3466 = vpop.f32.mrf.mxu0
  %v3467 = vadd.f32 %v385, %v3466
  %v3468 = vpop.f32.mrf.mxu0
  %3469 = vmatprep.mubr.f32.mxu0 0.0
  %3470 = vmatmul.mubr.f32.gmra.mxu0 %v3357
  %v3471 = vpop.f32.mrf.mxu0
  %v3472 = vadd.f32 %v385, %v3471
  %v3473 = vpop.f32.mrf.mxu0
  %3474 = vmatprep.mubr.f32.mxu0 0.0
  %3475 = vmatmul.mubr.f32.gmra.mxu0 %v3359
  %v3476 = vpop.f32.mrf.mxu0
  %v3477 = vadd.f32 %v385, %v3476
  %v3478 = vpop.f32.mrf.mxu0
  %3479 = vmatprep.mubr.f32.mxu0 0.0
  %3480 = vmatmul.mubr.f32.gmra.mxu0 %v3361
  %v3481 = vpop.f32.mrf.mxu0
  %v3482 = vadd.f32 %v385, %v3481
  %v3483 = vpop.f32.mrf.mxu0
  %3484 = vmatprep.mubr.f32.mxu0 0.0
  %3485 = vmatmul.mubr.f32.gmra.mxu0 %v3363
  %v3486 = vpop.f32.mrf.mxu0
  %v3487 = vadd.f32 %v385, %v3486
  %v3488 = vpop.f32.mrf.mxu0
  %3489 = vmatprep.mubr.f32.mxu0 0.0
  %3490 = vmatmul.mubr.f32.gmra.mxu0 %v3365
  %v3491 = vpop.f32.mrf.mxu0
  %v3492 = vadd.f32 %v385, %v3491
  %v3493 = vpop.f32.mrf.mxu0
  %3494 = vdwg.mxu0
  %v3495 = vsel %vm1296, %v3270, -inf
  %3496 = vmax.xlane.f32.xlu0 %v3495
  %v3497 = vpop.xlane.xlu0 %3496
  %v3498 = vsel %vm1296, %v3275, -inf
  %3499 = vmax.xlane.f32.xlu0 %v3498
  %v3500 = vpop.xlane.xlu0 %3499
  %v3501 = vsel %vm1296, %v3280, -inf
  %3502 = vmax.xlane.f32.xlu0 %v3501
  %v3503 = vpop.xlane.xlu0 %3502
  %v3504 = vsel %vm1296, %v3285, -inf
  %3505 = vmax.xlane.f32.xlu0 %v3504
  %v3506 = vpop.xlane.xlu0 %3505
  %v3507 = vsel %vm1296, %v3290, -inf
  %3508 = vmax.xlane.f32.xlu0 %v3507
  %v3509 = vpop.xlane.xlu0 %3508
  %v3510 = vsel %vm1296, %v3295, -inf
  %3511 = vmax.xlane.f32.xlu0 %v3510
  %v3512 = vpop.xlane.xlu0 %3511
  %v3513 = vsel %vm1296, %v3300, -inf
  %3514 = vmax.xlane.f32.xlu0 %v3513
  %v3515 = vpop.xlane.xlu0 %3514
  %v3516 = vsel %vm1296, %v3305, -inf
  %3517 = vmax.xlane.f32.xlu0 %v3516
  %v3518 = vpop.xlane.xlu0 %3517
  %v3519 = vsel %vm1296, %v3310, -inf
  %3520 = vmax.xlane.f32.xlu0 %v3519
  %v3521 = vpop.xlane.xlu0 %3520
  %v3522 = vsel %vm1296, %v3452, -inf
  %3523 = vmax.xlane.f32.xlu0 %v3522
  %v3524 = vpop.xlane.xlu0 %3523
  %v3525 = vsel %vm1296, %v3457, -inf
  %3526 = vmax.xlane.f32.xlu0 %v3525
  %v3527 = vpop.xlane.xlu0 %3526
  %v3528 = vsel %vm1296, %v3462, -inf
  %3529 = vmax.xlane.f32.xlu0 %v3528
  %v3530 = vpop.xlane.xlu0 %3529
  %v3531 = vsel %vm1296, %v3467, -inf
  %3532 = vmax.xlane.f32.xlu0 %v3531
  %v3533 = vpop.xlane.xlu0 %3532
  %v3534 = vsel %vm1296, %v3472, -inf
  %3535 = vmax.xlane.f32.xlu0 %v3534
  %v3536 = vpop.xlane.xlu0 %3535
  %v3537 = vsel %vm1296, %v3477, -inf
  %3538 = vmax.xlane.f32.xlu0 %v3537
  %v3539 = vpop.xlane.xlu0 %3538
  %v3540 = vsel %vm1296, %v3482, -inf
  %3541 = vmax.xlane.f32.xlu0 %v3540
  %v3542 = vpop.xlane.xlu0 %3541
  %v3543 = vsel %vm1296, %v3487, -inf
  %3544 = vmax.xlane.f32.xlu0 %v3543
  %v3545 = vpop.xlane.xlu0 %3544
  %v3546 = vsel %vm1296, %v3492, -inf
  %3547 = vmax.xlane.f32.xlu0 %v3546
  %v3548 = vpop.xlane.xlu0 %3547
  %v3549 = vsub.f32 %v3270, %v3497
  %v3550 = vsub.f32 %v3275, %v3500
  %v3551 = vsub.f32 %v3280, %v3503
  %v3552 = vsub.f32 %v3285, %v3506
  %v3553 = vsub.f32 %v3290, %v3509
  %v3554 = vsub.f32 %v3295, %v3512
  %v3555 = vsub.f32 %v3300, %v3515
  %v3556 = vsub.f32 %v3305, %v3518
  %v3557 = vsub.f32 %v3310, %v3521
  %v3558 = vsub.f32 %v3452, %v3524
  %v3559 = vsub.f32 %v3457, %v3527
  %v3560 = vsub.f32 %v3462, %v3530
  %v3561 = vsub.f32 %v3467, %v3533
  %v3562 = vsub.f32 %v3472, %v3536
  %v3563 = vsub.f32 %v3477, %v3539
  %v3564 = vsub.f32 %v3482, %v3542
  %v3565 = vsub.f32 %v3487, %v3545
  %v3566 = vsub.f32 %v3492, %v3548
  %v3567 = vmul.f32 %v3549, 1.442695
  %v3568 = vpow.pop %v3567
  %v3569 = vmul.f32 %v3550, 1.442695
  %v3570 = vpow.pop %v3569
  %v3571 = vmul.f32 %v3551, 1.442695
  %v3572 = vpow.pop %v3571
  %v3573 = vmul.f32 %v3552, 1.442695
  %v3574 = vpow.pop %v3573
  %v3575 = vmul.f32 %v3553, 1.442695
  %v3576 = vpow.pop %v3575
  %v3577 = vmul.f32 %v3554, 1.442695
  %v3578 = vpow.pop %v3577
  %v3579 = vmul.f32 %v3555, 1.442695
  %v3580 = vpow.pop %v3579
  %v3581 = vmul.f32 %v3556, 1.442695
  %v3582 = vpow.pop %v3581
  %v3583 = vmul.f32 %v3557, 1.442695
  %v3584 = vpow.pop %v3583
  %v3585 = vmul.f32 %v3558, 1.442695
  %v3586 = vpow.pop %v3585
  %v3587 = vmul.f32 %v3559, 1.442695
  %v3588 = vpow.pop %v3587
  %v3589 = vmul.f32 %v3560, 1.442695
  %v3590 = vpow.pop %v3589
  %v3591 = vmul.f32 %v3561, 1.442695
  %v3592 = vpow.pop %v3591
  %v3593 = vmul.f32 %v3562, 1.442695
  %v3594 = vpow.pop %v3593
  %v3595 = vmul.f32 %v3563, 1.442695
  %v3596 = vpow.pop %v3595
  %v3597 = vmul.f32 %v3564, 1.442695
  %v3598 = vpow.pop %v3597
  %v3599 = vmul.f32 %v3565, 1.442695
  %v3600 = vpow.pop %v3599
  %v3601 = vmul.f32 %v3566, 1.442695
  %v3602 = vpow.pop %v3601
  %v3603 = vsel %vm1296, %v3568, 0.0
  %3604 = vadd.xlane.f32.xlu0 %v3603
  %v3605 = vpop.xlane.xlu0 %3604
  %v3606 = vsel %vm1296, %v3570, 0.0
  %3607 = vadd.xlane.f32.xlu0 %v3606
  %v3608 = vpop.xlane.xlu0 %3607
  %v3609 = vsel %vm1296, %v3572, 0.0
  %3610 = vadd.xlane.f32.xlu0 %v3609
  %v3611 = vpop.xlane.xlu0 %3610
  %v3612 = vsel %vm1296, %v3574, 0.0
  %3613 = vadd.xlane.f32.xlu0 %v3612
  %v3614 = vpop.xlane.xlu0 %3613
  %v3615 = vsel %vm1296, %v3576, 0.0
  %3616 = vadd.xlane.f32.xlu0 %v3615
  %v3617 = vpop.xlane.xlu0 %3616
  %v3618 = vsel %vm1296, %v3578, 0.0
  %3619 = vadd.xlane.f32.xlu0 %v3618
  %v3620 = vpop.xlane.xlu0 %3619
  %v3621 = vsel %vm1296, %v3580, 0.0
  %3622 = vadd.xlane.f32.xlu0 %v3621
  %v3623 = vpop.xlane.xlu0 %3622
  %v3624 = vsel %vm1296, %v3582, 0.0
  %3625 = vadd.xlane.f32.xlu0 %v3624
  %v3626 = vpop.xlane.xlu0 %3625
  %v3627 = vsel %vm1296, %v3584, 0.0
  %3628 = vadd.xlane.f32.xlu0 %v3627
  %v3629 = vpop.xlane.xlu0 %3628
  %v3630 = vsel %vm1296, %v3586, 0.0
  %3631 = vadd.xlane.f32.xlu0 %v3630
  %v3632 = vpop.xlane.xlu0 %3631
  %v3633 = vsel %vm1296, %v3588, 0.0
  %3634 = vadd.xlane.f32.xlu0 %v3633
  %v3635 = vpop.xlane.xlu0 %3634
  %v3636 = vsel %vm1296, %v3590, 0.0
  %3637 = vadd.xlane.f32.xlu0 %v3636
  %v3638 = vpop.xlane.xlu0 %3637
  %v3639 = vsel %vm1296, %v3592, 0.0
  %3640 = vadd.xlane.f32.xlu0 %v3639
  %v3641 = vpop.xlane.xlu0 %3640
  %v3642 = vsel %vm1296, %v3594, 0.0
  %3643 = vadd.xlane.f32.xlu0 %v3642
  %v3644 = vpop.xlane.xlu0 %3643
  %v3645 = vsel %vm1296, %v3596, 0.0
  %3646 = vadd.xlane.f32.xlu0 %v3645
  %v3647 = vpop.xlane.xlu0 %3646
  %v3648 = vsel %vm1296, %v3598, 0.0
  %3649 = vadd.xlane.f32.xlu0 %v3648
  %v3650 = vpop.xlane.xlu0 %3649
  %v3651 = vsel %vm1296, %v3600, 0.0
  %3652 = vadd.xlane.f32.xlu0 %v3651
  %v3653 = vpop.xlane.xlu0 %3652
  %v3654 = vsel %vm1296, %v3602, 0.0
  %3655 = vadd.xlane.f32.xlu0 %v3654
  %v3656 = vpop.xlane.xlu0 %3655
  %v3657 = vrcp.pop %v3605
  %v3658 = vrcp.pop %v3608
  %v3659 = vrcp.pop %v3611
  %v3660 = vrcp.pop %v3614
  %v3661 = vrcp.pop %v3617
  %v3662 = vrcp.pop %v3620
  %v3663 = vrcp.pop %v3623
  %v3664 = vrcp.pop %v3626
  %v3665 = vrcp.pop %v3629
  %v3666 = vrcp.pop %v3632
  %v3667 = vrcp.pop %v3635
  %v3668 = vrcp.pop %v3638
  %v3669 = vrcp.pop %v3641
  %v3670 = vrcp.pop %v3644
  %v3671 = vrcp.pop %v3647
  %v3672 = vrcp.pop %v3650
  %v3673 = vrcp.pop %v3653
  %v3674 = vrcp.pop %v3656
  %v3675 = vmul.f32 %v3568, %v3657
  %v3676 = vmul.f32 %v3570, %v3658
  %v3677 = vmul.f32 %v3572, %v3659
  %v3678 = vmul.f32 %v3574, %v3660
  %v3679 = vmul.f32 %v3576, %v3661
  %v3680 = vmul.f32 %v3578, %v3662
  %v3681 = vmul.f32 %v3580, %v3663
  %v3682 = vmul.f32 %v3582, %v3664
  %v3683 = vmul.f32 %v3584, %v3665
  %v3684 = vmul.f32 %v3586, %v3666
  %v3685 = vmul.f32 %v3588, %v3667
  %v3686 = vmul.f32 %v3590, %v3668
  %v3687 = vmul.f32 %v3592, %v3669
  %v3688 = vmul.f32 %v3594, %v3670
  %v3689 = vmul.f32 %v3596, %v3671
  %v3690 = vmul.f32 %v3598, %v3672
  %v3691 = vmul.f32 %v3600, %v3673
  %v3692 = vmul.f32 %v3602, %v3674
  %3693 = vrot.lane.b32.xlu0 %v825, 48
  %v3694 = vpop.permute.xlu0 %3693
  %3695 = vrot.lane.b32.xlu0 %v830, 48
  %v3696 = vpop.permute.xlu0 %3695
  %3697 = vrot.lane.b32.xlu0 %v835, 48
  %v3698 = vpop.permute.xlu0 %3697
  %3699 = vrot.lane.b32.xlu0 %v840, 48
  %v3700 = vpop.permute.xlu0 %3699
  %3701 = vrot.lane.b32.xlu0 %v845, 48
  %v3702 = vpop.permute.xlu0 %3701
  %3703 = vrot.lane.b32.xlu0 %v850, 48
  %v3704 = vpop.permute.xlu0 %3703
  %3705 = vrot.lane.b32.xlu0 %v855, 48
  %v3706 = vpop.permute.xlu0 %3705
  %3707 = vrot.lane.b32.xlu0 %v860, 48
  %v3708 = vpop.permute.xlu0 %3707
  %3709 = vrot.lane.b32.xlu0 %v865, 48
  %v3710 = vpop.permute.xlu0 %3709
  %v3721 = vsel %vm1296, %v3675, 0
  %v3724 = vsel %vm1296, %v3676, 0
  %v3727 = vsel %vm1296, %v3677, 0
  %v3730 = vsel %vm1296, %v3678, 0
  %v3733 = vsel %vm1296, %v3679, 0
  %v3736 = vsel %vm1296, %v3680, 0
  %v3739 = vsel %vm1296, %v3681, 0
  %v3742 = vsel %vm1296, %v3682, 0
  %v3745 = vsel %vm1296, %v3683, 0
  %3747 = vmatprep.subr.mxu0 0.0
  %3748 = vmatpush1.msra.mxu0 0.0
  %3749 = vmatprep.subr.mxu0 0.0
  %3750 = vmatpush1.msra.mxu0 0.0
  %3751 = vmatprep.subr.mxu0 0.0
  %3752 = vmatpush1.msra.mxu0 0.0
  %3753 = vmatprep.subr.mxu0 0.0
  %3754 = vmatpush1.msra.mxu0 0.0
  %3755 = vmatprep.subr.mxu0 0.0
  %3756 = vmatpush1.msra.mxu0 0.0
  %3757 = vmatprep.subr.mxu0 0.0
  %3758 = vmatpush1.msra.mxu0 0.0
  %3759 = vmatprep.subr.mxu0 0.0
  %3760 = vmatpush1.msra.mxu0 0.0
  %3761 = vmatprep.subr.mxu0 0.0
  %3762 = vmatpush1.msra.mxu0 %v3710
  %3763 = vmatprep.subr.mxu0 0.0
  %3764 = vmatpush1.msra.mxu0 %v3708
  %3765 = vmatprep.subr.mxu0 0.0
  %3766 = vmatpush1.msra.mxu0 %v3706
  %3767 = vmatprep.subr.mxu0 0.0
  %3768 = vmatpush1.msra.mxu0 %v3704
  %3769 = vmatprep.subr.mxu0 0.0
  %3770 = vmatpush1.msra.mxu0 %v3702
  %3771 = vmatprep.subr.mxu0 0.0
  %3772 = vmatpush1.msra.mxu0 %v3700
  %3773 = vmatprep.subr.mxu0 0.0
  %3774 = vmatpush1.msra.mxu0 %v3698
  %3775 = vmatprep.subr.mxu0 0.0
  %3776 = vmatpush1.msra.mxu0 %v3696
  %3777 = vmatprep.subr.mxu0 0.0
  %3778 = vmatpush1.msra.mxu0 %v3694
  %3779 = vmatprep.subr.mxu0 0.0
  %3780 = vmatpush2.msra.mxu0 0.0
  %3781 = vmatprep.subr.mxu0 0.0
  %3782 = vmatpush2.msra.mxu0 0.0
  %3783 = vmatprep.subr.mxu0 0.0
  %3784 = vmatpush2.msra.mxu0 0.0
  %3785 = vmatprep.subr.mxu0 0.0
  %3786 = vmatpush2.msra.mxu0 0.0
  %3787 = vmatprep.subr.mxu0 0.0
  %3788 = vmatpush2.msra.mxu0 0.0
  %3789 = vmatprep.subr.mxu0 0.0
  %3790 = vmatpush2.msra.mxu0 0.0
  %3791 = vmatprep.subr.mxu0 0.0
  %3792 = vmatpush2.msra.mxu0 0.0
  %3793 = vmatprep.subr.mxu0 0.0
  %3794 = vmatpush2.msra.mxu0 0.0
  %3795 = vmatprep.subr.mxu0 0.0
  %3796 = vmatpush2.msra.mxu0 0.0
  %3797 = vmatprep.subr.mxu0 0.0
  %3798 = vmatpush2.msra.mxu0 0.0
  %3799 = vmatprep.subr.mxu0 0.0
  %3800 = vmatpush2.msra.mxu0 0.0
  %3801 = vmatprep.subr.mxu0 0.0
  %3802 = vmatpush2.msra.mxu0 0.0
  %3803 = vmatprep.subr.mxu0 0.0
  %3804 = vmatpush2.msra.mxu0 0.0
  %3805 = vmatprep.subr.mxu0 0.0
  %3806 = vmatpush2.msra.mxu0 0.0
  %3807 = vmatprep.subr.mxu0 0.0
  %3808 = vmatpush2.msra.mxu0 0.0
  %3809 = vmatprep.subr.mxu0 0.0
  %3810 = vmatpush2.msra.mxu0 0.0
  %3811 = vmatprep.mubr.f32.mxu0 0.0
  %3812 = vmatmul.mubr.f32.gmra.mxu0 %v3721
  %v3813 = vpop.f32.mrf.mxu0
  %v3814 = vadd.f32 0.0, %v3813
  %v3815 = vpop.f32.mrf.mxu0
  %3816 = vmatprep.mubr.f32.mxu0 0.0
  %3817 = vmatmul.mubr.f32.gmra.mxu0 %v3724
  %v3818 = vpop.f32.mrf.mxu0
  %v3819 = vadd.f32 0.0, %v3818
  %v3820 = vpop.f32.mrf.mxu0
  %3821 = vmatprep.mubr.f32.mxu0 0.0
  %3822 = vmatmul.mubr.f32.gmra.mxu0 %v3727
  %v3823 = vpop.f32.mrf.mxu0
  %v3824 = vadd.f32 0.0, %v3823
  %v3825 = vpop.f32.mrf.mxu0
  %3826 = vmatprep.mubr.f32.mxu0 0.0
  %3827 = vmatmul.mubr.f32.gmra.mxu0 %v3730
  %v3828 = vpop.f32.mrf.mxu0
  %v3829 = vadd.f32 0.0, %v3828
  %v3830 = vpop.f32.mrf.mxu0
  %3831 = vmatprep.mubr.f32.mxu0 0.0
  %3832 = vmatmul.mubr.f32.gmra.mxu0 %v3733
  %v3833 = vpop.f32.mrf.mxu0
  %v3834 = vadd.f32 0.0, %v3833
  %v3835 = vpop.f32.mrf.mxu0
  %3836 = vmatprep.mubr.f32.mxu0 0.0
  %3837 = vmatmul.mubr.f32.gmra.mxu0 %v3736
  %v3838 = vpop.f32.mrf.mxu0
  %v3839 = vadd.f32 0.0, %v3838
  %v3840 = vpop.f32.mrf.mxu0
  %3841 = vmatprep.mubr.f32.mxu0 0.0
  %3842 = vmatmul.mubr.f32.gmra.mxu0 %v3739
  %v3843 = vpop.f32.mrf.mxu0
  %v3844 = vadd.f32 0.0, %v3843
  %v3845 = vpop.f32.mrf.mxu0
  %3846 = vmatprep.mubr.f32.mxu0 0.0
  %3847 = vmatmul.mubr.f32.gmra.mxu0 %v3742
  %v3848 = vpop.f32.mrf.mxu0
  %v3849 = vadd.f32 0.0, %v3848
  %v3850 = vpop.f32.mrf.mxu0
  %3851 = vmatprep.mubr.f32.mxu0 0.0
  %3852 = vmatmul.mubr.f32.gmra.mxu0 %v3745
  %v3853 = vpop.f32.mrf.mxu0
  %v3854 = vadd.f32 0.0, %v3853
  %v3855 = vpop.f32.mrf.mxu0
  %3856 = vdwg.mxu0
  %3857 = vrot.lane.b32.xlu0 %v870, 48
  %v3858 = vpop.permute.xlu0 %3857
  %3859 = vrot.lane.b32.xlu0 %v875, 48
  %v3860 = vpop.permute.xlu0 %3859
  %3861 = vrot.lane.b32.xlu0 %v880, 48
  %v3862 = vpop.permute.xlu0 %3861
  %3863 = vrot.lane.b32.xlu0 %v885, 48
  %v3864 = vpop.permute.xlu0 %3863
  %3865 = vrot.lane.b32.xlu0 %v890, 48
  %v3866 = vpop.permute.xlu0 %3865
  %3867 = vrot.lane.b32.xlu0 %v895, 48
  %v3868 = vpop.permute.xlu0 %3867
  %3869 = vrot.lane.b32.xlu0 %v900, 48
  %v3870 = vpop.permute.xlu0 %3869
  %3871 = vrot.lane.b32.xlu0 %v905, 48
  %v3872 = vpop.permute.xlu0 %3871
  %3873 = vrot.lane.b32.xlu0 %v910, 48
  %v3874 = vpop.permute.xlu0 %3873
  %v3885 = vsel %vm1296, %v3684, 0
  %v3888 = vsel %vm1296, %v3685, 0
  %v3891 = vsel %vm1296, %v3686, 0
  %v3894 = vsel %vm1296, %v3687, 0
  %v3897 = vsel %vm1296, %v3688, 0
  %v3900 = vsel %vm1296, %v3689, 0
  %v3903 = vsel %vm1296, %v3690, 0
  %v3906 = vsel %vm1296, %v3691, 0
  %v3909 = vsel %vm1296, %v3692, 0
  %3911 = vmatprep.subr.mxu0 0.0
  %3912 = vmatpush1.msra.mxu0 0.0
  %3913 = vmatprep.subr.mxu0 0.0
  %3914 = vmatpush1.msra.mxu0 0.0
  %3915 = vmatprep.subr.mxu0 0.0
  %3916 = vmatpush1.msra.mxu0 0.0
  %3917 = vmatprep.subr.mxu0 0.0
  %3918 = vmatpush1.msra.mxu0 0.0
  %3919 = vmatprep.subr.mxu0 0.0
  %3920 = vmatpush1.msra.mxu0 0.0
  %3921 = vmatprep.subr.mxu0 0.0
  %3922 = vmatpush1.msra.mxu0 0.0
  %3923 = vmatprep.subr.mxu0 0.0
  %3924 = vmatpush1.msra.mxu0 0.0
  %3925 = vmatprep.subr.mxu0 0.0
  %3926 = vmatpush1.msra.mxu0 %v3874
  %3927 = vmatprep.subr.mxu0 0.0
  %3928 = vmatpush1.msra.mxu0 %v3872
  %3929 = vmatprep.subr.mxu0 0.0
  %3930 = vmatpush1.msra.mxu0 %v3870
  %3931 = vmatprep.subr.mxu0 0.0
  %3932 = vmatpush1.msra.mxu0 %v3868
  %3933 = vmatprep.subr.mxu0 0.0
  %3934 = vmatpush1.msra.mxu0 %v3866
  %3935 = vmatprep.subr.mxu0 0.0
  %3936 = vmatpush1.msra.mxu0 %v3864
  %3937 = vmatprep.subr.mxu0 0.0
  %3938 = vmatpush1.msra.mxu0 %v3862
  %3939 = vmatprep.subr.mxu0 0.0
  %3940 = vmatpush1.msra.mxu0 %v3860
  %3941 = vmatprep.subr.mxu0 0.0
  %3942 = vmatpush1.msra.mxu0 %v3858
  %3943 = vmatprep.subr.mxu0 0.0
  %3944 = vmatpush2.msra.mxu0 0.0
  %3945 = vmatprep.subr.mxu0 0.0
  %3946 = vmatpush2.msra.mxu0 0.0
  %3947 = vmatprep.subr.mxu0 0.0
  %3948 = vmatpush2.msra.mxu0 0.0
  %3949 = vmatprep.subr.mxu0 0.0
  %3950 = vmatpush2.msra.mxu0 0.0
  %3951 = vmatprep.subr.mxu0 0.0
  %3952 = vmatpush2.msra.mxu0 0.0
  %3953 = vmatprep.subr.mxu0 0.0
  %3954 = vmatpush2.msra.mxu0 0.0
  %3955 = vmatprep.subr.mxu0 0.0
  %3956 = vmatpush2.msra.mxu0 0.0
  %3957 = vmatprep.subr.mxu0 0.0
  %3958 = vmatpush2.msra.mxu0 0.0
  %3959 = vmatprep.subr.mxu0 0.0
  %3960 = vmatpush2.msra.mxu0 0.0
  %3961 = vmatprep.subr.mxu0 0.0
  %3962 = vmatpush2.msra.mxu0 0.0
  %3963 = vmatprep.subr.mxu0 0.0
  %3964 = vmatpush2.msra.mxu0 0.0
  %3965 = vmatprep.subr.mxu0 0.0
  %3966 = vmatpush2.msra.mxu0 0.0
  %3967 = vmatprep.subr.mxu0 0.0
  %3968 = vmatpush2.msra.mxu0 0.0
  %3969 = vmatprep.subr.mxu0 0.0
  %3970 = vmatpush2.msra.mxu0 0.0
  %3971 = vmatprep.subr.mxu0 0.0
  %3972 = vmatpush2.msra.mxu0 0.0
  %3973 = vmatprep.subr.mxu0 0.0
  %3974 = vmatpush2.msra.mxu0 0.0
  %3975 = vmatprep.mubr.f32.mxu0 0.0
  %3976 = vmatmul.mubr.f32.gmra.mxu0 %v3885
  %v3977 = vpop.f32.mrf.mxu0
  %v3978 = vadd.f32 0.0, %v3977
  %v3979 = vpop.f32.mrf.mxu0
  %3980 = vmatprep.mubr.f32.mxu0 0.0
  %3981 = vmatmul.mubr.f32.gmra.mxu0 %v3888
  %v3982 = vpop.f32.mrf.mxu0
  %v3983 = vadd.f32 0.0, %v3982
  %v3984 = vpop.f32.mrf.mxu0
  %3985 = vmatprep.mubr.f32.mxu0 0.0
  %3986 = vmatmul.mubr.f32.gmra.mxu0 %v3891
  %v3987 = vpop.f32.mrf.mxu0
  %v3988 = vadd.f32 0.0, %v3987
  %v3989 = vpop.f32.mrf.mxu0
  %3990 = vmatprep.mubr.f32.mxu0 0.0
  %3991 = vmatmul.mubr.f32.gmra.mxu0 %v3894
  %v3992 = vpop.f32.mrf.mxu0
  %v3993 = vadd.f32 0.0, %v3992
  %v3994 = vpop.f32.mrf.mxu0
  %3995 = vmatprep.mubr.f32.mxu0 0.0
  %3996 = vmatmul.mubr.f32.gmra.mxu0 %v3897
  %v3997 = vpop.f32.mrf.mxu0
  %v3998 = vadd.f32 0.0, %v3997
  %v3999 = vpop.f32.mrf.mxu0
  %4000 = vmatprep.mubr.f32.mxu0 0.0
  %4001 = vmatmul.mubr.f32.gmra.mxu0 %v3900
  %v4002 = vpop.f32.mrf.mxu0
  %v4003 = vadd.f32 0.0, %v4002
  %v4004 = vpop.f32.mrf.mxu0
  %4005 = vmatprep.mubr.f32.mxu0 0.0
  %4006 = vmatmul.mubr.f32.gmra.mxu0 %v3903
  %v4007 = vpop.f32.mrf.mxu0
  %v4008 = vadd.f32 0.0, %v4007
  %v4009 = vpop.f32.mrf.mxu0
  %4010 = vmatprep.mubr.f32.mxu0 0.0
  %4011 = vmatmul.mubr.f32.gmra.mxu0 %v3906
  %v4012 = vpop.f32.mrf.mxu0
  %v4013 = vadd.f32 0.0, %v4012
  %v4014 = vpop.f32.mrf.mxu0
  %4015 = vmatprep.mubr.f32.mxu0 0.0
  %4016 = vmatmul.mubr.f32.gmra.mxu0 %v3909
  %v4017 = vpop.f32.mrf.mxu0
  %v4018 = vadd.f32 0.0, %v4017
  %v4019 = vpop.f32.mrf.mxu0
  %4020 = vdwg.mxu0
  %v4022 = vsel %vm958, %v3814, 0
  %v4025 = vsel %vm958, %v3819, 0
  %v4028 = vsel %vm958, %v3824, 0
  %v4031 = vsel %vm958, %v3829, 0
  %v4034 = vsel %vm958, %v3834, 0
  %v4037 = vsel %vm958, %v3839, 0
  %v4040 = vsel %vm958, %v3844, 0
  %v4043 = vsel %vm958, %v3849, 0
  %v4046 = vsel %vm958, %v3854, 0
  %v4049 = vsel %vm958, %v3978, 0
  %v4052 = vsel %vm958, %v3983, 0
  %v4055 = vsel %vm958, %v3988, 0
  %v4058 = vsel %vm958, %v3993, 0
  %v4061 = vsel %vm958, %v3998, 0
  %v4064 = vsel %vm958, %v4003, 0
  %v4067 = vsel %vm958, %v4008, 0
  %v4070 = vsel %vm958, %v4013, 0
  %v4073 = vsel %vm958, %v4018, 0
  %4075 = vmatprep.subr.mxu0 0.0
  %4076 = vmatpush1.msra.mxu0 0.0
  %4077 = vmatprep.subr.mxu0 0.0
  %4078 = vmatpush1.msra.mxu0 0.0
  %4079 = vmatprep.subr.mxu0 0.0
  %4080 = vmatpush1.msra.mxu0 0.0
  %4081 = vmatprep.subr.mxu0 0.0
  %4082 = vmatpush1.msra.mxu0 0.0
  %4083 = vmatprep.subr.mxu0 0.0
  %4084 = vmatpush1.msra.mxu0 0.0
  %4085 = vmatprep.subr.mxu0 0.0
  %4086 = vmatpush1.msra.mxu0 0.0
  %4087 = vmatprep.subr.mxu0 0.0
  %4088 = vmatpush1.msra.mxu0 0.0
  %4089 = vmatprep.subr.mxu0 0.0
  %4090 = vmatpush1.msra.mxu0 0.0
  %4091 = vmatprep.subr.mxu0 0.0
  %4092 = vmatpush1.msra.mxu0 0.0
  %4093 = vmatprep.subr.mxu0 0.0
  %4094 = vmatpush1.msra.mxu0 0.0
  %4095 = vmatprep.subr.mxu0 0.0
  %4096 = vmatpush1.msra.mxu0 0.0
  %4097 = vmatprep.subr.mxu0 0.0
  %4098 = vmatpush1.msra.mxu0 0.0
  %4099 = vmatprep.subr.mxu0 0.0
  %4100 = vmatpush1.msra.mxu0 0.0
  %4101 = vmatprep.subr.mxu0 0.0
  %4102 = vmatpush1.msra.mxu0 0.0
  %4103 = vmatprep.subr.mxu0 0.0
  %4104 = vmatpush1.msra.mxu0 0.0
  %4105 = vmatprep.subr.mxu0 0.0
  %4106 = vmatpush1.msra.mxu0 %v396
  %4107 = vmatprep.subr.mxu0 0.0
  %4108 = vmatpush2.msra.mxu0 0.0
  %4109 = vmatprep.subr.mxu0 0.0
  %4110 = vmatpush2.msra.mxu0 0.0
  %4111 = vmatprep.subr.mxu0 0.0
  %4112 = vmatpush2.msra.mxu0 0.0
  %4113 = vmatprep.subr.mxu0 0.0
  %4114 = vmatpush2.msra.mxu0 0.0
  %4115 = vmatprep.subr.mxu0 0.0
  %4116 = vmatpush2.msra.mxu0 0.0
  %4117 = vmatprep.subr.mxu0 0.0
  %4118 = vmatpush2.msra.mxu0 0.0
  %4119 = vmatprep.subr.mxu0 0.0
  %4120 = vmatpush2.msra.mxu0 0.0
  %4121 = vmatprep.subr.mxu0 0.0
  %4122 = vmatpush2.msra.mxu0 0.0
  %4123 = vmatprep.subr.mxu0 0.0
  %4124 = vmatpush2.msra.mxu0 0.0
  %4125 = vmatprep.subr.mxu0 0.0
  %4126 = vmatpush2.msra.mxu0 0.0
  %4127 = vmatprep.subr.mxu0 0.0
  %4128 = vmatpush2.msra.mxu0 0.0
  %4129 = vmatprep.subr.mxu0 0.0
  %4130 = vmatpush2.msra.mxu0 0.0
  %4131 = vmatprep.subr.mxu0 0.0
  %4132 = vmatpush2.msra.mxu0 0.0
  %4133 = vmatprep.subr.mxu0 0.0
  %4134 = vmatpush2.msra.mxu0 0.0
  %4135 = vmatprep.subr.mxu0 0.0
  %4136 = vmatpush2.msra.mxu0 0.0
  %4137 = vmatprep.subr.mxu0 0.0
  %4138 = vmatpush2.msra.mxu0 0.0
  %4139 = vmatprep.mubr.f32.mxu0 0.0
  %4140 = vmatmul.mubr.f32.gmra.mxu0 %v4022
  %v4141 = vpop.f32.mrf.mxu0
  %v4142 = vadd.f32 0.0, %v4141
  %v4143 = vpop.f32.mrf.mxu0
  %4144 = vmatprep.mubr.f32.mxu0 0.0
  %4145 = vmatmul.mubr.f32.gmra.mxu0 %v4025
  %v4146 = vpop.f32.mrf.mxu0
  %v4147 = vadd.f32 0.0, %v4146
  %v4148 = vpop.f32.mrf.mxu0
  %4149 = vmatprep.mubr.f32.mxu0 0.0
  %4150 = vmatmul.mubr.f32.gmra.mxu0 %v4028
  %v4151 = vpop.f32.mrf.mxu0
  %v4152 = vadd.f32 0.0, %v4151
  %v4153 = vpop.f32.mrf.mxu0
  %4154 = vmatprep.mubr.f32.mxu0 0.0
  %4155 = vmatmul.mubr.f32.gmra.mxu0 %v4031
  %v4156 = vpop.f32.mrf.mxu0
  %v4157 = vadd.f32 0.0, %v4156
  %v4158 = vpop.f32.mrf.mxu0
  %4159 = vmatprep.mubr.f32.mxu0 0.0
  %4160 = vmatmul.mubr.f32.gmra.mxu0 %v4034
  %v4161 = vpop.f32.mrf.mxu0
  %v4162 = vadd.f32 0.0, %v4161
  %v4163 = vpop.f32.mrf.mxu0
  %4164 = vmatprep.mubr.f32.mxu0 0.0
  %4165 = vmatmul.mubr.f32.gmra.mxu0 %v4037
  %v4166 = vpop.f32.mrf.mxu0
  %v4167 = vadd.f32 0.0, %v4166
  %v4168 = vpop.f32.mrf.mxu0
  %4169 = vmatprep.mubr.f32.mxu0 0.0
  %4170 = vmatmul.mubr.f32.gmra.mxu0 %v4040
  %v4171 = vpop.f32.mrf.mxu0
  %v4172 = vadd.f32 0.0, %v4171
  %v4173 = vpop.f32.mrf.mxu0
  %4174 = vmatprep.mubr.f32.mxu0 0.0
  %4175 = vmatmul.mubr.f32.gmra.mxu0 %v4043
  %v4176 = vpop.f32.mrf.mxu0
  %v4177 = vadd.f32 0.0, %v4176
  %v4178 = vpop.f32.mrf.mxu0
  %4179 = vmatprep.mubr.f32.mxu0 0.0
  %4180 = vmatmul.mubr.f32.gmra.mxu0 %v4046
  %v4181 = vpop.f32.mrf.mxu0
  %v4182 = vadd.f32 0.0, %v4181
  %v4183 = vpop.f32.mrf.mxu0
  %4184 = vmatprep.mubr.f32.mxu0 0.0
  %4185 = vmatmul.mubr.f32.gmra.mxu0 %v4049
  %v4186 = vpop.f32.mrf.mxu0
  %v4187 = vadd.f32 0.0, %v4186
  %v4188 = vpop.f32.mrf.mxu0
  %4189 = vmatprep.mubr.f32.mxu0 0.0
  %4190 = vmatmul.mubr.f32.gmra.mxu0 %v4052
  %v4191 = vpop.f32.mrf.mxu0
  %v4192 = vadd.f32 0.0, %v4191
  %v4193 = vpop.f32.mrf.mxu0
  %4194 = vmatprep.mubr.f32.mxu0 0.0
  %4195 = vmatmul.mubr.f32.gmra.mxu0 %v4055
  %v4196 = vpop.f32.mrf.mxu0
  %v4197 = vadd.f32 0.0, %v4196
  %v4198 = vpop.f32.mrf.mxu0
  %4199 = vmatprep.mubr.f32.mxu0 0.0
  %4200 = vmatmul.mubr.f32.gmra.mxu0 %v4058
  %v4201 = vpop.f32.mrf.mxu0
  %v4202 = vadd.f32 0.0, %v4201
  %v4203 = vpop.f32.mrf.mxu0
  %4204 = vmatprep.mubr.f32.mxu0 0.0
  %4205 = vmatmul.mubr.f32.gmra.mxu0 %v4061
  %v4206 = vpop.f32.mrf.mxu0
  %v4207 = vadd.f32 0.0, %v4206
  %v4208 = vpop.f32.mrf.mxu0
  %4209 = vmatprep.mubr.f32.mxu0 0.0
  %4210 = vmatmul.mubr.f32.gmra.mxu0 %v4064
  %v4211 = vpop.f32.mrf.mxu0
  %v4212 = vadd.f32 0.0, %v4211
  %v4213 = vpop.f32.mrf.mxu0
  %4214 = vmatprep.mubr.f32.mxu0 0.0
  %4215 = vmatmul.mubr.f32.gmra.mxu0 %v4067
  %v4216 = vpop.f32.mrf.mxu0
  %v4217 = vadd.f32 0.0, %v4216
  %v4218 = vpop.f32.mrf.mxu0
  %4219 = vmatprep.mubr.f32.mxu0 0.0
  %4220 = vmatmul.mubr.f32.gmra.mxu0 %v4070
  %v4221 = vpop.f32.mrf.mxu0
  %v4222 = vadd.f32 0.0, %v4221
  %v4223 = vpop.f32.mrf.mxu0
  %4224 = vmatprep.mubr.f32.mxu0 0.0
  %4225 = vmatmul.mubr.f32.gmra.mxu0 %v4073
  %v4226 = vpop.f32.mrf.mxu0
  %v4227 = vadd.f32 0.0, %v4226
  %v4228 = vpop.f32.mrf.mxu0
  %4229 = vdwg.mxu0
  %v4230 = vadd.f32 %v3043, %v4142
  %v4231 = vadd.f32 %v3048, %v4147
  %v4232 = vadd.f32 %v3053, %v4152
  %v4233 = vadd.f32 %v3058, %v4157
  %v4234 = vadd.f32 %v3063, %v4162
  %v4235 = vadd.f32 %v3068, %v4167
  %v4236 = vadd.f32 %v3073, %v4172
  %v4237 = vadd.f32 %v3078, %v4177
  %v4238 = vadd.f32 %v3083, %v4182
  %v4239 = vadd.f32 %v3088, %v4187
  %v4240 = vadd.f32 %v3093, %v4192
  %v4241 = vadd.f32 %v3098, %v4197
  %v4242 = vadd.f32 %v3103, %v4202
  %v4243 = vadd.f32 %v3108, %v4207
  %v4244 = vadd.f32 %v3113, %v4212
  %v4245 = vadd.f32 %v3118, %v4217
  %v4246 = vadd.f32 %v3123, %v4222
  %v4247 = vadd.f32 %v3128, %v4227
  %4248 = vrot.lane.b32.xlu0 %v913, 104
  %v4249 = vpop.permute.xlu0 %4248
  %4250 = vrot.lane.b32.xlu0 %v914, 104
  %v4251 = vpop.permute.xlu0 %4250
  %4252 = vrot.lane.b32.xlu0 %v915, 104
  %v4253 = vpop.permute.xlu0 %4252
  %4254 = vrot.lane.b32.xlu0 %v916, 104
  %v4255 = vpop.permute.xlu0 %4254
  %4256 = vrot.lane.b32.xlu0 %v917, 104
  %v4257 = vpop.permute.xlu0 %4256
  %4258 = vrot.lane.b32.xlu0 %v918, 104
  %v4259 = vpop.permute.xlu0 %4258
  %4260 = vrot.lane.b32.xlu0 %v919, 104
  %v4261 = vpop.permute.xlu0 %4260
  %4262 = vrot.lane.b32.xlu0 %v920, 104
  %v4263 = vpop.permute.xlu0 %4262
  %4264 = vrot.lane.b32.xlu0 %v921, 104
  %v4265 = vpop.permute.xlu0 %4264
  %4266 = vrot.lane.b32.xlu0 %v825, 72
  %v4267 = vpop.permute.xlu0 %4266
  %4268 = vrot.lane.b32.xlu0 %v830, 72
  %v4269 = vpop.permute.xlu0 %4268
  %4270 = vrot.lane.b32.xlu0 %v835, 72
  %v4271 = vpop.permute.xlu0 %4270
  %4272 = vrot.lane.b32.xlu0 %v840, 72
  %v4273 = vpop.permute.xlu0 %4272
  %4274 = vrot.lane.b32.xlu0 %v845, 72
  %v4275 = vpop.permute.xlu0 %4274
  %4276 = vrot.lane.b32.xlu0 %v850, 72
  %v4277 = vpop.permute.xlu0 %4276
  %4278 = vrot.lane.b32.xlu0 %v855, 72
  %v4279 = vpop.permute.xlu0 %4278
  %4280 = vrot.lane.b32.xlu0 %v860, 72
  %v4281 = vpop.permute.xlu0 %4280
  %4282 = vrot.lane.b32.xlu0 %v865, 72
  %v4283 = vpop.permute.xlu0 %4282
  %v4284 = vsel %vm958, %v4249, 0
  %v4286 = vsel %vm958, %v4251, 0
  %v4288 = vsel %vm958, %v4253, 0
  %v4290 = vsel %vm958, %v4255, 0
  %v4292 = vsel %vm958, %v4257, 0
  %v4294 = vsel %vm958, %v4259, 0
  %v4296 = vsel %vm958, %v4261, 0
  %v4298 = vsel %vm958, %v4263, 0
  %v4300 = vsel %vm958, %v4265, 0
  %v4302 = vsel %vm958, %v4267, 0
  %v4304 = vsel %vm958, %v4269, 0
  %v4306 = vsel %vm958, %v4271, 0
  %v4308 = vsel %vm958, %v4273, 0
  %v4310 = vsel %vm958, %v4275, 0
  %v4312 = vsel %vm958, %v4277, 0
  %v4314 = vsel %vm958, %v4279, 0
  %v4316 = vsel %vm958, %v4281, 0
  %v4318 = vsel %vm958, %v4283, 0
  %4320 = vmatprep.subr.mxu0 0.0
  %4321 = vmatpush1.xpose.msra.mxu0 0.0
  %4322 = vmatprep.subr.mxu0 0.0
  %4323 = vmatpush1.xpose.msra.mxu0 0.0
  %4324 = vmatprep.subr.mxu0 0.0
  %4325 = vmatpush1.xpose.msra.mxu0 0.0
  %4326 = vmatprep.subr.mxu0 0.0
  %4327 = vmatpush1.xpose.msra.mxu0 0.0
  %4328 = vmatprep.subr.mxu0 0.0
  %4329 = vmatpush1.xpose.msra.mxu0 0.0
  %4330 = vmatprep.subr.mxu0 0.0
  %4331 = vmatpush1.xpose.msra.mxu0 0.0
  %4332 = vmatprep.subr.mxu0 0.0
  %4333 = vmatpush1.xpose.msra.mxu0 0.0
  %4334 = vmatprep.subr.mxu0 0.0
  %4335 = vmatpush1.xpose.msra.mxu0 %v4318
  %4336 = vmatprep.subr.mxu0 0.0
  %4337 = vmatpush1.xpose.msra.mxu0 %v4316
  %4338 = vmatprep.subr.mxu0 0.0
  %4339 = vmatpush1.xpose.msra.mxu0 %v4314
  %4340 = vmatprep.subr.mxu0 0.0
  %4341 = vmatpush1.xpose.msra.mxu0 %v4312
  %4342 = vmatprep.subr.mxu0 0.0
  %4343 = vmatpush1.xpose.msra.mxu0 %v4310
  %4344 = vmatprep.subr.mxu0 0.0
  %4345 = vmatpush1.xpose.msra.mxu0 %v4308
  %4346 = vmatprep.subr.mxu0 0.0
  %4347 = vmatpush1.xpose.msra.mxu0 %v4306
  %4348 = vmatprep.subr.mxu0 0.0
  %4349 = vmatpush1.xpose.msra.mxu0 %v4304
  %4350 = vmatprep.subr.mxu0 0.0
  %4351 = vmatpush1.xpose.msra.mxu0 %v4302
  %4352 = vmatprep.subr.mxu0 0.0
  %4353 = vmatpush2.xpose.msra.mxu0 0.0
  %4354 = vmatprep.subr.mxu0 0.0
  %4355 = vmatpush2.xpose.msra.mxu0 0.0
  %4356 = vmatprep.subr.mxu0 0.0
  %4357 = vmatpush2.xpose.msra.mxu0 0.0
  %4358 = vmatprep.subr.mxu0 0.0
  %4359 = vmatpush2.xpose.msra.mxu0 0.0
  %4360 = vmatprep.subr.mxu0 0.0
  %4361 = vmatpush2.xpose.msra.mxu0 0.0
  %4362 = vmatprep.subr.mxu0 0.0
  %4363 = vmatpush2.xpose.msra.mxu0 0.0
  %4364 = vmatprep.subr.mxu0 0.0
  %4365 = vmatpush2.xpose.msra.mxu0 0.0
  %4366 = vmatprep.subr.mxu0 0.0
  %4367 = vmatpush2.xpose.msra.mxu0 0.0
  %4368 = vmatprep.subr.mxu0 0.0
  %4369 = vmatpush2.xpose.msra.mxu0 0.0
  %4370 = vmatprep.subr.mxu0 0.0
  %4371 = vmatpush2.xpose.msra.mxu0 0.0
  %4372 = vmatprep.subr.mxu0 0.0
  %4373 = vmatpush2.xpose.msra.mxu0 0.0
  %4374 = vmatprep.subr.mxu0 0.0
  %4375 = vmatpush2.xpose.msra.mxu0 0.0
  %4376 = vmatprep.subr.mxu0 0.0
  %4377 = vmatpush2.xpose.msra.mxu0 0.0
  %4378 = vmatprep.subr.mxu0 0.0
  %4379 = vmatpush2.xpose.msra.mxu0 0.0
  %4380 = vmatprep.subr.mxu0 0.0
  %4381 = vmatpush2.xpose.msra.mxu0 0.0
  %4382 = vmatprep.subr.mxu0 0.0
  %4383 = vmatpush2.xpose.msra.mxu0 0.0
  %4384 = vmatprep.mubr.f32.mxu0 0.0
  %4385 = vmatmul.mubr.f32.gmra.mxu0 %v4284
  %v4386 = vpop.f32.mrf.mxu0
  %v4387 = vadd.f32 %v385, %v4386
  %v4388 = vpop.f32.mrf.mxu0
  %4389 = vmatprep.mubr.f32.mxu0 0.0
  %4390 = vmatmul.mubr.f32.gmra.mxu0 %v4286
  %v4391 = vpop.f32.mrf.mxu0
  %v4392 = vadd.f32 %v385, %v4391
  %v4393 = vpop.f32.mrf.mxu0
  %4394 = vmatprep.mubr.f32.mxu0 0.0
  %4395 = vmatmul.mubr.f32.gmra.mxu0 %v4288
  %v4396 = vpop.f32.mrf.mxu0
  %v4397 = vadd.f32 %v385, %v4396
  %v4398 = vpop.f32.mrf.mxu0
  %4399 = vmatprep.mubr.f32.mxu0 0.0
  %4400 = vmatmul.mubr.f32.gmra.mxu0 %v4290
  %v4401 = vpop.f32.mrf.mxu0
  %v4402 = vadd.f32 %v385, %v4401
  %v4403 = vpop.f32.mrf.mxu0
  %4404 = vmatprep.mubr.f32.mxu0 0.0
  %4405 = vmatmul.mubr.f32.gmra.mxu0 %v4292
  %v4406 = vpop.f32.mrf.mxu0
  %v4407 = vadd.f32 %v385, %v4406
  %v4408 = vpop.f32.mrf.mxu0
  %4409 = vmatprep.mubr.f32.mxu0 0.0
  %4410 = vmatmul.mubr.f32.gmra.mxu0 %v4294
  %v4411 = vpop.f32.mrf.mxu0
  %v4412 = vadd.f32 %v385, %v4411
  %v4413 = vpop.f32.mrf.mxu0
  %4414 = vmatprep.mubr.f32.mxu0 0.0
  %4415 = vmatmul.mubr.f32.gmra.mxu0 %v4296
  %v4416 = vpop.f32.mrf.mxu0
  %v4417 = vadd.f32 %v385, %v4416
  %v4418 = vpop.f32.mrf.mxu0
  %4419 = vmatprep.mubr.f32.mxu0 0.0
  %4420 = vmatmul.mubr.f32.gmra.mxu0 %v4298
  %v4421 = vpop.f32.mrf.mxu0
  %v4422 = vadd.f32 %v385, %v4421
  %v4423 = vpop.f32.mrf.mxu0
  %4424 = vmatprep.mubr.f32.mxu0 0.0
  %4425 = vmatmul.mubr.f32.gmra.mxu0 %v4300
  %v4426 = vpop.f32.mrf.mxu0
  %v4427 = vadd.f32 %v385, %v4426
  %v4428 = vpop.f32.mrf.mxu0
  %4429 = vdwg.mxu0
  %4430 = vrot.lane.b32.xlu0 %v922, 104
  %v4431 = vpop.permute.xlu0 %4430
  %4432 = vrot.lane.b32.xlu0 %v923, 104
  %v4433 = vpop.permute.xlu0 %4432
  %4434 = vrot.lane.b32.xlu0 %v924, 104
  %v4435 = vpop.permute.xlu0 %4434
  %4436 = vrot.lane.b32.xlu0 %v925, 104
  %v4437 = vpop.permute.xlu0 %4436
  %4438 = vrot.lane.b32.xlu0 %v926, 104
  %v4439 = vpop.permute.xlu0 %4438
  %4440 = vrot.lane.b32.xlu0 %v927, 104
  %v4441 = vpop.permute.xlu0 %4440
  %4442 = vrot.lane.b32.xlu0 %v928, 104
  %v4443 = vpop.permute.xlu0 %4442
  %4444 = vrot.lane.b32.xlu0 %v929, 104
  %v4445 = vpop.permute.xlu0 %4444
  %4446 = vrot.lane.b32.xlu0 %v930, 104
  %v4447 = vpop.permute.xlu0 %4446
  %4448 = vrot.lane.b32.xlu0 %v870, 72
  %v4449 = vpop.permute.xlu0 %4448
  %4450 = vrot.lane.b32.xlu0 %v875, 72
  %v4451 = vpop.permute.xlu0 %4450
  %4452 = vrot.lane.b32.xlu0 %v880, 72
  %v4453 = vpop.permute.xlu0 %4452
  %4454 = vrot.lane.b32.xlu0 %v885, 72
  %v4455 = vpop.permute.xlu0 %4454
  %4456 = vrot.lane.b32.xlu0 %v890, 72
  %v4457 = vpop.permute.xlu0 %4456
  %4458 = vrot.lane.b32.xlu0 %v895, 72
  %v4459 = vpop.permute.xlu0 %4458
  %4460 = vrot.lane.b32.xlu0 %v900, 72
  %v4461 = vpop.permute.xlu0 %4460
  %4462 = vrot.lane.b32.xlu0 %v905, 72
  %v4463 = vpop.permute.xlu0 %4462
  %4464 = vrot.lane.b32.xlu0 %v910, 72
  %v4465 = vpop.permute.xlu0 %4464
  %v4466 = vsel %vm958, %v4431, 0
  %v4468 = vsel %vm958, %v4433, 0
  %v4470 = vsel %vm958, %v4435, 0
  %v4472 = vsel %vm958, %v4437, 0
  %v4474 = vsel %vm958, %v4439, 0
  %v4476 = vsel %vm958, %v4441, 0
  %v4478 = vsel %vm958, %v4443, 0
  %v4480 = vsel %vm958, %v4445, 0
  %v4482 = vsel %vm958, %v4447, 0
  %v4484 = vsel %vm958, %v4449, 0
  %v4486 = vsel %vm958, %v4451, 0
  %v4488 = vsel %vm958, %v4453, 0
  %v4490 = vsel %vm958, %v4455, 0
  %v4492 = vsel %vm958, %v4457, 0
  %v4494 = vsel %vm958, %v4459, 0
  %v4496 = vsel %vm958, %v4461, 0
  %v4498 = vsel %vm958, %v4463, 0
  %v4500 = vsel %vm958, %v4465, 0
  %4502 = vmatprep.subr.mxu0 0.0
  %4503 = vmatpush1.xpose.msra.mxu0 0.0
  %4504 = vmatprep.subr.mxu0 0.0
  %4505 = vmatpush1.xpose.msra.mxu0 0.0
  %4506 = vmatprep.subr.mxu0 0.0
  %4507 = vmatpush1.xpose.msra.mxu0 0.0
  %4508 = vmatprep.subr.mxu0 0.0
  %4509 = vmatpush1.xpose.msra.mxu0 0.0
  %4510 = vmatprep.subr.mxu0 0.0
  %4511 = vmatpush1.xpose.msra.mxu0 0.0
  %4512 = vmatprep.subr.mxu0 0.0
  %4513 = vmatpush1.xpose.msra.mxu0 0.0
  %4514 = vmatprep.subr.mxu0 0.0
  %4515 = vmatpush1.xpose.msra.mxu0 0.0
  %4516 = vmatprep.subr.mxu0 0.0
  %4517 = vmatpush1.xpose.msra.mxu0 %v4500
  %4518 = vmatprep.subr.mxu0 0.0
  %4519 = vmatpush1.xpose.msra.mxu0 %v4498
  %4520 = vmatprep.subr.mxu0 0.0
  %4521 = vmatpush1.xpose.msra.mxu0 %v4496
  %4522 = vmatprep.subr.mxu0 0.0
  %4523 = vmatpush1.xpose.msra.mxu0 %v4494
  %4524 = vmatprep.subr.mxu0 0.0
  %4525 = vmatpush1.xpose.msra.mxu0 %v4492
  %4526 = vmatprep.subr.mxu0 0.0
  %4527 = vmatpush1.xpose.msra.mxu0 %v4490
  %4528 = vmatprep.subr.mxu0 0.0
  %4529 = vmatpush1.xpose.msra.mxu0 %v4488
  %4530 = vmatprep.subr.mxu0 0.0
  %4531 = vmatpush1.xpose.msra.mxu0 %v4486
  %4532 = vmatprep.subr.mxu0 0.0
  %4533 = vmatpush1.xpose.msra.mxu0 %v4484
  %4534 = vmatprep.subr.mxu0 0.0
  %4535 = vmatpush2.xpose.msra.mxu0 0.0
  %4536 = vmatprep.subr.mxu0 0.0
  %4537 = vmatpush2.xpose.msra.mxu0 0.0
  %4538 = vmatprep.subr.mxu0 0.0
  %4539 = vmatpush2.xpose.msra.mxu0 0.0
  %4540 = vmatprep.subr.mxu0 0.0
  %4541 = vmatpush2.xpose.msra.mxu0 0.0
  %4542 = vmatprep.subr.mxu0 0.0
  %4543 = vmatpush2.xpose.msra.mxu0 0.0
  %4544 = vmatprep.subr.mxu0 0.0
  %4545 = vmatpush2.xpose.msra.mxu0 0.0
  %4546 = vmatprep.subr.mxu0 0.0
  %4547 = vmatpush2.xpose.msra.mxu0 0.0
  %4548 = vmatprep.subr.mxu0 0.0
  %4549 = vmatpush2.xpose.msra.mxu0 0.0
  %4550 = vmatprep.subr.mxu0 0.0
  %4551 = vmatpush2.xpose.msra.mxu0 0.0
  %4552 = vmatprep.subr.mxu0 0.0
  %4553 = vmatpush2.xpose.msra.mxu0 0.0
  %4554 = vmatprep.subr.mxu0 0.0
  %4555 = vmatpush2.xpose.msra.mxu0 0.0
  %4556 = vmatprep.subr.mxu0 0.0
  %4557 = vmatpush2.xpose.msra.mxu0 0.0
  %4558 = vmatprep.subr.mxu0 0.0
  %4559 = vmatpush2.xpose.msra.mxu0 0.0
  %4560 = vmatprep.subr.mxu0 0.0
  %4561 = vmatpush2.xpose.msra.mxu0 0.0
  %4562 = vmatprep.subr.mxu0 0.0
  %4563 = vmatpush2.xpose.msra.mxu0 0.0
  %4564 = vmatprep.subr.mxu0 0.0
  %4565 = vmatpush2.xpose.msra.mxu0 0.0
  %4566 = vmatprep.mubr.f32.mxu0 0.0
  %4567 = vmatmul.mubr.f32.gmra.mxu0 %v4466
  %v4568 = vpop.f32.mrf.mxu0
  %v4569 = vadd.f32 %v385, %v4568
  %v4570 = vpop.f32.mrf.mxu0
  %4571 = vmatprep.mubr.f32.mxu0 0.0
  %4572 = vmatmul.mubr.f32.gmra.mxu0 %v4468
  %v4573 = vpop.f32.mrf.mxu0
  %v4574 = vadd.f32 %v385, %v4573
  %v4575 = vpop.f32.mrf.mxu0
  %4576 = vmatprep.mubr.f32.mxu0 0.0
  %4577 = vmatmul.mubr.f32.gmra.mxu0 %v4470
  %v4578 = vpop.f32.mrf.mxu0
  %v4579 = vadd.f32 %v385, %v4578
  %v4580 = vpop.f32.mrf.mxu0
  %4581 = vmatprep.mubr.f32.mxu0 0.0
  %4582 = vmatmul.mubr.f32.gmra.mxu0 %v4472
  %v4583 = vpop.f32.mrf.mxu0
  %v4584 = vadd.f32 %v385, %v4583
  %v4585 = vpop.f32.mrf.mxu0
  %4586 = vmatprep.mubr.f32.mxu0 0.0
  %4587 = vmatmul.mubr.f32.gmra.mxu0 %v4474
  %v4588 = vpop.f32.mrf.mxu0
  %v4589 = vadd.f32 %v385, %v4588
  %v4590 = vpop.f32.mrf.mxu0
  %4591 = vmatprep.mubr.f32.mxu0 0.0
  %4592 = vmatmul.mubr.f32.gmra.mxu0 %v4476
  %v4593 = vpop.f32.mrf.mxu0
  %v4594 = vadd.f32 %v385, %v4593
  %v4595 = vpop.f32.mrf.mxu0
  %4596 = vmatprep.mubr.f32.mxu0 0.0
  %4597 = vmatmul.mubr.f32.gmra.mxu0 %v4478
  %v4598 = vpop.f32.mrf.mxu0
  %v4599 = vadd.f32 %v385, %v4598
  %v4600 = vpop.f32.mrf.mxu0
  %4601 = vmatprep.mubr.f32.mxu0 0.0
  %4602 = vmatmul.mubr.f32.gmra.mxu0 %v4480
  %v4603 = vpop.f32.mrf.mxu0
  %v4604 = vadd.f32 %v385, %v4603
  %v4605 = vpop.f32.mrf.mxu0
  %4606 = vmatprep.mubr.f32.mxu0 0.0
  %4607 = vmatmul.mubr.f32.gmra.mxu0 %v4482
  %v4608 = vpop.f32.mrf.mxu0
  %v4609 = vadd.f32 %v385, %v4608
  %v4610 = vpop.f32.mrf.mxu0
  %4611 = vdwg.mxu0
  %v4612 = vsel %vm1296, %v4387, -inf
  %4613 = vmax.xlane.f32.xlu0 %v4612
  %v4614 = vpop.xlane.xlu0 %4613
  %v4615 = vsel %vm1296, %v4392, -inf
  %4616 = vmax.xlane.f32.xlu0 %v4615
  %v4617 = vpop.xlane.xlu0 %4616
  %v4618 = vsel %vm1296, %v4397, -inf
  %4619 = vmax.xlane.f32.xlu0 %v4618
  %v4620 = vpop.xlane.xlu0 %4619
  %v4621 = vsel %vm1296, %v4402, -inf
  %4622 = vmax.xlane.f32.xlu0 %v4621
  %v4623 = vpop.xlane.xlu0 %4622
  %v4624 = vsel %vm1296, %v4407, -inf
  %4625 = vmax.xlane.f32.xlu0 %v4624
  %v4626 = vpop.xlane.xlu0 %4625
  %v4627 = vsel %vm1296, %v4412, -inf
  %4628 = vmax.xlane.f32.xlu0 %v4627
  %v4629 = vpop.xlane.xlu0 %4628
  %v4630 = vsel %vm1296, %v4417, -inf
  %4631 = vmax.xlane.f32.xlu0 %v4630
  %v4632 = vpop.xlane.xlu0 %4631
  %v4633 = vsel %vm1296, %v4422, -inf
  %4634 = vmax.xlane.f32.xlu0 %v4633
  %v4635 = vpop.xlane.xlu0 %4634
  %v4636 = vsel %vm1296, %v4427, -inf
  %4637 = vmax.xlane.f32.xlu0 %v4636
  %v4638 = vpop.xlane.xlu0 %4637
  %v4639 = vsel %vm1296, %v4569, -inf
  %4640 = vmax.xlane.f32.xlu0 %v4639
  %v4641 = vpop.xlane.xlu0 %4640
  %v4642 = vsel %vm1296, %v4574, -inf
  %4643 = vmax.xlane.f32.xlu0 %v4642
  %v4644 = vpop.xlane.xlu0 %4643
  %v4645 = vsel %vm1296, %v4579, -inf
  %4646 = vmax.xlane.f32.xlu0 %v4645
  %v4647 = vpop.xlane.xlu0 %4646
  %v4648 = vsel %vm1296, %v4584, -inf
  %4649 = vmax.xlane.f32.xlu0 %v4648
  %v4650 = vpop.xlane.xlu0 %4649
  %v4651 = vsel %vm1296, %v4589, -inf
  %4652 = vmax.xlane.f32.xlu0 %v4651
  %v4653 = vpop.xlane.xlu0 %4652
  %v4654 = vsel %vm1296, %v4594, -inf
  %4655 = vmax.xlane.f32.xlu0 %v4654
  %v4656 = vpop.xlane.xlu0 %4655
  %v4657 = vsel %vm1296, %v4599, -inf
  %4658 = vmax.xlane.f32.xlu0 %v4657
  %v4659 = vpop.xlane.xlu0 %4658
  %v4660 = vsel %vm1296, %v4604, -inf
  %4661 = vmax.xlane.f32.xlu0 %v4660
  %v4662 = vpop.xlane.xlu0 %4661
  %v4663 = vsel %vm1296, %v4609, -inf
  %4664 = vmax.xlane.f32.xlu0 %v4663
  %v4665 = vpop.xlane.xlu0 %4664
  %v4666 = vsub.f32 %v4387, %v4614
  %v4667 = vsub.f32 %v4392, %v4617
  %v4668 = vsub.f32 %v4397, %v4620
  %v4669 = vsub.f32 %v4402, %v4623
  %v4670 = vsub.f32 %v4407, %v4626
  %v4671 = vsub.f32 %v4412, %v4629
  %v4672 = vsub.f32 %v4417, %v4632
  %v4673 = vsub.f32 %v4422, %v4635
  %v4674 = vsub.f32 %v4427, %v4638
  %v4675 = vsub.f32 %v4569, %v4641
  %v4676 = vsub.f32 %v4574, %v4644
  %v4677 = vsub.f32 %v4579, %v4647
  %v4678 = vsub.f32 %v4584, %v4650
  %v4679 = vsub.f32 %v4589, %v4653
  %v4680 = vsub.f32 %v4594, %v4656
  %v4681 = vsub.f32 %v4599, %v4659
  %v4682 = vsub.f32 %v4604, %v4662
  %v4683 = vsub.f32 %v4609, %v4665
  %v4684 = vmul.f32 %v4666, 1.442695
  %v4685 = vpow.pop %v4684
  %v4686 = vmul.f32 %v4667, 1.442695
  %v4687 = vpow.pop %v4686
  %v4688 = vmul.f32 %v4668, 1.442695
  %v4689 = vpow.pop %v4688
  %v4690 = vmul.f32 %v4669, 1.442695
  %v4691 = vpow.pop %v4690
  %v4692 = vmul.f32 %v4670, 1.442695
  %v4693 = vpow.pop %v4692
  %v4694 = vmul.f32 %v4671, 1.442695
  %v4695 = vpow.pop %v4694
  %v4696 = vmul.f32 %v4672, 1.442695
  %v4697 = vpow.pop %v4696
  %v4698 = vmul.f32 %v4673, 1.442695
  %v4699 = vpow.pop %v4698
  %v4700 = vmul.f32 %v4674, 1.442695
  %v4701 = vpow.pop %v4700
  %v4702 = vmul.f32 %v4675, 1.442695
  %v4703 = vpow.pop %v4702
  %v4704 = vmul.f32 %v4676, 1.442695
  %v4705 = vpow.pop %v4704
  %v4706 = vmul.f32 %v4677, 1.442695
  %v4707 = vpow.pop %v4706
  %v4708 = vmul.f32 %v4678, 1.442695
  %v4709 = vpow.pop %v4708
  %v4710 = vmul.f32 %v4679, 1.442695
  %v4711 = vpow.pop %v4710
  %v4712 = vmul.f32 %v4680, 1.442695
  %v4713 = vpow.pop %v4712
  %v4714 = vmul.f32 %v4681, 1.442695
  %v4715 = vpow.pop %v4714
  %v4716 = vmul.f32 %v4682, 1.442695
  %v4717 = vpow.pop %v4716
  %v4718 = vmul.f32 %v4683, 1.442695
  %v4719 = vpow.pop %v4718
  %v4720 = vsel %vm1296, %v4685, 0.0
  %4721 = vadd.xlane.f32.xlu0 %v4720
  %v4722 = vpop.xlane.xlu0 %4721
  %v4723 = vsel %vm1296, %v4687, 0.0
  %4724 = vadd.xlane.f32.xlu0 %v4723
  %v4725 = vpop.xlane.xlu0 %4724
  %v4726 = vsel %vm1296, %v4689, 0.0
  %4727 = vadd.xlane.f32.xlu0 %v4726
  %v4728 = vpop.xlane.xlu0 %4727
  %v4729 = vsel %vm1296, %v4691, 0.0
  %4730 = vadd.xlane.f32.xlu0 %v4729
  %v4731 = vpop.xlane.xlu0 %4730
  %v4732 = vsel %vm1296, %v4693, 0.0
  %4733 = vadd.xlane.f32.xlu0 %v4732
  %v4734 = vpop.xlane.xlu0 %4733
  %v4735 = vsel %vm1296, %v4695, 0.0
  %4736 = vadd.xlane.f32.xlu0 %v4735
  %v4737 = vpop.xlane.xlu0 %4736
  %v4738 = vsel %vm1296, %v4697, 0.0
  %4739 = vadd.xlane.f32.xlu0 %v4738
  %v4740 = vpop.xlane.xlu0 %4739
  %v4741 = vsel %vm1296, %v4699, 0.0
  %4742 = vadd.xlane.f32.xlu0 %v4741
  %v4743 = vpop.xlane.xlu0 %4742
  %v4744 = vsel %vm1296, %v4701, 0.0
  %4745 = vadd.xlane.f32.xlu0 %v4744
  %v4746 = vpop.xlane.xlu0 %4745
  %v4747 = vsel %vm1296, %v4703, 0.0
  %4748 = vadd.xlane.f32.xlu0 %v4747
  %v4749 = vpop.xlane.xlu0 %4748
  %v4750 = vsel %vm1296, %v4705, 0.0
  %4751 = vadd.xlane.f32.xlu0 %v4750
  %v4752 = vpop.xlane.xlu0 %4751
  %v4753 = vsel %vm1296, %v4707, 0.0
  %4754 = vadd.xlane.f32.xlu0 %v4753
  %v4755 = vpop.xlane.xlu0 %4754
  %v4756 = vsel %vm1296, %v4709, 0.0
  %4757 = vadd.xlane.f32.xlu0 %v4756
  %v4758 = vpop.xlane.xlu0 %4757
  %v4759 = vsel %vm1296, %v4711, 0.0
  %4760 = vadd.xlane.f32.xlu0 %v4759
  %v4761 = vpop.xlane.xlu0 %4760
  %v4762 = vsel %vm1296, %v4713, 0.0
  %4763 = vadd.xlane.f32.xlu0 %v4762
  %v4764 = vpop.xlane.xlu0 %4763
  %v4765 = vsel %vm1296, %v4715, 0.0
  %4766 = vadd.xlane.f32.xlu0 %v4765
  %v4767 = vpop.xlane.xlu0 %4766
  %v4768 = vsel %vm1296, %v4717, 0.0
  %4769 = vadd.xlane.f32.xlu0 %v4768
  %v4770 = vpop.xlane.xlu0 %4769
  %v4771 = vsel %vm1296, %v4719, 0.0
  %4772 = vadd.xlane.f32.xlu0 %v4771
  %v4773 = vpop.xlane.xlu0 %4772
  %v4774 = vrcp.pop %v4722
  %v4775 = vrcp.pop %v4725
  %v4776 = vrcp.pop %v4728
  %v4777 = vrcp.pop %v4731
  %v4778 = vrcp.pop %v4734
  %v4779 = vrcp.pop %v4737
  %v4780 = vrcp.pop %v4740
  %v4781 = vrcp.pop %v4743
  %v4782 = vrcp.pop %v4746
  %v4783 = vrcp.pop %v4749
  %v4784 = vrcp.pop %v4752
  %v4785 = vrcp.pop %v4755
  %v4786 = vrcp.pop %v4758
  %v4787 = vrcp.pop %v4761
  %v4788 = vrcp.pop %v4764
  %v4789 = vrcp.pop %v4767
  %v4790 = vrcp.pop %v4770
  %v4791 = vrcp.pop %v4773
  %v4792 = vmul.f32 %v4685, %v4774
  %v4793 = vmul.f32 %v4687, %v4775
  %v4794 = vmul.f32 %v4689, %v4776
  %v4795 = vmul.f32 %v4691, %v4777
  %v4796 = vmul.f32 %v4693, %v4778
  %v4797 = vmul.f32 %v4695, %v4779
  %v4798 = vmul.f32 %v4697, %v4780
  %v4799 = vmul.f32 %v4699, %v4781
  %v4800 = vmul.f32 %v4701, %v4782
  %v4801 = vmul.f32 %v4703, %v4783
  %v4802 = vmul.f32 %v4705, %v4784
  %v4803 = vmul.f32 %v4707, %v4785
  %v4804 = vmul.f32 %v4709, %v4786
  %v4805 = vmul.f32 %v4711, %v4787
  %v4806 = vmul.f32 %v4713, %v4788
  %v4807 = vmul.f32 %v4715, %v4789
  %v4808 = vmul.f32 %v4717, %v4790
  %v4809 = vmul.f32 %v4719, %v4791
  %4810 = vrot.lane.b32.xlu0 %v825, 40
  %v4811 = vpop.permute.xlu0 %4810
  %4812 = vrot.lane.b32.xlu0 %v830, 40
  %v4813 = vpop.permute.xlu0 %4812
  %4814 = vrot.lane.b32.xlu0 %v835, 40
  %v4815 = vpop.permute.xlu0 %4814
  %4816 = vrot.lane.b32.xlu0 %v840, 40
  %v4817 = vpop.permute.xlu0 %4816
  %4818 = vrot.lane.b32.xlu0 %v845, 40
  %v4819 = vpop.permute.xlu0 %4818
  %4820 = vrot.lane.b32.xlu0 %v850, 40
  %v4821 = vpop.permute.xlu0 %4820
  %4822 = vrot.lane.b32.xlu0 %v855, 40
  %v4823 = vpop.permute.xlu0 %4822
  %4824 = vrot.lane.b32.xlu0 %v860, 40
  %v4825 = vpop.permute.xlu0 %4824
  %4826 = vrot.lane.b32.xlu0 %v865, 40
  %v4827 = vpop.permute.xlu0 %4826
  %v4838 = vsel %vm1296, %v4792, 0
  %v4841 = vsel %vm1296, %v4793, 0
  %v4844 = vsel %vm1296, %v4794, 0
  %v4847 = vsel %vm1296, %v4795, 0
  %v4850 = vsel %vm1296, %v4796, 0
  %v4853 = vsel %vm1296, %v4797, 0
  %v4856 = vsel %vm1296, %v4798, 0
  %v4859 = vsel %vm1296, %v4799, 0
  %v4862 = vsel %vm1296, %v4800, 0
  %4864 = vmatprep.subr.mxu0 0.0
  %4865 = vmatpush1.msra.mxu0 0.0
  %4866 = vmatprep.subr.mxu0 0.0
  %4867 = vmatpush1.msra.mxu0 0.0
  %4868 = vmatprep.subr.mxu0 0.0
  %4869 = vmatpush1.msra.mxu0 0.0
  %4870 = vmatprep.subr.mxu0 0.0
  %4871 = vmatpush1.msra.mxu0 0.0
  %4872 = vmatprep.subr.mxu0 0.0
  %4873 = vmatpush1.msra.mxu0 0.0
  %4874 = vmatprep.subr.mxu0 0.0
  %4875 = vmatpush1.msra.mxu0 0.0
  %4876 = vmatprep.subr.mxu0 0.0
  %4877 = vmatpush1.msra.mxu0 0.0
  %4878 = vmatprep.subr.mxu0 0.0
  %4879 = vmatpush1.msra.mxu0 %v4827
  %4880 = vmatprep.subr.mxu0 0.0
  %4881 = vmatpush1.msra.mxu0 %v4825
  %4882 = vmatprep.subr.mxu0 0.0
  %4883 = vmatpush1.msra.mxu0 %v4823
  %4884 = vmatprep.subr.mxu0 0.0
  %4885 = vmatpush1.msra.mxu0 %v4821
  %4886 = vmatprep.subr.mxu0 0.0
  %4887 = vmatpush1.msra.mxu0 %v4819
  %4888 = vmatprep.subr.mxu0 0.0
  %4889 = vmatpush1.msra.mxu0 %v4817
  %4890 = vmatprep.subr.mxu0 0.0
  %4891 = vmatpush1.msra.mxu0 %v4815
  %4892 = vmatprep.subr.mxu0 0.0
  %4893 = vmatpush1.msra.mxu0 %v4813
  %4894 = vmatprep.subr.mxu0 0.0
  %4895 = vmatpush1.msra.mxu0 %v4811
  %4896 = vmatprep.subr.mxu0 0.0
  %4897 = vmatpush2.msra.mxu0 0.0
  %4898 = vmatprep.subr.mxu0 0.0
  %4899 = vmatpush2.msra.mxu0 0.0
  %4900 = vmatprep.subr.mxu0 0.0
  %4901 = vmatpush2.msra.mxu0 0.0
  %4902 = vmatprep.subr.mxu0 0.0
  %4903 = vmatpush2.msra.mxu0 0.0
  %4904 = vmatprep.subr.mxu0 0.0
  %4905 = vmatpush2.msra.mxu0 0.0
  %4906 = vmatprep.subr.mxu0 0.0
  %4907 = vmatpush2.msra.mxu0 0.0
  %4908 = vmatprep.subr.mxu0 0.0
  %4909 = vmatpush2.msra.mxu0 0.0
  %4910 = vmatprep.subr.mxu0 0.0
  %4911 = vmatpush2.msra.mxu0 0.0
  %4912 = vmatprep.subr.mxu0 0.0
  %4913 = vmatpush2.msra.mxu0 0.0
  %4914 = vmatprep.subr.mxu0 0.0
  %4915 = vmatpush2.msra.mxu0 0.0
  %4916 = vmatprep.subr.mxu0 0.0
  %4917 = vmatpush2.msra.mxu0 0.0
  %4918 = vmatprep.subr.mxu0 0.0
  %4919 = vmatpush2.msra.mxu0 0.0
  %4920 = vmatprep.subr.mxu0 0.0
  %4921 = vmatpush2.msra.mxu0 0.0
  %4922 = vmatprep.subr.mxu0 0.0
  %4923 = vmatpush2.msra.mxu0 0.0
  %4924 = vmatprep.subr.mxu0 0.0
  %4925 = vmatpush2.msra.mxu0 0.0
  %4926 = vmatprep.subr.mxu0 0.0
  %4927 = vmatpush2.msra.mxu0 0.0
  %4928 = vmatprep.mubr.f32.mxu0 0.0
  %4929 = vmatmul.mubr.f32.gmra.mxu0 %v4838
  %v4930 = vpop.f32.mrf.mxu0
  %v4931 = vadd.f32 0.0, %v4930
  %v4932 = vpop.f32.mrf.mxu0
  %4933 = vmatprep.mubr.f32.mxu0 0.0
  %4934 = vmatmul.mubr.f32.gmra.mxu0 %v4841
  %v4935 = vpop.f32.mrf.mxu0
  %v4936 = vadd.f32 0.0, %v4935
  %v4937 = vpop.f32.mrf.mxu0
  %4938 = vmatprep.mubr.f32.mxu0 0.0
  %4939 = vmatmul.mubr.f32.gmra.mxu0 %v4844
  %v4940 = vpop.f32.mrf.mxu0
  %v4941 = vadd.f32 0.0, %v4940
  %v4942 = vpop.f32.mrf.mxu0
  %4943 = vmatprep.mubr.f32.mxu0 0.0
  %4944 = vmatmul.mubr.f32.gmra.mxu0 %v4847
  %v4945 = vpop.f32.mrf.mxu0
  %v4946 = vadd.f32 0.0, %v4945
  %v4947 = vpop.f32.mrf.mxu0
  %4948 = vmatprep.mubr.f32.mxu0 0.0
  %4949 = vmatmul.mubr.f32.gmra.mxu0 %v4850
  %v4950 = vpop.f32.mrf.mxu0
  %v4951 = vadd.f32 0.0, %v4950
  %v4952 = vpop.f32.mrf.mxu0
  %4953 = vmatprep.mubr.f32.mxu0 0.0
  %4954 = vmatmul.mubr.f32.gmra.mxu0 %v4853
  %v4955 = vpop.f32.mrf.mxu0
  %v4956 = vadd.f32 0.0, %v4955
  %v4957 = vpop.f32.mrf.mxu0
  %4958 = vmatprep.mubr.f32.mxu0 0.0
  %4959 = vmatmul.mubr.f32.gmra.mxu0 %v4856
  %v4960 = vpop.f32.mrf.mxu0
  %v4961 = vadd.f32 0.0, %v4960
  %v4962 = vpop.f32.mrf.mxu0
  %4963 = vmatprep.mubr.f32.mxu0 0.0
  %4964 = vmatmul.mubr.f32.gmra.mxu0 %v4859
  %v4965 = vpop.f32.mrf.mxu0
  %v4966 = vadd.f32 0.0, %v4965
  %v4967 = vpop.f32.mrf.mxu0
  %4968 = vmatprep.mubr.f32.mxu0 0.0
  %4969 = vmatmul.mubr.f32.gmra.mxu0 %v4862
  %v4970 = vpop.f32.mrf.mxu0
  %v4971 = vadd.f32 0.0, %v4970
  %v4972 = vpop.f32.mrf.mxu0
  %4973 = vdwg.mxu0
  %4974 = vrot.lane.b32.xlu0 %v870, 40
  %v4975 = vpop.permute.xlu0 %4974
  %4976 = vrot.lane.b32.xlu0 %v875, 40
  %v4977 = vpop.permute.xlu0 %4976
  %4978 = vrot.lane.b32.xlu0 %v880, 40
  %v4979 = vpop.permute.xlu0 %4978
  %4980 = vrot.lane.b32.xlu0 %v885, 40
  %v4981 = vpop.permute.xlu0 %4980
  %4982 = vrot.lane.b32.xlu0 %v890, 40
  %v4983 = vpop.permute.xlu0 %4982
  %4984 = vrot.lane.b32.xlu0 %v895, 40
  %v4985 = vpop.permute.xlu0 %4984
  %4986 = vrot.lane.b32.xlu0 %v900, 40
  %v4987 = vpop.permute.xlu0 %4986
  %4988 = vrot.lane.b32.xlu0 %v905, 40
  %v4989 = vpop.permute.xlu0 %4988
  %4990 = vrot.lane.b32.xlu0 %v910, 40
  %v4991 = vpop.permute.xlu0 %4990
  %v5002 = vsel %vm1296, %v4801, 0
  %v5005 = vsel %vm1296, %v4802, 0
  %v5008 = vsel %vm1296, %v4803, 0
  %v5011 = vsel %vm1296, %v4804, 0
  %v5014 = vsel %vm1296, %v4805, 0
  %v5017 = vsel %vm1296, %v4806, 0
  %v5020 = vsel %vm1296, %v4807, 0
  %v5023 = vsel %vm1296, %v4808, 0
  %v5026 = vsel %vm1296, %v4809, 0
  %5028 = vmatprep.subr.mxu0 0.0
  %5029 = vmatpush1.msra.mxu0 0.0
  %5030 = vmatprep.subr.mxu0 0.0
  %5031 = vmatpush1.msra.mxu0 0.0
  %5032 = vmatprep.subr.mxu0 0.0
  %5033 = vmatpush1.msra.mxu0 0.0
  %5034 = vmatprep.subr.mxu0 0.0
  %5035 = vmatpush1.msra.mxu0 0.0
  %5036 = vmatprep.subr.mxu0 0.0
  %5037 = vmatpush1.msra.mxu0 0.0
  %5038 = vmatprep.subr.mxu0 0.0
  %5039 = vmatpush1.msra.mxu0 0.0
  %5040 = vmatprep.subr.mxu0 0.0
  %5041 = vmatpush1.msra.mxu0 0.0
  %5042 = vmatprep.subr.mxu0 0.0
  %5043 = vmatpush1.msra.mxu0 %v4991
  %5044 = vmatprep.subr.mxu0 0.0
  %5045 = vmatpush1.msra.mxu0 %v4989
  %5046 = vmatprep.subr.mxu0 0.0
  %5047 = vmatpush1.msra.mxu0 %v4987
  %5048 = vmatprep.subr.mxu0 0.0
  %5049 = vmatpush1.msra.mxu0 %v4985
  %5050 = vmatprep.subr.mxu0 0.0
  %5051 = vmatpush1.msra.mxu0 %v4983
  %5052 = vmatprep.subr.mxu0 0.0
  %5053 = vmatpush1.msra.mxu0 %v4981
  %5054 = vmatprep.subr.mxu0 0.0
  %5055 = vmatpush1.msra.mxu0 %v4979
  %5056 = vmatprep.subr.mxu0 0.0
  %5057 = vmatpush1.msra.mxu0 %v4977
  %5058 = vmatprep.subr.mxu0 0.0
  %5059 = vmatpush1.msra.mxu0 %v4975
  %5060 = vmatprep.subr.mxu0 0.0
  %5061 = vmatpush2.msra.mxu0 0.0
  %5062 = vmatprep.subr.mxu0 0.0
  %5063 = vmatpush2.msra.mxu0 0.0
  %5064 = vmatprep.subr.mxu0 0.0
  %5065 = vmatpush2.msra.mxu0 0.0
  %5066 = vmatprep.subr.mxu0 0.0
  %5067 = vmatpush2.msra.mxu0 0.0
  %5068 = vmatprep.subr.mxu0 0.0
  %5069 = vmatpush2.msra.mxu0 0.0
  %5070 = vmatprep.subr.mxu0 0.0
  %5071 = vmatpush2.msra.mxu0 0.0
  %5072 = vmatprep.subr.mxu0 0.0
  %5073 = vmatpush2.msra.mxu0 0.0
  %5074 = vmatprep.subr.mxu0 0.0
  %5075 = vmatpush2.msra.mxu0 0.0
  %5076 = vmatprep.subr.mxu0 0.0
  %5077 = vmatpush2.msra.mxu0 0.0
  %5078 = vmatprep.subr.mxu0 0.0
  %5079 = vmatpush2.msra.mxu0 0.0
  %5080 = vmatprep.subr.mxu0 0.0
  %5081 = vmatpush2.msra.mxu0 0.0
  %5082 = vmatprep.subr.mxu0 0.0
  %5083 = vmatpush2.msra.mxu0 0.0
  %5084 = vmatprep.subr.mxu0 0.0
  %5085 = vmatpush2.msra.mxu0 0.0
  %5086 = vmatprep.subr.mxu0 0.0
  %5087 = vmatpush2.msra.mxu0 0.0
  %5088 = vmatprep.subr.mxu0 0.0
  %5089 = vmatpush2.msra.mxu0 0.0
  %5090 = vmatprep.subr.mxu0 0.0
  %5091 = vmatpush2.msra.mxu0 0.0
  %5092 = vmatprep.mubr.f32.mxu0 0.0
  %5093 = vmatmul.mubr.f32.gmra.mxu0 %v5002
  %v5094 = vpop.f32.mrf.mxu0
  %v5095 = vadd.f32 0.0, %v5094
  %v5096 = vpop.f32.mrf.mxu0
  %5097 = vmatprep.mubr.f32.mxu0 0.0
  %5098 = vmatmul.mubr.f32.gmra.mxu0 %v5005
  %v5099 = vpop.f32.mrf.mxu0
  %v5100 = vadd.f32 0.0, %v5099
  %v5101 = vpop.f32.mrf.mxu0
  %5102 = vmatprep.mubr.f32.mxu0 0.0
  %5103 = vmatmul.mubr.f32.gmra.mxu0 %v5008
  %v5104 = vpop.f32.mrf.mxu0
  %v5105 = vadd.f32 0.0, %v5104
  %v5106 = vpop.f32.mrf.mxu0
  %5107 = vmatprep.mubr.f32.mxu0 0.0
  %5108 = vmatmul.mubr.f32.gmra.mxu0 %v5011
  %v5109 = vpop.f32.mrf.mxu0
  %v5110 = vadd.f32 0.0, %v5109
  %v5111 = vpop.f32.mrf.mxu0
  %5112 = vmatprep.mubr.f32.mxu0 0.0
  %5113 = vmatmul.mubr.f32.gmra.mxu0 %v5014
  %v5114 = vpop.f32.mrf.mxu0
  %v5115 = vadd.f32 0.0, %v5114
  %v5116 = vpop.f32.mrf.mxu0
  %5117 = vmatprep.mubr.f32.mxu0 0.0
  %5118 = vmatmul.mubr.f32.gmra.mxu0 %v5017
  %v5119 = vpop.f32.mrf.mxu0
  %v5120 = vadd.f32 0.0, %v5119
  %v5121 = vpop.f32.mrf.mxu0
  %5122 = vmatprep.mubr.f32.mxu0 0.0
  %5123 = vmatmul.mubr.f32.gmra.mxu0 %v5020
  %v5124 = vpop.f32.mrf.mxu0
  %v5125 = vadd.f32 0.0, %v5124
  %v5126 = vpop.f32.mrf.mxu0
  %5127 = vmatprep.mubr.f32.mxu0 0.0
  %5128 = vmatmul.mubr.f32.gmra.mxu0 %v5023
  %v5129 = vpop.f32.mrf.mxu0
  %v5130 = vadd.f32 0.0, %v5129
  %v5131 = vpop.f32.mrf.mxu0
  %5132 = vmatprep.mubr.f32.mxu0 0.0
  %5133 = vmatmul.mubr.f32.gmra.mxu0 %v5026
  %v5134 = vpop.f32.mrf.mxu0
  %v5135 = vadd.f32 0.0, %v5134
  %v5136 = vpop.f32.mrf.mxu0
  %5137 = vdwg.mxu0
  %v5139 = vsel %vm958, %v4931, 0
  %v5142 = vsel %vm958, %v4936, 0
  %v5145 = vsel %vm958, %v4941, 0
  %v5148 = vsel %vm958, %v4946, 0
  %v5151 = vsel %vm958, %v4951, 0
  %v5154 = vsel %vm958, %v4956, 0
  %v5157 = vsel %vm958, %v4961, 0
  %v5160 = vsel %vm958, %v4966, 0
  %v5163 = vsel %vm958, %v4971, 0
  %v5166 = vsel %vm958, %v5095, 0
  %v5169 = vsel %vm958, %v5100, 0
  %v5172 = vsel %vm958, %v5105, 0
  %v5175 = vsel %vm958, %v5110, 0
  %v5178 = vsel %vm958, %v5115, 0
  %v5181 = vsel %vm958, %v5120, 0
  %v5184 = vsel %vm958, %v5125, 0
  %v5187 = vsel %vm958, %v5130, 0
  %v5190 = vsel %vm958, %v5135, 0
  %5192 = vmatprep.subr.mxu0 0.0
  %5193 = vmatpush1.msra.mxu0 0.0
  %5194 = vmatprep.subr.mxu0 0.0
  %5195 = vmatpush1.msra.mxu0 0.0
  %5196 = vmatprep.subr.mxu0 0.0
  %5197 = vmatpush1.msra.mxu0 0.0
  %5198 = vmatprep.subr.mxu0 0.0
  %5199 = vmatpush1.msra.mxu0 0.0
  %5200 = vmatprep.subr.mxu0 0.0
  %5201 = vmatpush1.msra.mxu0 0.0
  %5202 = vmatprep.subr.mxu0 0.0
  %5203 = vmatpush1.msra.mxu0 0.0
  %5204 = vmatprep.subr.mxu0 0.0
  %5205 = vmatpush1.msra.mxu0 0.0
  %5206 = vmatprep.subr.mxu0 0.0
  %5207 = vmatpush1.msra.mxu0 0.0
  %5208 = vmatprep.subr.mxu0 0.0
  %5209 = vmatpush1.msra.mxu0 0.0
  %5210 = vmatprep.subr.mxu0 0.0
  %5211 = vmatpush1.msra.mxu0 0.0
  %5212 = vmatprep.subr.mxu0 0.0
  %5213 = vmatpush1.msra.mxu0 0.0
  %5214 = vmatprep.subr.mxu0 0.0
  %5215 = vmatpush1.msra.mxu0 0.0
  %5216 = vmatprep.subr.mxu0 0.0
  %5217 = vmatpush1.msra.mxu0 0.0
  %5218 = vmatprep.subr.mxu0 0.0
  %5219 = vmatpush1.msra.mxu0 0.0
  %5220 = vmatprep.subr.mxu0 0.0
  %5221 = vmatpush1.msra.mxu0 0.0
  %5222 = vmatprep.subr.mxu0 0.0
  %5223 = vmatpush1.msra.mxu0 %v397
  %5224 = vmatprep.subr.mxu0 0.0
  %5225 = vmatpush2.msra.mxu0 0.0
  %5226 = vmatprep.subr.mxu0 0.0
  %5227 = vmatpush2.msra.mxu0 0.0
  %5228 = vmatprep.subr.mxu0 0.0
  %5229 = vmatpush2.msra.mxu0 0.0
  %5230 = vmatprep.subr.mxu0 0.0
  %5231 = vmatpush2.msra.mxu0 0.0
  %5232 = vmatprep.subr.mxu0 0.0
  %5233 = vmatpush2.msra.mxu0 0.0
  %5234 = vmatprep.subr.mxu0 0.0
  %5235 = vmatpush2.msra.mxu0 0.0
  %5236 = vmatprep.subr.mxu0 0.0
  %5237 = vmatpush2.msra.mxu0 0.0
  %5238 = vmatprep.subr.mxu0 0.0
  %5239 = vmatpush2.msra.mxu0 0.0
  %5240 = vmatprep.subr.mxu0 0.0
  %5241 = vmatpush2.msra.mxu0 0.0
  %5242 = vmatprep.subr.mxu0 0.0
  %5243 = vmatpush2.msra.mxu0 0.0
  %5244 = vmatprep.subr.mxu0 0.0
  %5245 = vmatpush2.msra.mxu0 0.0
  %5246 = vmatprep.subr.mxu0 0.0
  %5247 = vmatpush2.msra.mxu0 0.0
  %5248 = vmatprep.subr.mxu0 0.0
  %5249 = vmatpush2.msra.mxu0 0.0
  %5250 = vmatprep.subr.mxu0 0.0
  %5251 = vmatpush2.msra.mxu0 0.0
  %5252 = vmatprep.subr.mxu0 0.0
  %5253 = vmatpush2.msra.mxu0 0.0
  %5254 = vmatprep.subr.mxu0 0.0
  %5255 = vmatpush2.msra.mxu0 0.0
  %5256 = vmatprep.mubr.f32.mxu0 0.0
  %5257 = vmatmul.mubr.f32.gmra.mxu0 %v5139
  %v5258 = vpop.f32.mrf.mxu0
  %v5259 = vadd.f32 0.0, %v5258
  %v5260 = vpop.f32.mrf.mxu0
  %5261 = vmatprep.mubr.f32.mxu0 0.0
  %5262 = vmatmul.mubr.f32.gmra.mxu0 %v5142
  %v5263 = vpop.f32.mrf.mxu0
  %v5264 = vadd.f32 0.0, %v5263
  %v5265 = vpop.f32.mrf.mxu0
  %5266 = vmatprep.mubr.f32.mxu0 0.0
  %5267 = vmatmul.mubr.f32.gmra.mxu0 %v5145
  %v5268 = vpop.f32.mrf.mxu0
  %v5269 = vadd.f32 0.0, %v5268
  %v5270 = vpop.f32.mrf.mxu0
  %5271 = vmatprep.mubr.f32.mxu0 0.0
  %5272 = vmatmul.mubr.f32.gmra.mxu0 %v5148
  %v5273 = vpop.f32.mrf.mxu0
  %v5274 = vadd.f32 0.0, %v5273
  %v5275 = vpop.f32.mrf.mxu0
  %5276 = vmatprep.mubr.f32.mxu0 0.0
  %5277 = vmatmul.mubr.f32.gmra.mxu0 %v5151
  %v5278 = vpop.f32.mrf.mxu0
  %v5279 = vadd.f32 0.0, %v5278
  %v5280 = vpop.f32.mrf.mxu0
  %5281 = vmatprep.mubr.f32.mxu0 0.0
  %5282 = vmatmul.mubr.f32.gmra.mxu0 %v5154
  %v5283 = vpop.f32.mrf.mxu0
  %v5284 = vadd.f32 0.0, %v5283
  %v5285 = vpop.f32.mrf.mxu0
  %5286 = vmatprep.mubr.f32.mxu0 0.0
  %5287 = vmatmul.mubr.f32.gmra.mxu0 %v5157
  %v5288 = vpop.f32.mrf.mxu0
  %v5289 = vadd.f32 0.0, %v5288
  %v5290 = vpop.f32.mrf.mxu0
  %5291 = vmatprep.mubr.f32.mxu0 0.0
  %5292 = vmatmul.mubr.f32.gmra.mxu0 %v5160
  %v5293 = vpop.f32.mrf.mxu0
  %v5294 = vadd.f32 0.0, %v5293
  %v5295 = vpop.f32.mrf.mxu0
  %5296 = vmatprep.mubr.f32.mxu0 0.0
  %5297 = vmatmul.mubr.f32.gmra.mxu0 %v5163
  %v5298 = vpop.f32.mrf.mxu0
  %v5299 = vadd.f32 0.0, %v5298
  %v5300 = vpop.f32.mrf.mxu0
  %5301 = vmatprep.mubr.f32.mxu0 0.0
  %5302 = vmatmul.mubr.f32.gmra.mxu0 %v5166
  %v5303 = vpop.f32.mrf.mxu0
  %v5304 = vadd.f32 0.0, %v5303
  %v5305 = vpop.f32.mrf.mxu0
  %5306 = vmatprep.mubr.f32.mxu0 0.0
  %5307 = vmatmul.mubr.f32.gmra.mxu0 %v5169
  %v5308 = vpop.f32.mrf.mxu0
  %v5309 = vadd.f32 0.0, %v5308
  %v5310 = vpop.f32.mrf.mxu0
  %5311 = vmatprep.mubr.f32.mxu0 0.0
  %5312 = vmatmul.mubr.f32.gmra.mxu0 %v5172
  %v5313 = vpop.f32.mrf.mxu0
  %v5314 = vadd.f32 0.0, %v5313
  %v5315 = vpop.f32.mrf.mxu0
  %5316 = vmatprep.mubr.f32.mxu0 0.0
  %5317 = vmatmul.mubr.f32.gmra.mxu0 %v5175
  %v5318 = vpop.f32.mrf.mxu0
  %v5319 = vadd.f32 0.0, %v5318
  %v5320 = vpop.f32.mrf.mxu0
  %5321 = vmatprep.mubr.f32.mxu0 0.0
  %5322 = vmatmul.mubr.f32.gmra.mxu0 %v5178
  %v5323 = vpop.f32.mrf.mxu0
  %v5324 = vadd.f32 0.0, %v5323
  %v5325 = vpop.f32.mrf.mxu0
  %5326 = vmatprep.mubr.f32.mxu0 0.0
  %5327 = vmatmul.mubr.f32.gmra.mxu0 %v5181
  %v5328 = vpop.f32.mrf.mxu0
  %v5329 = vadd.f32 0.0, %v5328
  %v5330 = vpop.f32.mrf.mxu0
  %5331 = vmatprep.mubr.f32.mxu0 0.0
  %5332 = vmatmul.mubr.f32.gmra.mxu0 %v5184
  %v5333 = vpop.f32.mrf.mxu0
  %v5334 = vadd.f32 0.0, %v5333
  %v5335 = vpop.f32.mrf.mxu0
  %5336 = vmatprep.mubr.f32.mxu0 0.0
  %5337 = vmatmul.mubr.f32.gmra.mxu0 %v5187
  %v5338 = vpop.f32.mrf.mxu0
  %v5339 = vadd.f32 0.0, %v5338
  %v5340 = vpop.f32.mrf.mxu0
  %5341 = vmatprep.mubr.f32.mxu0 0.0
  %5342 = vmatmul.mubr.f32.gmra.mxu0 %v5190
  %v5343 = vpop.f32.mrf.mxu0
  %v5344 = vadd.f32 0.0, %v5343
  %v5345 = vpop.f32.mrf.mxu0
  %5346 = vdwg.mxu0
  %v5347 = vadd.f32 %v4230, %v5259
  %v5348 = vadd.f32 %v4231, %v5264
  %v5349 = vadd.f32 %v4232, %v5269
  %v5350 = vadd.f32 %v4233, %v5274
  %v5351 = vadd.f32 %v4234, %v5279
  %v5352 = vadd.f32 %v4235, %v5284
  %v5353 = vadd.f32 %v4236, %v5289
  %v5354 = vadd.f32 %v4237, %v5294
  %v5355 = vadd.f32 %v4238, %v5299
  %v5356 = vadd.f32 %v4239, %v5304
  %v5357 = vadd.f32 %v4240, %v5309
  %v5358 = vadd.f32 %v4241, %v5314
  %v5359 = vadd.f32 %v4242, %v5319
  %v5360 = vadd.f32 %v4243, %v5324
  %v5361 = vadd.f32 %v4244, %v5329
  %v5362 = vadd.f32 %v4245, %v5334
  %v5363 = vadd.f32 %v4246, %v5339
  %v5364 = vadd.f32 %v4247, %v5344
  %v5365 = vadd.f32 %v364, %v5347
  %v5366 = vadd.f32 %v365, %v5348
  %v5367 = vadd.f32 %v366, %v5349
  %v5368 = vadd.f32 %v367, %v5350
  %v5369 = vadd.f32 %v368, %v5351
  %v5370 = vadd.f32 %v369, %v5352
  %v5371 = vadd.f32 %v370, %v5353
  %v5372 = vadd.f32 %v371, %v5354
  %v5373 = vadd.f32 %v372, %v5355
  %v5374 = vadd.f32 %v373, %v5356
  %v5375 = vadd.f32 %v374, %v5357
  %v5376 = vadd.f32 %v375, %v5358
  %v5377 = vadd.f32 %v376, %v5359
  %v5378 = vadd.f32 %v377, %v5360
  %v5379 = vadd.f32 %v378, %v5361
  %v5380 = vadd.f32 %v379, %v5362
  %v5381 = vadd.f32 %v380, %v5363
  %v5382 = vadd.f32 %v381, %v5364
  %v5384 = vlaneseq
  %v5385 = vshrl.u32 %v5384, 7
  %v5386 = vsub.s32 0, %v5385
  %v5387 = vrot.slane %v398, %v5386
  %v5389 = vadd.f32 %v5365, %v5387
  %v5390 = vadd.f32 %v5366, %v5387
  %v5391 = vadd.f32 %v5367, %v5387
  %v5392 = vadd.f32 %v5368, %v5387
  %v5393 = vadd.f32 %v5369, %v5387
  %v5394 = vadd.f32 %v5370, %v5387
  %v5395 = vadd.f32 %v5371, %v5387
  %v5396 = vadd.f32 %v5372, %v5387
  %v5397 = vadd.f32 %v5373, %v5387
  %v5398 = vadd.f32 %v5374, %v5387
  %v5399 = vadd.f32 %v5375, %v5387
  %v5400 = vadd.f32 %v5376, %v5387
  %v5401 = vadd.f32 %v5377, %v5387
  %v5402 = vadd.f32 %v5378, %v5387
  %v5403 = vadd.f32 %v5379, %v5387
  %v5404 = vadd.f32 %v5380, %v5387
  %v5405 = vadd.f32 %v5381, %v5387
  %v5406 = vadd.f32 %v5382, %v5387
  %v5407 = vsel %vm301, %v5389, 0.0
  %5408 = vadd.xlane.f32.xlu0 %v5407
  %v5409 = vpop.xlane.xlu0 %5408
  %v5410 = vsel %vm301, %v5390, 0.0
  %5411 = vadd.xlane.f32.xlu0 %v5410
  %v5412 = vpop.xlane.xlu0 %5411
  %v5413 = vsel %vm301, %v5391, 0.0
  %5414 = vadd.xlane.f32.xlu0 %v5413
  %v5415 = vpop.xlane.xlu0 %5414
  %v5416 = vsel %vm301, %v5392, 0.0
  %5417 = vadd.xlane.f32.xlu0 %v5416
  %v5418 = vpop.xlane.xlu0 %5417
  %v5419 = vsel %vm301, %v5393, 0.0
  %5420 = vadd.xlane.f32.xlu0 %v5419
  %v5421 = vpop.xlane.xlu0 %5420
  %v5422 = vsel %vm301, %v5394, 0.0
  %5423 = vadd.xlane.f32.xlu0 %v5422
  %v5424 = vpop.xlane.xlu0 %5423
  %v5425 = vsel %vm301, %v5395, 0.0
  %5426 = vadd.xlane.f32.xlu0 %v5425
  %v5427 = vpop.xlane.xlu0 %5426
  %v5428 = vsel %vm301, %v5396, 0.0
  %5429 = vadd.xlane.f32.xlu0 %v5428
  %v5430 = vpop.xlane.xlu0 %5429
  %v5431 = vsel %vm301, %v5397, 0.0
  %5432 = vadd.xlane.f32.xlu0 %v5431
  %v5433 = vpop.xlane.xlu0 %5432
  %v5434 = vsel %vm301, %v5398, 0.0
  %5435 = vadd.xlane.f32.xlu0 %v5434
  %v5436 = vpop.xlane.xlu0 %5435
  %v5437 = vsel %vm301, %v5399, 0.0
  %5438 = vadd.xlane.f32.xlu0 %v5437
  %v5439 = vpop.xlane.xlu0 %5438
  %v5440 = vsel %vm301, %v5400, 0.0
  %5441 = vadd.xlane.f32.xlu0 %v5440
  %v5442 = vpop.xlane.xlu0 %5441
  %v5443 = vsel %vm301, %v5401, 0.0
  %5444 = vadd.xlane.f32.xlu0 %v5443
  %v5445 = vpop.xlane.xlu0 %5444
  %v5446 = vsel %vm301, %v5402, 0.0
  %5447 = vadd.xlane.f32.xlu0 %v5446
  %v5448 = vpop.xlane.xlu0 %5447
  %v5449 = vsel %vm301, %v5403, 0.0
  %5450 = vadd.xlane.f32.xlu0 %v5449
  %v5451 = vpop.xlane.xlu0 %5450
  %v5452 = vsel %vm301, %v5404, 0.0
  %5453 = vadd.xlane.f32.xlu0 %v5452
  %v5454 = vpop.xlane.xlu0 %5453
  %v5455 = vsel %vm301, %v5405, 0.0
  %5456 = vadd.xlane.f32.xlu0 %v5455
  %v5457 = vpop.xlane.xlu0 %5456
  %v5458 = vsel %vm301, %v5406, 0.0
  %5459 = vadd.xlane.f32.xlu0 %v5458
  %v5460 = vpop.xlane.xlu0 %5459
  %v5461 = vmul.f32 %v5409, %v475
  %v5462 = vmul.f32 %v5412, %v475
  %v5463 = vmul.f32 %v5415, %v475
  %v5464 = vmul.f32 %v5418, %v475
  %v5465 = vmul.f32 %v5421, %v475
  %v5466 = vmul.f32 %v5424, %v475
  %v5467 = vmul.f32 %v5427, %v475
  %v5468 = vmul.f32 %v5430, %v475
  %v5469 = vmul.f32 %v5433, %v475
  %v5470 = vmul.f32 %v5436, %v475
  %v5471 = vmul.f32 %v5439, %v475
  %v5472 = vmul.f32 %v5442, %v475
  %v5473 = vmul.f32 %v5445, %v475
  %v5474 = vmul.f32 %v5448, %v475
  %v5475 = vmul.f32 %v5451, %v475
  %v5476 = vmul.f32 %v5454, %v475
  %v5477 = vmul.f32 %v5457, %v475
  %v5478 = vmul.f32 %v5460, %v475
  %v5479 = vsub.f32 %v5389, %v5461
  %v5480 = vsub.f32 %v5390, %v5462
  %v5481 = vsub.f32 %v5391, %v5463
  %v5482 = vsub.f32 %v5392, %v5464
  %v5483 = vsub.f32 %v5393, %v5465
  %v5484 = vsub.f32 %v5394, %v5466
  %v5485 = vsub.f32 %v5395, %v5467
  %v5486 = vsub.f32 %v5396, %v5468
  %v5487 = vsub.f32 %v5397, %v5469
  %v5488 = vsub.f32 %v5398, %v5470
  %v5489 = vsub.f32 %v5399, %v5471
  %v5490 = vsub.f32 %v5400, %v5472
  %v5491 = vsub.f32 %v5401, %v5473
  %v5492 = vsub.f32 %v5402, %v5474
  %v5493 = vsub.f32 %v5403, %v5475
  %v5494 = vsub.f32 %v5404, %v5476
  %v5495 = vsub.f32 %v5405, %v5477
  %v5496 = vsub.f32 %v5406, %v5478
  %v5497 = vmul.f32 %v5479, %v5479
  %v5498 = vmul.f32 %v5480, %v5480
  %v5499 = vmul.f32 %v5481, %v5481
  %v5500 = vmul.f32 %v5482, %v5482
  %v5501 = vmul.f32 %v5483, %v5483
  %v5502 = vmul.f32 %v5484, %v5484
  %v5503 = vmul.f32 %v5485, %v5485
  %v5504 = vmul.f32 %v5486, %v5486
  %v5505 = vmul.f32 %v5487, %v5487
  %v5506 = vmul.f32 %v5488, %v5488
  %v5507 = vmul.f32 %v5489, %v5489
  %v5508 = vmul.f32 %v5490, %v5490
  %v5509 = vmul.f32 %v5491, %v5491
  %v5510 = vmul.f32 %v5492, %v5492
  %v5511 = vmul.f32 %v5493, %v5493
  %v5512 = vmul.f32 %v5494, %v5494
  %v5513 = vmul.f32 %v5495, %v5495
  %v5514 = vmul.f32 %v5496, %v5496
  %v5515 = vsel %vm301, %v5497, 0.0
  %5516 = vadd.xlane.f32.xlu0 %v5515
  %v5517 = vpop.xlane.xlu0 %5516
  %v5518 = vsel %vm301, %v5498, 0.0
  %5519 = vadd.xlane.f32.xlu0 %v5518
  %v5520 = vpop.xlane.xlu0 %5519
  %v5521 = vsel %vm301, %v5499, 0.0
  %5522 = vadd.xlane.f32.xlu0 %v5521
  %v5523 = vpop.xlane.xlu0 %5522
  %v5524 = vsel %vm301, %v5500, 0.0
  %5525 = vadd.xlane.f32.xlu0 %v5524
  %v5526 = vpop.xlane.xlu0 %5525
  %v5527 = vsel %vm301, %v5501, 0.0
  %5528 = vadd.xlane.f32.xlu0 %v5527
  %v5529 = vpop.xlane.xlu0 %5528
  %v5530 = vsel %vm301, %v5502, 0.0
  %5531 = vadd.xlane.f32.xlu0 %v5530
  %v5532 = vpop.xlane.xlu0 %5531
  %v5533 = vsel %vm301, %v5503, 0.0
  %5534 = vadd.xlane.f32.xlu0 %v5533
  %v5535 = vpop.xlane.xlu0 %5534
  %v5536 = vsel %vm301, %v5504, 0.0
  %5537 = vadd.xlane.f32.xlu0 %v5536
  %v5538 = vpop.xlane.xlu0 %5537
  %v5539 = vsel %vm301, %v5505, 0.0
  %5540 = vadd.xlane.f32.xlu0 %v5539
  %v5541 = vpop.xlane.xlu0 %5540
  %v5542 = vsel %vm301, %v5506, 0.0
  %5543 = vadd.xlane.f32.xlu0 %v5542
  %v5544 = vpop.xlane.xlu0 %5543
  %v5545 = vsel %vm301, %v5507, 0.0
  %5546 = vadd.xlane.f32.xlu0 %v5545
  %v5547 = vpop.xlane.xlu0 %5546
  %v5548 = vsel %vm301, %v5508, 0.0
  %5549 = vadd.xlane.f32.xlu0 %v5548
  %v5550 = vpop.xlane.xlu0 %5549
  %v5551 = vsel %vm301, %v5509, 0.0
  %5552 = vadd.xlane.f32.xlu0 %v5551
  %v5553 = vpop.xlane.xlu0 %5552
  %v5554 = vsel %vm301, %v5510, 0.0
  %5555 = vadd.xlane.f32.xlu0 %v5554
  %v5556 = vpop.xlane.xlu0 %5555
  %v5557 = vsel %vm301, %v5511, 0.0
  %5558 = vadd.xlane.f32.xlu0 %v5557
  %v5559 = vpop.xlane.xlu0 %5558
  %v5560 = vsel %vm301, %v5512, 0.0
  %5561 = vadd.xlane.f32.xlu0 %v5560
  %v5562 = vpop.xlane.xlu0 %5561
  %v5563 = vsel %vm301, %v5513, 0.0
  %5564 = vadd.xlane.f32.xlu0 %v5563
  %v5565 = vpop.xlane.xlu0 %5564
  %v5566 = vsel %vm301, %v5514, 0.0
  %5567 = vadd.xlane.f32.xlu0 %v5566
  %v5568 = vpop.xlane.xlu0 %5567
  %v5569 = vmul.f32 %v5517, %v475
  %v5570 = vmul.f32 %v5520, %v475
  %v5571 = vmul.f32 %v5523, %v475
  %v5572 = vmul.f32 %v5526, %v475
  %v5573 = vmul.f32 %v5529, %v475
  %v5574 = vmul.f32 %v5532, %v475
  %v5575 = vmul.f32 %v5535, %v475
  %v5576 = vmul.f32 %v5538, %v475
  %v5577 = vmul.f32 %v5541, %v475
  %v5578 = vmul.f32 %v5544, %v475
  %v5579 = vmul.f32 %v5547, %v475
  %v5580 = vmul.f32 %v5550, %v475
  %v5581 = vmul.f32 %v5553, %v475
  %v5582 = vmul.f32 %v5556, %v475
  %v5583 = vmul.f32 %v5559, %v475
  %v5584 = vmul.f32 %v5562, %v475
  %v5585 = vmul.f32 %v5565, %v475
  %v5586 = vmul.f32 %v5568, %v475
  %v5587 = vadd.f32 %v5569, 1e-05
  %v5588 = vadd.f32 %v5570, 1e-05
  %v5589 = vadd.f32 %v5571, 1e-05
  %v5590 = vadd.f32 %v5572, 1e-05
  %v5591 = vadd.f32 %v5573, 1e-05
  %v5592 = vadd.f32 %v5574, 1e-05
  %v5593 = vadd.f32 %v5575, 1e-05
  %v5594 = vadd.f32 %v5576, 1e-05
  %v5595 = vadd.f32 %v5577, 1e-05
  %v5596 = vadd.f32 %v5578, 1e-05
  %v5597 = vadd.f32 %v5579, 1e-05
  %v5598 = vadd.f32 %v5580, 1e-05
  %v5599 = vadd.f32 %v5581, 1e-05
  %v5600 = vadd.f32 %v5582, 1e-05
  %v5601 = vadd.f32 %v5583, 1e-05
  %v5602 = vadd.f32 %v5584, 1e-05
  %v5603 = vadd.f32 %v5585, 1e-05
  %v5604 = vadd.f32 %v5586, 1e-05
  %v5605 = vrsqrt.pop %v5587
  %v5606 = vrsqrt.pop %v5588
  %v5607 = vrsqrt.pop %v5589
  %v5608 = vrsqrt.pop %v5590
  %v5609 = vrsqrt.pop %v5591
  %v5610 = vrsqrt.pop %v5592
  %v5611 = vrsqrt.pop %v5593
  %v5612 = vrsqrt.pop %v5594
  %v5613 = vrsqrt.pop %v5595
  %v5614 = vrsqrt.pop %v5596
  %v5615 = vrsqrt.pop %v5597
  %v5616 = vrsqrt.pop %v5598
  %v5617 = vrsqrt.pop %v5599
  %v5618 = vrsqrt.pop %v5600
  %v5619 = vrsqrt.pop %v5601
  %v5620 = vrsqrt.pop %v5602
  %v5621 = vrsqrt.pop %v5603
  %v5622 = vrsqrt.pop %v5604
  %v5623 = vmul.f32 %v5479, %v5605
  %v5624 = vmul.f32 %v5480, %v5606
  %v5625 = vmul.f32 %v5481, %v5607
  %v5626 = vmul.f32 %v5482, %v5608
  %v5627 = vmul.f32 %v5483, %v5609
  %v5628 = vmul.f32 %v5484, %v5610
  %v5629 = vmul.f32 %v5485, %v5611
  %v5630 = vmul.f32 %v5486, %v5612
  %v5631 = vmul.f32 %v5487, %v5613
  %v5632 = vmul.f32 %v5488, %v5614
  %v5633 = vmul.f32 %v5489, %v5615
  %v5634 = vmul.f32 %v5490, %v5616
  %v5635 = vmul.f32 %v5491, %v5617
  %v5636 = vmul.f32 %v5492, %v5618
  %v5637 = vmul.f32 %v5493, %v5619
  %v5638 = vmul.f32 %v5494, %v5620
  %v5639 = vmul.f32 %v5495, %v5621
  %v5640 = vmul.f32 %v5496, %v5622
  %v5642 = vlaneseq
  %v5643 = vshrl.u32 %v5642, 7
  %v5644 = vsub.s32 0, %v5643
  %v5645 = vrot.slane %v388, %v5644
  %v5647 = vmul.f32 %v5623, %v5645
  %v5648 = vmul.f32 %v5624, %v5645
  %v5649 = vmul.f32 %v5625, %v5645
  %v5650 = vmul.f32 %v5626, %v5645
  %v5651 = vmul.f32 %v5627, %v5645
  %v5652 = vmul.f32 %v5628, %v5645
  %v5653 = vmul.f32 %v5629, %v5645
  %v5654 = vmul.f32 %v5630, %v5645
  %v5655 = vmul.f32 %v5631, %v5645
  %v5656 = vmul.f32 %v5632, %v5645
  %v5657 = vmul.f32 %v5633, %v5645
  %v5658 = vmul.f32 %v5634, %v5645
  %v5659 = vmul.f32 %v5635, %v5645
  %v5660 = vmul.f32 %v5636, %v5645
  %v5661 = vmul.f32 %v5637, %v5645
  %v5662 = vmul.f32 %v5638, %v5645
  %v5663 = vmul.f32 %v5639, %v5645
  %v5664 = vmul.f32 %v5640, %v5645
  %v5666 = vlaneseq
  %v5667 = vshrl.u32 %v5666, 7
  %v5668 = vsub.s32 0, %v5667
  %v5669 = vrot.slane %v389, %v5668
  %v5671 = vadd.f32 %v5647, %v5669
  %v5672 = vadd.f32 %v5648, %v5669
  %v5673 = vadd.f32 %v5649, %v5669
  %v5674 = vadd.f32 %v5650, %v5669
  %v5675 = vadd.f32 %v5651, %v5669
  %v5676 = vadd.f32 %v5652, %v5669
  %v5677 = vadd.f32 %v5653, %v5669
  %v5678 = vadd.f32 %v5654, %v5669
  %v5679 = vadd.f32 %v5655, %v5669
  %v5680 = vadd.f32 %v5656, %v5669
  %v5681 = vadd.f32 %v5657, %v5669
  %v5682 = vadd.f32 %v5658, %v5669
  %v5683 = vadd.f32 %v5659, %v5669
  %v5684 = vadd.f32 %v5660, %v5669
  %v5685 = vadd.f32 %v5661, %v5669
  %v5686 = vadd.f32 %v5662, %v5669
  %v5687 = vadd.f32 %v5663, %v5669
  %v5688 = vadd.f32 %v5664, %v5669
  %v5690 = vlaneseq
  %v5691 = vshrl.u32 %v5690, 7
  %v5692 = vsub.s32 0, %v5691
  %v5693 = vrot.slane %v403, %v5692
  %v5696 = vsel %vm301, %v5671, 0
  %v5699 = vsel %vm301, %v5672, 0
  %v5702 = vsel %vm301, %v5673, 0
  %v5705 = vsel %vm301, %v5674, 0
  %v5708 = vsel %vm301, %v5675, 0
  %v5711 = vsel %vm301, %v5676, 0
  %v5714 = vsel %vm301, %v5677, 0
  %v5717 = vsel %vm301, %v5678, 0
  %v5720 = vsel %vm301, %v5679, 0
  %v5723 = vsel %vm301, %v5680, 0
  %v5726 = vsel %vm301, %v5681, 0
  %v5729 = vsel %vm301, %v5682, 0
  %v5732 = vsel %vm301, %v5683, 0
  %v5735 = vsel %vm301, %v5684, 0
  %v5738 = vsel %vm301, %v5685, 0
  %v5741 = vsel %vm301, %v5686, 0
  %v5744 = vsel %vm301, %v5687, 0
  %v5747 = vsel %vm301, %v5688, 0
  %5749 = vmatprep.subr.mxu0 0.0
  %5750 = vmatpush1.msra.mxu0 0.0
  %5751 = vmatprep.subr.mxu0 0.0
  %5752 = vmatpush1.msra.mxu0 0.0
  %5753 = vmatprep.subr.mxu0 0.0
  %5754 = vmatpush1.msra.mxu0 0.0
  %5755 = vmatprep.subr.mxu0 0.0
  %5756 = vmatpush1.msra.mxu0 0.0
  %5757 = vmatprep.subr.mxu0 0.0
  %5758 = vmatpush1.msra.mxu0 0.0
  %5759 = vmatprep.subr.mxu0 0.0
  %5760 = vmatpush1.msra.mxu0 0.0
  %5761 = vmatprep.subr.mxu0 0.0
  %5762 = vmatpush1.msra.mxu0 0.0
  %5763 = vmatprep.subr.mxu0 0.0
  %5764 = vmatpush1.msra.mxu0 0.0
  %5765 = vmatprep.subr.mxu0 0.0
  %5766 = vmatpush1.msra.mxu0 0.0
  %5767 = vmatprep.subr.mxu0 0.0
  %5768 = vmatpush1.msra.mxu0 0.0
  %5769 = vmatprep.subr.mxu0 0.0
  %5770 = vmatpush1.msra.mxu0 0.0
  %5771 = vmatprep.subr.mxu0 0.0
  %5772 = vmatpush1.msra.mxu0 0.0
  %5773 = vmatprep.subr.mxu0 0.0
  %5774 = vmatpush1.msra.mxu0 %v402
  %5775 = vmatprep.subr.mxu0 0.0
  %5776 = vmatpush1.msra.mxu0 %v401
  %5777 = vmatprep.subr.mxu0 0.0
  %5778 = vmatpush1.msra.mxu0 %v400
  %5779 = vmatprep.subr.mxu0 0.0
  %5780 = vmatpush1.msra.mxu0 %v399
  %5781 = vmatprep.subr.mxu0 0.0
  %5782 = vmatpush2.msra.mxu0 0.0
  %5783 = vmatprep.subr.mxu0 0.0
  %5784 = vmatpush2.msra.mxu0 0.0
  %5785 = vmatprep.subr.mxu0 0.0
  %5786 = vmatpush2.msra.mxu0 0.0
  %5787 = vmatprep.subr.mxu0 0.0
  %5788 = vmatpush2.msra.mxu0 0.0
  %5789 = vmatprep.subr.mxu0 0.0
  %5790 = vmatpush2.msra.mxu0 0.0
  %5791 = vmatprep.subr.mxu0 0.0
  %5792 = vmatpush2.msra.mxu0 0.0
  %5793 = vmatprep.subr.mxu0 0.0
  %5794 = vmatpush2.msra.mxu0 0.0
  %5795 = vmatprep.subr.mxu0 0.0
  %5796 = vmatpush2.msra.mxu0 0.0
  %5797 = vmatprep.subr.mxu0 0.0
  %5798 = vmatpush2.msra.mxu0 0.0
  %5799 = vmatprep.subr.mxu0 0.0
  %5800 = vmatpush2.msra.mxu0 0.0
  %5801 = vmatprep.subr.mxu0 0.0
  %5802 = vmatpush2.msra.mxu0 0.0
  %5803 = vmatprep.subr.mxu0 0.0
  %5804 = vmatpush2.msra.mxu0 0.0
  %5805 = vmatprep.subr.mxu0 0.0
  %5806 = vmatpush2.msra.mxu0 0.0
  %5807 = vmatprep.subr.mxu0 0.0
  %5808 = vmatpush2.msra.mxu0 0.0
  %5809 = vmatprep.subr.mxu0 0.0
  %5810 = vmatpush2.msra.mxu0 0.0
  %5811 = vmatprep.subr.mxu0 0.0
  %5812 = vmatpush2.msra.mxu0 0.0
  %5813 = vmatprep.mubr.f32.mxu0 0.0
  %5814 = vmatmul.mubr.f32.gmra.mxu0 %v5696
  %v5815 = vpop.f32.mrf.mxu0
  %v5816 = vadd.f32 %v5693, %v5815
  %v5817 = vpop.f32.mrf.mxu0
  %5818 = vmatprep.mubr.f32.mxu0 0.0
  %5819 = vmatmul.mubr.f32.gmra.mxu0 %v5699
  %v5820 = vpop.f32.mrf.mxu0
  %v5821 = vadd.f32 %v5693, %v5820
  %v5822 = vpop.f32.mrf.mxu0
  %5823 = vmatprep.mubr.f32.mxu0 0.0
  %5824 = vmatmul.mubr.f32.gmra.mxu0 %v5702
  %v5825 = vpop.f32.mrf.mxu0
  %v5826 = vadd.f32 %v5693, %v5825
  %v5827 = vpop.f32.mrf.mxu0
  %5828 = vmatprep.mubr.f32.mxu0 0.0
  %5829 = vmatmul.mubr.f32.gmra.mxu0 %v5705
  %v5830 = vpop.f32.mrf.mxu0
  %v5831 = vadd.f32 %v5693, %v5830
  %v5832 = vpop.f32.mrf.mxu0
  %5833 = vmatprep.mubr.f32.mxu0 0.0
  %5834 = vmatmul.mubr.f32.gmra.mxu0 %v5708
  %v5835 = vpop.f32.mrf.mxu0
  %v5836 = vadd.f32 %v5693, %v5835
  %v5837 = vpop.f32.mrf.mxu0
  %5838 = vmatprep.mubr.f32.mxu0 0.0
  %5839 = vmatmul.mubr.f32.gmra.mxu0 %v5711
  %v5840 = vpop.f32.mrf.mxu0
  %v5841 = vadd.f32 %v5693, %v5840
  %v5842 = vpop.f32.mrf.mxu0
  %5843 = vmatprep.mubr.f32.mxu0 0.0
  %5844 = vmatmul.mubr.f32.gmra.mxu0 %v5714
  %v5845 = vpop.f32.mrf.mxu0
  %v5846 = vadd.f32 %v5693, %v5845
  %v5847 = vpop.f32.mrf.mxu0
  %5848 = vmatprep.mubr.f32.mxu0 0.0
  %5849 = vmatmul.mubr.f32.gmra.mxu0 %v5717
  %v5850 = vpop.f32.mrf.mxu0
  %v5851 = vadd.f32 %v5693, %v5850
  %v5852 = vpop.f32.mrf.mxu0
  %5853 = vmatprep.mubr.f32.mxu0 0.0
  %5854 = vmatmul.mubr.f32.gmra.mxu0 %v5720
  %v5855 = vpop.f32.mrf.mxu0
  %v5856 = vadd.f32 %v5693, %v5855
  %v5857 = vpop.f32.mrf.mxu0
  %5858 = vmatprep.mubr.f32.mxu0 0.0
  %5859 = vmatmul.mubr.f32.gmra.mxu0 %v5723
  %v5860 = vpop.f32.mrf.mxu0
  %v5861 = vadd.f32 %v5693, %v5860
  %v5862 = vpop.f32.mrf.mxu0
  %5863 = vmatprep.mubr.f32.mxu0 0.0
  %5864 = vmatmul.mubr.f32.gmra.mxu0 %v5726
  %v5865 = vpop.f32.mrf.mxu0
  %v5866 = vadd.f32 %v5693, %v5865
  %v5867 = vpop.f32.mrf.mxu0
  %5868 = vmatprep.mubr.f32.mxu0 0.0
  %5869 = vmatmul.mubr.f32.gmra.mxu0 %v5729
  %v5870 = vpop.f32.mrf.mxu0
  %v5871 = vadd.f32 %v5693, %v5870
  %v5872 = vpop.f32.mrf.mxu0
  %5873 = vmatprep.mubr.f32.mxu0 0.0
  %5874 = vmatmul.mubr.f32.gmra.mxu0 %v5732
  %v5875 = vpop.f32.mrf.mxu0
  %v5876 = vadd.f32 %v5693, %v5875
  %v5877 = vpop.f32.mrf.mxu0
  %5878 = vmatprep.mubr.f32.mxu0 0.0
  %5879 = vmatmul.mubr.f32.gmra.mxu0 %v5735
  %v5880 = vpop.f32.mrf.mxu0
  %v5881 = vadd.f32 %v5693, %v5880
  %v5882 = vpop.f32.mrf.mxu0
  %5883 = vmatprep.mubr.f32.mxu0 0.0
  %5884 = vmatmul.mubr.f32.gmra.mxu0 %v5738
  %v5885 = vpop.f32.mrf.mxu0
  %v5886 = vadd.f32 %v5693, %v5885
  %v5887 = vpop.f32.mrf.mxu0
  %5888 = vmatprep.mubr.f32.mxu0 0.0
  %5889 = vmatmul.mubr.f32.gmra.mxu0 %v5741
  %v5890 = vpop.f32.mrf.mxu0
  %v5891 = vadd.f32 %v5693, %v5890
  %v5892 = vpop.f32.mrf.mxu0
  %5893 = vmatprep.mubr.f32.mxu0 0.0
  %5894 = vmatmul.mubr.f32.gmra.mxu0 %v5744
  %v5895 = vpop.f32.mrf.mxu0
  %v5896 = vadd.f32 %v5693, %v5895
  %v5897 = vpop.f32.mrf.mxu0
  %5898 = vmatprep.mubr.f32.mxu0 0.0
  %5899 = vmatmul.mubr.f32.gmra.mxu0 %v5747
  %v5900 = vpop.f32.mrf.mxu0
  %v5901 = vadd.f32 %v5693, %v5900
  %v5902 = vpop.f32.mrf.mxu0
  %5903 = vdwg.mxu0
  %v5904 = vmul.f32 %v5816, 0.5
  %v5905 = vmul.f32 %v5821, 0.5
  %v5906 = vmul.f32 %v5826, 0.5
  %v5907 = vmul.f32 %v5831, 0.5
  %v5908 = vmul.f32 %v5836, 0.5
  %v5909 = vmul.f32 %v5841, 0.5
  %v5910 = vmul.f32 %v5846, 0.5
  %v5911 = vmul.f32 %v5851, 0.5
  %v5912 = vmul.f32 %v5856, 0.5
  %v5913 = vmul.f32 %v5861, 0.5
  %v5914 = vmul.f32 %v5866, 0.5
  %v5915 = vmul.f32 %v5871, 0.5
  %v5916 = vmul.f32 %v5876, 0.5
  %v5917 = vmul.f32 %v5881, 0.5
  %v5918 = vmul.f32 %v5886, 0.5
  %v5919 = vmul.f32 %v5891, 0.5
  %v5920 = vmul.f32 %v5896, 0.5
  %v5921 = vmul.f32 %v5901, 0.5
  %v5922 = vmul.f32 %v5816, 0.044715
  %v5923 = vmul.f32 %v5821, 0.044715
  %v5924 = vmul.f32 %v5826, 0.044715
  %v5925 = vmul.f32 %v5831, 0.044715
  %v5926 = vmul.f32 %v5836, 0.044715
  %v5927 = vmul.f32 %v5841, 0.044715
  %v5928 = vmul.f32 %v5846, 0.044715
  %v5929 = vmul.f32 %v5851, 0.044715
  %v5930 = vmul.f32 %v5856, 0.044715
  %v5931 = vmul.f32 %v5861, 0.044715
  %v5932 = vmul.f32 %v5866, 0.044715
  %v5933 = vmul.f32 %v5871, 0.044715
  %v5934 = vmul.f32 %v5876, 0.044715
  %v5935 = vmul.f32 %v5881, 0.044715
  %v5936 = vmul.f32 %v5886, 0.044715
  %v5937 = vmul.f32 %v5891, 0.044715
  %v5938 = vmul.f32 %v5896, 0.044715
  %v5939 = vmul.f32 %v5901, 0.044715
  %v5940 = vmul.f32 %v5922, %v5816
  %v5941 = vmul.f32 %v5923, %v5821
  %v5942 = vmul.f32 %v5924, %v5826
  %v5943 = vmul.f32 %v5925, %v5831
  %v5944 = vmul.f32 %v5926, %v5836
  %v5945 = vmul.f32 %v5927, %v5841
  %v5946 = vmul.f32 %v5928, %v5846
  %v5947 = vmul.f32 %v5929, %v5851
  %v5948 = vmul.f32 %v5930, %v5856
  %v5949 = vmul.f32 %v5931, %v5861
  %v5950 = vmul.f32 %v5932, %v5866
  %v5951 = vmul.f32 %v5933, %v5871
  %v5952 = vmul.f32 %v5934, %v5876
  %v5953 = vmul.f32 %v5935, %v5881
  %v5954 = vmul.f32 %v5936, %v5886
  %v5955 = vmul.f32 %v5937, %v5891
  %v5956 = vmul.f32 %v5938, %v5896
  %v5957 = vmul.f32 %v5939, %v5901
  %v5958 = vmul.f32 %v5940, %v5816
  %v5959 = vmul.f32 %v5941, %v5821
  %v5960 = vmul.f32 %v5942, %v5826
  %v5961 = vmul.f32 %v5943, %v5831
  %v5962 = vmul.f32 %v5944, %v5836
  %v5963 = vmul.f32 %v5945, %v5841
  %v5964 = vmul.f32 %v5946, %v5846
  %v5965 = vmul.f32 %v5947, %v5851
  %v5966 = vmul.f32 %v5948, %v5856
  %v5967 = vmul.f32 %v5949, %v5861
  %v5968 = vmul.f32 %v5950, %v5866
  %v5969 = vmul.f32 %v5951, %v5871
  %v5970 = vmul.f32 %v5952, %v5876
  %v5971 = vmul.f32 %v5953, %v5881
  %v5972 = vmul.f32 %v5954, %v5886
  %v5973 = vmul.f32 %v5955, %v5891
  %v5974 = vmul.f32 %v5956, %v5896
  %v5975 = vmul.f32 %v5957, %v5901
  %v5976 = vadd.f32 %v5816, %v5958
  %v5977 = vadd.f32 %v5821, %v5959
  %v5978 = vadd.f32 %v5826, %v5960
  %v5979 = vadd.f32 %v5831, %v5961
  %v5980 = vadd.f32 %v5836, %v5962
  %v5981 = vadd.f32 %v5841, %v5963
  %v5982 = vadd.f32 %v5846, %v5964
  %v5983 = vadd.f32 %v5851, %v5965
  %v5984 = vadd.f32 %v5856, %v5966
  %v5985 = vadd.f32 %v5861, %v5967
  %v5986 = vadd.f32 %v5866, %v5968
  %v5987 = vadd.f32 %v5871, %v5969
  %v5988 = vadd.f32 %v5876, %v5970
  %v5989 = vadd.f32 %v5881, %v5971
  %v5990 = vadd.f32 %v5886, %v5972
  %v5991 = vadd.f32 %v5891, %v5973
  %v5992 = vadd.f32 %v5896, %v5974
  %v5993 = vadd.f32 %v5901, %v5975
  %v5994 = vmul.f32 %v5976, 0.7978846
  %v5995 = vmul.f32 %v5977, 0.7978846
  %v5996 = vmul.f32 %v5978, 0.7978846
  %v5997 = vmul.f32 %v5979, 0.7978846
  %v5998 = vmul.f32 %v5980, 0.7978846
  %v5999 = vmul.f32 %v5981, 0.7978846
  %v6000 = vmul.f32 %v5982, 0.7978846
  %v6001 = vmul.f32 %v5983, 0.7978846
  %v6002 = vmul.f32 %v5984, 0.7978846
  %v6003 = vmul.f32 %v5985, 0.7978846
  %v6004 = vmul.f32 %v5986, 0.7978846
  %v6005 = vmul.f32 %v5987, 0.7978846
  %v6006 = vmul.f32 %v5988, 0.7978846
  %v6007 = vmul.f32 %v5989, 0.7978846
  %v6008 = vmul.f32 %v5990, 0.7978846
  %v6009 = vmul.f32 %v5991, 0.7978846
  %v6010 = vmul.f32 %v5992, 0.7978846
  %v6011 = vmul.f32 %v5993, 0.7978846
  %v6012 = vtanh.pop %v5994
  %v6013 = vtanh.pop %v5995
  %v6014 = vtanh.pop %v5996
  %v6015 = vtanh.pop %v5997
  %v6016 = vtanh.pop %v5998
  %v6017 = vtanh.pop %v5999
  %v6018 = vtanh.pop %v6000
  %v6019 = vtanh.pop %v6001
  %v6020 = vtanh.pop %v6002
  %v6021 = vtanh.pop %v6003
  %v6022 = vtanh.pop %v6004
  %v6023 = vtanh.pop %v6005
  %v6024 = vtanh.pop %v6006
  %v6025 = vtanh.pop %v6007
  %v6026 = vtanh.pop %v6008
  %v6027 = vtanh.pop %v6009
  %v6028 = vtanh.pop %v6010
  %v6029 = vtanh.pop %v6011
  %v6030 = vadd.f32 %v6012, 1.0
  %v6031 = vadd.f32 %v6013, 1.0
  %v6032 = vadd.f32 %v6014, 1.0
  %v6033 = vadd.f32 %v6015, 1.0
  %v6034 = vadd.f32 %v6016, 1.0
  %v6035 = vadd.f32 %v6017, 1.0
  %v6036 = vadd.f32 %v6018, 1.0
  %v6037 = vadd.f32 %v6019, 1.0
  %v6038 = vadd.f32 %v6020, 1.0
  %v6039 = vadd.f32 %v6021, 1.0
  %v6040 = vadd.f32 %v6022, 1.0
  %v6041 = vadd.f32 %v6023, 1.0
  %v6042 = vadd.f32 %v6024, 1.0
  %v6043 = vadd.f32 %v6025, 1.0
  %v6044 = vadd.f32 %v6026, 1.0
  %v6045 = vadd.f32 %v6027, 1.0
  %v6046 = vadd.f32 %v6028, 1.0
  %v6047 = vadd.f32 %v6029, 1.0
  %v6048 = vmul.f32 %v5904, %v6030
  %v6049 = vmul.f32 %v5905, %v6031
  %v6050 = vmul.f32 %v5906, %v6032
  %v6051 = vmul.f32 %v5907, %v6033
  %v6052 = vmul.f32 %v5908, %v6034
  %v6053 = vmul.f32 %v5909, %v6035
  %v6054 = vmul.f32 %v5910, %v6036
  %v6055 = vmul.f32 %v5911, %v6037
  %v6056 = vmul.f32 %v5912, %v6038
  %v6057 = vmul.f32 %v5913, %v6039
  %v6058 = vmul.f32 %v5914, %v6040
  %v6059 = vmul.f32 %v5915, %v6041
  %v6060 = vmul.f32 %v5916, %v6042
  %v6061 = vmul.f32 %v5917, %v6043
  %v6062 = vmul.f32 %v5918, %v6044
  %v6063 = vmul.f32 %v5919, %v6045
  %v6064 = vmul.f32 %v5920, %v6046
  %v6065 = vmul.f32 %v5921, %v6047
  %6066 = vmatprep.subr.mxu0 0.0
  %6067 = vmatpush1.msra.mxu0 %v419
  %6068 = vmatprep.subr.mxu0 0.0
  %6069 = vmatpush1.msra.mxu0 %v418
  %6070 = vmatprep.subr.mxu0 0.0
  %6071 = vmatpush1.msra.mxu0 %v417
  %6072 = vmatprep.subr.mxu0 0.0
  %6073 = vmatpush1.msra.mxu0 %v416
  %6074 = vmatprep.subr.mxu0 0.0
  %6075 = vmatpush1.msra.mxu0 %v415
  %6076 = vmatprep.subr.mxu0 0.0
  %6077 = vmatpush1.msra.mxu0 %v414
  %6078 = vmatprep.subr.mxu0 0.0
  %6079 = vmatpush1.msra.mxu0 %v413
  %6080 = vmatprep.subr.mxu0 0.0
  %6081 = vmatpush1.msra.mxu0 %v412
  %6082 = vmatprep.subr.mxu0 0.0
  %6083 = vmatpush1.msra.mxu0 %v411
  %6084 = vmatprep.subr.mxu0 0.0
  %6085 = vmatpush1.msra.mxu0 %v410
  %6086 = vmatprep.subr.mxu0 0.0
  %6087 = vmatpush1.msra.mxu0 %v409
  %6088 = vmatprep.subr.mxu0 0.0
  %6089 = vmatpush1.msra.mxu0 %v408
  %6090 = vmatprep.subr.mxu0 0.0
  %6091 = vmatpush1.msra.mxu0 %v407
  %6092 = vmatprep.subr.mxu0 0.0
  %6093 = vmatpush1.msra.mxu0 %v406
  %6094 = vmatprep.subr.mxu0 0.0
  %6095 = vmatpush1.msra.mxu0 %v405
  %6096 = vmatprep.subr.mxu0 0.0
  %6097 = vmatpush1.msra.mxu0 %v404
  %6098 = vmatprep.subr.mxu0 0.0
  %6099 = vmatpush2.msra.mxu0 0.0
  %6100 = vmatprep.subr.mxu0 0.0
  %6101 = vmatpush2.msra.mxu0 0.0
  %6102 = vmatprep.subr.mxu0 0.0
  %6103 = vmatpush2.msra.mxu0 0.0
  %6104 = vmatprep.subr.mxu0 0.0
  %6105 = vmatpush2.msra.mxu0 0.0
  %6106 = vmatprep.subr.mxu0 0.0
  %6107 = vmatpush2.msra.mxu0 0.0
  %6108 = vmatprep.subr.mxu0 0.0
  %6109 = vmatpush2.msra.mxu0 0.0
  %6110 = vmatprep.subr.mxu0 0.0
  %6111 = vmatpush2.msra.mxu0 0.0
  %6112 = vmatprep.subr.mxu0 0.0
  %6113 = vmatpush2.msra.mxu0 0.0
  %6114 = vmatprep.subr.mxu0 0.0
  %6115 = vmatpush2.msra.mxu0 0.0
  %6116 = vmatprep.subr.mxu0 0.0
  %6117 = vmatpush2.msra.mxu0 0.0
  %6118 = vmatprep.subr.mxu0 0.0
  %6119 = vmatpush2.msra.mxu0 0.0
  %6120 = vmatprep.subr.mxu0 0.0
  %6121 = vmatpush2.msra.mxu0 0.0
  %6122 = vmatprep.subr.mxu0 0.0
  %6123 = vmatpush2.msra.mxu0 0.0
  %6124 = vmatprep.subr.mxu0 0.0
  %6125 = vmatpush2.msra.mxu0 0.0
  %6126 = vmatprep.subr.mxu0 0.0
  %6127 = vmatpush2.msra.mxu0 0.0
  %6128 = vmatprep.subr.mxu0 0.0
  %6129 = vmatpush2.msra.mxu0 0.0
  %6130 = vmatprep.mubr.f32.mxu0 0.0
  %6131 = vmatmul.mubr.f32.gmra.mxu0 %v6048
  %v6132 = vpop.f32.mrf.mxu0
  %v6133 = vadd.f32 0.0, %v6132
  %v6134 = vpop.f32.mrf.mxu0
  %6135 = vmatprep.mubr.f32.mxu0 0.0
  %6136 = vmatmul.mubr.f32.gmra.mxu0 %v6049
  %v6137 = vpop.f32.mrf.mxu0
  %v6138 = vadd.f32 0.0, %v6137
  %v6139 = vpop.f32.mrf.mxu0
  %6140 = vmatprep.mubr.f32.mxu0 0.0
  %6141 = vmatmul.mubr.f32.gmra.mxu0 %v6050
  %v6142 = vpop.f32.mrf.mxu0
  %v6143 = vadd.f32 0.0, %v6142
  %v6144 = vpop.f32.mrf.mxu0
  %6145 = vmatprep.mubr.f32.mxu0 0.0
  %6146 = vmatmul.mubr.f32.gmra.mxu0 %v6051
  %v6147 = vpop.f32.mrf.mxu0
  %v6148 = vadd.f32 0.0, %v6147
  %v6149 = vpop.f32.mrf.mxu0
  %6150 = vmatprep.mubr.f32.mxu0 0.0
  %6151 = vmatmul.mubr.f32.gmra.mxu0 %v6052
  %v6152 = vpop.f32.mrf.mxu0
  %v6153 = vadd.f32 0.0, %v6152
  %v6154 = vpop.f32.mrf.mxu0
  %6155 = vmatprep.mubr.f32.mxu0 0.0
  %6156 = vmatmul.mubr.f32.gmra.mxu0 %v6053
  %v6157 = vpop.f32.mrf.mxu0
  %v6158 = vadd.f32 0.0, %v6157
  %v6159 = vpop.f32.mrf.mxu0
  %6160 = vmatprep.mubr.f32.mxu0 0.0
  %6161 = vmatmul.mubr.f32.gmra.mxu0 %v6054
  %v6162 = vpop.f32.mrf.mxu0
  %v6163 = vadd.f32 0.0, %v6162
  %v6164 = vpop.f32.mrf.mxu0
  %6165 = vmatprep.mubr.f32.mxu0 0.0
  %6166 = vmatmul.mubr.f32.gmra.mxu0 %v6055
  %v6167 = vpop.f32.mrf.mxu0
  %v6168 = vadd.f32 0.0, %v6167
  %v6169 = vpop.f32.mrf.mxu0
  %6170 = vmatprep.mubr.f32.mxu0 0.0
  %6171 = vmatmul.mubr.f32.gmra.mxu0 %v6056
  %v6172 = vpop.f32.mrf.mxu0
  %v6173 = vadd.f32 0.0, %v6172
  %v6174 = vpop.f32.mrf.mxu0
  %6175 = vmatprep.mubr.f32.mxu0 0.0
  %6176 = vmatmul.mubr.f32.gmra.mxu0 %v6057
  %v6177 = vpop.f32.mrf.mxu0
  %v6178 = vadd.f32 0.0, %v6177
  %v6179 = vpop.f32.mrf.mxu0
  %6180 = vmatprep.mubr.f32.mxu0 0.0
  %6181 = vmatmul.mubr.f32.gmra.mxu0 %v6058
  %v6182 = vpop.f32.mrf.mxu0
  %v6183 = vadd.f32 0.0, %v6182
  %v6184 = vpop.f32.mrf.mxu0
  %6185 = vmatprep.mubr.f32.mxu0 0.0
  %6186 = vmatmul.mubr.f32.gmra.mxu0 %v6059
  %v6187 = vpop.f32.mrf.mxu0
  %v6188 = vadd.f32 0.0, %v6187
  %v6189 = vpop.f32.mrf.mxu0
  %6190 = vmatprep.mubr.f32.mxu0 0.0
  %6191 = vmatmul.mubr.f32.gmra.mxu0 %v6060
  %v6192 = vpop.f32.mrf.mxu0
  %v6193 = vadd.f32 0.0, %v6192
  %v6194 = vpop.f32.mrf.mxu0
  %6195 = vmatprep.mubr.f32.mxu0 0.0
  %6196 = vmatmul.mubr.f32.gmra.mxu0 %v6061
  %v6197 = vpop.f32.mrf.mxu0
  %v6198 = vadd.f32 0.0, %v6197
  %v6199 = vpop.f32.mrf.mxu0
  %6200 = vmatprep.mubr.f32.mxu0 0.0
  %6201 = vmatmul.mubr.f32.gmra.mxu0 %v6062
  %v6202 = vpop.f32.mrf.mxu0
  %v6203 = vadd.f32 0.0, %v6202
  %v6204 = vpop.f32.mrf.mxu0
  %6205 = vmatprep.mubr.f32.mxu0 0.0
  %6206 = vmatmul.mubr.f32.gmra.mxu0 %v6063
  %v6207 = vpop.f32.mrf.mxu0
  %v6208 = vadd.f32 0.0, %v6207
  %v6209 = vpop.f32.mrf.mxu0
  %6210 = vmatprep.mubr.f32.mxu0 0.0
  %6211 = vmatmul.mubr.f32.gmra.mxu0 %v6064
  %v6212 = vpop.f32.mrf.mxu0
  %v6213 = vadd.f32 0.0, %v6212
  %v6214 = vpop.f32.mrf.mxu0
  %6215 = vmatprep.mubr.f32.mxu0 0.0
  %6216 = vmatmul.mubr.f32.gmra.mxu0 %v6065
  %v6217 = vpop.f32.mrf.mxu0
  %v6218 = vadd.f32 0.0, %v6217
  %v6219 = vpop.f32.mrf.mxu0
  %6220 = vdwg.mxu0
  %v6221 = vadd.f32 %v5389, %v6133
  %v6222 = vadd.f32 %v5390, %v6138
  %v6223 = vadd.f32 %v5391, %v6143
  %v6224 = vadd.f32 %v5392, %v6148
  %v6225 = vadd.f32 %v5393, %v6153
  %v6226 = vadd.f32 %v5394, %v6158
  %v6227 = vadd.f32 %v5395, %v6163
  %v6228 = vadd.f32 %v5396, %v6168
  %v6229 = vadd.f32 %v5397, %v6173
  %v6230 = vadd.f32 %v5398, %v6178
  %v6231 = vadd.f32 %v5399, %v6183
  %v6232 = vadd.f32 %v5400, %v6188
  %v6233 = vadd.f32 %v5401, %v6193
  %v6234 = vadd.f32 %v5402, %v6198
  %v6235 = vadd.f32 %v5403, %v6203
  %v6236 = vadd.f32 %v5404, %v6208
  %v6237 = vadd.f32 %v5405, %v6213
  %v6238 = vadd.f32 %v5406, %v6218
  %v6240 = vlaneseq
  %v6241 = vshrl.u32 %v6240, 7
  %v6242 = vsub.s32 0, %v6241
  %v6243 = vrot.slane %v420, %v6242
  %v6245 = vadd.f32 %v6221, %v6243
  %v6246 = vadd.f32 %v6222, %v6243
  %v6247 = vadd.f32 %v6223, %v6243
  %v6248 = vadd.f32 %v6224, %v6243
  %v6249 = vadd.f32 %v6225, %v6243
  %v6250 = vadd.f32 %v6226, %v6243
  %v6251 = vadd.f32 %v6227, %v6243
  %v6252 = vadd.f32 %v6228, %v6243
  %v6253 = vadd.f32 %v6229, %v6243
  %v6254 = vadd.f32 %v6230, %v6243
  %v6255 = vadd.f32 %v6231, %v6243
  %v6256 = vadd.f32 %v6232, %v6243
  %v6257 = vadd.f32 %v6233, %v6243
  %v6258 = vadd.f32 %v6234, %v6243
  %v6259 = vadd.f32 %v6235, %v6243
  %v6260 = vadd.f32 %v6236, %v6243
  %v6261 = vadd.f32 %v6237, %v6243
  %v6262 = vadd.f32 %v6238, %v6243
  %s6263 = scalar_lea.vmem %s7, 1
  %v6264 = vld [vmem:[%s6263] sm:$0x1]
  %s6265 = scalar_lea.vmem %s8, 1
  %v6266 = vld [vmem:[%s6265] sm:$0x1]
  %s6267 = scalar_lea.vmem %s12, 1
  %v6268 = vld [vmem:[%s6267] sm:$0x1]
  %s6269 = scalar_lea.vmem %s13, 1
  %v6270 = vld [vmem:[%s6269] sm:$0x1]
  %s6271 = scalar_lea.vmem %s9, 32
  %v6272 = vld [vmem:[%s6271] sm:$0xff]
  %v6273 = vld [vmem:[%s6271 + $0x8] sm:$0xff]
  %v6274 = vld [vmem:[%s6271 + $0x10] sm:$0xff]
  %v6275 = vld [vmem:[%s6271 + $0x18] sm:$0xff]
  %s6276 = scalar_lea.vmem %s10, 32
  %v6277 = vld [vmem:[%s6276] sm:$0xff]
  %v6278 = vld [vmem:[%s6276 + $0x8] sm:$0xff]
  %v6279 = vld [vmem:[%s6276 + $0x10] sm:$0xff]
  %v6280 = vld [vmem:[%s6276 + $0x18] sm:$0xff]
  %s6281 = scalar_lea.vmem %s11, 1
  %v6282 = vld [vmem:[%s6281] sm:$0x1]
  %s6283 = scalar_lea.vmem %s14, 32
  %v6284 = vld [vmem:[%s6283] sm:$0xff]
  %v6285 = vld [vmem:[%s6283 + $0x8] sm:$0xff]
  %v6286 = vld [vmem:[%s6283 + $0x10] sm:$0xff]
  %v6287 = vld [vmem:[%s6283 + $0x18] sm:$0xff]
  %s6288 = scalar_lea.vmem %s15, 1
  %v6289 = vld [vmem:[%s6288] sm:$0x1]
  %s6290 = scalar_lea.vmem %s16, 128
  %v6291 = vld [vmem:[%s6290] sm:$0xff]
  %v6292 = vld [vmem:[%s6290 + $0x8] sm:$0xff]
  %v6293 = vld [vmem:[%s6290 + $0x10] sm:$0xff]
  %v6294 = vld [vmem:[%s6290 + $0x18] sm:$0xff]
  %v6295 = vld [vmem:[%s6290 + $0x20] sm:$0xff]
  %v6296 = vld [vmem:[%s6290 + $0x28] sm:$0xff]
  %v6297 = vld [vmem:[%s6290 + $0x30] sm:$0xff]
  %v6298 = vld [vmem:[%s6290 + $0x38] sm:$0xff]
  %v6299 = vld [vmem:[%s6290 + $0x40] sm:$0xff]
  %v6300 = vld [vmem:[%s6290 + $0x48] sm:$0xff]
  %v6301 = vld [vmem:[%s6290 + $0x50] sm:$0xff]
  %v6302 = vld [vmem:[%s6290 + $0x58] sm:$0xff]
  %v6303 = vld [vmem:[%s6290 + $0x60] sm:$0xff]
  %v6304 = vld [vmem:[%s6290 + $0x68] sm:$0xff]
  %v6305 = vld [vmem:[%s6290 + $0x70] sm:$0xff]
  %v6306 = vld [vmem:[%s6290 + $0x78] sm:$0xff]
  %s6307 = scalar_lea.vmem %s17, 1
  %v6308 = vld [vmem:[%s6307] sm:$0x1]
  %v6309 = vsel %vm301, %v6245, 0.0
  %6310 = vadd.xlane.f32.xlu0 %v6309
  %v6311 = vpop.xlane.xlu0 %6310
  %v6312 = vsel %vm301, %v6246, 0.0
  %6313 = vadd.xlane.f32.xlu0 %v6312
  %v6314 = vpop.xlane.xlu0 %6313
  %v6315 = vsel %vm301, %v6247, 0.0
  %6316 = vadd.xlane.f32.xlu0 %v6315
  %v6317 = vpop.xlane.xlu0 %6316
  %v6318 = vsel %vm301, %v6248, 0.0
  %6319 = vadd.xlane.f32.xlu0 %v6318
  %v6320 = vpop.xlane.xlu0 %6319
  %v6321 = vsel %vm301, %v6249, 0.0
  %6322 = vadd.xlane.f32.xlu0 %v6321
  %v6323 = vpop.xlane.xlu0 %6322
  %v6324 = vsel %vm301, %v6250, 0.0
  %6325 = vadd.xlane.f32.xlu0 %v6324
  %v6326 = vpop.xlane.xlu0 %6325
  %v6327 = vsel %vm301, %v6251, 0.0
  %6328 = vadd.xlane.f32.xlu0 %v6327
  %v6329 = vpop.xlane.xlu0 %6328
  %v6330 = vsel %vm301, %v6252, 0.0
  %6331 = vadd.xlane.f32.xlu0 %v6330
  %v6332 = vpop.xlane.xlu0 %6331
  %v6333 = vsel %vm301, %v6253, 0.0
  %6334 = vadd.xlane.f32.xlu0 %v6333
  %v6335 = vpop.xlane.xlu0 %6334
  %v6336 = vsel %vm301, %v6254, 0.0
  %6337 = vadd.xlane.f32.xlu0 %v6336
  %v6338 = vpop.xlane.xlu0 %6337
  %v6339 = vsel %vm301, %v6255, 0.0
  %6340 = vadd.xlane.f32.xlu0 %v6339
  %v6341 = vpop.xlane.xlu0 %6340
  %v6342 = vsel %vm301, %v6256, 0.0
  %6343 = vadd.xlane.f32.xlu0 %v6342
  %v6344 = vpop.xlane.xlu0 %6343
  %v6345 = vsel %vm301, %v6257, 0.0
  %6346 = vadd.xlane.f32.xlu0 %v6345
  %v6347 = vpop.xlane.xlu0 %6346
  %v6348 = vsel %vm301, %v6258, 0.0
  %6349 = vadd.xlane.f32.xlu0 %v6348
  %v6350 = vpop.xlane.xlu0 %6349
  %v6351 = vsel %vm301, %v6259, 0.0
  %6352 = vadd.xlane.f32.xlu0 %v6351
  %v6353 = vpop.xlane.xlu0 %6352
  %v6354 = vsel %vm301, %v6260, 0.0
  %6355 = vadd.xlane.f32.xlu0 %v6354
  %v6356 = vpop.xlane.xlu0 %6355
  %v6357 = vsel %vm301, %v6261, 0.0
  %6358 = vadd.xlane.f32.xlu0 %v6357
  %v6359 = vpop.xlane.xlu0 %6358
  %v6360 = vsel %vm301, %v6262, 0.0
  %6361 = vadd.xlane.f32.xlu0 %v6360
  %v6362 = vpop.xlane.xlu0 %6361
  %v6363 = vmul.f32 %v6311, %v475
  %v6364 = vmul.f32 %v6314, %v475
  %v6365 = vmul.f32 %v6317, %v475
  %v6366 = vmul.f32 %v6320, %v475
  %v6367 = vmul.f32 %v6323, %v475
  %v6368 = vmul.f32 %v6326, %v475
  %v6369 = vmul.f32 %v6329, %v475
  %v6370 = vmul.f32 %v6332, %v475
  %v6371 = vmul.f32 %v6335, %v475
  %v6372 = vmul.f32 %v6338, %v475
  %v6373 = vmul.f32 %v6341, %v475
  %v6374 = vmul.f32 %v6344, %v475
  %v6375 = vmul.f32 %v6347, %v475
  %v6376 = vmul.f32 %v6350, %v475
  %v6377 = vmul.f32 %v6353, %v475
  %v6378 = vmul.f32 %v6356, %v475
  %v6379 = vmul.f32 %v6359, %v475
  %v6380 = vmul.f32 %v6362, %v475
  %v6381 = vsub.f32 %v6245, %v6363
  %v6382 = vsub.f32 %v6246, %v6364
  %v6383 = vsub.f32 %v6247, %v6365
  %v6384 = vsub.f32 %v6248, %v6366
  %v6385 = vsub.f32 %v6249, %v6367
  %v6386 = vsub.f32 %v6250, %v6368
  %v6387 = vsub.f32 %v6251, %v6369
  %v6388 = vsub.f32 %v6252, %v6370
  %v6389 = vsub.f32 %v6253, %v6371
  %v6390 = vsub.f32 %v6254, %v6372
  %v6391 = vsub.f32 %v6255, %v6373
  %v6392 = vsub.f32 %v6256, %v6374
  %v6393 = vsub.f32 %v6257, %v6375
  %v6394 = vsub.f32 %v6258, %v6376
  %v6395 = vsub.f32 %v6259, %v6377
  %v6396 = vsub.f32 %v6260, %v6378
  %v6397 = vsub.f32 %v6261, %v6379
  %v6398 = vsub.f32 %v6262, %v6380
  %v6399 = vmul.f32 %v6381, %v6381
  %v6400 = vmul.f32 %v6382, %v6382
  %v6401 = vmul.f32 %v6383, %v6383
  %v6402 = vmul.f32 %v6384, %v6384
  %v6403 = vmul.f32 %v6385, %v6385
  %v6404 = vmul.f32 %v6386, %v6386
  %v6405 = vmul.f32 %v6387, %v6387
  %v6406 = vmul.f32 %v6388, %v6388
  %v6407 = vmul.f32 %v6389, %v6389
  %v6408 = vmul.f32 %v6390, %v6390
  %v6409 = vmul.f32 %v6391, %v6391
  %v6410 = vmul.f32 %v6392, %v6392
  %v6411 = vmul.f32 %v6393, %v6393
  %v6412 = vmul.f32 %v6394, %v6394
  %v6413 = vmul.f32 %v6395, %v6395
  %v6414 = vmul.f32 %v6396, %v6396
  %v6415 = vmul.f32 %v6397, %v6397
  %v6416 = vmul.f32 %v6398, %v6398
  %v6417 = vsel %vm301, %v6399, 0.0
  %6418 = vadd.xlane.f32.xlu0 %v6417
  %v6419 = vpop.xlane.xlu0 %6418
  %v6420 = vsel %vm301, %v6400, 0.0
  %6421 = vadd.xlane.f32.xlu0 %v6420
  %v6422 = vpop.xlane.xlu0 %6421
  %v6423 = vsel %vm301, %v6401, 0.0
  %6424 = vadd.xlane.f32.xlu0 %v6423
  %v6425 = vpop.xlane.xlu0 %6424
  %v6426 = vsel %vm301, %v6402, 0.0
  %6427 = vadd.xlane.f32.xlu0 %v6426
  %v6428 = vpop.xlane.xlu0 %6427
  %v6429 = vsel %vm301, %v6403, 0.0
  %6430 = vadd.xlane.f32.xlu0 %v6429
  %v6431 = vpop.xlane.xlu0 %6430
  %v6432 = vsel %vm301, %v6404, 0.0
  %6433 = vadd.xlane.f32.xlu0 %v6432
  %v6434 = vpop.xlane.xlu0 %6433
  %v6435 = vsel %vm301, %v6405, 0.0
  %6436 = vadd.xlane.f32.xlu0 %v6435
  %v6437 = vpop.xlane.xlu0 %6436
  %v6438 = vsel %vm301, %v6406, 0.0
  %6439 = vadd.xlane.f32.xlu0 %v6438
  %v6440 = vpop.xlane.xlu0 %6439
  %v6441 = vsel %vm301, %v6407, 0.0
  %6442 = vadd.xlane.f32.xlu0 %v6441
  %v6443 = vpop.xlane.xlu0 %6442
  %v6444 = vsel %vm301, %v6408, 0.0
  %6445 = vadd.xlane.f32.xlu0 %v6444
  %v6446 = vpop.xlane.xlu0 %6445
  %v6447 = vsel %vm301, %v6409, 0.0
  %6448 = vadd.xlane.f32.xlu0 %v6447
  %v6449 = vpop.xlane.xlu0 %6448
  %v6450 = vsel %vm301, %v6410, 0.0
  %6451 = vadd.xlane.f32.xlu0 %v6450
  %v6452 = vpop.xlane.xlu0 %6451
  %v6453 = vsel %vm301, %v6411, 0.0
  %6454 = vadd.xlane.f32.xlu0 %v6453
  %v6455 = vpop.xlane.xlu0 %6454
  %v6456 = vsel %vm301, %v6412, 0.0
  %6457 = vadd.xlane.f32.xlu0 %v6456
  %v6458 = vpop.xlane.xlu0 %6457
  %v6459 = vsel %vm301, %v6413, 0.0
  %6460 = vadd.xlane.f32.xlu0 %v6459
  %v6461 = vpop.xlane.xlu0 %6460
  %v6462 = vsel %vm301, %v6414, 0.0
  %6463 = vadd.xlane.f32.xlu0 %v6462
  %v6464 = vpop.xlane.xlu0 %6463
  %v6465 = vsel %vm301, %v6415, 0.0
  %6466 = vadd.xlane.f32.xlu0 %v6465
  %v6467 = vpop.xlane.xlu0 %6466
  %v6468 = vsel %vm301, %v6416, 0.0
  %6469 = vadd.xlane.f32.xlu0 %v6468
  %v6470 = vpop.xlane.xlu0 %6469
  %v6471 = vmul.f32 %v6419, %v475
  %v6472 = vmul.f32 %v6422, %v475
  %v6473 = vmul.f32 %v6425, %v475
  %v6474 = vmul.f32 %v6428, %v475
  %v6475 = vmul.f32 %v6431, %v475
  %v6476 = vmul.f32 %v6434, %v475
  %v6477 = vmul.f32 %v6437, %v475
  %v6478 = vmul.f32 %v6440, %v475
  %v6479 = vmul.f32 %v6443, %v475
  %v6480 = vmul.f32 %v6446, %v475
  %v6481 = vmul.f32 %v6449, %v475
  %v6482 = vmul.f32 %v6452, %v475
  %v6483 = vmul.f32 %v6455, %v475
  %v6484 = vmul.f32 %v6458, %v475
  %v6485 = vmul.f32 %v6461, %v475
  %v6486 = vmul.f32 %v6464, %v475
  %v6487 = vmul.f32 %v6467, %v475
  %v6488 = vmul.f32 %v6470, %v475
  %v6489 = vadd.f32 %v6471, 1e-05
  %v6490 = vadd.f32 %v6472, 1e-05
  %v6491 = vadd.f32 %v6473, 1e-05
  %v6492 = vadd.f32 %v6474, 1e-05
  %v6493 = vadd.f32 %v6475, 1e-05
  %v6494 = vadd.f32 %v6476, 1e-05
  %v6495 = vadd.f32 %v6477, 1e-05
  %v6496 = vadd.f32 %v6478, 1e-05
  %v6497 = vadd.f32 %v6479, 1e-05
  %v6498 = vadd.f32 %v6480, 1e-05
  %v6499 = vadd.f32 %v6481, 1e-05
  %v6500 = vadd.f32 %v6482, 1e-05
  %v6501 = vadd.f32 %v6483, 1e-05
  %v6502 = vadd.f32 %v6484, 1e-05
  %v6503 = vadd.f32 %v6485, 1e-05
  %v6504 = vadd.f32 %v6486, 1e-05
  %v6505 = vadd.f32 %v6487, 1e-05
  %v6506 = vadd.f32 %v6488, 1e-05
  %v6507 = vrsqrt.pop %v6489
  %v6508 = vrsqrt.pop %v6490
  %v6509 = vrsqrt.pop %v6491
  %v6510 = vrsqrt.pop %v6492
  %v6511 = vrsqrt.pop %v6493
  %v6512 = vrsqrt.pop %v6494
  %v6513 = vrsqrt.pop %v6495
  %v6514 = vrsqrt.pop %v6496
  %v6515 = vrsqrt.pop %v6497
  %v6516 = vrsqrt.pop %v6498
  %v6517 = vrsqrt.pop %v6499
  %v6518 = vrsqrt.pop %v6500
  %v6519 = vrsqrt.pop %v6501
  %v6520 = vrsqrt.pop %v6502
  %v6521 = vrsqrt.pop %v6503
  %v6522 = vrsqrt.pop %v6504
  %v6523 = vrsqrt.pop %v6505
  %v6524 = vrsqrt.pop %v6506
  %v6525 = vmul.f32 %v6381, %v6507
  %v6526 = vmul.f32 %v6382, %v6508
  %v6527 = vmul.f32 %v6383, %v6509
  %v6528 = vmul.f32 %v6384, %v6510
  %v6529 = vmul.f32 %v6385, %v6511
  %v6530 = vmul.f32 %v6386, %v6512
  %v6531 = vmul.f32 %v6387, %v6513
  %v6532 = vmul.f32 %v6388, %v6514
  %v6533 = vmul.f32 %v6389, %v6515
  %v6534 = vmul.f32 %v6390, %v6516
  %v6535 = vmul.f32 %v6391, %v6517
  %v6536 = vmul.f32 %v6392, %v6518
  %v6537 = vmul.f32 %v6393, %v6519
  %v6538 = vmul.f32 %v6394, %v6520
  %v6539 = vmul.f32 %v6395, %v6521
  %v6540 = vmul.f32 %v6396, %v6522
  %v6541 = vmul.f32 %v6397, %v6523
  %v6542 = vmul.f32 %v6398, %v6524
  %v6544 = vlaneseq
  %v6545 = vshrl.u32 %v6544, 7
  %v6546 = vsub.s32 0, %v6545
  %v6547 = vrot.slane %v6264, %v6546
  %v6549 = vmul.f32 %v6525, %v6547
  %v6550 = vmul.f32 %v6526, %v6547
  %v6551 = vmul.f32 %v6527, %v6547
  %v6552 = vmul.f32 %v6528, %v6547
  %v6553 = vmul.f32 %v6529, %v6547
  %v6554 = vmul.f32 %v6530, %v6547
  %v6555 = vmul.f32 %v6531, %v6547
  %v6556 = vmul.f32 %v6532, %v6547
  %v6557 = vmul.f32 %v6533, %v6547
  %v6558 = vmul.f32 %v6534, %v6547
  %v6559 = vmul.f32 %v6535, %v6547
  %v6560 = vmul.f32 %v6536, %v6547
  %v6561 = vmul.f32 %v6537, %v6547
  %v6562 = vmul.f32 %v6538, %v6547
  %v6563 = vmul.f32 %v6539, %v6547
  %v6564 = vmul.f32 %v6540, %v6547
  %v6565 = vmul.f32 %v6541, %v6547
  %v6566 = vmul.f32 %v6542, %v6547
  %v6568 = vlaneseq
  %v6569 = vshrl.u32 %v6568, 7
  %v6570 = vsub.s32 0, %v6569
  %v6571 = vrot.slane %v6266, %v6570
  %v6573 = vadd.f32 %v6549, %v6571
  %v6574 = vadd.f32 %v6550, %v6571
  %v6575 = vadd.f32 %v6551, %v6571
  %v6576 = vadd.f32 %v6552, %v6571
  %v6577 = vadd.f32 %v6553, %v6571
  %v6578 = vadd.f32 %v6554, %v6571
  %v6579 = vadd.f32 %v6555, %v6571
  %v6580 = vadd.f32 %v6556, %v6571
  %v6581 = vadd.f32 %v6557, %v6571
  %v6582 = vadd.f32 %v6558, %v6571
  %v6583 = vadd.f32 %v6559, %v6571
  %v6584 = vadd.f32 %v6560, %v6571
  %v6585 = vadd.f32 %v6561, %v6571
  %v6586 = vadd.f32 %v6562, %v6571
  %v6587 = vadd.f32 %v6563, %v6571
  %v6588 = vadd.f32 %v6564, %v6571
  %v6589 = vadd.f32 %v6565, %v6571
  %v6590 = vadd.f32 %v6566, %v6571
  %v6592 = vsel %vm301, %v6573, 0
  %v6595 = vsel %vm301, %v6574, 0
  %v6598 = vsel %vm301, %v6575, 0
  %v6601 = vsel %vm301, %v6576, 0
  %v6604 = vsel %vm301, %v6577, 0
  %v6607 = vsel %vm301, %v6578, 0
  %v6610 = vsel %vm301, %v6579, 0
  %v6613 = vsel %vm301, %v6580, 0
  %v6616 = vsel %vm301, %v6581, 0
  %v6619 = vsel %vm301, %v6582, 0
  %v6622 = vsel %vm301, %v6583, 0
  %v6625 = vsel %vm301, %v6584, 0
  %v6628 = vsel %vm301, %v6585, 0
  %v6631 = vsel %vm301, %v6586, 0
  %v6634 = vsel %vm301, %v6587, 0
  %v6637 = vsel %vm301, %v6588, 0
  %v6640 = vsel %vm301, %v6589, 0
  %v6643 = vsel %vm301, %v6590, 0
  %6645 = vmatprep.subr.mxu0 0.0
  %6646 = vmatpush1.msra.mxu0 0.0
  %6647 = vmatprep.subr.mxu0 0.0
  %6648 = vmatpush1.msra.mxu0 0.0
  %6649 = vmatprep.subr.mxu0 0.0
  %6650 = vmatpush1.msra.mxu0 0.0
  %6651 = vmatprep.subr.mxu0 0.0
  %6652 = vmatpush1.msra.mxu0 0.0
  %6653 = vmatprep.subr.mxu0 0.0
  %6654 = vmatpush1.msra.mxu0 0.0
  %6655 = vmatprep.subr.mxu0 0.0
  %6656 = vmatpush1.msra.mxu0 0.0
  %6657 = vmatprep.subr.mxu0 0.0
  %6658 = vmatpush1.msra.mxu0 0.0
  %6659 = vmatprep.subr.mxu0 0.0
  %6660 = vmatpush1.msra.mxu0 0.0
  %6661 = vmatprep.subr.mxu0 0.0
  %6662 = vmatpush1.msra.mxu0 0.0
  %6663 = vmatprep.subr.mxu0 0.0
  %6664 = vmatpush1.msra.mxu0 0.0
  %6665 = vmatprep.subr.mxu0 0.0
  %6666 = vmatpush1.msra.mxu0 0.0
  %6667 = vmatprep.subr.mxu0 0.0
  %6668 = vmatpush1.msra.mxu0 0.0
  %6669 = vmatprep.subr.mxu0 0.0
  %6670 = vmatpush1.msra.mxu0 %v6275
  %6671 = vmatprep.subr.mxu0 0.0
  %6672 = vmatpush1.msra.mxu0 %v6274
  %6673 = vmatprep.subr.mxu0 0.0
  %6674 = vmatpush1.msra.mxu0 %v6273
  %6675 = vmatprep.subr.mxu0 0.0
  %6676 = vmatpush1.msra.mxu0 %v6272
  %6677 = vmatprep.subr.mxu0 0.0
  %6678 = vmatpush2.msra.mxu0 0.0
  %6679 = vmatprep.subr.mxu0 0.0
  %6680 = vmatpush2.msra.mxu0 0.0
  %6681 = vmatprep.subr.mxu0 0.0
  %6682 = vmatpush2.msra.mxu0 0.0
  %6683 = vmatprep.subr.mxu0 0.0
  %6684 = vmatpush2.msra.mxu0 0.0
  %6685 = vmatprep.subr.mxu0 0.0
  %6686 = vmatpush2.msra.mxu0 0.0
  %6687 = vmatprep.subr.mxu0 0.0
  %6688 = vmatpush2.msra.mxu0 0.0
  %6689 = vmatprep.subr.mxu0 0.0
  %6690 = vmatpush2.msra.mxu0 0.0
  %6691 = vmatprep.subr.mxu0 0.0
  %6692 = vmatpush2.msra.mxu0 0.0
  %6693 = vmatprep.subr.mxu0 0.0
  %6694 = vmatpush2.msra.mxu0 0.0
  %6695 = vmatprep.subr.mxu0 0.0
  %6696 = vmatpush2.msra.mxu0 0.0
  %6697 = vmatprep.subr.mxu0 0.0
  %6698 = vmatpush2.msra.mxu0 0.0
  %6699 = vmatprep.subr.mxu0 0.0
  %6700 = vmatpush2.msra.mxu0 0.0
  %6701 = vmatprep.subr.mxu0 0.0
  %6702 = vmatpush2.msra.mxu0 0.0
  %6703 = vmatprep.subr.mxu0 0.0
  %6704 = vmatpush2.msra.mxu0 0.0
  %6705 = vmatprep.subr.mxu0 0.0
  %6706 = vmatpush2.msra.mxu0 0.0
  %6707 = vmatprep.subr.mxu0 0.0
  %6708 = vmatpush2.msra.mxu0 0.0
  %6709 = vmatprep.mubr.f32.mxu0 0.0
  %6710 = vmatmul.mubr.f32.gmra.mxu0 %v6592
  %v6711 = vpop.f32.mrf.mxu0
  %v6712 = vadd.f32 0.0, %v6711
  %v6713 = vpop.f32.mrf.mxu0
  %6714 = vmatprep.mubr.f32.mxu0 0.0
  %6715 = vmatmul.mubr.f32.gmra.mxu0 %v6595
  %v6716 = vpop.f32.mrf.mxu0
  %v6717 = vadd.f32 0.0, %v6716
  %v6718 = vpop.f32.mrf.mxu0
  %6719 = vmatprep.mubr.f32.mxu0 0.0
  %6720 = vmatmul.mubr.f32.gmra.mxu0 %v6598
  %v6721 = vpop.f32.mrf.mxu0
  %v6722 = vadd.f32 0.0, %v6721
  %v6723 = vpop.f32.mrf.mxu0
  %6724 = vmatprep.mubr.f32.mxu0 0.0
  %6725 = vmatmul.mubr.f32.gmra.mxu0 %v6601
  %v6726 = vpop.f32.mrf.mxu0
  %v6727 = vadd.f32 0.0, %v6726
  %v6728 = vpop.f32.mrf.mxu0
  %6729 = vmatprep.mubr.f32.mxu0 0.0
  %6730 = vmatmul.mubr.f32.gmra.mxu0 %v6604
  %v6731 = vpop.f32.mrf.mxu0
  %v6732 = vadd.f32 0.0, %v6731
  %v6733 = vpop.f32.mrf.mxu0
  %6734 = vmatprep.mubr.f32.mxu0 0.0
  %6735 = vmatmul.mubr.f32.gmra.mxu0 %v6607
  %v6736 = vpop.f32.mrf.mxu0
  %v6737 = vadd.f32 0.0, %v6736
  %v6738 = vpop.f32.mrf.mxu0
  %6739 = vmatprep.mubr.f32.mxu0 0.0
  %6740 = vmatmul.mubr.f32.gmra.mxu0 %v6610
  %v6741 = vpop.f32.mrf.mxu0
  %v6742 = vadd.f32 0.0, %v6741
  %v6743 = vpop.f32.mrf.mxu0
  %6744 = vmatprep.mubr.f32.mxu0 0.0
  %6745 = vmatmul.mubr.f32.gmra.mxu0 %v6613
  %v6746 = vpop.f32.mrf.mxu0
  %v6747 = vadd.f32 0.0, %v6746
  %v6748 = vpop.f32.mrf.mxu0
  %6749 = vmatprep.mubr.f32.mxu0 0.0
  %6750 = vmatmul.mubr.f32.gmra.mxu0 %v6616
  %v6751 = vpop.f32.mrf.mxu0
  %v6752 = vadd.f32 0.0, %v6751
  %v6753 = vpop.f32.mrf.mxu0
  %6754 = vmatprep.mubr.f32.mxu0 0.0
  %6755 = vmatmul.mubr.f32.gmra.mxu0 %v6619
  %v6756 = vpop.f32.mrf.mxu0
  %v6757 = vadd.f32 0.0, %v6756
  %v6758 = vpop.f32.mrf.mxu0
  %6759 = vmatprep.mubr.f32.mxu0 0.0
  %6760 = vmatmul.mubr.f32.gmra.mxu0 %v6622
  %v6761 = vpop.f32.mrf.mxu0
  %v6762 = vadd.f32 0.0, %v6761
  %v6763 = vpop.f32.mrf.mxu0
  %6764 = vmatprep.mubr.f32.mxu0 0.0
  %6765 = vmatmul.mubr.f32.gmra.mxu0 %v6625
  %v6766 = vpop.f32.mrf.mxu0
  %v6767 = vadd.f32 0.0, %v6766
  %v6768 = vpop.f32.mrf.mxu0
  %6769 = vmatprep.mubr.f32.mxu0 0.0
  %6770 = vmatmul.mubr.f32.gmra.mxu0 %v6628
  %v6771 = vpop.f32.mrf.mxu0
  %v6772 = vadd.f32 0.0, %v6771
  %v6773 = vpop.f32.mrf.mxu0
  %6774 = vmatprep.mubr.f32.mxu0 0.0
  %6775 = vmatmul.mubr.f32.gmra.mxu0 %v6631
  %v6776 = vpop.f32.mrf.mxu0
  %v6777 = vadd.f32 0.0, %v6776
  %v6778 = vpop.f32.mrf.mxu0
  %6779 = vmatprep.mubr.f32.mxu0 0.0
  %6780 = vmatmul.mubr.f32.gmra.mxu0 %v6634
  %v6781 = vpop.f32.mrf.mxu0
  %v6782 = vadd.f32 0.0, %v6781
  %v6783 = vpop.f32.mrf.mxu0
  %6784 = vmatprep.mubr.f32.mxu0 0.0
  %6785 = vmatmul.mubr.f32.gmra.mxu0 %v6637
  %v6786 = vpop.f32.mrf.mxu0
  %v6787 = vadd.f32 0.0, %v6786
  %v6788 = vpop.f32.mrf.mxu0
  %6789 = vmatprep.mubr.f32.mxu0 0.0
  %6790 = vmatmul.mubr.f32.gmra.mxu0 %v6640
  %v6791 = vpop.f32.mrf.mxu0
  %v6792 = vadd.f32 0.0, %v6791
  %v6793 = vpop.f32.mrf.mxu0
  %6794 = vmatprep.mubr.f32.mxu0 0.0
  %6795 = vmatmul.mubr.f32.gmra.mxu0 %v6643
  %v6796 = vpop.f32.mrf.mxu0
  %v6797 = vadd.f32 0.0, %v6796
  %v6798 = vpop.f32.mrf.mxu0
  %6799 = vdwg.mxu0
  %v6800 = vmul.f32 %v6712, 0.35355338
  %v6801 = vmul.f32 %v6717, 0.35355338
  %v6802 = vmul.f32 %v6722, 0.35355338
  %v6803 = vmul.f32 %v6727, 0.35355338
  %v6804 = vmul.f32 %v6732, 0.35355338
  %v6805 = vmul.f32 %v6737, 0.35355338
  %v6806 = vmul.f32 %v6742, 0.35355338
  %v6807 = vmul.f32 %v6747, 0.35355338
  %v6808 = vmul.f32 %v6752, 0.35355338
  %v6809 = vmul.f32 %v6757, 0.35355338
  %v6810 = vmul.f32 %v6762, 0.35355338
  %v6811 = vmul.f32 %v6767, 0.35355338
  %v6812 = vmul.f32 %v6772, 0.35355338
  %v6813 = vmul.f32 %v6777, 0.35355338
  %v6814 = vmul.f32 %v6782, 0.35355338
  %v6815 = vmul.f32 %v6787, 0.35355338
  %v6816 = vmul.f32 %v6792, 0.35355338
  %v6817 = vmul.f32 %v6797, 0.35355338
  %6827 = vrot.lane.b32.xlu0 %v6712, 96
  %v6828 = vpop.permute.xlu0 %6827
  %6829 = vrot.lane.b32.xlu0 %v6717, 96
  %v6830 = vpop.permute.xlu0 %6829
  %6831 = vrot.lane.b32.xlu0 %v6722, 96
  %v6832 = vpop.permute.xlu0 %6831
  %6833 = vrot.lane.b32.xlu0 %v6727, 96
  %v6834 = vpop.permute.xlu0 %6833
  %6835 = vrot.lane.b32.xlu0 %v6732, 96
  %v6836 = vpop.permute.xlu0 %6835
  %6837 = vrot.lane.b32.xlu0 %v6737, 96
  %v6838 = vpop.permute.xlu0 %6837
  %6839 = vrot.lane.b32.xlu0 %v6742, 96
  %v6840 = vpop.permute.xlu0 %6839
  %6841 = vrot.lane.b32.xlu0 %v6747, 96
  %v6842 = vpop.permute.xlu0 %6841
  %6843 = vrot.lane.b32.xlu0 %v6752, 96
  %v6844 = vpop.permute.xlu0 %6843
  %v6846 = vsel %vm958, %v6800, 0
  %v6849 = vsel %vm958, %v6801, 0
  %v6852 = vsel %vm958, %v6802, 0
  %v6855 = vsel %vm958, %v6803, 0
  %v6858 = vsel %vm958, %v6804, 0
  %v6861 = vsel %vm958, %v6805, 0
  %v6864 = vsel %vm958, %v6806, 0
  %v6867 = vsel %vm958, %v6807, 0
  %v6870 = vsel %vm958, %v6808, 0
  %v6872 = vsel %vm958, %v6828, 0
  %v6874 = vsel %vm958, %v6830, 0
  %v6876 = vsel %vm958, %v6832, 0
  %v6878 = vsel %vm958, %v6834, 0
  %v6880 = vsel %vm958, %v6836, 0
  %v6882 = vsel %vm958, %v6838, 0
  %v6884 = vsel %vm958, %v6840, 0
  %v6886 = vsel %vm958, %v6842, 0
  %v6888 = vsel %vm958, %v6844, 0
  %6890 = vmatprep.subr.mxu0 0.0
  %6891 = vmatpush1.xpose.msra.mxu0 0.0
  %6892 = vmatprep.subr.mxu0 0.0
  %6893 = vmatpush1.xpose.msra.mxu0 0.0
  %6894 = vmatprep.subr.mxu0 0.0
  %6895 = vmatpush1.xpose.msra.mxu0 0.0
  %6896 = vmatprep.subr.mxu0 0.0
  %6897 = vmatpush1.xpose.msra.mxu0 0.0
  %6898 = vmatprep.subr.mxu0 0.0
  %6899 = vmatpush1.xpose.msra.mxu0 0.0
  %6900 = vmatprep.subr.mxu0 0.0
  %6901 = vmatpush1.xpose.msra.mxu0 0.0
  %6902 = vmatprep.subr.mxu0 0.0
  %6903 = vmatpush1.xpose.msra.mxu0 0.0
  %6904 = vmatprep.subr.mxu0 0.0
  %6905 = vmatpush1.xpose.msra.mxu0 %v6888
  %6906 = vmatprep.subr.mxu0 0.0
  %6907 = vmatpush1.xpose.msra.mxu0 %v6886
  %6908 = vmatprep.subr.mxu0 0.0
  %6909 = vmatpush1.xpose.msra.mxu0 %v6884
  %6910 = vmatprep.subr.mxu0 0.0
  %6911 = vmatpush1.xpose.msra.mxu0 %v6882
  %6912 = vmatprep.subr.mxu0 0.0
  %6913 = vmatpush1.xpose.msra.mxu0 %v6880
  %6914 = vmatprep.subr.mxu0 0.0
  %6915 = vmatpush1.xpose.msra.mxu0 %v6878
  %6916 = vmatprep.subr.mxu0 0.0
  %6917 = vmatpush1.xpose.msra.mxu0 %v6876
  %6918 = vmatprep.subr.mxu0 0.0
  %6919 = vmatpush1.xpose.msra.mxu0 %v6874
  %6920 = vmatprep.subr.mxu0 0.0
  %6921 = vmatpush1.xpose.msra.mxu0 %v6872
  %6922 = vmatprep.subr.mxu0 0.0
  %6923 = vmatpush2.xpose.msra.mxu0 0.0
  %6924 = vmatprep.subr.mxu0 0.0
  %6925 = vmatpush2.xpose.msra.mxu0 0.0
  %6926 = vmatprep.subr.mxu0 0.0
  %6927 = vmatpush2.xpose.msra.mxu0 0.0
  %6928 = vmatprep.subr.mxu0 0.0
  %6929 = vmatpush2.xpose.msra.mxu0 0.0
  %6930 = vmatprep.subr.mxu0 0.0
  %6931 = vmatpush2.xpose.msra.mxu0 0.0
  %6932 = vmatprep.subr.mxu0 0.0
  %6933 = vmatpush2.xpose.msra.mxu0 0.0
  %6934 = vmatprep.subr.mxu0 0.0
  %6935 = vmatpush2.xpose.msra.mxu0 0.0
  %6936 = vmatprep.subr.mxu0 0.0
  %6937 = vmatpush2.xpose.msra.mxu0 0.0
  %6938 = vmatprep.subr.mxu0 0.0
  %6939 = vmatpush2.xpose.msra.mxu0 0.0
  %6940 = vmatprep.subr.mxu0 0.0
  %6941 = vmatpush2.xpose.msra.mxu0 0.0
  %6942 = vmatprep.subr.mxu0 0.0
  %6943 = vmatpush2.xpose.msra.mxu0 0.0
  %6944 = vmatprep.subr.mxu0 0.0
  %6945 = vmatpush2.xpose.msra.mxu0 0.0
  %6946 = vmatprep.subr.mxu0 0.0
  %6947 = vmatpush2.xpose.msra.mxu0 0.0
  %6948 = vmatprep.subr.mxu0 0.0
  %6949 = vmatpush2.xpose.msra.mxu0 0.0
  %6950 = vmatprep.subr.mxu0 0.0
  %6951 = vmatpush2.xpose.msra.mxu0 0.0
  %6952 = vmatprep.subr.mxu0 0.0
  %6953 = vmatpush2.xpose.msra.mxu0 0.0
  %6954 = vmatprep.mubr.f32.mxu0 0.0
  %6955 = vmatmul.mubr.f32.gmra.mxu0 %v6846
  %v6956 = vpop.f32.mrf.mxu0
  %v6957 = vadd.f32 %v385, %v6956
  %v6958 = vpop.f32.mrf.mxu0
  %6959 = vmatprep.mubr.f32.mxu0 0.0
  %6960 = vmatmul.mubr.f32.gmra.mxu0 %v6849
  %v6961 = vpop.f32.mrf.mxu0
  %v6962 = vadd.f32 %v385, %v6961
  %v6963 = vpop.f32.mrf.mxu0
  %6964 = vmatprep.mubr.f32.mxu0 0.0
  %6965 = vmatmul.mubr.f32.gmra.mxu0 %v6852
  %v6966 = vpop.f32.mrf.mxu0
  %v6967 = vadd.f32 %v385, %v6966
  %v6968 = vpop.f32.mrf.mxu0
  %6969 = vmatprep.mubr.f32.mxu0 0.0
  %6970 = vmatmul.mubr.f32.gmra.mxu0 %v6855
  %v6971 = vpop.f32.mrf.mxu0
  %v6972 = vadd.f32 %v385, %v6971
  %v6973 = vpop.f32.mrf.mxu0
  %6974 = vmatprep.mubr.f32.mxu0 0.0
  %6975 = vmatmul.mubr.f32.gmra.mxu0 %v6858
  %v6976 = vpop.f32.mrf.mxu0
  %v6977 = vadd.f32 %v385, %v6976
  %v6978 = vpop.f32.mrf.mxu0
  %6979 = vmatprep.mubr.f32.mxu0 0.0
  %6980 = vmatmul.mubr.f32.gmra.mxu0 %v6861
  %v6981 = vpop.f32.mrf.mxu0
  %v6982 = vadd.f32 %v385, %v6981
  %v6983 = vpop.f32.mrf.mxu0
  %6984 = vmatprep.mubr.f32.mxu0 0.0
  %6985 = vmatmul.mubr.f32.gmra.mxu0 %v6864
  %v6986 = vpop.f32.mrf.mxu0
  %v6987 = vadd.f32 %v385, %v6986
  %v6988 = vpop.f32.mrf.mxu0
  %6989 = vmatprep.mubr.f32.mxu0 0.0
  %6990 = vmatmul.mubr.f32.gmra.mxu0 %v6867
  %v6991 = vpop.f32.mrf.mxu0
  %v6992 = vadd.f32 %v385, %v6991
  %v6993 = vpop.f32.mrf.mxu0
  %6994 = vmatprep.mubr.f32.mxu0 0.0
  %6995 = vmatmul.mubr.f32.gmra.mxu0 %v6870
  %v6996 = vpop.f32.mrf.mxu0
  %v6997 = vadd.f32 %v385, %v6996
  %v6998 = vpop.f32.mrf.mxu0
  %6999 = vdwg.mxu0
  %7009 = vrot.lane.b32.xlu0 %v6757, 96
  %v7010 = vpop.permute.xlu0 %7009
  %7011 = vrot.lane.b32.xlu0 %v6762, 96
  %v7012 = vpop.permute.xlu0 %7011
  %7013 = vrot.lane.b32.xlu0 %v6767, 96
  %v7014 = vpop.permute.xlu0 %7013
  %7015 = vrot.lane.b32.xlu0 %v6772, 96
  %v7016 = vpop.permute.xlu0 %7015
  %7017 = vrot.lane.b32.xlu0 %v6777, 96
  %v7018 = vpop.permute.xlu0 %7017
  %7019 = vrot.lane.b32.xlu0 %v6782, 96
  %v7020 = vpop.permute.xlu0 %7019
  %7021 = vrot.lane.b32.xlu0 %v6787, 96
  %v7022 = vpop.permute.xlu0 %7021
  %7023 = vrot.lane.b32.xlu0 %v6792, 96
  %v7024 = vpop.permute.xlu0 %7023
  %7025 = vrot.lane.b32.xlu0 %v6797, 96
  %v7026 = vpop.permute.xlu0 %7025
  %v7028 = vsel %vm958, %v6809, 0
  %v7031 = vsel %vm958, %v6810, 0
  %v7034 = vsel %vm958, %v6811, 0
  %v7037 = vsel %vm958, %v6812, 0
  %v7040 = vsel %vm958, %v6813, 0
  %v7043 = vsel %vm958, %v6814, 0
  %v7046 = vsel %vm958, %v6815, 0
  %v7049 = vsel %vm958, %v6816, 0
  %v7052 = vsel %vm958, %v6817, 0
  %v7054 = vsel %vm958, %v7010, 0
  %v7056 = vsel %vm958, %v7012, 0
  %v7058 = vsel %vm958, %v7014, 0
  %v7060 = vsel %vm958, %v7016, 0
  %v7062 = vsel %vm958, %v7018, 0
  %v7064 = vsel %vm958, %v7020, 0
  %v7066 = vsel %vm958, %v7022, 0
  %v7068 = vsel %vm958, %v7024, 0
  %v7070 = vsel %vm958, %v7026, 0
  %7072 = vmatprep.subr.mxu0 0.0
  %7073 = vmatpush1.xpose.msra.mxu0 0.0
  %7074 = vmatprep.subr.mxu0 0.0
  %7075 = vmatpush1.xpose.msra.mxu0 0.0
  %7076 = vmatprep.subr.mxu0 0.0
  %7077 = vmatpush1.xpose.msra.mxu0 0.0
  %7078 = vmatprep.subr.mxu0 0.0
  %7079 = vmatpush1.xpose.msra.mxu0 0.0
  %7080 = vmatprep.subr.mxu0 0.0
  %7081 = vmatpush1.xpose.msra.mxu0 0.0
  %7082 = vmatprep.subr.mxu0 0.0
  %7083 = vmatpush1.xpose.msra.mxu0 0.0
  %7084 = vmatprep.subr.mxu0 0.0
  %7085 = vmatpush1.xpose.msra.mxu0 0.0
  %7086 = vmatprep.subr.mxu0 0.0
  %7087 = vmatpush1.xpose.msra.mxu0 %v7070
  %7088 = vmatprep.subr.mxu0 0.0
  %7089 = vmatpush1.xpose.msra.mxu0 %v7068
  %7090 = vmatprep.subr.mxu0 0.0
  %7091 = vmatpush1.xpose.msra.mxu0 %v7066
  %7092 = vmatprep.subr.mxu0 0.0
  %7093 = vmatpush1.xpose.msra.mxu0 %v7064
  %7094 = vmatprep.subr.mxu0 0.0
  %7095 = vmatpush1.xpose.msra.mxu0 %v7062
  %7096 = vmatprep.subr.mxu0 0.0
  %7097 = vmatpush1.xpose.msra.mxu0 %v7060
  %7098 = vmatprep.subr.mxu0 0.0
  %7099 = vmatpush1.xpose.msra.mxu0 %v7058
  %7100 = vmatprep.subr.mxu0 0.0
  %7101 = vmatpush1.xpose.msra.mxu0 %v7056
  %7102 = vmatprep.subr.mxu0 0.0
  %7103 = vmatpush1.xpose.msra.mxu0 %v7054
  %7104 = vmatprep.subr.mxu0 0.0
  %7105 = vmatpush2.xpose.msra.mxu0 0.0
  %7106 = vmatprep.subr.mxu0 0.0
  %7107 = vmatpush2.xpose.msra.mxu0 0.0
  %7108 = vmatprep.subr.mxu0 0.0
  %7109 = vmatpush2.xpose.msra.mxu0 0.0
  %7110 = vmatprep.subr.mxu0 0.0
  %7111 = vmatpush2.xpose.msra.mxu0 0.0
  %7112 = vmatprep.subr.mxu0 0.0
  %7113 = vmatpush2.xpose.msra.mxu0 0.0
  %7114 = vmatprep.subr.mxu0 0.0
  %7115 = vmatpush2.xpose.msra.mxu0 0.0
  %7116 = vmatprep.subr.mxu0 0.0
  %7117 = vmatpush2.xpose.msra.mxu0 0.0
  %7118 = vmatprep.subr.mxu0 0.0
  %7119 = vmatpush2.xpose.msra.mxu0 0.0
  %7120 = vmatprep.subr.mxu0 0.0
  %7121 = vmatpush2.xpose.msra.mxu0 0.0
  %7122 = vmatprep.subr.mxu0 0.0
  %7123 = vmatpush2.xpose.msra.mxu0 0.0
  %7124 = vmatprep.subr.mxu0 0.0
  %7125 = vmatpush2.xpose.msra.mxu0 0.0
  %7126 = vmatprep.subr.mxu0 0.0
  %7127 = vmatpush2.xpose.msra.mxu0 0.0
  %7128 = vmatprep.subr.mxu0 0.0
  %7129 = vmatpush2.xpose.msra.mxu0 0.0
  %7130 = vmatprep.subr.mxu0 0.0
  %7131 = vmatpush2.xpose.msra.mxu0 0.0
  %7132 = vmatprep.subr.mxu0 0.0
  %7133 = vmatpush2.xpose.msra.mxu0 0.0
  %7134 = vmatprep.subr.mxu0 0.0
  %7135 = vmatpush2.xpose.msra.mxu0 0.0
  %7136 = vmatprep.mubr.f32.mxu0 0.0
  %7137 = vmatmul.mubr.f32.gmra.mxu0 %v7028
  %v7138 = vpop.f32.mrf.mxu0
  %v7139 = vadd.f32 %v385, %v7138
  %v7140 = vpop.f32.mrf.mxu0
  %7141 = vmatprep.mubr.f32.mxu0 0.0
  %7142 = vmatmul.mubr.f32.gmra.mxu0 %v7031
  %v7143 = vpop.f32.mrf.mxu0
  %v7144 = vadd.f32 %v385, %v7143
  %v7145 = vpop.f32.mrf.mxu0
  %7146 = vmatprep.mubr.f32.mxu0 0.0
  %7147 = vmatmul.mubr.f32.gmra.mxu0 %v7034
  %v7148 = vpop.f32.mrf.mxu0
  %v7149 = vadd.f32 %v385, %v7148
  %v7150 = vpop.f32.mrf.mxu0
  %7151 = vmatprep.mubr.f32.mxu0 0.0
  %7152 = vmatmul.mubr.f32.gmra.mxu0 %v7037
  %v7153 = vpop.f32.mrf.mxu0
  %v7154 = vadd.f32 %v385, %v7153
  %v7155 = vpop.f32.mrf.mxu0
  %7156 = vmatprep.mubr.f32.mxu0 0.0
  %7157 = vmatmul.mubr.f32.gmra.mxu0 %v7040
  %v7158 = vpop.f32.mrf.mxu0
  %v7159 = vadd.f32 %v385, %v7158
  %v7160 = vpop.f32.mrf.mxu0
  %7161 = vmatprep.mubr.f32.mxu0 0.0
  %7162 = vmatmul.mubr.f32.gmra.mxu0 %v7043
  %v7163 = vpop.f32.mrf.mxu0
  %v7164 = vadd.f32 %v385, %v7163
  %v7165 = vpop.f32.mrf.mxu0
  %7166 = vmatprep.mubr.f32.mxu0 0.0
  %7167 = vmatmul.mubr.f32.gmra.mxu0 %v7046
  %v7168 = vpop.f32.mrf.mxu0
  %v7169 = vadd.f32 %v385, %v7168
  %v7170 = vpop.f32.mrf.mxu0
  %7171 = vmatprep.mubr.f32.mxu0 0.0
  %7172 = vmatmul.mubr.f32.gmra.mxu0 %v7049
  %v7173 = vpop.f32.mrf.mxu0
  %v7174 = vadd.f32 %v385, %v7173
  %v7175 = vpop.f32.mrf.mxu0
  %7176 = vmatprep.mubr.f32.mxu0 0.0
  %7177 = vmatmul.mubr.f32.gmra.mxu0 %v7052
  %v7178 = vpop.f32.mrf.mxu0
  %v7179 = vadd.f32 %v385, %v7178
  %v7180 = vpop.f32.mrf.mxu0
  %7181 = vdwg.mxu0
  %v7182 = vsel %vm1296, %v6957, -inf
  %7183 = vmax.xlane.f32.xlu0 %v7182
  %v7184 = vpop.xlane.xlu0 %7183
  %v7185 = vsel %vm1296, %v6962, -inf
  %7186 = vmax.xlane.f32.xlu0 %v7185
  %v7187 = vpop.xlane.xlu0 %7186
  %v7188 = vsel %vm1296, %v6967, -inf
  %7189 = vmax.xlane.f32.xlu0 %v7188
  %v7190 = vpop.xlane.xlu0 %7189
  %v7191 = vsel %vm1296, %v6972, -inf
  %7192 = vmax.xlane.f32.xlu0 %v7191
  %v7193 = vpop.xlane.xlu0 %7192
  %v7194 = vsel %vm1296, %v6977, -inf
  %7195 = vmax.xlane.f32.xlu0 %v7194
  %v7196 = vpop.xlane.xlu0 %7195
  %v7197 = vsel %vm1296, %v6982, -inf
  %7198 = vmax.xlane.f32.xlu0 %v7197
  %v7199 = vpop.xlane.xlu0 %7198
  %v7200 = vsel %vm1296, %v6987, -inf
  %7201 = vmax.xlane.f32.xlu0 %v7200
  %v7202 = vpop.xlane.xlu0 %7201
  %v7203 = vsel %vm1296, %v6992, -inf
  %7204 = vmax.xlane.f32.xlu0 %v7203
  %v7205 = vpop.xlane.xlu0 %7204
  %v7206 = vsel %vm1296, %v6997, -inf
  %7207 = vmax.xlane.f32.xlu0 %v7206
  %v7208 = vpop.xlane.xlu0 %7207
  %v7209 = vsel %vm1296, %v7139, -inf
  %7210 = vmax.xlane.f32.xlu0 %v7209
  %v7211 = vpop.xlane.xlu0 %7210
  %v7212 = vsel %vm1296, %v7144, -inf
  %7213 = vmax.xlane.f32.xlu0 %v7212
  %v7214 = vpop.xlane.xlu0 %7213
  %v7215 = vsel %vm1296, %v7149, -inf
  %7216 = vmax.xlane.f32.xlu0 %v7215
  %v7217 = vpop.xlane.xlu0 %7216
  %v7218 = vsel %vm1296, %v7154, -inf
  %7219 = vmax.xlane.f32.xlu0 %v7218
  %v7220 = vpop.xlane.xlu0 %7219
  %v7221 = vsel %vm1296, %v7159, -inf
  %7222 = vmax.xlane.f32.xlu0 %v7221
  %v7223 = vpop.xlane.xlu0 %7222
  %v7224 = vsel %vm1296, %v7164, -inf
  %7225 = vmax.xlane.f32.xlu0 %v7224
  %v7226 = vpop.xlane.xlu0 %7225
  %v7227 = vsel %vm1296, %v7169, -inf
  %7228 = vmax.xlane.f32.xlu0 %v7227
  %v7229 = vpop.xlane.xlu0 %7228
  %v7230 = vsel %vm1296, %v7174, -inf
  %7231 = vmax.xlane.f32.xlu0 %v7230
  %v7232 = vpop.xlane.xlu0 %7231
  %v7233 = vsel %vm1296, %v7179, -inf
  %7234 = vmax.xlane.f32.xlu0 %v7233
  %v7235 = vpop.xlane.xlu0 %7234
  %v7236 = vsub.f32 %v6957, %v7184
  %v7237 = vsub.f32 %v6962, %v7187
  %v7238 = vsub.f32 %v6967, %v7190
  %v7239 = vsub.f32 %v6972, %v7193
  %v7240 = vsub.f32 %v6977, %v7196
  %v7241 = vsub.f32 %v6982, %v7199
  %v7242 = vsub.f32 %v6987, %v7202
  %v7243 = vsub.f32 %v6992, %v7205
  %v7244 = vsub.f32 %v6997, %v7208
  %v7245 = vsub.f32 %v7139, %v7211
  %v7246 = vsub.f32 %v7144, %v7214
  %v7247 = vsub.f32 %v7149, %v7217
  %v7248 = vsub.f32 %v7154, %v7220
  %v7249 = vsub.f32 %v7159, %v7223
  %v7250 = vsub.f32 %v7164, %v7226
  %v7251 = vsub.f32 %v7169, %v7229
  %v7252 = vsub.f32 %v7174, %v7232
  %v7253 = vsub.f32 %v7179, %v7235
  %v7254 = vmul.f32 %v7236, 1.442695
  %v7255 = vpow.pop %v7254
  %v7256 = vmul.f32 %v7237, 1.442695
  %v7257 = vpow.pop %v7256
  %v7258 = vmul.f32 %v7238, 1.442695
  %v7259 = vpow.pop %v7258
  %v7260 = vmul.f32 %v7239, 1.442695
  %v7261 = vpow.pop %v7260
  %v7262 = vmul.f32 %v7240, 1.442695
  %v7263 = vpow.pop %v7262
  %v7264 = vmul.f32 %v7241, 1.442695
  %v7265 = vpow.pop %v7264
  %v7266 = vmul.f32 %v7242, 1.442695
  %v7267 = vpow.pop %v7266
  %v7268 = vmul.f32 %v7243, 1.442695
  %v7269 = vpow.pop %v7268
  %v7270 = vmul.f32 %v7244, 1.442695
  %v7271 = vpow.pop %v7270
  %v7272 = vmul.f32 %v7245, 1.442695
  %v7273 = vpow.pop %v7272
  %v7274 = vmul.f32 %v7246, 1.442695
  %v7275 = vpow.pop %v7274
  %v7276 = vmul.f32 %v7247, 1.442695
  %v7277 = vpow.pop %v7276
  %v7278 = vmul.f32 %v7248, 1.442695
  %v7279 = vpow.pop %v7278
  %v7280 = vmul.f32 %v7249, 1.442695
  %v7281 = vpow.pop %v7280
  %v7282 = vmul.f32 %v7250, 1.442695
  %v7283 = vpow.pop %v7282
  %v7284 = vmul.f32 %v7251, 1.442695
  %v7285 = vpow.pop %v7284
  %v7286 = vmul.f32 %v7252, 1.442695
  %v7287 = vpow.pop %v7286
  %v7288 = vmul.f32 %v7253, 1.442695
  %v7289 = vpow.pop %v7288
  %v7290 = vsel %vm1296, %v7255, 0.0
  %7291 = vadd.xlane.f32.xlu0 %v7290
  %v7292 = vpop.xlane.xlu0 %7291
  %v7293 = vsel %vm1296, %v7257, 0.0
  %7294 = vadd.xlane.f32.xlu0 %v7293
  %v7295 = vpop.xlane.xlu0 %7294
  %v7296 = vsel %vm1296, %v7259, 0.0
  %7297 = vadd.xlane.f32.xlu0 %v7296
  %v7298 = vpop.xlane.xlu0 %7297
  %v7299 = vsel %vm1296, %v7261, 0.0
  %7300 = vadd.xlane.f32.xlu0 %v7299
  %v7301 = vpop.xlane.xlu0 %7300
  %v7302 = vsel %vm1296, %v7263, 0.0
  %7303 = vadd.xlane.f32.xlu0 %v7302
  %v7304 = vpop.xlane.xlu0 %7303
  %v7305 = vsel %vm1296, %v7265, 0.0
  %7306 = vadd.xlane.f32.xlu0 %v7305
  %v7307 = vpop.xlane.xlu0 %7306
  %v7308 = vsel %vm1296, %v7267, 0.0
  %7309 = vadd.xlane.f32.xlu0 %v7308
  %v7310 = vpop.xlane.xlu0 %7309
  %v7311 = vsel %vm1296, %v7269, 0.0
  %7312 = vadd.xlane.f32.xlu0 %v7311
  %v7313 = vpop.xlane.xlu0 %7312
  %v7314 = vsel %vm1296, %v7271, 0.0
  %7315 = vadd.xlane.f32.xlu0 %v7314
  %v7316 = vpop.xlane.xlu0 %7315
  %v7317 = vsel %vm1296, %v7273, 0.0
  %7318 = vadd.xlane.f32.xlu0 %v7317
  %v7319 = vpop.xlane.xlu0 %7318
  %v7320 = vsel %vm1296, %v7275, 0.0
  %7321 = vadd.xlane.f32.xlu0 %v7320
  %v7322 = vpop.xlane.xlu0 %7321
  %v7323 = vsel %vm1296, %v7277, 0.0
  %7324 = vadd.xlane.f32.xlu0 %v7323
  %v7325 = vpop.xlane.xlu0 %7324
  %v7326 = vsel %vm1296, %v7279, 0.0
  %7327 = vadd.xlane.f32.xlu0 %v7326
  %v7328 = vpop.xlane.xlu0 %7327
  %v7329 = vsel %vm1296, %v7281, 0.0
  %7330 = vadd.xlane.f32.xlu0 %v7329
  %v7331 = vpop.xlane.xlu0 %7330
  %v7332 = vsel %vm1296, %v7283, 0.0
  %7333 = vadd.xlane.f32.xlu0 %v7332
  %v7334 = vpop.xlane.xlu0 %7333
  %v7335 = vsel %vm1296, %v7285, 0.0
  %7336 = vadd.xlane.f32.xlu0 %v7335
  %v7337 = vpop.xlane.xlu0 %7336
  %v7338 = vsel %vm1296, %v7287, 0.0
  %7339 = vadd.xlane.f32.xlu0 %v7338
  %v7340 = vpop.xlane.xlu0 %7339
  %v7341 = vsel %vm1296, %v7289, 0.0
  %7342 = vadd.xlane.f32.xlu0 %v7341
  %v7343 = vpop.xlane.xlu0 %7342
  %v7344 = vrcp.pop %v7292
  %v7345 = vrcp.pop %v7295
  %v7346 = vrcp.pop %v7298
  %v7347 = vrcp.pop %v7301
  %v7348 = vrcp.pop %v7304
  %v7349 = vrcp.pop %v7307
  %v7350 = vrcp.pop %v7310
  %v7351 = vrcp.pop %v7313
  %v7352 = vrcp.pop %v7316
  %v7353 = vrcp.pop %v7319
  %v7354 = vrcp.pop %v7322
  %v7355 = vrcp.pop %v7325
  %v7356 = vrcp.pop %v7328
  %v7357 = vrcp.pop %v7331
  %v7358 = vrcp.pop %v7334
  %v7359 = vrcp.pop %v7337
  %v7360 = vrcp.pop %v7340
  %v7361 = vrcp.pop %v7343
  %v7362 = vmul.f32 %v7255, %v7344
  %v7363 = vmul.f32 %v7257, %v7345
  %v7364 = vmul.f32 %v7259, %v7346
  %v7365 = vmul.f32 %v7261, %v7347
  %v7366 = vmul.f32 %v7263, %v7348
  %v7367 = vmul.f32 %v7265, %v7349
  %v7368 = vmul.f32 %v7267, %v7350
  %v7369 = vmul.f32 %v7269, %v7351
  %v7370 = vmul.f32 %v7271, %v7352
  %v7371 = vmul.f32 %v7273, %v7353
  %v7372 = vmul.f32 %v7275, %v7354
  %v7373 = vmul.f32 %v7277, %v7355
  %v7374 = vmul.f32 %v7279, %v7356
  %v7375 = vmul.f32 %v7281, %v7357
  %v7376 = vmul.f32 %v7283, %v7358
  %v7377 = vmul.f32 %v7285, %v7359
  %v7378 = vmul.f32 %v7287, %v7360
  %v7379 = vmul.f32 %v7289, %v7361
  %7380 = vrot.lane.b32.xlu0 %v6712, 64
  %v7381 = vpop.permute.xlu0 %7380
  %7382 = vrot.lane.b32.xlu0 %v6717, 64
  %v7383 = vpop.permute.xlu0 %7382
  %7384 = vrot.lane.b32.xlu0 %v6722, 64
  %v7385 = vpop.permute.xlu0 %7384
  %7386 = vrot.lane.b32.xlu0 %v6727, 64
  %v7387 = vpop.permute.xlu0 %7386
  %7388 = vrot.lane.b32.xlu0 %v6732, 64
  %v7389 = vpop.permute.xlu0 %7388
  %7390 = vrot.lane.b32.xlu0 %v6737, 64
  %v7391 = vpop.permute.xlu0 %7390
  %7392 = vrot.lane.b32.xlu0 %v6742, 64
  %v7393 = vpop.permute.xlu0 %7392
  %7394 = vrot.lane.b32.xlu0 %v6747, 64
  %v7395 = vpop.permute.xlu0 %7394
  %7396 = vrot.lane.b32.xlu0 %v6752, 64
  %v7397 = vpop.permute.xlu0 %7396
  %v7408 = vsel %vm1296, %v7362, 0
  %v7411 = vsel %vm1296, %v7363, 0
  %v7414 = vsel %vm1296, %v7364, 0
  %v7417 = vsel %vm1296, %v7365, 0
  %v7420 = vsel %vm1296, %v7366, 0
  %v7423 = vsel %vm1296, %v7367, 0
  %v7426 = vsel %vm1296, %v7368, 0
  %v7429 = vsel %vm1296, %v7369, 0
  %v7432 = vsel %vm1296, %v7370, 0
  %7434 = vmatprep.subr.mxu0 0.0
  %7435 = vmatpush1.msra.mxu0 0.0
  %7436 = vmatprep.subr.mxu0 0.0
  %7437 = vmatpush1.msra.mxu0 0.0
  %7438 = vmatprep.subr.mxu0 0.0
  %7439 = vmatpush1.msra.mxu0 0.0
  %7440 = vmatprep.subr.mxu0 0.0
  %7441 = vmatpush1.msra.mxu0 0.0
  %7442 = vmatprep.subr.mxu0 0.0
  %7443 = vmatpush1.msra.mxu0 0.0
  %7444 = vmatprep.subr.mxu0 0.0
  %7445 = vmatpush1.msra.mxu0 0.0
  %7446 = vmatprep.subr.mxu0 0.0
  %7447 = vmatpush1.msra.mxu0 0.0
  %7448 = vmatprep.subr.mxu0 0.0
  %7449 = vmatpush1.msra.mxu0 %v7397
  %7450 = vmatprep.subr.mxu0 0.0
  %7451 = vmatpush1.msra.mxu0 %v7395
  %7452 = vmatprep.subr.mxu0 0.0
  %7453 = vmatpush1.msra.mxu0 %v7393
  %7454 = vmatprep.subr.mxu0 0.0
  %7455 = vmatpush1.msra.mxu0 %v7391
  %7456 = vmatprep.subr.mxu0 0.0
  %7457 = vmatpush1.msra.mxu0 %v7389
  %7458 = vmatprep.subr.mxu0 0.0
  %7459 = vmatpush1.msra.mxu0 %v7387
  %7460 = vmatprep.subr.mxu0 0.0
  %7461 = vmatpush1.msra.mxu0 %v7385
  %7462 = vmatprep.subr.mxu0 0.0
  %7463 = vmatpush1.msra.mxu0 %v7383
  %7464 = vmatprep.subr.mxu0 0.0
  %7465 = vmatpush1.msra.mxu0 %v7381
  %7466 = vmatprep.subr.mxu0 0.0
  %7467 = vmatpush2.msra.mxu0 0.0
  %7468 = vmatprep.subr.mxu0 0.0
  %7469 = vmatpush2.msra.mxu0 0.0
  %7470 = vmatprep.subr.mxu0 0.0
  %7471 = vmatpush2.msra.mxu0 0.0
  %7472 = vmatprep.subr.mxu0 0.0
  %7473 = vmatpush2.msra.mxu0 0.0
  %7474 = vmatprep.subr.mxu0 0.0
  %7475 = vmatpush2.msra.mxu0 0.0
  %7476 = vmatprep.subr.mxu0 0.0
  %7477 = vmatpush2.msra.mxu0 0.0
  %7478 = vmatprep.subr.mxu0 0.0
  %7479 = vmatpush2.msra.mxu0 0.0
  %7480 = vmatprep.subr.mxu0 0.0
  %7481 = vmatpush2.msra.mxu0 0.0
  %7482 = vmatprep.subr.mxu0 0.0
  %7483 = vmatpush2.msra.mxu0 0.0
  %7484 = vmatprep.subr.mxu0 0.0
  %7485 = vmatpush2.msra.mxu0 0.0
  %7486 = vmatprep.subr.mxu0 0.0
  %7487 = vmatpush2.msra.mxu0 0.0
  %7488 = vmatprep.subr.mxu0 0.0
  %7489 = vmatpush2.msra.mxu0 0.0
  %7490 = vmatprep.subr.mxu0 0.0
  %7491 = vmatpush2.msra.mxu0 0.0
  %7492 = vmatprep.subr.mxu0 0.0
  %7493 = vmatpush2.msra.mxu0 0.0
  %7494 = vmatprep.subr.mxu0 0.0
  %7495 = vmatpush2.msra.mxu0 0.0
  %7496 = vmatprep.subr.mxu0 0.0
  %7497 = vmatpush2.msra.mxu0 0.0
  %7498 = vmatprep.mubr.f32.mxu0 0.0
  %7499 = vmatmul.mubr.f32.gmra.mxu0 %v7408
  %v7500 = vpop.f32.mrf.mxu0
  %v7501 = vadd.f32 0.0, %v7500
  %v7502 = vpop.f32.mrf.mxu0
  %7503 = vmatprep.mubr.f32.mxu0 0.0
  %7504 = vmatmul.mubr.f32.gmra.mxu0 %v7411
  %v7505 = vpop.f32.mrf.mxu0
  %v7506 = vadd.f32 0.0, %v7505
  %v7507 = vpop.f32.mrf.mxu0
  %7508 = vmatprep.mubr.f32.mxu0 0.0
  %7509 = vmatmul.mubr.f32.gmra.mxu0 %v7414
  %v7510 = vpop.f32.mrf.mxu0
  %v7511 = vadd.f32 0.0, %v7510
  %v7512 = vpop.f32.mrf.mxu0
  %7513 = vmatprep.mubr.f32.mxu0 0.0
  %7514 = vmatmul.mubr.f32.gmra.mxu0 %v7417
  %v7515 = vpop.f32.mrf.mxu0
  %v7516 = vadd.f32 0.0, %v7515
  %v7517 = vpop.f32.mrf.mxu0
  %7518 = vmatprep.mubr.f32.mxu0 0.0
  %7519 = vmatmul.mubr.f32.gmra.mxu0 %v7420
  %v7520 = vpop.f32.mrf.mxu0
  %v7521 = vadd.f32 0.0, %v7520
  %v7522 = vpop.f32.mrf.mxu0
  %7523 = vmatprep.mubr.f32.mxu0 0.0
  %7524 = vmatmul.mubr.f32.gmra.mxu0 %v7423
  %v7525 = vpop.f32.mrf.mxu0
  %v7526 = vadd.f32 0.0, %v7525
  %v7527 = vpop.f32.mrf.mxu0
  %7528 = vmatprep.mubr.f32.mxu0 0.0
  %7529 = vmatmul.mubr.f32.gmra.mxu0 %v7426
  %v7530 = vpop.f32.mrf.mxu0
  %v7531 = vadd.f32 0.0, %v7530
  %v7532 = vpop.f32.mrf.mxu0
  %7533 = vmatprep.mubr.f32.mxu0 0.0
  %7534 = vmatmul.mubr.f32.gmra.mxu0 %v7429
  %v7535 = vpop.f32.mrf.mxu0
  %v7536 = vadd.f32 0.0, %v7535
  %v7537 = vpop.f32.mrf.mxu0
  %7538 = vmatprep.mubr.f32.mxu0 0.0
  %7539 = vmatmul.mubr.f32.gmra.mxu0 %v7432
  %v7540 = vpop.f32.mrf.mxu0
  %v7541 = vadd.f32 0.0, %v7540
  %v7542 = vpop.f32.mrf.mxu0
  %7543 = vdwg.mxu0
  %7544 = vrot.lane.b32.xlu0 %v6757, 64
  %v7545 = vpop.permute.xlu0 %7544
  %7546 = vrot.lane.b32.xlu0 %v6762, 64
  %v7547 = vpop.permute.xlu0 %7546
  %7548 = vrot.lane.b32.xlu0 %v6767, 64
  %v7549 = vpop.permute.xlu0 %7548
  %7550 = vrot.lane.b32.xlu0 %v6772, 64
  %v7551 = vpop.permute.xlu0 %7550
  %7552 = vrot.lane.b32.xlu0 %v6777, 64
  %v7553 = vpop.permute.xlu0 %7552
  %7554 = vrot.lane.b32.xlu0 %v6782, 64
  %v7555 = vpop.permute.xlu0 %7554
  %7556 = vrot.lane.b32.xlu0 %v6787, 64
  %v7557 = vpop.permute.xlu0 %7556
  %7558 = vrot.lane.b32.xlu0 %v6792, 64
  %v7559 = vpop.permute.xlu0 %7558
  %7560 = vrot.lane.b32.xlu0 %v6797, 64
  %v7561 = vpop.permute.xlu0 %7560
  %v7572 = vsel %vm1296, %v7371, 0
  %v7575 = vsel %vm1296, %v7372, 0
  %v7578 = vsel %vm1296, %v7373, 0
  %v7581 = vsel %vm1296, %v7374, 0
  %v7584 = vsel %vm1296, %v7375, 0
  %v7587 = vsel %vm1296, %v7376, 0
  %v7590 = vsel %vm1296, %v7377, 0
  %v7593 = vsel %vm1296, %v7378, 0
  %v7596 = vsel %vm1296, %v7379, 0
  %7598 = vmatprep.subr.mxu0 0.0
  %7599 = vmatpush1.msra.mxu0 0.0
  %7600 = vmatprep.subr.mxu0 0.0
  %7601 = vmatpush1.msra.mxu0 0.0
  %7602 = vmatprep.subr.mxu0 0.0
  %7603 = vmatpush1.msra.mxu0 0.0
  %7604 = vmatprep.subr.mxu0 0.0
  %7605 = vmatpush1.msra.mxu0 0.0
  %7606 = vmatprep.subr.mxu0 0.0
  %7607 = vmatpush1.msra.mxu0 0.0
  %7608 = vmatprep.subr.mxu0 0.0
  %7609 = vmatpush1.msra.mxu0 0.0
  %7610 = vmatprep.subr.mxu0 0.0
  %7611 = vmatpush1.msra.mxu0 0.0
  %7612 = vmatprep.subr.mxu0 0.0
  %7613 = vmatpush1.msra.mxu0 %v7561
  %7614 = vmatprep.subr.mxu0 0.0
  %7615 = vmatpush1.msra.mxu0 %v7559
  %7616 = vmatprep.subr.mxu0 0.0
  %7617 = vmatpush1.msra.mxu0 %v7557
  %7618 = vmatprep.subr.mxu0 0.0
  %7619 = vmatpush1.msra.mxu0 %v7555
  %7620 = vmatprep.subr.mxu0 0.0
  %7621 = vmatpush1.msra.mxu0 %v7553
  %7622 = vmatprep.subr.mxu0 0.0
  %7623 = vmatpush1.msra.mxu0 %v7551
  %7624 = vmatprep.subr.mxu0 0.0
  %7625 = vmatpush1.msra.mxu0 %v7549
  %7626 = vmatprep.subr.mxu0 0.0
  %7627 = vmatpush1.msra.mxu0 %v7547
  %7628 = vmatprep.subr.mxu0 0.0
  %7629 = vmatpush1.msra.mxu0 %v7545
  %7630 = vmatprep.subr.mxu0 0.0
  %7631 = vmatpush2.msra.mxu0 0.0
  %7632 = vmatprep.subr.mxu0 0.0
  %7633 = vmatpush2.msra.mxu0 0.0
  %7634 = vmatprep.subr.mxu0 0.0
  %7635 = vmatpush2.msra.mxu0 0.0
  %7636 = vmatprep.subr.mxu0 0.0
  %7637 = vmatpush2.msra.mxu0 0.0
  %7638 = vmatprep.subr.mxu0 0.0
  %7639 = vmatpush2.msra.mxu0 0.0
  %7640 = vmatprep.subr.mxu0 0.0
  %7641 = vmatpush2.msra.mxu0 0.0
  %7642 = vmatprep.subr.mxu0 0.0
  %7643 = vmatpush2.msra.mxu0 0.0
  %7644 = vmatprep.subr.mxu0 0.0
  %7645 = vmatpush2.msra.mxu0 0.0
  %7646 = vmatprep.subr.mxu0 0.0
  %7647 = vmatpush2.msra.mxu0 0.0
  %7648 = vmatprep.subr.mxu0 0.0
  %7649 = vmatpush2.msra.mxu0 0.0
  %7650 = vmatprep.subr.mxu0 0.0
  %7651 = vmatpush2.msra.mxu0 0.0
  %7652 = vmatprep.subr.mxu0 0.0
  %7653 = vmatpush2.msra.mxu0 0.0
  %7654 = vmatprep.subr.mxu0 0.0
  %7655 = vmatpush2.msra.mxu0 0.0
  %7656 = vmatprep.subr.mxu0 0.0
  %7657 = vmatpush2.msra.mxu0 0.0
  %7658 = vmatprep.subr.mxu0 0.0
  %7659 = vmatpush2.msra.mxu0 0.0
  %7660 = vmatprep.subr.mxu0 0.0
  %7661 = vmatpush2.msra.mxu0 0.0
  %7662 = vmatprep.mubr.f32.mxu0 0.0
  %7663 = vmatmul.mubr.f32.gmra.mxu0 %v7572
  %v7664 = vpop.f32.mrf.mxu0
  %v7665 = vadd.f32 0.0, %v7664
  %v7666 = vpop.f32.mrf.mxu0
  %7667 = vmatprep.mubr.f32.mxu0 0.0
  %7668 = vmatmul.mubr.f32.gmra.mxu0 %v7575
  %v7669 = vpop.f32.mrf.mxu0
  %v7670 = vadd.f32 0.0, %v7669
  %v7671 = vpop.f32.mrf.mxu0
  %7672 = vmatprep.mubr.f32.mxu0 0.0
  %7673 = vmatmul.mubr.f32.gmra.mxu0 %v7578
  %v7674 = vpop.f32.mrf.mxu0
  %v7675 = vadd.f32 0.0, %v7674
  %v7676 = vpop.f32.mrf.mxu0
  %7677 = vmatprep.mubr.f32.mxu0 0.0
  %7678 = vmatmul.mubr.f32.gmra.mxu0 %v7581
  %v7679 = vpop.f32.mrf.mxu0
  %v7680 = vadd.f32 0.0, %v7679
  %v7681 = vpop.f32.mrf.mxu0
  %7682 = vmatprep.mubr.f32.mxu0 0.0
  %7683 = vmatmul.mubr.f32.gmra.mxu0 %v7584
  %v7684 = vpop.f32.mrf.mxu0
  %v7685 = vadd.f32 0.0, %v7684
  %v7686 = vpop.f32.mrf.mxu0
  %7687 = vmatprep.mubr.f32.mxu0 0.0
  %7688 = vmatmul.mubr.f32.gmra.mxu0 %v7587
  %v7689 = vpop.f32.mrf.mxu0
  %v7690 = vadd.f32 0.0, %v7689
  %v7691 = vpop.f32.mrf.mxu0
  %7692 = vmatprep.mubr.f32.mxu0 0.0
  %7693 = vmatmul.mubr.f32.gmra.mxu0 %v7590
  %v7694 = vpop.f32.mrf.mxu0
  %v7695 = vadd.f32 0.0, %v7694
  %v7696 = vpop.f32.mrf.mxu0
  %7697 = vmatprep.mubr.f32.mxu0 0.0
  %7698 = vmatmul.mubr.f32.gmra.mxu0 %v7593
  %v7699 = vpop.f32.mrf.mxu0
  %v7700 = vadd.f32 0.0, %v7699
  %v7701 = vpop.f32.mrf.mxu0
  %7702 = vmatprep.mubr.f32.mxu0 0.0
  %7703 = vmatmul.mubr.f32.gmra.mxu0 %v7596
  %v7704 = vpop.f32.mrf.mxu0
  %v7705 = vadd.f32 0.0, %v7704
  %v7706 = vpop.f32.mrf.mxu0
  %7707 = vdwg.mxu0
  %7708 = vrot.lane.b32.xlu0 %v6800, 120
  %v7709 = vpop.permute.xlu0 %7708
  %7710 = vrot.lane.b32.xlu0 %v6801, 120
  %v7711 = vpop.permute.xlu0 %7710
  %7712 = vrot.lane.b32.xlu0 %v6802, 120
  %v7713 = vpop.permute.xlu0 %7712
  %7714 = vrot.lane.b32.xlu0 %v6803, 120
  %v7715 = vpop.permute.xlu0 %7714
  %7716 = vrot.lane.b32.xlu0 %v6804, 120
  %v7717 = vpop.permute.xlu0 %7716
  %7718 = vrot.lane.b32.xlu0 %v6805, 120
  %v7719 = vpop.permute.xlu0 %7718
  %7720 = vrot.lane.b32.xlu0 %v6806, 120
  %v7721 = vpop.permute.xlu0 %7720
  %7722 = vrot.lane.b32.xlu0 %v6807, 120
  %v7723 = vpop.permute.xlu0 %7722
  %7724 = vrot.lane.b32.xlu0 %v6808, 120
  %v7725 = vpop.permute.xlu0 %7724
  %7726 = vrot.lane.b32.xlu0 %v6712, 88
  %v7727 = vpop.permute.xlu0 %7726
  %7728 = vrot.lane.b32.xlu0 %v6717, 88
  %v7729 = vpop.permute.xlu0 %7728
  %7730 = vrot.lane.b32.xlu0 %v6722, 88
  %v7731 = vpop.permute.xlu0 %7730
  %7732 = vrot.lane.b32.xlu0 %v6727, 88
  %v7733 = vpop.permute.xlu0 %7732
  %7734 = vrot.lane.b32.xlu0 %v6732, 88
  %v7735 = vpop.permute.xlu0 %7734
  %7736 = vrot.lane.b32.xlu0 %v6737, 88
  %v7737 = vpop.permute.xlu0 %7736
  %7738 = vrot.lane.b32.xlu0 %v6742, 88
  %v7739 = vpop.permute.xlu0 %7738
  %7740 = vrot.lane.b32.xlu0 %v6747, 88
  %v7741 = vpop.permute.xlu0 %7740
  %7742 = vrot.lane.b32.xlu0 %v6752, 88
  %v7743 = vpop.permute.xlu0 %7742
  %v7744 = vsel %vm958, %v7709, 0
  %v7746 = vsel %vm958, %v7711, 0
  %v7748 = vsel %vm958, %v7713, 0
  %v7750 = vsel %vm958, %v7715, 0
  %v7752 = vsel %vm958, %v7717, 0
  %v7754 = vsel %vm958, %v7719, 0
  %v7756 = vsel %vm958, %v7721, 0
  %v7758 = vsel %vm958, %v7723, 0
  %v7760 = vsel %vm958, %v7725, 0
  %v7762 = vsel %vm958, %v7727, 0
  %v7764 = vsel %vm958, %v7729, 0
  %v7766 = vsel %vm958, %v7731, 0
  %v7768 = vsel %vm958, %v7733, 0
  %v7770 = vsel %vm958, %v7735, 0
  %v7772 = vsel %vm958, %v7737, 0
  %v7774 = vsel %vm958, %v7739, 0
  %v7776 = vsel %vm958, %v7741, 0
  %v7778 = vsel %vm958, %v7743, 0
  %7780 = vmatprep.subr.mxu0 0.0
  %7781 = vmatpush1.xpose.msra.mxu0 0.0
  %7782 = vmatprep.subr.mxu0 0.0
  %7783 = vmatpush1.xpose.msra.mxu0 0.0
  %7784 = vmatprep.subr.mxu0 0.0
  %7785 = vmatpush1.xpose.msra.mxu0 0.0
  %7786 = vmatprep.subr.mxu0 0.0
  %7787 = vmatpush1.xpose.msra.mxu0 0.0
  %7788 = vmatprep.subr.mxu0 0.0
  %7789 = vmatpush1.xpose.msra.mxu0 0.0
  %7790 = vmatprep.subr.mxu0 0.0
  %7791 = vmatpush1.xpose.msra.mxu0 0.0
  %7792 = vmatprep.subr.mxu0 0.0
  %7793 = vmatpush1.xpose.msra.mxu0 0.0
  %7794 = vmatprep.subr.mxu0 0.0
  %7795 = vmatpush1.xpose.msra.mxu0 %v7778
  %7796 = vmatprep.subr.mxu0 0.0
  %7797 = vmatpush1.xpose.msra.mxu0 %v7776
  %7798 = vmatprep.subr.mxu0 0.0
  %7799 = vmatpush1.xpose.msra.mxu0 %v7774
  %7800 = vmatprep.subr.mxu0 0.0
  %7801 = vmatpush1.xpose.msra.mxu0 %v7772
  %7802 = vmatprep.subr.mxu0 0.0
  %7803 = vmatpush1.xpose.msra.mxu0 %v7770
  %7804 = vmatprep.subr.mxu0 0.0
  %7805 = vmatpush1.xpose.msra.mxu0 %v7768
  %7806 = vmatprep.subr.mxu0 0.0
  %7807 = vmatpush1.xpose.msra.mxu0 %v7766
  %7808 = vmatprep.subr.mxu0 0.0
  %7809 = vmatpush1.xpose.msra.mxu0 %v7764
  %7810 = vmatprep.subr.mxu0 0.0
  %7811 = vmatpush1.xpose.msra.mxu0 %v7762
  %7812 = vmatprep.subr.mxu0 0.0
  %7813 = vmatpush2.xpose.msra.mxu0 0.0
  %7814 = vmatprep.subr.mxu0 0.0
  %7815 = vmatpush2.xpose.msra.mxu0 0.0
  %7816 = vmatprep.subr.mxu0 0.0
  %7817 = vmatpush2.xpose.msra.mxu0 0.0
  %7818 = vmatprep.subr.mxu0 0.0
  %7819 = vmatpush2.xpose.msra.mxu0 0.0
  %7820 = vmatprep.subr.mxu0 0.0
  %7821 = vmatpush2.xpose.msra.mxu0 0.0
  %7822 = vmatprep.subr.mxu0 0.0
  %7823 = vmatpush2.xpose.msra.mxu0 0.0
  %7824 = vmatprep.subr.mxu0 0.0
  %7825 = vmatpush2.xpose.msra.mxu0 0.0
  %7826 = vmatprep.subr.mxu0 0.0
  %7827 = vmatpush2.xpose.msra.mxu0 0.0
  %7828 = vmatprep.subr.mxu0 0.0
  %7829 = vmatpush2.xpose.msra.mxu0 0.0
  %7830 = vmatprep.subr.mxu0 0.0
  %7831 = vmatpush2.xpose.msra.mxu0 0.0
  %7832 = vmatprep.subr.mxu0 0.0
  %7833 = vmatpush2.xpose.msra.mxu0 0.0
  %7834 = vmatprep.subr.mxu0 0.0
  %7835 = vmatpush2.xpose.msra.mxu0 0.0
  %7836 = vmatprep.subr.mxu0 0.0
  %7837 = vmatpush2.xpose.msra.mxu0 0.0
  %7838 = vmatprep.subr.mxu0 0.0
  %7839 = vmatpush2.xpose.msra.mxu0 0.0
  %7840 = vmatprep.subr.mxu0 0.0
  %7841 = vmatpush2.xpose.msra.mxu0 0.0
  %7842 = vmatprep.subr.mxu0 0.0
  %7843 = vmatpush2.xpose.msra.mxu0 0.0
  %7844 = vmatprep.mubr.f32.mxu0 0.0
  %7845 = vmatmul.mubr.f32.gmra.mxu0 %v7744
  %v7846 = vpop.f32.mrf.mxu0
  %v7847 = vadd.f32 %v385, %v7846
  %v7848 = vpop.f32.mrf.mxu0
  %7849 = vmatprep.mubr.f32.mxu0 0.0
  %7850 = vmatmul.mubr.f32.gmra.mxu0 %v7746
  %v7851 = vpop.f32.mrf.mxu0
  %v7852 = vadd.f32 %v385, %v7851
  %v7853 = vpop.f32.mrf.mxu0
  %7854 = vmatprep.mubr.f32.mxu0 0.0
  %7855 = vmatmul.mubr.f32.gmra.mxu0 %v7748
  %v7856 = vpop.f32.mrf.mxu0
  %v7857 = vadd.f32 %v385, %v7856
  %v7858 = vpop.f32.mrf.mxu0
  %7859 = vmatprep.mubr.f32.mxu0 0.0
  %7860 = vmatmul.mubr.f32.gmra.mxu0 %v7750
  %v7861 = vpop.f32.mrf.mxu0
  %v7862 = vadd.f32 %v385, %v7861
  %v7863 = vpop.f32.mrf.mxu0
  %7864 = vmatprep.mubr.f32.mxu0 0.0
  %7865 = vmatmul.mubr.f32.gmra.mxu0 %v7752
  %v7866 = vpop.f32.mrf.mxu0
  %v7867 = vadd.f32 %v385, %v7866
  %v7868 = vpop.f32.mrf.mxu0
  %7869 = vmatprep.mubr.f32.mxu0 0.0
  %7870 = vmatmul.mubr.f32.gmra.mxu0 %v7754
  %v7871 = vpop.f32.mrf.mxu0
  %v7872 = vadd.f32 %v385, %v7871
  %v7873 = vpop.f32.mrf.mxu0
  %7874 = vmatprep.mubr.f32.mxu0 0.0
  %7875 = vmatmul.mubr.f32.gmra.mxu0 %v7756
  %v7876 = vpop.f32.mrf.mxu0
  %v7877 = vadd.f32 %v385, %v7876
  %v7878 = vpop.f32.mrf.mxu0
  %7879 = vmatprep.mubr.f32.mxu0 0.0
  %7880 = vmatmul.mubr.f32.gmra.mxu0 %v7758
  %v7881 = vpop.f32.mrf.mxu0
  %v7882 = vadd.f32 %v385, %v7881
  %v7883 = vpop.f32.mrf.mxu0
  %7884 = vmatprep.mubr.f32.mxu0 0.0
  %7885 = vmatmul.mubr.f32.gmra.mxu0 %v7760
  %v7886 = vpop.f32.mrf.mxu0
  %v7887 = vadd.f32 %v385, %v7886
  %v7888 = vpop.f32.mrf.mxu0
  %7889 = vdwg.mxu0
  %7890 = vrot.lane.b32.xlu0 %v6809, 120
  %v7891 = vpop.permute.xlu0 %7890
  %7892 = vrot.lane.b32.xlu0 %v6810, 120
  %v7893 = vpop.permute.xlu0 %7892
  %7894 = vrot.lane.b32.xlu0 %v6811, 120
  %v7895 = vpop.permute.xlu0 %7894
  %7896 = vrot.lane.b32.xlu0 %v6812, 120
  %v7897 = vpop.permute.xlu0 %7896
  %7898 = vrot.lane.b32.xlu0 %v6813, 120
  %v7899 = vpop.permute.xlu0 %7898
  %7900 = vrot.lane.b32.xlu0 %v6814, 120
  %v7901 = vpop.permute.xlu0 %7900
  %7902 = vrot.lane.b32.xlu0 %v6815, 120
  %v7903 = vpop.permute.xlu0 %7902
  %7904 = vrot.lane.b32.xlu0 %v6816, 120
  %v7905 = vpop.permute.xlu0 %7904
  %7906 = vrot.lane.b32.xlu0 %v6817, 120
  %v7907 = vpop.permute.xlu0 %7906
  %7908 = vrot.lane.b32.xlu0 %v6757, 88
  %v7909 = vpop.permute.xlu0 %7908
  %7910 = vrot.lane.b32.xlu0 %v6762, 88
  %v7911 = vpop.permute.xlu0 %7910
  %7912 = vrot.lane.b32.xlu0 %v6767, 88
  %v7913 = vpop.permute.xlu0 %7912
  %7914 = vrot.lane.b32.xlu0 %v6772, 88
  %v7915 = vpop.permute.xlu0 %7914
  %7916 = vrot.lane.b32.xlu0 %v6777, 88
  %v7917 = vpop.permute.xlu0 %7916
  %7918 = vrot.lane.b32.xlu0 %v6782, 88
  %v7919 = vpop.permute.xlu0 %7918
  %7920 = vrot.lane.b32.xlu0 %v6787, 88
  %v7921 = vpop.permute.xlu0 %7920
  %7922 = vrot.lane.b32.xlu0 %v6792, 88
  %v7923 = vpop.permute.xlu0 %7922
  %7924 = vrot.lane.b32.xlu0 %v6797, 88
  %v7925 = vpop.permute.xlu0 %7924
  %v7926 = vsel %vm958, %v7891, 0
  %v7928 = vsel %vm958, %v7893, 0
  %v7930 = vsel %vm958, %v7895, 0
  %v7932 = vsel %vm958, %v7897, 0
  %v7934 = vsel %vm958, %v7899, 0
  %v7936 = vsel %vm958, %v7901, 0
  %v7938 = vsel %vm958, %v7903, 0
  %v7940 = vsel %vm958, %v7905, 0
  %v7942 = vsel %vm958, %v7907, 0
  %v7944 = vsel %vm958, %v7909, 0
  %v7946 = vsel %vm958, %v7911, 0
  %v7948 = vsel %vm958, %v7913, 0
  %v7950 = vsel %vm958, %v7915, 0
  %v7952 = vsel %vm958, %v7917, 0
  %v7954 = vsel %vm958, %v7919, 0
  %v7956 = vsel %vm958, %v7921, 0
  %v7958 = vsel %vm958, %v7923, 0
  %v7960 = vsel %vm958, %v7925, 0
  %7962 = vmatprep.subr.mxu0 0.0
  %7963 = vmatpush1.xpose.msra.mxu0 0.0
  %7964 = vmatprep.subr.mxu0 0.0
  %7965 = vmatpush1.xpose.msra.mxu0 0.0
  %7966 = vmatprep.subr.mxu0 0.0
  %7967 = vmatpush1.xpose.msra.mxu0 0.0
  %7968 = vmatprep.subr.mxu0 0.0
  %7969 = vmatpush1.xpose.msra.mxu0 0.0
  %7970 = vmatprep.subr.mxu0 0.0
  %7971 = vmatpush1.xpose.msra.mxu0 0.0
  %7972 = vmatprep.subr.mxu0 0.0
  %7973 = vmatpush1.xpose.msra.mxu0 0.0
  %7974 = vmatprep.subr.mxu0 0.0
  %7975 = vmatpush1.xpose.msra.mxu0 0.0
  %7976 = vmatprep.subr.mxu0 0.0
  %7977 = vmatpush1.xpose.msra.mxu0 %v7960
  %7978 = vmatprep.subr.mxu0 0.0
  %7979 = vmatpush1.xpose.msra.mxu0 %v7958
  %7980 = vmatprep.subr.mxu0 0.0
  %7981 = vmatpush1.xpose.msra.mxu0 %v7956
  %7982 = vmatprep.subr.mxu0 0.0
  %7983 = vmatpush1.xpose.msra.mxu0 %v7954
  %7984 = vmatprep.subr.mxu0 0.0
  %7985 = vmatpush1.xpose.msra.mxu0 %v7952
  %7986 = vmatprep.subr.mxu0 0.0
  %7987 = vmatpush1.xpose.msra.mxu0 %v7950
  %7988 = vmatprep.subr.mxu0 0.0
  %7989 = vmatpush1.xpose.msra.mxu0 %v7948
  %7990 = vmatprep.subr.mxu0 0.0
  %7991 = vmatpush1.xpose.msra.mxu0 %v7946
  %7992 = vmatprep.subr.mxu0 0.0
  %7993 = vmatpush1.xpose.msra.mxu0 %v7944
  %7994 = vmatprep.subr.mxu0 0.0
  %7995 = vmatpush2.xpose.msra.mxu0 0.0
  %7996 = vmatprep.subr.mxu0 0.0
  %7997 = vmatpush2.xpose.msra.mxu0 0.0
  %7998 = vmatprep.subr.mxu0 0.0
  %7999 = vmatpush2.xpose.msra.mxu0 0.0
  %8000 = vmatprep.subr.mxu0 0.0
  %8001 = vmatpush2.xpose.msra.mxu0 0.0
  %8002 = vmatprep.subr.mxu0 0.0
  %8003 = vmatpush2.xpose.msra.mxu0 0.0
  %8004 = vmatprep.subr.mxu0 0.0
  %8005 = vmatpush2.xpose.msra.mxu0 0.0
  %8006 = vmatprep.subr.mxu0 0.0
  %8007 = vmatpush2.xpose.msra.mxu0 0.0
  %8008 = vmatprep.subr.mxu0 0.0
  %8009 = vmatpush2.xpose.msra.mxu0 0.0
  %8010 = vmatprep.subr.mxu0 0.0
  %8011 = vmatpush2.xpose.msra.mxu0 0.0
  %8012 = vmatprep.subr.mxu0 0.0
  %8013 = vmatpush2.xpose.msra.mxu0 0.0
  %8014 = vmatprep.subr.mxu0 0.0
  %8015 = vmatpush2.xpose.msra.mxu0 0.0
  %8016 = vmatprep.subr.mxu0 0.0
  %8017 = vmatpush2.xpose.msra.mxu0 0.0
  %8018 = vmatprep.subr.mxu0 0.0
  %8019 = vmatpush2.xpose.msra.mxu0 0.0
  %8020 = vmatprep.subr.mxu0 0.0
  %8021 = vmatpush2.xpose.msra.mxu0 0.0
  %8022 = vmatprep.subr.mxu0 0.0
  %8023 = vmatpush2.xpose.msra.mxu0 0.0
  %8024 = vmatprep.subr.mxu0 0.0
  %8025 = vmatpush2.xpose.msra.mxu0 0.0
  %8026 = vmatprep.mubr.f32.mxu0 0.0
  %8027 = vmatmul.mubr.f32.gmra.mxu0 %v7926
  %v8028 = vpop.f32.mrf.mxu0
  %v8029 = vadd.f32 %v385, %v8028
  %v8030 = vpop.f32.mrf.mxu0
  %8031 = vmatprep.mubr.f32.mxu0 0.0
  %8032 = vmatmul.mubr.f32.gmra.mxu0 %v7928
  %v8033 = vpop.f32.mrf.mxu0
  %v8034 = vadd.f32 %v385, %v8033
  %v8035 = vpop.f32.mrf.mxu0
  %8036 = vmatprep.mubr.f32.mxu0 0.0
  %8037 = vmatmul.mubr.f32.gmra.mxu0 %v7930
  %v8038 = vpop.f32.mrf.mxu0
  %v8039 = vadd.f32 %v385, %v8038
  %v8040 = vpop.f32.mrf.mxu0
  %8041 = vmatprep.mubr.f32.mxu0 0.0
  %8042 = vmatmul.mubr.f32.gmra.mxu0 %v7932
  %v8043 = vpop.f32.mrf.mxu0
  %v8044 = vadd.f32 %v385, %v8043
  %v8045 = vpop.f32.mrf.mxu0
  %8046 = vmatprep.mubr.f32.mxu0 0.0
  %8047 = vmatmul.mubr.f32.gmra.mxu0 %v7934
  %v8048 = vpop.f32.mrf.mxu0
  %v8049 = vadd.f32 %v385, %v8048
  %v8050 = vpop.f32.mrf.mxu0
  %8051 = vmatprep.mubr.f32.mxu0 0.0
  %8052 = vmatmul.mubr.f32.gmra.mxu0 %v7936
  %v8053 = vpop.f32.mrf.mxu0
  %v8054 = vadd.f32 %v385, %v8053
  %v8055 = vpop.f32.mrf.mxu0
  %8056 = vmatprep.mubr.f32.mxu0 0.0
  %8057 = vmatmul.mubr.f32.gmra.mxu0 %v7938
  %v8058 = vpop.f32.mrf.mxu0
  %v8059 = vadd.f32 %v385, %v8058
  %v8060 = vpop.f32.mrf.mxu0
  %8061 = vmatprep.mubr.f32.mxu0 0.0
  %8062 = vmatmul.mubr.f32.gmra.mxu0 %v7940
  %v8063 = vpop.f32.mrf.mxu0
  %v8064 = vadd.f32 %v385, %v8063
  %v8065 = vpop.f32.mrf.mxu0
  %8066 = vmatprep.mubr.f32.mxu0 0.0
  %8067 = vmatmul.mubr.f32.gmra.mxu0 %v7942
  %v8068 = vpop.f32.mrf.mxu0
  %v8069 = vadd.f32 %v385, %v8068
  %v8070 = vpop.f32.mrf.mxu0
  %8071 = vdwg.mxu0
  %v8072 = vsel %vm1296, %v7847, -inf
  %8073 = vmax.xlane.f32.xlu0 %v8072
  %v8074 = vpop.xlane.xlu0 %8073
  %v8075 = vsel %vm1296, %v7852, -inf
  %8076 = vmax.xlane.f32.xlu0 %v8075
  %v8077 = vpop.xlane.xlu0 %8076
  %v8078 = vsel %vm1296, %v7857, -inf
  %8079 = vmax.xlane.f32.xlu0 %v8078
  %v8080 = vpop.xlane.xlu0 %8079
  %v8081 = vsel %vm1296, %v7862, -inf
  %8082 = vmax.xlane.f32.xlu0 %v8081
  %v8083 = vpop.xlane.xlu0 %8082
  %v8084 = vsel %vm1296, %v7867, -inf
  %8085 = vmax.xlane.f32.xlu0 %v8084
  %v8086 = vpop.xlane.xlu0 %8085
  %v8087 = vsel %vm1296, %v7872, -inf
  %8088 = vmax.xlane.f32.xlu0 %v8087
  %v8089 = vpop.xlane.xlu0 %8088
  %v8090 = vsel %vm1296, %v7877, -inf
  %8091 = vmax.xlane.f32.xlu0 %v8090
  %v8092 = vpop.xlane.xlu0 %8091
  %v8093 = vsel %vm1296, %v7882, -inf
  %8094 = vmax.xlane.f32.xlu0 %v8093
  %v8095 = vpop.xlane.xlu0 %8094
  %v8096 = vsel %vm1296, %v7887, -inf
  %8097 = vmax.xlane.f32.xlu0 %v8096
  %v8098 = vpop.xlane.xlu0 %8097
  %v8099 = vsel %vm1296, %v8029, -inf
  %8100 = vmax.xlane.f32.xlu0 %v8099
  %v8101 = vpop.xlane.xlu0 %8100
  %v8102 = vsel %vm1296, %v8034, -inf
  %8103 = vmax.xlane.f32.xlu0 %v8102
  %v8104 = vpop.xlane.xlu0 %8103
  %v8105 = vsel %vm1296, %v8039, -inf
  %8106 = vmax.xlane.f32.xlu0 %v8105
  %v8107 = vpop.xlane.xlu0 %8106
  %v8108 = vsel %vm1296, %v8044, -inf
  %8109 = vmax.xlane.f32.xlu0 %v8108
  %v8110 = vpop.xlane.xlu0 %8109
  %v8111 = vsel %vm1296, %v8049, -inf
  %8112 = vmax.xlane.f32.xlu0 %v8111
  %v8113 = vpop.xlane.xlu0 %8112
  %v8114 = vsel %vm1296, %v8054, -inf
  %8115 = vmax.xlane.f32.xlu0 %v8114
  %v8116 = vpop.xlane.xlu0 %8115
  %v8117 = vsel %vm1296, %v8059, -inf
  %8118 = vmax.xlane.f32.xlu0 %v8117
  %v8119 = vpop.xlane.xlu0 %8118
  %v8120 = vsel %vm1296, %v8064, -inf
  %8121 = vmax.xlane.f32.xlu0 %v8120
  %v8122 = vpop.xlane.xlu0 %8121
  %v8123 = vsel %vm1296, %v8069, -inf
  %8124 = vmax.xlane.f32.xlu0 %v8123
  %v8125 = vpop.xlane.xlu0 %8124
  %v8126 = vsub.f32 %v7847, %v8074
  %v8127 = vsub.f32 %v7852, %v8077
  %v8128 = vsub.f32 %v7857, %v8080
  %v8129 = vsub.f32 %v7862, %v8083
  %v8130 = vsub.f32 %v7867, %v8086
  %v8131 = vsub.f32 %v7872, %v8089
  %v8132 = vsub.f32 %v7877, %v8092
  %v8133 = vsub.f32 %v7882, %v8095
  %v8134 = vsub.f32 %v7887, %v8098
  %v8135 = vsub.f32 %v8029, %v8101
  %v8136 = vsub.f32 %v8034, %v8104
  %v8137 = vsub.f32 %v8039, %v8107
  %v8138 = vsub.f32 %v8044, %v8110
  %v8139 = vsub.f32 %v8049, %v8113
  %v8140 = vsub.f32 %v8054, %v8116
  %v8141 = vsub.f32 %v8059, %v8119
  %v8142 = vsub.f32 %v8064, %v8122
  %v8143 = vsub.f32 %v8069, %v8125
  %v8144 = vmul.f32 %v8126, 1.442695
  %v8145 = vpow.pop %v8144
  %v8146 = vmul.f32 %v8127, 1.442695
  %v8147 = vpow.pop %v8146
  %v8148 = vmul.f32 %v8128, 1.442695
  %v8149 = vpow.pop %v8148
  %v8150 = vmul.f32 %v8129, 1.442695
  %v8151 = vpow.pop %v8150
  %v8152 = vmul.f32 %v8130, 1.442695
  %v8153 = vpow.pop %v8152
  %v8154 = vmul.f32 %v8131, 1.442695
  %v8155 = vpow.pop %v8154
  %v8156 = vmul.f32 %v8132, 1.442695
  %v8157 = vpow.pop %v8156
  %v8158 = vmul.f32 %v8133, 1.442695
  %v8159 = vpow.pop %v8158
  %v8160 = vmul.f32 %v8134, 1.442695
  %v8161 = vpow.pop %v8160
  %v8162 = vmul.f32 %v8135, 1.442695
  %v8163 = vpow.pop %v8162
  %v8164 = vmul.f32 %v8136, 1.442695
  %v8165 = vpow.pop %v8164
  %v8166 = vmul.f32 %v8137, 1.442695
  %v8167 = vpow.pop %v8166
  %v8168 = vmul.f32 %v8138, 1.442695
  %v8169 = vpow.pop %v8168
  %v8170 = vmul.f32 %v8139, 1.442695
  %v8171 = vpow.pop %v8170
  %v8172 = vmul.f32 %v8140, 1.442695
  %v8173 = vpow.pop %v8172
  %v8174 = vmul.f32 %v8141, 1.442695
  %v8175 = vpow.pop %v8174
  %v8176 = vmul.f32 %v8142, 1.442695
  %v8177 = vpow.pop %v8176
  %v8178 = vmul.f32 %v8143, 1.442695
  %v8179 = vpow.pop %v8178
  %v8180 = vsel %vm1296, %v8145, 0.0
  %8181 = vadd.xlane.f32.xlu0 %v8180
  %v8182 = vpop.xlane.xlu0 %8181
  %v8183 = vsel %vm1296, %v8147, 0.0
  %8184 = vadd.xlane.f32.xlu0 %v8183
  %v8185 = vpop.xlane.xlu0 %8184
  %v8186 = vsel %vm1296, %v8149, 0.0
  %8187 = vadd.xlane.f32.xlu0 %v8186
  %v8188 = vpop.xlane.xlu0 %8187
  %v8189 = vsel %vm1296, %v8151, 0.0
  %8190 = vadd.xlane.f32.xlu0 %v8189
  %v8191 = vpop.xlane.xlu0 %8190
  %v8192 = vsel %vm1296, %v8153, 0.0
  %8193 = vadd.xlane.f32.xlu0 %v8192
  %v8194 = vpop.xlane.xlu0 %8193
  %v8195 = vsel %vm1296, %v8155, 0.0
  %8196 = vadd.xlane.f32.xlu0 %v8195
  %v8197 = vpop.xlane.xlu0 %8196
  %v8198 = vsel %vm1296, %v8157, 0.0
  %8199 = vadd.xlane.f32.xlu0 %v8198
  %v8200 = vpop.xlane.xlu0 %8199
  %v8201 = vsel %vm1296, %v8159, 0.0
  %8202 = vadd.xlane.f32.xlu0 %v8201
  %v8203 = vpop.xlane.xlu0 %8202
  %v8204 = vsel %vm1296, %v8161, 0.0
  %8205 = vadd.xlane.f32.xlu0 %v8204
  %v8206 = vpop.xlane.xlu0 %8205
  %v8207 = vsel %vm1296, %v8163, 0.0
  %8208 = vadd.xlane.f32.xlu0 %v8207
  %v8209 = vpop.xlane.xlu0 %8208
  %v8210 = vsel %vm1296, %v8165, 0.0
  %8211 = vadd.xlane.f32.xlu0 %v8210
  %v8212 = vpop.xlane.xlu0 %8211
  %v8213 = vsel %vm1296, %v8167, 0.0
  %8214 = vadd.xlane.f32.xlu0 %v8213
  %v8215 = vpop.xlane.xlu0 %8214
  %v8216 = vsel %vm1296, %v8169, 0.0
  %8217 = vadd.xlane.f32.xlu0 %v8216
  %v8218 = vpop.xlane.xlu0 %8217
  %v8219 = vsel %vm1296, %v8171, 0.0
  %8220 = vadd.xlane.f32.xlu0 %v8219
  %v8221 = vpop.xlane.xlu0 %8220
  %v8222 = vsel %vm1296, %v8173, 0.0
  %8223 = vadd.xlane.f32.xlu0 %v8222
  %v8224 = vpop.xlane.xlu0 %8223
  %v8225 = vsel %vm1296, %v8175, 0.0
  %8226 = vadd.xlane.f32.xlu0 %v8225
  %v8227 = vpop.xlane.xlu0 %8226
  %v8228 = vsel %vm1296, %v8177, 0.0
  %8229 = vadd.xlane.f32.xlu0 %v8228
  %v8230 = vpop.xlane.xlu0 %8229
  %v8231 = vsel %vm1296, %v8179, 0.0
  %8232 = vadd.xlane.f32.xlu0 %v8231
  %v8233 = vpop.xlane.xlu0 %8232
  %v8234 = vrcp.pop %v8182
  %v8235 = vrcp.pop %v8185
  %v8236 = vrcp.pop %v8188
  %v8237 = vrcp.pop %v8191
  %v8238 = vrcp.pop %v8194
  %v8239 = vrcp.pop %v8197
  %v8240 = vrcp.pop %v8200
  %v8241 = vrcp.pop %v8203
  %v8242 = vrcp.pop %v8206
  %v8243 = vrcp.pop %v8209
  %v8244 = vrcp.pop %v8212
  %v8245 = vrcp.pop %v8215
  %v8246 = vrcp.pop %v8218
  %v8247 = vrcp.pop %v8221
  %v8248 = vrcp.pop %v8224
  %v8249 = vrcp.pop %v8227
  %v8250 = vrcp.pop %v8230
  %v8251 = vrcp.pop %v8233
  %v8252 = vmul.f32 %v8145, %v8234
  %v8253 = vmul.f32 %v8147, %v8235
  %v8254 = vmul.f32 %v8149, %v8236
  %v8255 = vmul.f32 %v8151, %v8237
  %v8256 = vmul.f32 %v8153, %v8238
  %v8257 = vmul.f32 %v8155, %v8239
  %v8258 = vmul.f32 %v8157, %v8240
  %v8259 = vmul.f32 %v8159, %v8241
  %v8260 = vmul.f32 %v8161, %v8242
  %v8261 = vmul.f32 %v8163, %v8243
  %v8262 = vmul.f32 %v8165, %v8244
  %v8263 = vmul.f32 %v8167, %v8245
  %v8264 = vmul.f32 %v8169, %v8246
  %v8265 = vmul.f32 %v8171, %v8247
  %v8266 = vmul.f32 %v8173, %v8248
  %v8267 = vmul.f32 %v8175, %v8249
  %v8268 = vmul.f32 %v8177, %v8250
  %v8269 = vmul.f32 %v8179, %v8251
  %8270 = vrot.lane.b32.xlu0 %v6712, 56
  %v8271 = vpop.permute.xlu0 %8270
  %8272 = vrot.lane.b32.xlu0 %v6717, 56
  %v8273 = vpop.permute.xlu0 %8272
  %8274 = vrot.lane.b32.xlu0 %v6722, 56
  %v8275 = vpop.permute.xlu0 %8274
  %8276 = vrot.lane.b32.xlu0 %v6727, 56
  %v8277 = vpop.permute.xlu0 %8276
  %8278 = vrot.lane.b32.xlu0 %v6732, 56
  %v8279 = vpop.permute.xlu0 %8278
  %8280 = vrot.lane.b32.xlu0 %v6737, 56
  %v8281 = vpop.permute.xlu0 %8280
  %8282 = vrot.lane.b32.xlu0 %v6742, 56
  %v8283 = vpop.permute.xlu0 %8282
  %8284 = vrot.lane.b32.xlu0 %v6747, 56
  %v8285 = vpop.permute.xlu0 %8284
  %8286 = vrot.lane.b32.xlu0 %v6752, 56
  %v8287 = vpop.permute.xlu0 %8286
  %v8298 = vsel %vm1296, %v8252, 0
  %v8301 = vsel %vm1296, %v8253, 0
  %v8304 = vsel %vm1296, %v8254, 0
  %v8307 = vsel %vm1296, %v8255, 0
  %v8310 = vsel %vm1296, %v8256, 0
  %v8313 = vsel %vm1296, %v8257, 0
  %v8316 = vsel %vm1296, %v8258, 0
  %v8319 = vsel %vm1296, %v8259, 0
  %v8322 = vsel %vm1296, %v8260, 0
  %8324 = vmatprep.subr.mxu0 0.0
  %8325 = vmatpush1.msra.mxu0 0.0
  %8326 = vmatprep.subr.mxu0 0.0
  %8327 = vmatpush1.msra.mxu0 0.0
  %8328 = vmatprep.subr.mxu0 0.0
  %8329 = vmatpush1.msra.mxu0 0.0
  %8330 = vmatprep.subr.mxu0 0.0
  %8331 = vmatpush1.msra.mxu0 0.0
  %8332 = vmatprep.subr.mxu0 0.0
  %8333 = vmatpush1.msra.mxu0 0.0
  %8334 = vmatprep.subr.mxu0 0.0
  %8335 = vmatpush1.msra.mxu0 0.0
  %8336 = vmatprep.subr.mxu0 0.0
  %8337 = vmatpush1.msra.mxu0 0.0
  %8338 = vmatprep.subr.mxu0 0.0
  %8339 = vmatpush1.msra.mxu0 %v8287
  %8340 = vmatprep.subr.mxu0 0.0
  %8341 = vmatpush1.msra.mxu0 %v8285
  %8342 = vmatprep.subr.mxu0 0.0
  %8343 = vmatpush1.msra.mxu0 %v8283
  %8344 = vmatprep.subr.mxu0 0.0
  %8345 = vmatpush1.msra.mxu0 %v8281
  %8346 = vmatprep.subr.mxu0 0.0
  %8347 = vmatpush1.msra.mxu0 %v8279
  %8348 = vmatprep.subr.mxu0 0.0
  %8349 = vmatpush1.msra.mxu0 %v8277
  %8350 = vmatprep.subr.mxu0 0.0
  %8351 = vmatpush1.msra.mxu0 %v8275
  %8352 = vmatprep.subr.mxu0 0.0
  %8353 = vmatpush1.msra.mxu0 %v8273
  %8354 = vmatprep.subr.mxu0 0.0
  %8355 = vmatpush1.msra.mxu0 %v8271
  %8356 = vmatprep.subr.mxu0 0.0
  %8357 = vmatpush2.msra.mxu0 0.0
  %8358 = vmatprep.subr.mxu0 0.0
  %8359 = vmatpush2.msra.mxu0 0.0
  %8360 = vmatprep.subr.mxu0 0.0
  %8361 = vmatpush2.msra.mxu0 0.0
  %8362 = vmatprep.subr.mxu0 0.0
  %8363 = vmatpush2.msra.mxu0 0.0
  %8364 = vmatprep.subr.mxu0 0.0
  %8365 = vmatpush2.msra.mxu0 0.0
  %8366 = vmatprep.subr.mxu0 0.0
  %8367 = vmatpush2.msra.mxu0 0.0
  %8368 = vmatprep.subr.mxu0 0.0
  %8369 = vmatpush2.msra.mxu0 0.0
  %8370 = vmatprep.subr.mxu0 0.0
  %8371 = vmatpush2.msra.mxu0 0.0
  %8372 = vmatprep.subr.mxu0 0.0
  %8373 = vmatpush2.msra.mxu0 0.0
  %8374 = vmatprep.subr.mxu0 0.0
  %8375 = vmatpush2.msra.mxu0 0.0
  %8376 = vmatprep.subr.mxu0 0.0
  %8377 = vmatpush2.msra.mxu0 0.0
  %8378 = vmatprep.subr.mxu0 0.0
  %8379 = vmatpush2.msra.mxu0 0.0
  %8380 = vmatprep.subr.mxu0 0.0
  %8381 = vmatpush2.msra.mxu0 0.0
  %8382 = vmatprep.subr.mxu0 0.0
  %8383 = vmatpush2.msra.mxu0 0.0
  %8384 = vmatprep.subr.mxu0 0.0
  %8385 = vmatpush2.msra.mxu0 0.0
  %8386 = vmatprep.subr.mxu0 0.0
  %8387 = vmatpush2.msra.mxu0 0.0
  %8388 = vmatprep.mubr.f32.mxu0 0.0
  %8389 = vmatmul.mubr.f32.gmra.mxu0 %v8298
  %v8390 = vpop.f32.mrf.mxu0
  %v8391 = vadd.f32 0.0, %v8390
  %v8392 = vpop.f32.mrf.mxu0
  %8393 = vmatprep.mubr.f32.mxu0 0.0
  %8394 = vmatmul.mubr.f32.gmra.mxu0 %v8301
  %v8395 = vpop.f32.mrf.mxu0
  %v8396 = vadd.f32 0.0, %v8395
  %v8397 = vpop.f32.mrf.mxu0
  %8398 = vmatprep.mubr.f32.mxu0 0.0
  %8399 = vmatmul.mubr.f32.gmra.mxu0 %v8304
  %v8400 = vpop.f32.mrf.mxu0
  %v8401 = vadd.f32 0.0, %v8400
  %v8402 = vpop.f32.mrf.mxu0
  %8403 = vmatprep.mubr.f32.mxu0 0.0
  %8404 = vmatmul.mubr.f32.gmra.mxu0 %v8307
  %v8405 = vpop.f32.mrf.mxu0
  %v8406 = vadd.f32 0.0, %v8405
  %v8407 = vpop.f32.mrf.mxu0
  %8408 = vmatprep.mubr.f32.mxu0 0.0
  %8409 = vmatmul.mubr.f32.gmra.mxu0 %v8310
  %v8410 = vpop.f32.mrf.mxu0
  %v8411 = vadd.f32 0.0, %v8410
  %v8412 = vpop.f32.mrf.mxu0
  %8413 = vmatprep.mubr.f32.mxu0 0.0
  %8414 = vmatmul.mubr.f32.gmra.mxu0 %v8313
  %v8415 = vpop.f32.mrf.mxu0
  %v8416 = vadd.f32 0.0, %v8415
  %v8417 = vpop.f32.mrf.mxu0
  %8418 = vmatprep.mubr.f32.mxu0 0.0
  %8419 = vmatmul.mubr.f32.gmra.mxu0 %v8316
  %v8420 = vpop.f32.mrf.mxu0
  %v8421 = vadd.f32 0.0, %v8420
  %v8422 = vpop.f32.mrf.mxu0
  %8423 = vmatprep.mubr.f32.mxu0 0.0
  %8424 = vmatmul.mubr.f32.gmra.mxu0 %v8319
  %v8425 = vpop.f32.mrf.mxu0
  %v8426 = vadd.f32 0.0, %v8425
  %v8427 = vpop.f32.mrf.mxu0
  %8428 = vmatprep.mubr.f32.mxu0 0.0
  %8429 = vmatmul.mubr.f32.gmra.mxu0 %v8322
  %v8430 = vpop.f32.mrf.mxu0
  %v8431 = vadd.f32 0.0, %v8430
  %v8432 = vpop.f32.mrf.mxu0
  %8433 = vdwg.mxu0
  %8434 = vrot.lane.b32.xlu0 %v6757, 56
  %v8435 = vpop.permute.xlu0 %8434
  %8436 = vrot.lane.b32.xlu0 %v6762, 56
  %v8437 = vpop.permute.xlu0 %8436
  %8438 = vrot.lane.b32.xlu0 %v6767, 56
  %v8439 = vpop.permute.xlu0 %8438
  %8440 = vrot.lane.b32.xlu0 %v6772, 56
  %v8441 = vpop.permute.xlu0 %8440
  %8442 = vrot.lane.b32.xlu0 %v6777, 56
  %v8443 = vpop.permute.xlu0 %8442
  %8444 = vrot.lane.b32.xlu0 %v6782, 56
  %v8445 = vpop.permute.xlu0 %8444
  %8446 = vrot.lane.b32.xlu0 %v6787, 56
  %v8447 = vpop.permute.xlu0 %8446
  %8448 = vrot.lane.b32.xlu0 %v6792, 56
  %v8449 = vpop.permute.xlu0 %8448
  %8450 = vrot.lane.b32.xlu0 %v6797, 56
  %v8451 = vpop.permute.xlu0 %8450
  %v8462 = vsel %vm1296, %v8261, 0
  %v8465 = vsel %vm1296, %v8262, 0
  %v8468 = vsel %vm1296, %v8263, 0
  %v8471 = vsel %vm1296, %v8264, 0
  %v8474 = vsel %vm1296, %v8265, 0
  %v8477 = vsel %vm1296, %v8266, 0
  %v8480 = vsel %vm1296, %v8267, 0
  %v8483 = vsel %vm1296, %v8268, 0
  %v8486 = vsel %vm1296, %v8269, 0
  %8488 = vmatprep.subr.mxu0 0.0
  %8489 = vmatpush1.msra.mxu0 0.0
  %8490 = vmatprep.subr.mxu0 0.0
  %8491 = vmatpush1.msra.mxu0 0.0
  %8492 = vmatprep.subr.mxu0 0.0
  %8493 = vmatpush1.msra.mxu0 0.0
  %8494 = vmatprep.subr.mxu0 0.0
  %8495 = vmatpush1.msra.mxu0 0.0
  %8496 = vmatprep.subr.mxu0 0.0
  %8497 = vmatpush1.msra.mxu0 0.0
  %8498 = vmatprep.subr.mxu0 0.0
  %8499 = vmatpush1.msra.mxu0 0.0
  %8500 = vmatprep.subr.mxu0 0.0
  %8501 = vmatpush1.msra.mxu0 0.0
  %8502 = vmatprep.subr.mxu0 0.0
  %8503 = vmatpush1.msra.mxu0 %v8451
  %8504 = vmatprep.subr.mxu0 0.0
  %8505 = vmatpush1.msra.mxu0 %v8449
  %8506 = vmatprep.subr.mxu0 0.0
  %8507 = vmatpush1.msra.mxu0 %v8447
  %8508 = vmatprep.subr.mxu0 0.0
  %8509 = vmatpush1.msra.mxu0 %v8445
  %8510 = vmatprep.subr.mxu0 0.0
  %8511 = vmatpush1.msra.mxu0 %v8443
  %8512 = vmatprep.subr.mxu0 0.0
  %8513 = vmatpush1.msra.mxu0 %v8441
  %8514 = vmatprep.subr.mxu0 0.0
  %8515 = vmatpush1.msra.mxu0 %v8439
  %8516 = vmatprep.subr.mxu0 0.0
  %8517 = vmatpush1.msra.mxu0 %v8437
  %8518 = vmatprep.subr.mxu0 0.0
  %8519 = vmatpush1.msra.mxu0 %v8435
  %8520 = vmatprep.subr.mxu0 0.0
  %8521 = vmatpush2.msra.mxu0 0.0
  %8522 = vmatprep.subr.mxu0 0.0
  %8523 = vmatpush2.msra.mxu0 0.0
  %8524 = vmatprep.subr.mxu0 0.0
  %8525 = vmatpush2.msra.mxu0 0.0
  %8526 = vmatprep.subr.mxu0 0.0
  %8527 = vmatpush2.msra.mxu0 0.0
  %8528 = vmatprep.subr.mxu0 0.0
  %8529 = vmatpush2.msra.mxu0 0.0
  %8530 = vmatprep.subr.mxu0 0.0
  %8531 = vmatpush2.msra.mxu0 0.0
  %8532 = vmatprep.subr.mxu0 0.0
  %8533 = vmatpush2.msra.mxu0 0.0
  %8534 = vmatprep.subr.mxu0 0.0
  %8535 = vmatpush2.msra.mxu0 0.0
  %8536 = vmatprep.subr.mxu0 0.0
  %8537 = vmatpush2.msra.mxu0 0.0
  %8538 = vmatprep.subr.mxu0 0.0
  %8539 = vmatpush2.msra.mxu0 0.0
  %8540 = vmatprep.subr.mxu0 0.0
  %8541 = vmatpush2.msra.mxu0 0.0
  %8542 = vmatprep.subr.mxu0 0.0
  %8543 = vmatpush2.msra.mxu0 0.0
  %8544 = vmatprep.subr.mxu0 0.0
  %8545 = vmatpush2.msra.mxu0 0.0
  %8546 = vmatprep.subr.mxu0 0.0
  %8547 = vmatpush2.msra.mxu0 0.0
  %8548 = vmatprep.subr.mxu0 0.0
  %8549 = vmatpush2.msra.mxu0 0.0
  %8550 = vmatprep.subr.mxu0 0.0
  %8551 = vmatpush2.msra.mxu0 0.0
  %8552 = vmatprep.mubr.f32.mxu0 0.0
  %8553 = vmatmul.mubr.f32.gmra.mxu0 %v8462
  %v8554 = vpop.f32.mrf.mxu0
  %v8555 = vadd.f32 0.0, %v8554
  %v8556 = vpop.f32.mrf.mxu0
  %8557 = vmatprep.mubr.f32.mxu0 0.0
  %8558 = vmatmul.mubr.f32.gmra.mxu0 %v8465
  %v8559 = vpop.f32.mrf.mxu0
  %v8560 = vadd.f32 0.0, %v8559
  %v8561 = vpop.f32.mrf.mxu0
  %8562 = vmatprep.mubr.f32.mxu0 0.0
  %8563 = vmatmul.mubr.f32.gmra.mxu0 %v8468
  %v8564 = vpop.f32.mrf.mxu0
  %v8565 = vadd.f32 0.0, %v8564
  %v8566 = vpop.f32.mrf.mxu0
  %8567 = vmatprep.mubr.f32.mxu0 0.0
  %8568 = vmatmul.mubr.f32.gmra.mxu0 %v8471
  %v8569 = vpop.f32.mrf.mxu0
  %v8570 = vadd.f32 0.0, %v8569
  %v8571 = vpop.f32.mrf.mxu0
  %8572 = vmatprep.mubr.f32.mxu0 0.0
  %8573 = vmatmul.mubr.f32.gmra.mxu0 %v8474
  %v8574 = vpop.f32.mrf.mxu0
  %v8575 = vadd.f32 0.0, %v8574
  %v8576 = vpop.f32.mrf.mxu0
  %8577 = vmatprep.mubr.f32.mxu0 0.0
  %8578 = vmatmul.mubr.f32.gmra.mxu0 %v8477
  %v8579 = vpop.f32.mrf.mxu0
  %v8580 = vadd.f32 0.0, %v8579
  %v8581 = vpop.f32.mrf.mxu0
  %8582 = vmatprep.mubr.f32.mxu0 0.0
  %8583 = vmatmul.mubr.f32.gmra.mxu0 %v8480
  %v8584 = vpop.f32.mrf.mxu0
  %v8585 = vadd.f32 0.0, %v8584
  %v8586 = vpop.f32.mrf.mxu0
  %8587 = vmatprep.mubr.f32.mxu0 0.0
  %8588 = vmatmul.mubr.f32.gmra.mxu0 %v8483
  %v8589 = vpop.f32.mrf.mxu0
  %v8590 = vadd.f32 0.0, %v8589
  %v8591 = vpop.f32.mrf.mxu0
  %8592 = vmatprep.mubr.f32.mxu0 0.0
  %8593 = vmatmul.mubr.f32.gmra.mxu0 %v8486
  %v8594 = vpop.f32.mrf.mxu0
  %v8595 = vadd.f32 0.0, %v8594
  %v8596 = vpop.f32.mrf.mxu0
  %8597 = vdwg.mxu0
  %v8599 = vsel %vm958, %v8391, 0
  %v8602 = vsel %vm958, %v8396, 0
  %v8605 = vsel %vm958, %v8401, 0
  %v8608 = vsel %vm958, %v8406, 0
  %v8611 = vsel %vm958, %v8411, 0
  %v8614 = vsel %vm958, %v8416, 0
  %v8617 = vsel %vm958, %v8421, 0
  %v8620 = vsel %vm958, %v8426, 0
  %v8623 = vsel %vm958, %v8431, 0
  %v8626 = vsel %vm958, %v8555, 0
  %v8629 = vsel %vm958, %v8560, 0
  %v8632 = vsel %vm958, %v8565, 0
  %v8635 = vsel %vm958, %v8570, 0
  %v8638 = vsel %vm958, %v8575, 0
  %v8641 = vsel %vm958, %v8580, 0
  %v8644 = vsel %vm958, %v8585, 0
  %v8647 = vsel %vm958, %v8590, 0
  %v8650 = vsel %vm958, %v8595, 0
  %8652 = vmatprep.subr.mxu0 0.0
  %8653 = vmatpush1.msra.mxu0 0.0
  %8654 = vmatprep.subr.mxu0 0.0
  %8655 = vmatpush1.msra.mxu0 0.0
  %8656 = vmatprep.subr.mxu0 0.0
  %8657 = vmatpush1.msra.mxu0 0.0
  %8658 = vmatprep.subr.mxu0 0.0
  %8659 = vmatpush1.msra.mxu0 0.0
  %8660 = vmatprep.subr.mxu0 0.0
  %8661 = vmatpush1.msra.mxu0 0.0
  %8662 = vmatprep.subr.mxu0 0.0
  %8663 = vmatpush1.msra.mxu0 0.0
  %8664 = vmatprep.subr.mxu0 0.0
  %8665 = vmatpush1.msra.mxu0 0.0
  %8666 = vmatprep.subr.mxu0 0.0
  %8667 = vmatpush1.msra.mxu0 0.0
  %8668 = vmatprep.subr.mxu0 0.0
  %8669 = vmatpush1.msra.mxu0 0.0
  %8670 = vmatprep.subr.mxu0 0.0
  %8671 = vmatpush1.msra.mxu0 0.0
  %8672 = vmatprep.subr.mxu0 0.0
  %8673 = vmatpush1.msra.mxu0 0.0
  %8674 = vmatprep.subr.mxu0 0.0
  %8675 = vmatpush1.msra.mxu0 0.0
  %8676 = vmatprep.subr.mxu0 0.0
  %8677 = vmatpush1.msra.mxu0 0.0
  %8678 = vmatprep.subr.mxu0 0.0
  %8679 = vmatpush1.msra.mxu0 0.0
  %8680 = vmatprep.subr.mxu0 0.0
  %8681 = vmatpush1.msra.mxu0 0.0
  %8682 = vmatprep.subr.mxu0 0.0
  %8683 = vmatpush1.msra.mxu0 %v6278
  %8684 = vmatprep.subr.mxu0 0.0
  %8685 = vmatpush2.msra.mxu0 0.0
  %8686 = vmatprep.subr.mxu0 0.0
  %8687 = vmatpush2.msra.mxu0 0.0
  %8688 = vmatprep.subr.mxu0 0.0
  %8689 = vmatpush2.msra.mxu0 0.0
  %8690 = vmatprep.subr.mxu0 0.0
  %8691 = vmatpush2.msra.mxu0 0.0
  %8692 = vmatprep.subr.mxu0 0.0
  %8693 = vmatpush2.msra.mxu0 0.0
  %8694 = vmatprep.subr.mxu0 0.0
  %8695 = vmatpush2.msra.mxu0 0.0
  %8696 = vmatprep.subr.mxu0 0.0
  %8697 = vmatpush2.msra.mxu0 0.0
  %8698 = vmatprep.subr.mxu0 0.0
  %8699 = vmatpush2.msra.mxu0 0.0
  %8700 = vmatprep.subr.mxu0 0.0
  %8701 = vmatpush2.msra.mxu0 0.0
  %8702 = vmatprep.subr.mxu0 0.0
  %8703 = vmatpush2.msra.mxu0 0.0
  %8704 = vmatprep.subr.mxu0 0.0
  %8705 = vmatpush2.msra.mxu0 0.0
  %8706 = vmatprep.subr.mxu0 0.0
  %8707 = vmatpush2.msra.mxu0 0.0
  %8708 = vmatprep.subr.mxu0 0.0
  %8709 = vmatpush2.msra.mxu0 0.0
  %8710 = vmatprep.subr.mxu0 0.0
  %8711 = vmatpush2.msra.mxu0 0.0
  %8712 = vmatprep.subr.mxu0 0.0
  %8713 = vmatpush2.msra.mxu0 0.0
  %8714 = vmatprep.subr.mxu0 0.0
  %8715 = vmatpush2.msra.mxu0 0.0
  %8716 = vmatprep.mubr.f32.mxu0 0.0
  %8717 = vmatmul.mubr.f32.gmra.mxu0 %v8599
  %v8718 = vpop.f32.mrf.mxu0
  %v8719 = vadd.f32 0.0, %v8718
  %v8720 = vpop.f32.mrf.mxu0
  %8721 = vmatprep.mubr.f32.mxu0 0.0
  %8722 = vmatmul.mubr.f32.gmra.mxu0 %v8602
  %v8723 = vpop.f32.mrf.mxu0
  %v8724 = vadd.f32 0.0, %v8723
  %v8725 = vpop.f32.mrf.mxu0
  %8726 = vmatprep.mubr.f32.mxu0 0.0
  %8727 = vmatmul.mubr.f32.gmra.mxu0 %v8605
  %v8728 = vpop.f32.mrf.mxu0
  %v8729 = vadd.f32 0.0, %v8728
  %v8730 = vpop.f32.mrf.mxu0
  %8731 = vmatprep.mubr.f32.mxu0 0.0
  %8732 = vmatmul.mubr.f32.gmra.mxu0 %v8608
  %v8733 = vpop.f32.mrf.mxu0
  %v8734 = vadd.f32 0.0, %v8733
  %v8735 = vpop.f32.mrf.mxu0
  %8736 = vmatprep.mubr.f32.mxu0 0.0
  %8737 = vmatmul.mubr.f32.gmra.mxu0 %v8611
  %v8738 = vpop.f32.mrf.mxu0
  %v8739 = vadd.f32 0.0, %v8738
  %v8740 = vpop.f32.mrf.mxu0
  %8741 = vmatprep.mubr.f32.mxu0 0.0
  %8742 = vmatmul.mubr.f32.gmra.mxu0 %v8614
  %v8743 = vpop.f32.mrf.mxu0
  %v8744 = vadd.f32 0.0, %v8743
  %v8745 = vpop.f32.mrf.mxu0
  %8746 = vmatprep.mubr.f32.mxu0 0.0
  %8747 = vmatmul.mubr.f32.gmra.mxu0 %v8617
  %v8748 = vpop.f32.mrf.mxu0
  %v8749 = vadd.f32 0.0, %v8748
  %v8750 = vpop.f32.mrf.mxu0
  %8751 = vmatprep.mubr.f32.mxu0 0.0
  %8752 = vmatmul.mubr.f32.gmra.mxu0 %v8620
  %v8753 = vpop.f32.mrf.mxu0
  %v8754 = vadd.f32 0.0, %v8753
  %v8755 = vpop.f32.mrf.mxu0
  %8756 = vmatprep.mubr.f32.mxu0 0.0
  %8757 = vmatmul.mubr.f32.gmra.mxu0 %v8623
  %v8758 = vpop.f32.mrf.mxu0
  %v8759 = vadd.f32 0.0, %v8758
  %v8760 = vpop.f32.mrf.mxu0
  %8761 = vmatprep.mubr.f32.mxu0 0.0
  %8762 = vmatmul.mubr.f32.gmra.mxu0 %v8626
  %v8763 = vpop.f32.mrf.mxu0
  %v8764 = vadd.f32 0.0, %v8763
  %v8765 = vpop.f32.mrf.mxu0
  %8766 = vmatprep.mubr.f32.mxu0 0.0
  %8767 = vmatmul.mubr.f32.gmra.mxu0 %v8629
  %v8768 = vpop.f32.mrf.mxu0
  %v8769 = vadd.f32 0.0, %v8768
  %v8770 = vpop.f32.mrf.mxu0
  %8771 = vmatprep.mubr.f32.mxu0 0.0
  %8772 = vmatmul.mubr.f32.gmra.mxu0 %v8632
  %v8773 = vpop.f32.mrf.mxu0
  %v8774 = vadd.f32 0.0, %v8773
  %v8775 = vpop.f32.mrf.mxu0
  %8776 = vmatprep.mubr.f32.mxu0 0.0
  %8777 = vmatmul.mubr.f32.gmra.mxu0 %v8635
  %v8778 = vpop.f32.mrf.mxu0
  %v8779 = vadd.f32 0.0, %v8778
  %v8780 = vpop.f32.mrf.mxu0
  %8781 = vmatprep.mubr.f32.mxu0 0.0
  %8782 = vmatmul.mubr.f32.gmra.mxu0 %v8638
  %v8783 = vpop.f32.mrf.mxu0
  %v8784 = vadd.f32 0.0, %v8783
  %v8785 = vpop.f32.mrf.mxu0
  %8786 = vmatprep.mubr.f32.mxu0 0.0
  %8787 = vmatmul.mubr.f32.gmra.mxu0 %v8641
  %v8788 = vpop.f32.mrf.mxu0
  %v8789 = vadd.f32 0.0, %v8788
  %v8790 = vpop.f32.mrf.mxu0
  %8791 = vmatprep.mubr.f32.mxu0 0.0
  %8792 = vmatmul.mubr.f32.gmra.mxu0 %v8644
  %v8793 = vpop.f32.mrf.mxu0
  %v8794 = vadd.f32 0.0, %v8793
  %v8795 = vpop.f32.mrf.mxu0
  %8796 = vmatprep.mubr.f32.mxu0 0.0
  %8797 = vmatmul.mubr.f32.gmra.mxu0 %v8647
  %v8798 = vpop.f32.mrf.mxu0
  %v8799 = vadd.f32 0.0, %v8798
  %v8800 = vpop.f32.mrf.mxu0
  %8801 = vmatprep.mubr.f32.mxu0 0.0
  %8802 = vmatmul.mubr.f32.gmra.mxu0 %v8650
  %v8803 = vpop.f32.mrf.mxu0
  %v8804 = vadd.f32 0.0, %v8803
  %v8805 = vpop.f32.mrf.mxu0
  %8806 = vdwg.mxu0
  %v8808 = vsel %vm958, %v7501, 0
  %v8811 = vsel %vm958, %v7506, 0
  %v8814 = vsel %vm958, %v7511, 0
  %v8817 = vsel %vm958, %v7516, 0
  %v8820 = vsel %vm958, %v7521, 0
  %v8823 = vsel %vm958, %v7526, 0
  %v8826 = vsel %vm958, %v7531, 0
  %v8829 = vsel %vm958, %v7536, 0
  %v8832 = vsel %vm958, %v7541, 0
  %v8835 = vsel %vm958, %v7665, 0
  %v8838 = vsel %vm958, %v7670, 0
  %v8841 = vsel %vm958, %v7675, 0
  %v8844 = vsel %vm958, %v7680, 0
  %v8847 = vsel %vm958, %v7685, 0
  %v8850 = vsel %vm958, %v7690, 0
  %v8853 = vsel %vm958, %v7695, 0
  %v8856 = vsel %vm958, %v7700, 0
  %v8859 = vsel %vm958, %v7705, 0
  %8861 = vmatprep.subr.mxu0 0.0
  %8862 = vmatpush1.msra.mxu0 0.0
  %8863 = vmatprep.subr.mxu0 0.0
  %8864 = vmatpush1.msra.mxu0 0.0
  %8865 = vmatprep.subr.mxu0 0.0
  %8866 = vmatpush1.msra.mxu0 0.0
  %8867 = vmatprep.subr.mxu0 0.0
  %8868 = vmatpush1.msra.mxu0 0.0
  %8869 = vmatprep.subr.mxu0 0.0
  %8870 = vmatpush1.msra.mxu0 0.0
  %8871 = vmatprep.subr.mxu0 0.0
  %8872 = vmatpush1.msra.mxu0 0.0
  %8873 = vmatprep.subr.mxu0 0.0
  %8874 = vmatpush1.msra.mxu0 0.0
  %8875 = vmatprep.subr.mxu0 0.0
  %8876 = vmatpush1.msra.mxu0 0.0
  %8877 = vmatprep.subr.mxu0 0.0
  %8878 = vmatpush1.msra.mxu0 0.0
  %8879 = vmatprep.subr.mxu0 0.0
  %8880 = vmatpush1.msra.mxu0 0.0
  %8881 = vmatprep.subr.mxu0 0.0
  %8882 = vmatpush1.msra.mxu0 0.0
  %8883 = vmatprep.subr.mxu0 0.0
  %8884 = vmatpush1.msra.mxu0 0.0
  %8885 = vmatprep.subr.mxu0 0.0
  %8886 = vmatpush1.msra.mxu0 0.0
  %8887 = vmatprep.subr.mxu0 0.0
  %8888 = vmatpush1.msra.mxu0 0.0
  %8889 = vmatprep.subr.mxu0 0.0
  %8890 = vmatpush1.msra.mxu0 0.0
  %8891 = vmatprep.subr.mxu0 0.0
  %8892 = vmatpush1.msra.mxu0 %v6277
  %8893 = vmatprep.subr.mxu0 0.0
  %8894 = vmatpush2.msra.mxu0 0.0
  %8895 = vmatprep.subr.mxu0 0.0
  %8896 = vmatpush2.msra.mxu0 0.0
  %8897 = vmatprep.subr.mxu0 0.0
  %8898 = vmatpush2.msra.mxu0 0.0
  %8899 = vmatprep.subr.mxu0 0.0
  %8900 = vmatpush2.msra.mxu0 0.0
  %8901 = vmatprep.subr.mxu0 0.0
  %8902 = vmatpush2.msra.mxu0 0.0
  %8903 = vmatprep.subr.mxu0 0.0
  %8904 = vmatpush2.msra.mxu0 0.0
  %8905 = vmatprep.subr.mxu0 0.0
  %8906 = vmatpush2.msra.mxu0 0.0
  %8907 = vmatprep.subr.mxu0 0.0
  %8908 = vmatpush2.msra.mxu0 0.0
  %8909 = vmatprep.subr.mxu0 0.0
  %8910 = vmatpush2.msra.mxu0 0.0
  %8911 = vmatprep.subr.mxu0 0.0
  %8912 = vmatpush2.msra.mxu0 0.0
  %8913 = vmatprep.subr.mxu0 0.0
  %8914 = vmatpush2.msra.mxu0 0.0
  %8915 = vmatprep.subr.mxu0 0.0
  %8916 = vmatpush2.msra.mxu0 0.0
  %8917 = vmatprep.subr.mxu0 0.0
  %8918 = vmatpush2.msra.mxu0 0.0
  %8919 = vmatprep.subr.mxu0 0.0
  %8920 = vmatpush2.msra.mxu0 0.0
  %8921 = vmatprep.subr.mxu0 0.0
  %8922 = vmatpush2.msra.mxu0 0.0
  %8923 = vmatprep.subr.mxu0 0.0
  %8924 = vmatpush2.msra.mxu0 0.0
  %8925 = vmatprep.mubr.f32.mxu0 0.0
  %8926 = vmatmul.mubr.f32.gmra.mxu0 %v8808
  %v8927 = vpop.f32.mrf.mxu0
  %v8928 = vadd.f32 %v8719, %v8927
  %v8929 = vpop.f32.mrf.mxu0
  %8930 = vmatprep.mubr.f32.mxu0 0.0
  %8931 = vmatmul.mubr.f32.gmra.mxu0 %v8811
  %v8932 = vpop.f32.mrf.mxu0
  %v8933 = vadd.f32 %v8724, %v8932
  %v8934 = vpop.f32.mrf.mxu0
  %8935 = vmatprep.mubr.f32.mxu0 0.0
  %8936 = vmatmul.mubr.f32.gmra.mxu0 %v8814
  %v8937 = vpop.f32.mrf.mxu0
  %v8938 = vadd.f32 %v8729, %v8937
  %v8939 = vpop.f32.mrf.mxu0
  %8940 = vmatprep.mubr.f32.mxu0 0.0
  %8941 = vmatmul.mubr.f32.gmra.mxu0 %v8817
  %v8942 = vpop.f32.mrf.mxu0
  %v8943 = vadd.f32 %v8734, %v8942
  %v8944 = vpop.f32.mrf.mxu0
  %8945 = vmatprep.mubr.f32.mxu0 0.0
  %8946 = vmatmul.mubr.f32.gmra.mxu0 %v8820
  %v8947 = vpop.f32.mrf.mxu0
  %v8948 = vadd.f32 %v8739, %v8947
  %v8949 = vpop.f32.mrf.mxu0
  %8950 = vmatprep.mubr.f32.mxu0 0.0
  %8951 = vmatmul.mubr.f32.gmra.mxu0 %v8823
  %v8952 = vpop.f32.mrf.mxu0
  %v8953 = vadd.f32 %v8744, %v8952
  %v8954 = vpop.f32.mrf.mxu0
  %8955 = vmatprep.mubr.f32.mxu0 0.0
  %8956 = vmatmul.mubr.f32.gmra.mxu0 %v8826
  %v8957 = vpop.f32.mrf.mxu0
  %v8958 = vadd.f32 %v8749, %v8957
  %v8959 = vpop.f32.mrf.mxu0
  %8960 = vmatprep.mubr.f32.mxu0 0.0
  %8961 = vmatmul.mubr.f32.gmra.mxu0 %v8829
  %v8962 = vpop.f32.mrf.mxu0
  %v8963 = vadd.f32 %v8754, %v8962
  %v8964 = vpop.f32.mrf.mxu0
  %8965 = vmatprep.mubr.f32.mxu0 0.0
  %8966 = vmatmul.mubr.f32.gmra.mxu0 %v8832
  %v8967 = vpop.f32.mrf.mxu0
  %v8968 = vadd.f32 %v8759, %v8967
  %v8969 = vpop.f32.mrf.mxu0
  %8970 = vmatprep.mubr.f32.mxu0 0.0
  %8971 = vmatmul.mubr.f32.gmra.mxu0 %v8835
  %v8972 = vpop.f32.mrf.mxu0
  %v8973 = vadd.f32 %v8764, %v8972
  %v8974 = vpop.f32.mrf.mxu0
  %8975 = vmatprep.mubr.f32.mxu0 0.0
  %8976 = vmatmul.mubr.f32.gmra.mxu0 %v8838
  %v8977 = vpop.f32.mrf.mxu0
  %v8978 = vadd.f32 %v8769, %v8977
  %v8979 = vpop.f32.mrf.mxu0
  %8980 = vmatprep.mubr.f32.mxu0 0.0
  %8981 = vmatmul.mubr.f32.gmra.mxu0 %v8841
  %v8982 = vpop.f32.mrf.mxu0
  %v8983 = vadd.f32 %v8774, %v8982
  %v8984 = vpop.f32.mrf.mxu0
  %8985 = vmatprep.mubr.f32.mxu0 0.0
  %8986 = vmatmul.mubr.f32.gmra.mxu0 %v8844
  %v8987 = vpop.f32.mrf.mxu0
  %v8988 = vadd.f32 %v8779, %v8987
  %v8989 = vpop.f32.mrf.mxu0
  %8990 = vmatprep.mubr.f32.mxu0 0.0
  %8991 = vmatmul.mubr.f32.gmra.mxu0 %v8847
  %v8992 = vpop.f32.mrf.mxu0
  %v8993 = vadd.f32 %v8784, %v8992
  %v8994 = vpop.f32.mrf.mxu0
  %8995 = vmatprep.mubr.f32.mxu0 0.0
  %8996 = vmatmul.mubr.f32.gmra.mxu0 %v8850
  %v8997 = vpop.f32.mrf.mxu0
  %v8998 = vadd.f32 %v8789, %v8997
  %v8999 = vpop.f32.mrf.mxu0
  %9000 = vmatprep.mubr.f32.mxu0 0.0
  %9001 = vmatmul.mubr.f32.gmra.mxu0 %v8853
  %v9002 = vpop.f32.mrf.mxu0
  %v9003 = vadd.f32 %v8794, %v9002
  %v9004 = vpop.f32.mrf.mxu0
  %9005 = vmatprep.mubr.f32.mxu0 0.0
  %9006 = vmatmul.mubr.f32.gmra.mxu0 %v8856
  %v9007 = vpop.f32.mrf.mxu0
  %v9008 = vadd.f32 %v8799, %v9007
  %v9009 = vpop.f32.mrf.mxu0
  %9010 = vmatprep.mubr.f32.mxu0 0.0
  %9011 = vmatmul.mubr.f32.gmra.mxu0 %v8859
  %v9012 = vpop.f32.mrf.mxu0
  %v9013 = vadd.f32 %v8804, %v9012
  %v9014 = vpop.f32.mrf.mxu0
  %9015 = vdwg.mxu0
  %9016 = vrot.lane.b32.xlu0 %v6800, 112
  %v9017 = vpop.permute.xlu0 %9016
  %9018 = vrot.lane.b32.xlu0 %v6801, 112
  %v9019 = vpop.permute.xlu0 %9018
  %9020 = vrot.lane.b32.xlu0 %v6802, 112
  %v9021 = vpop.permute.xlu0 %9020
  %9022 = vrot.lane.b32.xlu0 %v6803, 112
  %v9023 = vpop.permute.xlu0 %9022
  %9024 = vrot.lane.b32.xlu0 %v6804, 112
  %v9025 = vpop.permute.xlu0 %9024
  %9026 = vrot.lane.b32.xlu0 %v6805, 112
  %v9027 = vpop.permute.xlu0 %9026
  %9028 = vrot.lane.b32.xlu0 %v6806, 112
  %v9029 = vpop.permute.xlu0 %9028
  %9030 = vrot.lane.b32.xlu0 %v6807, 112
  %v9031 = vpop.permute.xlu0 %9030
  %9032 = vrot.lane.b32.xlu0 %v6808, 112
  %v9033 = vpop.permute.xlu0 %9032
  %9034 = vrot.lane.b32.xlu0 %v6712, 80
  %v9035 = vpop.permute.xlu0 %9034
  %9036 = vrot.lane.b32.xlu0 %v6717, 80
  %v9037 = vpop.permute.xlu0 %9036
  %9038 = vrot.lane.b32.xlu0 %v6722, 80
  %v9039 = vpop.permute.xlu0 %9038
  %9040 = vrot.lane.b32.xlu0 %v6727, 80
  %v9041 = vpop.permute.xlu0 %9040
  %9042 = vrot.lane.b32.xlu0 %v6732, 80
  %v9043 = vpop.permute.xlu0 %9042
  %9044 = vrot.lane.b32.xlu0 %v6737, 80
  %v9045 = vpop.permute.xlu0 %9044
  %9046 = vrot.lane.b32.xlu0 %v6742, 80
  %v9047 = vpop.permute.xlu0 %9046
  %9048 = vrot.lane.b32.xlu0 %v6747, 80
  %v9049 = vpop.permute.xlu0 %9048
  %9050 = vrot.lane.b32.xlu0 %v6752, 80
  %v9051 = vpop.permute.xlu0 %9050
  %v9052 = vsel %vm958, %v9017, 0
  %v9054 = vsel %vm958, %v9019, 0
  %v9056 = vsel %vm958, %v9021, 0
  %v9058 = vsel %vm958, %v9023, 0
  %v9060 = vsel %vm958, %v9025, 0
  %v9062 = vsel %vm958, %v9027, 0
  %v9064 = vsel %vm958, %v9029, 0
  %v9066 = vsel %vm958, %v9031, 0
  %v9068 = vsel %vm958, %v9033, 0
  %v9070 = vsel %vm958, %v9035, 0
  %v9072 = vsel %vm958, %v9037, 0
  %v9074 = vsel %vm958, %v9039, 0
  %v9076 = vsel %vm958, %v9041, 0
  %v9078 = vsel %vm958, %v9043, 0
  %v9080 = vsel %vm958, %v9045, 0
  %v9082 = vsel %vm958, %v9047, 0
  %v9084 = vsel %vm958, %v9049, 0
  %v9086 = vsel %vm958, %v9051, 0
  %9088 = vmatprep.subr.mxu0 0.0
  %9089 = vmatpush1.xpose.msra.mxu0 0.0
  %9090 = vmatprep.subr.mxu0 0.0
  %9091 = vmatpush1.xpose.msra.mxu0 0.0
  %9092 = vmatprep.subr.mxu0 0.0
  %9093 = vmatpush1.xpose.msra.mxu0 0.0
  %9094 = vmatprep.subr.mxu0 0.0
  %9095 = vmatpush1.xpose.msra.mxu0 0.0
  %9096 = vmatprep.subr.mxu0 0.0
  %9097 = vmatpush1.xpose.msra.mxu0 0.0
  %9098 = vmatprep.subr.mxu0 0.0
  %9099 = vmatpush1.xpose.msra.mxu0 0.0
  %9100 = vmatprep.subr.mxu0 0.0
  %9101 = vmatpush1.xpose.msra.mxu0 0.0
  %9102 = vmatprep.subr.mxu0 0.0
  %9103 = vmatpush1.xpose.msra.mxu0 %v9086
  %9104 = vmatprep.subr.mxu0 0.0
  %9105 = vmatpush1.xpose.msra.mxu0 %v9084
  %9106 = vmatprep.subr.mxu0 0.0
  %9107 = vmatpush1.xpose.msra.mxu0 %v9082
  %9108 = vmatprep.subr.mxu0 0.0
  %9109 = vmatpush1.xpose.msra.mxu0 %v9080
  %9110 = vmatprep.subr.mxu0 0.0
  %9111 = vmatpush1.xpose.msra.mxu0 %v9078
  %9112 = vmatprep.subr.mxu0 0.0
  %9113 = vmatpush1.xpose.msra.mxu0 %v9076
  %9114 = vmatprep.subr.mxu0 0.0
  %9115 = vmatpush1.xpose.msra.mxu0 %v9074
  %9116 = vmatprep.subr.mxu0 0.0
  %9117 = vmatpush1.xpose.msra.mxu0 %v9072
  %9118 = vmatprep.subr.mxu0 0.0
  %9119 = vmatpush1.xpose.msra.mxu0 %v9070
  %9120 = vmatprep.subr.mxu0 0.0
  %9121 = vmatpush2.xpose.msra.mxu0 0.0
  %9122 = vmatprep.subr.mxu0 0.0
  %9123 = vmatpush2.xpose.msra.mxu0 0.0
  %9124 = vmatprep.subr.mxu0 0.0
  %9125 = vmatpush2.xpose.msra.mxu0 0.0
  %9126 = vmatprep.subr.mxu0 0.0
  %9127 = vmatpush2.xpose.msra.mxu0 0.0
  %9128 = vmatprep.subr.mxu0 0.0
  %9129 = vmatpush2.xpose.msra.mxu0 0.0
  %9130 = vmatprep.subr.mxu0 0.0
  %9131 = vmatpush2.xpose.msra.mxu0 0.0
  %9132 = vmatprep.subr.mxu0 0.0
  %9133 = vmatpush2.xpose.msra.mxu0 0.0
  %9134 = vmatprep.subr.mxu0 0.0
  %9135 = vmatpush2.xpose.msra.mxu0 0.0
  %9136 = vmatprep.subr.mxu0 0.0
  %9137 = vmatpush2.xpose.msra.mxu0 0.0
  %9138 = vmatprep.subr.mxu0 0.0
  %9139 = vmatpush2.xpose.msra.mxu0 0.0
  %9140 = vmatprep.subr.mxu0 0.0
  %9141 = vmatpush2.xpose.msra.mxu0 0.0
  %9142 = vmatprep.subr.mxu0 0.0
  %9143 = vmatpush2.xpose.msra.mxu0 0.0
  %9144 = vmatprep.subr.mxu0 0.0
  %9145 = vmatpush2.xpose.msra.mxu0 0.0
  %9146 = vmatprep.subr.mxu0 0.0
  %9147 = vmatpush2.xpose.msra.mxu0 0.0
  %9148 = vmatprep.subr.mxu0 0.0
  %9149 = vmatpush2.xpose.msra.mxu0 0.0
  %9150 = vmatprep.subr.mxu0 0.0
  %9151 = vmatpush2.xpose.msra.mxu0 0.0
  %9152 = vmatprep.mubr.f32.mxu0 0.0
  %9153 = vmatmul.mubr.f32.gmra.mxu0 %v9052
  %v9154 = vpop.f32.mrf.mxu0
  %v9155 = vadd.f32 %v385, %v9154
  %v9156 = vpop.f32.mrf.mxu0
  %9157 = vmatprep.mubr.f32.mxu0 0.0
  %9158 = vmatmul.mubr.f32.gmra.mxu0 %v9054
  %v9159 = vpop.f32.mrf.mxu0
  %v9160 = vadd.f32 %v385, %v9159
  %v9161 = vpop.f32.mrf.mxu0
  %9162 = vmatprep.mubr.f32.mxu0 0.0
  %9163 = vmatmul.mubr.f32.gmra.mxu0 %v9056
  %v9164 = vpop.f32.mrf.mxu0
  %v9165 = vadd.f32 %v385, %v9164
  %v9166 = vpop.f32.mrf.mxu0
  %9167 = vmatprep.mubr.f32.mxu0 0.0
  %9168 = vmatmul.mubr.f32.gmra.mxu0 %v9058
  %v9169 = vpop.f32.mrf.mxu0
  %v9170 = vadd.f32 %v385, %v9169
  %v9171 = vpop.f32.mrf.mxu0
  %9172 = vmatprep.mubr.f32.mxu0 0.0
  %9173 = vmatmul.mubr.f32.gmra.mxu0 %v9060
  %v9174 = vpop.f32.mrf.mxu0
  %v9175 = vadd.f32 %v385, %v9174
  %v9176 = vpop.f32.mrf.mxu0
  %9177 = vmatprep.mubr.f32.mxu0 0.0
  %9178 = vmatmul.mubr.f32.gmra.mxu0 %v9062
  %v9179 = vpop.f32.mrf.mxu0
  %v9180 = vadd.f32 %v385, %v9179
  %v9181 = vpop.f32.mrf.mxu0
  %9182 = vmatprep.mubr.f32.mxu0 0.0
  %9183 = vmatmul.mubr.f32.gmra.mxu0 %v9064
  %v9184 = vpop.f32.mrf.mxu0
  %v9185 = vadd.f32 %v385, %v9184
  %v9186 = vpop.f32.mrf.mxu0
  %9187 = vmatprep.mubr.f32.mxu0 0.0
  %9188 = vmatmul.mubr.f32.gmra.mxu0 %v9066
  %v9189 = vpop.f32.mrf.mxu0
  %v9190 = vadd.f32 %v385, %v9189
  %v9191 = vpop.f32.mrf.mxu0
  %9192 = vmatprep.mubr.f32.mxu0 0.0
  %9193 = vmatmul.mubr.f32.gmra.mxu0 %v9068
  %v9194 = vpop.f32.mrf.mxu0
  %v9195 = vadd.f32 %v385, %v9194
  %v9196 = vpop.f32.mrf.mxu0
  %9197 = vdwg.mxu0
  %9198 = vrot.lane.b32.xlu0 %v6809, 112
  %v9199 = vpop.permute.xlu0 %9198
  %9200 = vrot.lane.b32.xlu0 %v6810, 112
  %v9201 = vpop.permute.xlu0 %9200
  %9202 = vrot.lane.b32.xlu0 %v6811, 112
  %v9203 = vpop.permute.xlu0 %9202
  %9204 = vrot.lane.b32.xlu0 %v6812, 112
  %v9205 = vpop.permute.xlu0 %9204
  %9206 = vrot.lane.b32.xlu0 %v6813, 112
  %v9207 = vpop.permute.xlu0 %9206
  %9208 = vrot.lane.b32.xlu0 %v6814, 112
  %v9209 = vpop.permute.xlu0 %9208
  %9210 = vrot.lane.b32.xlu0 %v6815, 112
  %v9211 = vpop.permute.xlu0 %9210
  %9212 = vrot.lane.b32.xlu0 %v6816, 112
  %v9213 = vpop.permute.xlu0 %9212
  %9214 = vrot.lane.b32.xlu0 %v6817, 112
  %v9215 = vpop.permute.xlu0 %9214
  %9216 = vrot.lane.b32.xlu0 %v6757, 80
  %v9217 = vpop.permute.xlu0 %9216
  %9218 = vrot.lane.b32.xlu0 %v6762, 80
  %v9219 = vpop.permute.xlu0 %9218
  %9220 = vrot.lane.b32.xlu0 %v6767, 80
  %v9221 = vpop.permute.xlu0 %9220
  %9222 = vrot.lane.b32.xlu0 %v6772, 80
  %v9223 = vpop.permute.xlu0 %9222
  %9224 = vrot.lane.b32.xlu0 %v6777, 80
  %v9225 = vpop.permute.xlu0 %9224
  %9226 = vrot.lane.b32.xlu0 %v6782, 80
  %v9227 = vpop.permute.xlu0 %9226
  %9228 = vrot.lane.b32.xlu0 %v6787, 80
  %v9229 = vpop.permute.xlu0 %9228
  %9230 = vrot.lane.b32.xlu0 %v6792, 80
  %v9231 = vpop.permute.xlu0 %9230
  %9232 = vrot.lane.b32.xlu0 %v6797, 80
  %v9233 = vpop.permute.xlu0 %9232
  %v9234 = vsel %vm958, %v9199, 0
  %v9236 = vsel %vm958, %v9201, 0
  %v9238 = vsel %vm958, %v9203, 0
  %v9240 = vsel %vm958, %v9205, 0
  %v9242 = vsel %vm958, %v9207, 0
  %v9244 = vsel %vm958, %v9209, 0
  %v9246 = vsel %vm958, %v9211, 0
  %v9248 = vsel %vm958, %v9213, 0
  %v9250 = vsel %vm958, %v9215, 0
  %v9252 = vsel %vm958, %v9217, 0
  %v9254 = vsel %vm958, %v9219, 0
  %v9256 = vsel %vm958, %v9221, 0
  %v9258 = vsel %vm958, %v9223, 0
  %v9260 = vsel %vm958, %v9225, 0
  %v9262 = vsel %vm958, %v9227, 0
  %v9264 = vsel %vm958, %v9229, 0
  %v9266 = vsel %vm958, %v9231, 0
  %v9268 = vsel %vm958, %v9233, 0
  %9270 = vmatprep.subr.mxu0 0.0
  %9271 = vmatpush1.xpose.msra.mxu0 0.0
  %9272 = vmatprep.subr.mxu0 0.0
  %9273 = vmatpush1.xpose.msra.mxu0 0.0
  %9274 = vmatprep.subr.mxu0 0.0
  %9275 = vmatpush1.xpose.msra.mxu0 0.0
  %9276 = vmatprep.subr.mxu0 0.0
  %9277 = vmatpush1.xpose.msra.mxu0 0.0
  %9278 = vmatprep.subr.mxu0 0.0
  %9279 = vmatpush1.xpose.msra.mxu0 0.0
  %9280 = vmatprep.subr.mxu0 0.0
  %9281 = vmatpush1.xpose.msra.mxu0 0.0
  %9282 = vmatprep.subr.mxu0 0.0
  %9283 = vmatpush1.xpose.msra.mxu0 0.0
  %9284 = vmatprep.subr.mxu0 0.0
  %9285 = vmatpush1.xpose.msra.mxu0 %v9268
  %9286 = vmatprep.subr.mxu0 0.0
  %9287 = vmatpush1.xpose.msra.mxu0 %v9266
  %9288 = vmatprep.subr.mxu0 0.0
  %9289 = vmatpush1.xpose.msra.mxu0 %v9264
  %9290 = vmatprep.subr.mxu0 0.0
  %9291 = vmatpush1.xpose.msra.mxu0 %v9262
  %9292 = vmatprep.subr.mxu0 0.0
  %9293 = vmatpush1.xpose.msra.mxu0 %v9260
  %9294 = vmatprep.subr.mxu0 0.0
  %9295 = vmatpush1.xpose.msra.mxu0 %v9258
  %9296 = vmatprep.subr.mxu0 0.0
  %9297 = vmatpush1.xpose.msra.mxu0 %v9256
  %9298 = vmatprep.subr.mxu0 0.0
  %9299 = vmatpush1.xpose.msra.mxu0 %v9254
  %9300 = vmatprep.subr.mxu0 0.0
  %9301 = vmatpush1.xpose.msra.mxu0 %v9252
  %9302 = vmatprep.subr.mxu0 0.0
  %9303 = vmatpush2.xpose.msra.mxu0 0.0
  %9304 = vmatprep.subr.mxu0 0.0
  %9305 = vmatpush2.xpose.msra.mxu0 0.0
  %9306 = vmatprep.subr.mxu0 0.0
  %9307 = vmatpush2.xpose.msra.mxu0 0.0
  %9308 = vmatprep.subr.mxu0 0.0
  %9309 = vmatpush2.xpose.msra.mxu0 0.0
  %9310 = vmatprep.subr.mxu0 0.0
  %9311 = vmatpush2.xpose.msra.mxu0 0.0
  %9312 = vmatprep.subr.mxu0 0.0
  %9313 = vmatpush2.xpose.msra.mxu0 0.0
  %9314 = vmatprep.subr.mxu0 0.0
  %9315 = vmatpush2.xpose.msra.mxu0 0.0
  %9316 = vmatprep.subr.mxu0 0.0
  %9317 = vmatpush2.xpose.msra.mxu0 0.0
  %9318 = vmatprep.subr.mxu0 0.0
  %9319 = vmatpush2.xpose.msra.mxu0 0.0
  %9320 = vmatprep.subr.mxu0 0.0
  %9321 = vmatpush2.xpose.msra.mxu0 0.0
  %9322 = vmatprep.subr.mxu0 0.0
  %9323 = vmatpush2.xpose.msra.mxu0 0.0
  %9324 = vmatprep.subr.mxu0 0.0
  %9325 = vmatpush2.xpose.msra.mxu0 0.0
  %9326 = vmatprep.subr.mxu0 0.0
  %9327 = vmatpush2.xpose.msra.mxu0 0.0
  %9328 = vmatprep.subr.mxu0 0.0
  %9329 = vmatpush2.xpose.msra.mxu0 0.0
  %9330 = vmatprep.subr.mxu0 0.0
  %9331 = vmatpush2.xpose.msra.mxu0 0.0
  %9332 = vmatprep.subr.mxu0 0.0
  %9333 = vmatpush2.xpose.msra.mxu0 0.0
  %9334 = vmatprep.mubr.f32.mxu0 0.0
  %9335 = vmatmul.mubr.f32.gmra.mxu0 %v9234
  %v9336 = vpop.f32.mrf.mxu0
  %v9337 = vadd.f32 %v385, %v9336
  %v9338 = vpop.f32.mrf.mxu0
  %9339 = vmatprep.mubr.f32.mxu0 0.0
  %9340 = vmatmul.mubr.f32.gmra.mxu0 %v9236
  %v9341 = vpop.f32.mrf.mxu0
  %v9342 = vadd.f32 %v385, %v9341
  %v9343 = vpop.f32.mrf.mxu0
  %9344 = vmatprep.mubr.f32.mxu0 0.0
  %9345 = vmatmul.mubr.f32.gmra.mxu0 %v9238
  %v9346 = vpop.f32.mrf.mxu0
  %v9347 = vadd.f32 %v385, %v9346
  %v9348 = vpop.f32.mrf.mxu0
  %9349 = vmatprep.mubr.f32.mxu0 0.0
  %9350 = vmatmul.mubr.f32.gmra.mxu0 %v9240
  %v9351 = vpop.f32.mrf.mxu0
  %v9352 = vadd.f32 %v385, %v9351
  %v9353 = vpop.f32.mrf.mxu0
  %9354 = vmatprep.mubr.f32.mxu0 0.0
  %9355 = vmatmul.mubr.f32.gmra.mxu0 %v9242
  %v9356 = vpop.f32.mrf.mxu0
  %v9357 = vadd.f32 %v385, %v9356
  %v9358 = vpop.f32.mrf.mxu0
  %9359 = vmatprep.mubr.f32.mxu0 0.0
  %9360 = vmatmul.mubr.f32.gmra.mxu0 %v9244
  %v9361 = vpop.f32.mrf.mxu0
  %v9362 = vadd.f32 %v385, %v9361
  %v9363 = vpop.f32.mrf.mxu0
  %9364 = vmatprep.mubr.f32.mxu0 0.0
  %9365 = vmatmul.mubr.f32.gmra.mxu0 %v9246
  %v9366 = vpop.f32.mrf.mxu0
  %v9367 = vadd.f32 %v385, %v9366
  %v9368 = vpop.f32.mrf.mxu0
  %9369 = vmatprep.mubr.f32.mxu0 0.0
  %9370 = vmatmul.mubr.f32.gmra.mxu0 %v9248
  %v9371 = vpop.f32.mrf.mxu0
  %v9372 = vadd.f32 %v385, %v9371
  %v9373 = vpop.f32.mrf.mxu0
  %9374 = vmatprep.mubr.f32.mxu0 0.0
  %9375 = vmatmul.mubr.f32.gmra.mxu0 %v9250
  %v9376 = vpop.f32.mrf.mxu0
  %v9377 = vadd.f32 %v385, %v9376
  %v9378 = vpop.f32.mrf.mxu0
  %9379 = vdwg.mxu0
  %v9380 = vsel %vm1296, %v9155, -inf
  %9381 = vmax.xlane.f32.xlu0 %v9380
  %v9382 = vpop.xlane.xlu0 %9381
  %v9383 = vsel %vm1296, %v9160, -inf
  %9384 = vmax.xlane.f32.xlu0 %v9383
  %v9385 = vpop.xlane.xlu0 %9384
  %v9386 = vsel %vm1296, %v9165, -inf
  %9387 = vmax.xlane.f32.xlu0 %v9386
  %v9388 = vpop.xlane.xlu0 %9387
  %v9389 = vsel %vm1296, %v9170, -inf
  %9390 = vmax.xlane.f32.xlu0 %v9389
  %v9391 = vpop.xlane.xlu0 %9390
  %v9392 = vsel %vm1296, %v9175, -inf
  %9393 = vmax.xlane.f32.xlu0 %v9392
  %v9394 = vpop.xlane.xlu0 %9393
  %v9395 = vsel %vm1296, %v9180, -inf
  %9396 = vmax.xlane.f32.xlu0 %v9395
  %v9397 = vpop.xlane.xlu0 %9396
  %v9398 = vsel %vm1296, %v9185, -inf
  %9399 = vmax.xlane.f32.xlu0 %v9398
  %v9400 = vpop.xlane.xlu0 %9399
  %v9401 = vsel %vm1296, %v9190, -inf
  %9402 = vmax.xlane.f32.xlu0 %v9401
  %v9403 = vpop.xlane.xlu0 %9402
  %v9404 = vsel %vm1296, %v9195, -inf
  %9405 = vmax.xlane.f32.xlu0 %v9404
  %v9406 = vpop.xlane.xlu0 %9405
  %v9407 = vsel %vm1296, %v9337, -inf
  %9408 = vmax.xlane.f32.xlu0 %v9407
  %v9409 = vpop.xlane.xlu0 %9408
  %v9410 = vsel %vm1296, %v9342, -inf
  %9411 = vmax.xlane.f32.xlu0 %v9410
  %v9412 = vpop.xlane.xlu0 %9411
  %v9413 = vsel %vm1296, %v9347, -inf
  %9414 = vmax.xlane.f32.xlu0 %v9413
  %v9415 = vpop.xlane.xlu0 %9414
  %v9416 = vsel %vm1296, %v9352, -inf
  %9417 = vmax.xlane.f32.xlu0 %v9416
  %v9418 = vpop.xlane.xlu0 %9417
  %v9419 = vsel %vm1296, %v9357, -inf
  %9420 = vmax.xlane.f32.xlu0 %v9419
  %v9421 = vpop.xlane.xlu0 %9420
  %v9422 = vsel %vm1296, %v9362, -inf
  %9423 = vmax.xlane.f32.xlu0 %v9422
  %v9424 = vpop.xlane.xlu0 %9423
  %v9425 = vsel %vm1296, %v9367, -inf
  %9426 = vmax.xlane.f32.xlu0 %v9425
  %v9427 = vpop.xlane.xlu0 %9426
  %v9428 = vsel %vm1296, %v9372, -inf
  %9429 = vmax.xlane.f32.xlu0 %v9428
  %v9430 = vpop.xlane.xlu0 %9429
  %v9431 = vsel %vm1296, %v9377, -inf
  %9432 = vmax.xlane.f32.xlu0 %v9431
  %v9433 = vpop.xlane.xlu0 %9432
  %v9434 = vsub.f32 %v9155, %v9382
  %v9435 = vsub.f32 %v9160, %v9385
  %v9436 = vsub.f32 %v9165, %v9388
  %v9437 = vsub.f32 %v9170, %v9391
  %v9438 = vsub.f32 %v9175, %v9394
  %v9439 = vsub.f32 %v9180, %v9397
  %v9440 = vsub.f32 %v9185, %v9400
  %v9441 = vsub.f32 %v9190, %v9403
  %v9442 = vsub.f32 %v9195, %v9406
  %v9443 = vsub.f32 %v9337, %v9409
  %v9444 = vsub.f32 %v9342, %v9412
  %v9445 = vsub.f32 %v9347, %v9415
  %v9446 = vsub.f32 %v9352, %v9418
  %v9447 = vsub.f32 %v9357, %v9421
  %v9448 = vsub.f32 %v9362, %v9424
  %v9449 = vsub.f32 %v9367, %v9427
  %v9450 = vsub.f32 %v9372, %v9430
  %v9451 = vsub.f32 %v9377, %v9433
  %v9452 = vmul.f32 %v9434, 1.442695
  %v9453 = vpow.pop %v9452
  %v9454 = vmul.f32 %v9435, 1.442695
  %v9455 = vpow.pop %v9454
  %v9456 = vmul.f32 %v9436, 1.442695
  %v9457 = vpow.pop %v9456
  %v9458 = vmul.f32 %v9437, 1.442695
  %v9459 = vpow.pop %v9458
  %v9460 = vmul.f32 %v9438, 1.442695
  %v9461 = vpow.pop %v9460
  %v9462 = vmul.f32 %v9439, 1.442695
  %v9463 = vpow.pop %v9462
  %v9464 = vmul.f32 %v9440, 1.442695
  %v9465 = vpow.pop %v9464
  %v9466 = vmul.f32 %v9441, 1.442695
  %v9467 = vpow.pop %v9466
  %v9468 = vmul.f32 %v9442, 1.442695
  %v9469 = vpow.pop %v9468
  %v9470 = vmul.f32 %v9443, 1.442695
  %v9471 = vpow.pop %v9470
  %v9472 = vmul.f32 %v9444, 1.442695
  %v9473 = vpow.pop %v9472
  %v9474 = vmul.f32 %v9445, 1.442695
  %v9475 = vpow.pop %v9474
  %v9476 = vmul.f32 %v9446, 1.442695
  %v9477 = vpow.pop %v9476
  %v9478 = vmul.f32 %v9447, 1.442695
  %v9479 = vpow.pop %v9478
  %v9480 = vmul.f32 %v9448, 1.442695
  %v9481 = vpow.pop %v9480
  %v9482 = vmul.f32 %v9449, 1.442695
  %v9483 = vpow.pop %v9482
  %v9484 = vmul.f32 %v9450, 1.442695
  %v9485 = vpow.pop %v9484
  %v9486 = vmul.f32 %v9451, 1.442695
  %v9487 = vpow.pop %v9486
  %v9488 = vsel %vm1296, %v9453, 0.0
  %9489 = vadd.xlane.f32.xlu0 %v9488
  %v9490 = vpop.xlane.xlu0 %9489
  %v9491 = vsel %vm1296, %v9455, 0.0
  %9492 = vadd.xlane.f32.xlu0 %v9491
  %v9493 = vpop.xlane.xlu0 %9492
  %v9494 = vsel %vm1296, %v9457, 0.0
  %9495 = vadd.xlane.f32.xlu0 %v9494
  %v9496 = vpop.xlane.xlu0 %9495
  %v9497 = vsel %vm1296, %v9459, 0.0
  %9498 = vadd.xlane.f32.xlu0 %v9497
  %v9499 = vpop.xlane.xlu0 %9498
  %v9500 = vsel %vm1296, %v9461, 0.0
  %9501 = vadd.xlane.f32.xlu0 %v9500
  %v9502 = vpop.xlane.xlu0 %9501
  %v9503 = vsel %vm1296, %v9463, 0.0
  %9504 = vadd.xlane.f32.xlu0 %v9503
  %v9505 = vpop.xlane.xlu0 %9504
  %v9506 = vsel %vm1296, %v9465, 0.0
  %9507 = vadd.xlane.f32.xlu0 %v9506
  %v9508 = vpop.xlane.xlu0 %9507
  %v9509 = vsel %vm1296, %v9467, 0.0
  %9510 = vadd.xlane.f32.xlu0 %v9509
  %v9511 = vpop.xlane.xlu0 %9510
  %v9512 = vsel %vm1296, %v9469, 0.0
  %9513 = vadd.xlane.f32.xlu0 %v9512
  %v9514 = vpop.xlane.xlu0 %9513
  %v9515 = vsel %vm1296, %v9471, 0.0
  %9516 = vadd.xlane.f32.xlu0 %v9515
  %v9517 = vpop.xlane.xlu0 %9516
  %v9518 = vsel %vm1296, %v9473, 0.0
  %9519 = vadd.xlane.f32.xlu0 %v9518
  %v9520 = vpop.xlane.xlu0 %9519
  %v9521 = vsel %vm1296, %v9475, 0.0
  %9522 = vadd.xlane.f32.xlu0 %v9521
  %v9523 = vpop.xlane.xlu0 %9522
  %v9524 = vsel %vm1296, %v9477, 0.0
  %9525 = vadd.xlane.f32.xlu0 %v9524
  %v9526 = vpop.xlane.xlu0 %9525
  %v9527 = vsel %vm1296, %v9479, 0.0
  %9528 = vadd.xlane.f32.xlu0 %v9527
  %v9529 = vpop.xlane.xlu0 %9528
  %v9530 = vsel %vm1296, %v9481, 0.0
  %9531 = vadd.xlane.f32.xlu0 %v9530
  %v9532 = vpop.xlane.xlu0 %9531
  %v9533 = vsel %vm1296, %v9483, 0.0
  %9534 = vadd.xlane.f32.xlu0 %v9533
  %v9535 = vpop.xlane.xlu0 %9534
  %v9536 = vsel %vm1296, %v9485, 0.0
  %9537 = vadd.xlane.f32.xlu0 %v9536
  %v9538 = vpop.xlane.xlu0 %9537
  %v9539 = vsel %vm1296, %v9487, 0.0
  %9540 = vadd.xlane.f32.xlu0 %v9539
  %v9541 = vpop.xlane.xlu0 %9540
  %v9542 = vrcp.pop %v9490
  %v9543 = vrcp.pop %v9493
  %v9544 = vrcp.pop %v9496
  %v9545 = vrcp.pop %v9499
  %v9546 = vrcp.pop %v9502
  %v9547 = vrcp.pop %v9505
  %v9548 = vrcp.pop %v9508
  %v9549 = vrcp.pop %v9511
  %v9550 = vrcp.pop %v9514
  %v9551 = vrcp.pop %v9517
  %v9552 = vrcp.pop %v9520
  %v9553 = vrcp.pop %v9523
  %v9554 = vrcp.pop %v9526
  %v9555 = vrcp.pop %v9529
  %v9556 = vrcp.pop %v9532
  %v9557 = vrcp.pop %v9535
  %v9558 = vrcp.pop %v9538
  %v9559 = vrcp.pop %v9541
  %v9560 = vmul.f32 %v9453, %v9542
  %v9561 = vmul.f32 %v9455, %v9543
  %v9562 = vmul.f32 %v9457, %v9544
  %v9563 = vmul.f32 %v9459, %v9545
  %v9564 = vmul.f32 %v9461, %v9546
  %v9565 = vmul.f32 %v9463, %v9547
  %v9566 = vmul.f32 %v9465, %v9548
  %v9567 = vmul.f32 %v9467, %v9549
  %v9568 = vmul.f32 %v9469, %v9550
  %v9569 = vmul.f32 %v9471, %v9551
  %v9570 = vmul.f32 %v9473, %v9552
  %v9571 = vmul.f32 %v9475, %v9553
  %v9572 = vmul.f32 %v9477, %v9554
  %v9573 = vmul.f32 %v9479, %v9555
  %v9574 = vmul.f32 %v9481, %v9556
  %v9575 = vmul.f32 %v9483, %v9557
  %v9576 = vmul.f32 %v9485, %v9558
  %v9577 = vmul.f32 %v9487, %v9559
  %9578 = vrot.lane.b32.xlu0 %v6712, 48
  %v9579 = vpop.permute.xlu0 %9578
  %9580 = vrot.lane.b32.xlu0 %v6717, 48
  %v9581 = vpop.permute.xlu0 %9580
  %9582 = vrot.lane.b32.xlu0 %v6722, 48
  %v9583 = vpop.permute.xlu0 %9582
  %9584 = vrot.lane.b32.xlu0 %v6727, 48
  %v9585 = vpop.permute.xlu0 %9584
  %9586 = vrot.lane.b32.xlu0 %v6732, 48
  %v9587 = vpop.permute.xlu0 %9586
  %9588 = vrot.lane.b32.xlu0 %v6737, 48
  %v9589 = vpop.permute.xlu0 %9588
  %9590 = vrot.lane.b32.xlu0 %v6742, 48
  %v9591 = vpop.permute.xlu0 %9590
  %9592 = vrot.lane.b32.xlu0 %v6747, 48
  %v9593 = vpop.permute.xlu0 %9592
  %9594 = vrot.lane.b32.xlu0 %v6752, 48
  %v9595 = vpop.permute.xlu0 %9594
  %v9606 = vsel %vm1296, %v9560, 0
  %v9609 = vsel %vm1296, %v9561, 0
  %v9612 = vsel %vm1296, %v9562, 0
  %v9615 = vsel %vm1296, %v9563, 0
  %v9618 = vsel %vm1296, %v9564, 0
  %v9621 = vsel %vm1296, %v9565, 0
  %v9624 = vsel %vm1296, %v9566, 0
  %v9627 = vsel %vm1296, %v9567, 0
  %v9630 = vsel %vm1296, %v9568, 0
  %9632 = vmatprep.subr.mxu0 0.0
  %9633 = vmatpush1.msra.mxu0 0.0
  %9634 = vmatprep.subr.mxu0 0.0
  %9635 = vmatpush1.msra.mxu0 0.0
  %9636 = vmatprep.subr.mxu0 0.0
  %9637 = vmatpush1.msra.mxu0 0.0
  %9638 = vmatprep.subr.mxu0 0.0
  %9639 = vmatpush1.msra.mxu0 0.0
  %9640 = vmatprep.subr.mxu0 0.0
  %9641 = vmatpush1.msra.mxu0 0.0
  %9642 = vmatprep.subr.mxu0 0.0
  %9643 = vmatpush1.msra.mxu0 0.0
  %9644 = vmatprep.subr.mxu0 0.0
  %9645 = vmatpush1.msra.mxu0 0.0
  %9646 = vmatprep.subr.mxu0 0.0
  %9647 = vmatpush1.msra.mxu0 %v9595
  %9648 = vmatprep.subr.mxu0 0.0
  %9649 = vmatpush1.msra.mxu0 %v9593
  %9650 = vmatprep.subr.mxu0 0.0
  %9651 = vmatpush1.msra.mxu0 %v9591
  %9652 = vmatprep.subr.mxu0 0.0
  %9653 = vmatpush1.msra.mxu0 %v9589
  %9654 = vmatprep.subr.mxu0 0.0
  %9655 = vmatpush1.msra.mxu0 %v9587
  %9656 = vmatprep.subr.mxu0 0.0
  %9657 = vmatpush1.msra.mxu0 %v9585
  %9658 = vmatprep.subr.mxu0 0.0
  %9659 = vmatpush1.msra.mxu0 %v9583
  %9660 = vmatprep.subr.mxu0 0.0
  %9661 = vmatpush1.msra.mxu0 %v9581
  %9662 = vmatprep.subr.mxu0 0.0
  %9663 = vmatpush1.msra.mxu0 %v9579
  %9664 = vmatprep.subr.mxu0 0.0
  %9665 = vmatpush2.msra.mxu0 0.0
  %9666 = vmatprep.subr.mxu0 0.0
  %9667 = vmatpush2.msra.mxu0 0.0
  %9668 = vmatprep.subr.mxu0 0.0
  %9669 = vmatpush2.msra.mxu0 0.0
  %9670 = vmatprep.subr.mxu0 0.0
  %9671 = vmatpush2.msra.mxu0 0.0
  %9672 = vmatprep.subr.mxu0 0.0
  %9673 = vmatpush2.msra.mxu0 0.0
  %9674 = vmatprep.subr.mxu0 0.0
  %9675 = vmatpush2.msra.mxu0 0.0
  %9676 = vmatprep.subr.mxu0 0.0
  %9677 = vmatpush2.msra.mxu0 0.0
  %9678 = vmatprep.subr.mxu0 0.0
  %9679 = vmatpush2.msra.mxu0 0.0
  %9680 = vmatprep.subr.mxu0 0.0
  %9681 = vmatpush2.msra.mxu0 0.0
  %9682 = vmatprep.subr.mxu0 0.0
  %9683 = vmatpush2.msra.mxu0 0.0
  %9684 = vmatprep.subr.mxu0 0.0
  %9685 = vmatpush2.msra.mxu0 0.0
  %9686 = vmatprep.subr.mxu0 0.0
  %9687 = vmatpush2.msra.mxu0 0.0
  %9688 = vmatprep.subr.mxu0 0.0
  %9689 = vmatpush2.msra.mxu0 0.0
  %9690 = vmatprep.subr.mxu0 0.0
  %9691 = vmatpush2.msra.mxu0 0.0
  %9692 = vmatprep.subr.mxu0 0.0
  %9693 = vmatpush2.msra.mxu0 0.0
  %9694 = vmatprep.subr.mxu0 0.0
  %9695 = vmatpush2.msra.mxu0 0.0
  %9696 = vmatprep.mubr.f32.mxu0 0.0
  %9697 = vmatmul.mubr.f32.gmra.mxu0 %v9606
  %v9698 = vpop.f32.mrf.mxu0
  %v9699 = vadd.f32 0.0, %v9698
  %v9700 = vpop.f32.mrf.mxu0
  %9701 = vmatprep.mubr.f32.mxu0 0.0
  %9702 = vmatmul.mubr.f32.gmra.mxu0 %v9609
  %v9703 = vpop.f32.mrf.mxu0
  %v9704 = vadd.f32 0.0, %v9703
  %v9705 = vpop.f32.mrf.mxu0
  %9706 = vmatprep.mubr.f32.mxu0 0.0
  %9707 = vmatmul.mubr.f32.gmra.mxu0 %v9612
  %v9708 = vpop.f32.mrf.mxu0
  %v9709 = vadd.f32 0.0, %v9708
  %v9710 = vpop.f32.mrf.mxu0
  %9711 = vmatprep.mubr.f32.mxu0 0.0
  %9712 = vmatmul.mubr.f32.gmra.mxu0 %v9615
  %v9713 = vpop.f32.mrf.mxu0
  %v9714 = vadd.f32 0.0, %v9713
  %v9715 = vpop.f32.mrf.mxu0
  %9716 = vmatprep.mubr.f32.mxu0 0.0
  %9717 = vmatmul.mubr.f32.gmra.mxu0 %v9618
  %v9718 = vpop.f32.mrf.mxu0
  %v9719 = vadd.f32 0.0, %v9718
  %v9720 = vpop.f32.mrf.mxu0
  %9721 = vmatprep.mubr.f32.mxu0 0.0
  %9722 = vmatmul.mubr.f32.gmra.mxu0 %v9621
  %v9723 = vpop.f32.mrf.mxu0
  %v9724 = vadd.f32 0.0, %v9723
  %v9725 = vpop.f32.mrf.mxu0
  %9726 = vmatprep.mubr.f32.mxu0 0.0
  %9727 = vmatmul.mubr.f32.gmra.mxu0 %v9624
  %v9728 = vpop.f32.mrf.mxu0
  %v9729 = vadd.f32 0.0, %v9728
  %v9730 = vpop.f32.mrf.mxu0
  %9731 = vmatprep.mubr.f32.mxu0 0.0
  %9732 = vmatmul.mubr.f32.gmra.mxu0 %v9627
  %v9733 = vpop.f32.mrf.mxu0
  %v9734 = vadd.f32 0.0, %v9733
  %v9735 = vpop.f32.mrf.mxu0
  %9736 = vmatprep.mubr.f32.mxu0 0.0
  %9737 = vmatmul.mubr.f32.gmra.mxu0 %v9630
  %v9738 = vpop.f32.mrf.mxu0
  %v9739 = vadd.f32 0.0, %v9738
  %v9740 = vpop.f32.mrf.mxu0
  %9741 = vdwg.mxu0
  %9742 = vrot.lane.b32.xlu0 %v6757, 48
  %v9743 = vpop.permute.xlu0 %9742
  %9744 = vrot.lane.b32.xlu0 %v6762, 48
  %v9745 = vpop.permute.xlu0 %9744
  %9746 = vrot.lane.b32.xlu0 %v6767, 48
  %v9747 = vpop.permute.xlu0 %9746
  %9748 = vrot.lane.b32.xlu0 %v6772, 48
  %v9749 = vpop.permute.xlu0 %9748
  %9750 = vrot.lane.b32.xlu0 %v6777, 48
  %v9751 = vpop.permute.xlu0 %9750
  %9752 = vrot.lane.b32.xlu0 %v6782, 48
  %v9753 = vpop.permute.xlu0 %9752
  %9754 = vrot.lane.b32.xlu0 %v6787, 48
  %v9755 = vpop.permute.xlu0 %9754
  %9756 = vrot.lane.b32.xlu0 %v6792, 48
  %v9757 = vpop.permute.xlu0 %9756
  %9758 = vrot.lane.b32.xlu0 %v6797, 48
  %v9759 = vpop.permute.xlu0 %9758
  %v9770 = vsel %vm1296, %v9569, 0
  %v9773 = vsel %vm1296, %v9570, 0
  %v9776 = vsel %vm1296, %v9571, 0
  %v9779 = vsel %vm1296, %v9572, 0
  %v9782 = vsel %vm1296, %v9573, 0
  %v9785 = vsel %vm1296, %v9574, 0
  %v9788 = vsel %vm1296, %v9575, 0
  %v9791 = vsel %vm1296, %v9576, 0
  %v9794 = vsel %vm1296, %v9577, 0
  %9796 = vmatprep.subr.mxu0 0.0
  %9797 = vmatpush1.msra.mxu0 0.0
  %9798 = vmatprep.subr.mxu0 0.0
  %9799 = vmatpush1.msra.mxu0 0.0
  %9800 = vmatprep.subr.mxu0 0.0
  %9801 = vmatpush1.msra.mxu0 0.0
  %9802 = vmatprep.subr.mxu0 0.0
  %9803 = vmatpush1.msra.mxu0 0.0
  %9804 = vmatprep.subr.mxu0 0.0
  %9805 = vmatpush1.msra.mxu0 0.0
  %9806 = vmatprep.subr.mxu0 0.0
  %9807 = vmatpush1.msra.mxu0 0.0
  %9808 = vmatprep.subr.mxu0 0.0
  %9809 = vmatpush1.msra.mxu0 0.0
  %9810 = vmatprep.subr.mxu0 0.0
  %9811 = vmatpush1.msra.mxu0 %v9759
  %9812 = vmatprep.subr.mxu0 0.0
  %9813 = vmatpush1.msra.mxu0 %v9757
  %9814 = vmatprep.subr.mxu0 0.0
  %9815 = vmatpush1.msra.mxu0 %v9755
  %9816 = vmatprep.subr.mxu0 0.0
  %9817 = vmatpush1.msra.mxu0 %v9753
  %9818 = vmatprep.subr.mxu0 0.0
  %9819 = vmatpush1.msra.mxu0 %v9751
  %9820 = vmatprep.subr.mxu0 0.0
  %9821 = vmatpush1.msra.mxu0 %v9749
  %9822 = vmatprep.subr.mxu0 0.0
  %9823 = vmatpush1.msra.mxu0 %v9747
  %9824 = vmatprep.subr.mxu0 0.0
  %9825 = vmatpush1.msra.mxu0 %v9745
  %9826 = vmatprep.subr.mxu0 0.0
  %9827 = vmatpush1.msra.mxu0 %v9743
  %9828 = vmatprep.subr.mxu0 0.0
  %9829 = vmatpush2.msra.mxu0 0.0
  %9830 = vmatprep.subr.mxu0 0.0
  %9831 = vmatpush2.msra.mxu0 0.0
  %9832 = vmatprep.subr.mxu0 0.0
  %9833 = vmatpush2.msra.mxu0 0.0
  %9834 = vmatprep.subr.mxu0 0.0
  %9835 = vmatpush2.msra.mxu0 0.0
  %9836 = vmatprep.subr.mxu0 0.0
  %9837 = vmatpush2.msra.mxu0 0.0
  %9838 = vmatprep.subr.mxu0 0.0
  %9839 = vmatpush2.msra.mxu0 0.0
  %9840 = vmatprep.subr.mxu0 0.0
  %9841 = vmatpush2.msra.mxu0 0.0
  %9842 = vmatprep.subr.mxu0 0.0
  %9843 = vmatpush2.msra.mxu0 0.0
  %9844 = vmatprep.subr.mxu0 0.0
  %9845 = vmatpush2.msra.mxu0 0.0
  %9846 = vmatprep.subr.mxu0 0.0
  %9847 = vmatpush2.msra.mxu0 0.0
  %9848 = vmatprep.subr.mxu0 0.0
  %9849 = vmatpush2.msra.mxu0 0.0
  %9850 = vmatprep.subr.mxu0 0.0
  %9851 = vmatpush2.msra.mxu0 0.0
  %9852 = vmatprep.subr.mxu0 0.0
  %9853 = vmatpush2.msra.mxu0 0.0
  %9854 = vmatprep.subr.mxu0 0.0
  %9855 = vmatpush2.msra.mxu0 0.0
  %9856 = vmatprep.subr.mxu0 0.0
  %9857 = vmatpush2.msra.mxu0 0.0
  %9858 = vmatprep.subr.mxu0 0.0
  %9859 = vmatpush2.msra.mxu0 0.0
  %9860 = vmatprep.mubr.f32.mxu0 0.0
  %9861 = vmatmul.mubr.f32.gmra.mxu0 %v9770
  %v9862 = vpop.f32.mrf.mxu0
  %v9863 = vadd.f32 0.0, %v9862
  %v9864 = vpop.f32.mrf.mxu0
  %9865 = vmatprep.mubr.f32.mxu0 0.0
  %9866 = vmatmul.mubr.f32.gmra.mxu0 %v9773
  %v9867 = vpop.f32.mrf.mxu0
  %v9868 = vadd.f32 0.0, %v9867
  %v9869 = vpop.f32.mrf.mxu0
  %9870 = vmatprep.mubr.f32.mxu0 0.0
  %9871 = vmatmul.mubr.f32.gmra.mxu0 %v9776
  %v9872 = vpop.f32.mrf.mxu0
  %v9873 = vadd.f32 0.0, %v9872
  %v9874 = vpop.f32.mrf.mxu0
  %9875 = vmatprep.mubr.f32.mxu0 0.0
  %9876 = vmatmul.mubr.f32.gmra.mxu0 %v9779
  %v9877 = vpop.f32.mrf.mxu0
  %v9878 = vadd.f32 0.0, %v9877
  %v9879 = vpop.f32.mrf.mxu0
  %9880 = vmatprep.mubr.f32.mxu0 0.0
  %9881 = vmatmul.mubr.f32.gmra.mxu0 %v9782
  %v9882 = vpop.f32.mrf.mxu0
  %v9883 = vadd.f32 0.0, %v9882
  %v9884 = vpop.f32.mrf.mxu0
  %9885 = vmatprep.mubr.f32.mxu0 0.0
  %9886 = vmatmul.mubr.f32.gmra.mxu0 %v9785
  %v9887 = vpop.f32.mrf.mxu0
  %v9888 = vadd.f32 0.0, %v9887
  %v9889 = vpop.f32.mrf.mxu0
  %9890 = vmatprep.mubr.f32.mxu0 0.0
  %9891 = vmatmul.mubr.f32.gmra.mxu0 %v9788
  %v9892 = vpop.f32.mrf.mxu0
  %v9893 = vadd.f32 0.0, %v9892
  %v9894 = vpop.f32.mrf.mxu0
  %9895 = vmatprep.mubr.f32.mxu0 0.0
  %9896 = vmatmul.mubr.f32.gmra.mxu0 %v9791
  %v9897 = vpop.f32.mrf.mxu0
  %v9898 = vadd.f32 0.0, %v9897
  %v9899 = vpop.f32.mrf.mxu0
  %9900 = vmatprep.mubr.f32.mxu0 0.0
  %9901 = vmatmul.mubr.f32.gmra.mxu0 %v9794
  %v9902 = vpop.f32.mrf.mxu0
  %v9903 = vadd.f32 0.0, %v9902
  %v9904 = vpop.f32.mrf.mxu0
  %9905 = vdwg.mxu0
  %v9907 = vsel %vm958, %v9699, 0
  %v9910 = vsel %vm958, %v9704, 0
  %v9913 = vsel %vm958, %v9709, 0
  %v9916 = vsel %vm958, %v9714, 0
  %v9919 = vsel %vm958, %v9719, 0
  %v9922 = vsel %vm958, %v9724, 0
  %v9925 = vsel %vm958, %v9729, 0
  %v9928 = vsel %vm958, %v9734, 0
  %v9931 = vsel %vm958, %v9739, 0
  %v9934 = vsel %vm958, %v9863, 0
  %v9937 = vsel %vm958, %v9868, 0
  %v9940 = vsel %vm958, %v9873, 0
  %v9943 = vsel %vm958, %v9878, 0
  %v9946 = vsel %vm958, %v9883, 0
  %v9949 = vsel %vm958, %v9888, 0
  %v9952 = vsel %vm958, %v9893, 0
  %v9955 = vsel %vm958, %v9898, 0
  %v9958 = vsel %vm958, %v9903, 0
  %9960 = vmatprep.subr.mxu0 0.0
  %9961 = vmatpush1.msra.mxu0 0.0
  %9962 = vmatprep.subr.mxu0 0.0
  %9963 = vmatpush1.msra.mxu0 0.0
  %9964 = vmatprep.subr.mxu0 0.0
  %9965 = vmatpush1.msra.mxu0 0.0
  %9966 = vmatprep.subr.mxu0 0.0
  %9967 = vmatpush1.msra.mxu0 0.0
  %9968 = vmatprep.subr.mxu0 0.0
  %9969 = vmatpush1.msra.mxu0 0.0
  %9970 = vmatprep.subr.mxu0 0.0
  %9971 = vmatpush1.msra.mxu0 0.0
  %9972 = vmatprep.subr.mxu0 0.0
  %9973 = vmatpush1.msra.mxu0 0.0
  %9974 = vmatprep.subr.mxu0 0.0
  %9975 = vmatpush1.msra.mxu0 0.0
  %9976 = vmatprep.subr.mxu0 0.0
  %9977 = vmatpush1.msra.mxu0 0.0
  %9978 = vmatprep.subr.mxu0 0.0
  %9979 = vmatpush1.msra.mxu0 0.0
  %9980 = vmatprep.subr.mxu0 0.0
  %9981 = vmatpush1.msra.mxu0 0.0
  %9982 = vmatprep.subr.mxu0 0.0
  %9983 = vmatpush1.msra.mxu0 0.0
  %9984 = vmatprep.subr.mxu0 0.0
  %9985 = vmatpush1.msra.mxu0 0.0
  %9986 = vmatprep.subr.mxu0 0.0
  %9987 = vmatpush1.msra.mxu0 0.0
  %9988 = vmatprep.subr.mxu0 0.0
  %9989 = vmatpush1.msra.mxu0 0.0
  %9990 = vmatprep.subr.mxu0 0.0
  %9991 = vmatpush1.msra.mxu0 %v6279
  %9992 = vmatprep.subr.mxu0 0.0
  %9993 = vmatpush2.msra.mxu0 0.0
  %9994 = vmatprep.subr.mxu0 0.0
  %9995 = vmatpush2.msra.mxu0 0.0
  %9996 = vmatprep.subr.mxu0 0.0
  %9997 = vmatpush2.msra.mxu0 0.0
  %9998 = vmatprep.subr.mxu0 0.0
  %9999 = vmatpush2.msra.mxu0 0.0
  %10000 = vmatprep.subr.mxu0 0.0
  %10001 = vmatpush2.msra.mxu0 0.0
  %10002 = vmatprep.subr.mxu0 0.0
  %10003 = vmatpush2.msra.mxu0 0.0
  %10004 = vmatprep.subr.mxu0 0.0
  %10005 = vmatpush2.msra.mxu0 0.0
  %10006 = vmatprep.subr.mxu0 0.0
  %10007 = vmatpush2.msra.mxu0 0.0
  %10008 = vmatprep.subr.mxu0 0.0
  %10009 = vmatpush2.msra.mxu0 0.0
  %10010 = vmatprep.subr.mxu0 0.0
  %10011 = vmatpush2.msra.mxu0 0.0
  %10012 = vmatprep.subr.mxu0 0.0
  %10013 = vmatpush2.msra.mxu0 0.0
  %10014 = vmatprep.subr.mxu0 0.0
  %10015 = vmatpush2.msra.mxu0 0.0
  %10016 = vmatprep.subr.mxu0 0.0
  %10017 = vmatpush2.msra.mxu0 0.0
  %10018 = vmatprep.subr.mxu0 0.0
  %10019 = vmatpush2.msra.mxu0 0.0
  %10020 = vmatprep.subr.mxu0 0.0
  %10021 = vmatpush2.msra.mxu0 0.0
  %10022 = vmatprep.subr.mxu0 0.0
  %10023 = vmatpush2.msra.mxu0 0.0
  %10024 = vmatprep.mubr.f32.mxu0 0.0
  %10025 = vmatmul.mubr.f32.gmra.mxu0 %v9907
  %v10026 = vpop.f32.mrf.mxu0
  %v10027 = vadd.f32 0.0, %v10026
  %v10028 = vpop.f32.mrf.mxu0
  %10029 = vmatprep.mubr.f32.mxu0 0.0
  %10030 = vmatmul.mubr.f32.gmra.mxu0 %v9910
  %v10031 = vpop.f32.mrf.mxu0
  %v10032 = vadd.f32 0.0, %v10031
  %v10033 = vpop.f32.mrf.mxu0
  %10034 = vmatprep.mubr.f32.mxu0 0.0
  %10035 = vmatmul.mubr.f32.gmra.mxu0 %v9913
  %v10036 = vpop.f32.mrf.mxu0
  %v10037 = vadd.f32 0.0, %v10036
  %v10038 = vpop.f32.mrf.mxu0
  %10039 = vmatprep.mubr.f32.mxu0 0.0
  %10040 = vmatmul.mubr.f32.gmra.mxu0 %v9916
  %v10041 = vpop.f32.mrf.mxu0
  %v10042 = vadd.f32 0.0, %v10041
  %v10043 = vpop.f32.mrf.mxu0
  %10044 = vmatprep.mubr.f32.mxu0 0.0
  %10045 = vmatmul.mubr.f32.gmra.mxu0 %v9919
  %v10046 = vpop.f32.mrf.mxu0
  %v10047 = vadd.f32 0.0, %v10046
  %v10048 = vpop.f32.mrf.mxu0
  %10049 = vmatprep.mubr.f32.mxu0 0.0
  %10050 = vmatmul.mubr.f32.gmra.mxu0 %v9922
  %v10051 = vpop.f32.mrf.mxu0
  %v10052 = vadd.f32 0.0, %v10051
  %v10053 = vpop.f32.mrf.mxu0
  %10054 = vmatprep.mubr.f32.mxu0 0.0
  %10055 = vmatmul.mubr.f32.gmra.mxu0 %v9925
  %v10056 = vpop.f32.mrf.mxu0
  %v10057 = vadd.f32 0.0, %v10056
  %v10058 = vpop.f32.mrf.mxu0
  %10059 = vmatprep.mubr.f32.mxu0 0.0
  %10060 = vmatmul.mubr.f32.gmra.mxu0 %v9928
  %v10061 = vpop.f32.mrf.mxu0
  %v10062 = vadd.f32 0.0, %v10061
  %v10063 = vpop.f32.mrf.mxu0
  %10064 = vmatprep.mubr.f32.mxu0 0.0
  %10065 = vmatmul.mubr.f32.gmra.mxu0 %v9931
  %v10066 = vpop.f32.mrf.mxu0
  %v10067 = vadd.f32 0.0, %v10066
  %v10068 = vpop.f32.mrf.mxu0
  %10069 = vmatprep.mubr.f32.mxu0 0.0
  %10070 = vmatmul.mubr.f32.gmra.mxu0 %v9934
  %v10071 = vpop.f32.mrf.mxu0
  %v10072 = vadd.f32 0.0, %v10071
  %v10073 = vpop.f32.mrf.mxu0
  %10074 = vmatprep.mubr.f32.mxu0 0.0
  %10075 = vmatmul.mubr.f32.gmra.mxu0 %v9937
  %v10076 = vpop.f32.mrf.mxu0
  %v10077 = vadd.f32 0.0, %v10076
  %v10078 = vpop.f32.mrf.mxu0
  %10079 = vmatprep.mubr.f32.mxu0 0.0
  %10080 = vmatmul.mubr.f32.gmra.mxu0 %v9940
  %v10081 = vpop.f32.mrf.mxu0
  %v10082 = vadd.f32 0.0, %v10081
  %v10083 = vpop.f32.mrf.mxu0
  %10084 = vmatprep.mubr.f32.mxu0 0.0
  %10085 = vmatmul.mubr.f32.gmra.mxu0 %v9943
  %v10086 = vpop.f32.mrf.mxu0
  %v10087 = vadd.f32 0.0, %v10086
  %v10088 = vpop.f32.mrf.mxu0
  %10089 = vmatprep.mubr.f32.mxu0 0.0
  %10090 = vmatmul.mubr.f32.gmra.mxu0 %v9946
  %v10091 = vpop.f32.mrf.mxu0
  %v10092 = vadd.f32 0.0, %v10091
  %v10093 = vpop.f32.mrf.mxu0
  %10094 = vmatprep.mubr.f32.mxu0 0.0
  %10095 = vmatmul.mubr.f32.gmra.mxu0 %v9949
  %v10096 = vpop.f32.mrf.mxu0
  %v10097 = vadd.f32 0.0, %v10096
  %v10098 = vpop.f32.mrf.mxu0
  %10099 = vmatprep.mubr.f32.mxu0 0.0
  %10100 = vmatmul.mubr.f32.gmra.mxu0 %v9952
  %v10101 = vpop.f32.mrf.mxu0
  %v10102 = vadd.f32 0.0, %v10101
  %v10103 = vpop.f32.mrf.mxu0
  %10104 = vmatprep.mubr.f32.mxu0 0.0
  %10105 = vmatmul.mubr.f32.gmra.mxu0 %v9955
  %v10106 = vpop.f32.mrf.mxu0
  %v10107 = vadd.f32 0.0, %v10106
  %v10108 = vpop.f32.mrf.mxu0
  %10109 = vmatprep.mubr.f32.mxu0 0.0
  %10110 = vmatmul.mubr.f32.gmra.mxu0 %v9958
  %v10111 = vpop.f32.mrf.mxu0
  %v10112 = vadd.f32 0.0, %v10111
  %v10113 = vpop.f32.mrf.mxu0
  %10114 = vdwg.mxu0
  %v10115 = vadd.f32 %v8928, %v10027
  %v10116 = vadd.f32 %v8933, %v10032
  %v10117 = vadd.f32 %v8938, %v10037
  %v10118 = vadd.f32 %v8943, %v10042
  %v10119 = vadd.f32 %v8948, %v10047
  %v10120 = vadd.f32 %v8953, %v10052
  %v10121 = vadd.f32 %v8958, %v10057
  %v10122 = vadd.f32 %v8963, %v10062
  %v10123 = vadd.f32 %v8968, %v10067
  %v10124 = vadd.f32 %v8973, %v10072
  %v10125 = vadd.f32 %v8978, %v10077
  %v10126 = vadd.f32 %v8983, %v10082
  %v10127 = vadd.f32 %v8988, %v10087
  %v10128 = vadd.f32 %v8993, %v10092
  %v10129 = vadd.f32 %v8998, %v10097
  %v10130 = vadd.f32 %v9003, %v10102
  %v10131 = vadd.f32 %v9008, %v10107
  %v10132 = vadd.f32 %v9013, %v10112
  %10133 = vrot.lane.b32.xlu0 %v6800, 104
  %v10134 = vpop.permute.xlu0 %10133
  %10135 = vrot.lane.b32.xlu0 %v6801, 104
  %v10136 = vpop.permute.xlu0 %10135
  %10137 = vrot.lane.b32.xlu0 %v6802, 104
  %v10138 = vpop.permute.xlu0 %10137
  %10139 = vrot.lane.b32.xlu0 %v6803, 104
  %v10140 = vpop.permute.xlu0 %10139
  %10141 = vrot.lane.b32.xlu0 %v6804, 104
  %v10142 = vpop.permute.xlu0 %10141
  %10143 = vrot.lane.b32.xlu0 %v6805, 104
  %v10144 = vpop.permute.xlu0 %10143
  %10145 = vrot.lane.b32.xlu0 %v6806, 104
  %v10146 = vpop.permute.xlu0 %10145
  %10147 = vrot.lane.b32.xlu0 %v6807, 104
  %v10148 = vpop.permute.xlu0 %10147
  %10149 = vrot.lane.b32.xlu0 %v6808, 104
  %v10150 = vpop.permute.xlu0 %10149
  %10151 = vrot.lane.b32.xlu0 %v6712, 72
  %v10152 = vpop.permute.xlu0 %10151
  %10153 = vrot.lane.b32.xlu0 %v6717, 72
  %v10154 = vpop.permute.xlu0 %10153
  %10155 = vrot.lane.b32.xlu0 %v6722, 72
  %v10156 = vpop.permute.xlu0 %10155
  %10157 = vrot.lane.b32.xlu0 %v6727, 72
  %v10158 = vpop.permute.xlu0 %10157
  %10159 = vrot.lane.b32.xlu0 %v6732, 72
  %v10160 = vpop.permute.xlu0 %10159
  %10161 = vrot.lane.b32.xlu0 %v6737, 72
  %v10162 = vpop.permute.xlu0 %10161
  %10163 = vrot.lane.b32.xlu0 %v6742, 72
  %v10164 = vpop.permute.xlu0 %10163
  %10165 = vrot.lane.b32.xlu0 %v6747, 72
  %v10166 = vpop.permute.xlu0 %10165
  %10167 = vrot.lane.b32.xlu0 %v6752, 72
  %v10168 = vpop.permute.xlu0 %10167
  %v10169 = vsel %vm958, %v10134, 0
  %v10171 = vsel %vm958, %v10136, 0
  %v10173 = vsel %vm958, %v10138, 0
  %v10175 = vsel %vm958, %v10140, 0
  %v10177 = vsel %vm958, %v10142, 0
  %v10179 = vsel %vm958, %v10144, 0
  %v10181 = vsel %vm958, %v10146, 0
  %v10183 = vsel %vm958, %v10148, 0
  %v10185 = vsel %vm958, %v10150, 0
  %v10187 = vsel %vm958, %v10152, 0
  %v10189 = vsel %vm958, %v10154, 0
  %v10191 = vsel %vm958, %v10156, 0
  %v10193 = vsel %vm958, %v10158, 0
  %v10195 = vsel %vm958, %v10160, 0
  %v10197 = vsel %vm958, %v10162, 0
  %v10199 = vsel %vm958, %v10164, 0
  %v10201 = vsel %vm958, %v10166, 0
  %v10203 = vsel %vm958, %v10168, 0
  %10205 = vmatprep.subr.mxu0 0.0
  %10206 = vmatpush1.xpose.msra.mxu0 0.0
  %10207 = vmatprep.subr.mxu0 0.0
  %10208 = vmatpush1.xpose.msra.mxu0 0.0
  %10209 = vmatprep.subr.mxu0 0.0
  %10210 = vmatpush1.xpose.msra.mxu0 0.0
  %10211 = vmatprep.subr.mxu0 0.0
  %10212 = vmatpush1.xpose.msra.mxu0 0.0
  %10213 = vmatprep.subr.mxu0 0.0
  %10214 = vmatpush1.xpose.msra.mxu0 0.0
  %10215 = vmatprep.subr.mxu0 0.0
  %10216 = vmatpush1.xpose.msra.mxu0 0.0
  %10217 = vmatprep.subr.mxu0 0.0
  %10218 = vmatpush1.xpose.msra.mxu0 0.0
  %10219 = vmatprep.subr.mxu0 0.0
  %10220 = vmatpush1.xpose.msra.mxu0 %v10203
  %10221 = vmatprep.subr.mxu0 0.0
  %10222 = vmatpush1.xpose.msra.mxu0 %v10201
  %10223 = vmatprep.subr.mxu0 0.0
  %10224 = vmatpush1.xpose.msra.mxu0 %v10199
  %10225 = vmatprep.subr.mxu0 0.0
  %10226 = vmatpush1.xpose.msra.mxu0 %v10197
  %10227 = vmatprep.subr.mxu0 0.0
  %10228 = vmatpush1.xpose.msra.mxu0 %v10195
  %10229 = vmatprep.subr.mxu0 0.0
  %10230 = vmatpush1.xpose.msra.mxu0 %v10193
  %10231 = vmatprep.subr.mxu0 0.0
  %10232 = vmatpush1.xpose.msra.mxu0 %v10191
  %10233 = vmatprep.subr.mxu0 0.0
  %10234 = vmatpush1.xpose.msra.mxu0 %v10189
  %10235 = vmatprep.subr.mxu0 0.0
  %10236 = vmatpush1.xpose.msra.mxu0 %v10187
  %10237 = vmatprep.subr.mxu0 0.0
  %10238 = vmatpush2.xpose.msra.mxu0 0.0
  %10239 = vmatprep.subr.mxu0 0.0
  %10240 = vmatpush2.xpose.msra.mxu0 0.0
  %10241 = vmatprep.subr.mxu0 0.0
  %10242 = vmatpush2.xpose.msra.mxu0 0.0
  %10243 = vmatprep.subr.mxu0 0.0
  %10244 = vmatpush2.xpose.msra.mxu0 0.0
  %10245 = vmatprep.subr.mxu0 0.0
  %10246 = vmatpush2.xpose.msra.mxu0 0.0
  %10247 = vmatprep.subr.mxu0 0.0
  %10248 = vmatpush2.xpose.msra.mxu0 0.0
  %10249 = vmatprep.subr.mxu0 0.0
  %10250 = vmatpush2.xpose.msra.mxu0 0.0
  %10251 = vmatprep.subr.mxu0 0.0
  %10252 = vmatpush2.xpose.msra.mxu0 0.0
  %10253 = vmatprep.subr.mxu0 0.0
  %10254 = vmatpush2.xpose.msra.mxu0 0.0
  %10255 = vmatprep.subr.mxu0 0.0
  %10256 = vmatpush2.xpose.msra.mxu0 0.0
  %10257 = vmatprep.subr.mxu0 0.0
  %10258 = vmatpush2.xpose.msra.mxu0 0.0
  %10259 = vmatprep.subr.mxu0 0.0
  %10260 = vmatpush2.xpose.msra.mxu0 0.0
  %10261 = vmatprep.subr.mxu0 0.0
  %10262 = vmatpush2.xpose.msra.mxu0 0.0
  %10263 = vmatprep.subr.mxu0 0.0
  %10264 = vmatpush2.xpose.msra.mxu0 0.0
  %10265 = vmatprep.subr.mxu0 0.0
  %10266 = vmatpush2.xpose.msra.mxu0 0.0
  %10267 = vmatprep.subr.mxu0 0.0
  %10268 = vmatpush2.xpose.msra.mxu0 0.0
  %10269 = vmatprep.mubr.f32.mxu0 0.0
  %10270 = vmatmul.mubr.f32.gmra.mxu0 %v10169
  %v10271 = vpop.f32.mrf.mxu0
  %v10272 = vadd.f32 %v385, %v10271
  %v10273 = vpop.f32.mrf.mxu0
  %10274 = vmatprep.mubr.f32.mxu0 0.0
  %10275 = vmatmul.mubr.f32.gmra.mxu0 %v10171
  %v10276 = vpop.f32.mrf.mxu0
  %v10277 = vadd.f32 %v385, %v10276
  %v10278 = vpop.f32.mrf.mxu0
  %10279 = vmatprep.mubr.f32.mxu0 0.0
  %10280 = vmatmul.mubr.f32.gmra.mxu0 %v10173
  %v10281 = vpop.f32.mrf.mxu0
  %v10282 = vadd.f32 %v385, %v10281
  %v10283 = vpop.f32.mrf.mxu0
  %10284 = vmatprep.mubr.f32.mxu0 0.0
  %10285 = vmatmul.mubr.f32.gmra.mxu0 %v10175
  %v10286 = vpop.f32.mrf.mxu0
  %v10287 = vadd.f32 %v385, %v10286
  %v10288 = vpop.f32.mrf.mxu0
  %10289 = vmatprep.mubr.f32.mxu0 0.0
  %10290 = vmatmul.mubr.f32.gmra.mxu0 %v10177
  %v10291 = vpop.f32.mrf.mxu0
  %v10292 = vadd.f32 %v385, %v10291
  %v10293 = vpop.f32.mrf.mxu0
  %10294 = vmatprep.mubr.f32.mxu0 0.0
  %10295 = vmatmul.mubr.f32.gmra.mxu0 %v10179
  %v10296 = vpop.f32.mrf.mxu0
  %v10297 = vadd.f32 %v385, %v10296
  %v10298 = vpop.f32.mrf.mxu0
  %10299 = vmatprep.mubr.f32.mxu0 0.0
  %10300 = vmatmul.mubr.f32.gmra.mxu0 %v10181
  %v10301 = vpop.f32.mrf.mxu0
  %v10302 = vadd.f32 %v385, %v10301
  %v10303 = vpop.f32.mrf.mxu0
  %10304 = vmatprep.mubr.f32.mxu0 0.0
  %10305 = vmatmul.mubr.f32.gmra.mxu0 %v10183
  %v10306 = vpop.f32.mrf.mxu0
  %v10307 = vadd.f32 %v385, %v10306
  %v10308 = vpop.f32.mrf.mxu0
  %10309 = vmatprep.mubr.f32.mxu0 0.0
  %10310 = vmatmul.mubr.f32.gmra.mxu0 %v10185
  %v10311 = vpop.f32.mrf.mxu0
  %v10312 = vadd.f32 %v385, %v10311
  %v10313 = vpop.f32.mrf.mxu0
  %10314 = vdwg.mxu0
  %10315 = vrot.lane.b32.xlu0 %v6809, 104
  %v10316 = vpop.permute.xlu0 %10315
  %10317 = vrot.lane.b32.xlu0 %v6810, 104
  %v10318 = vpop.permute.xlu0 %10317
  %10319 = vrot.lane.b32.xlu0 %v6811, 104
  %v10320 = vpop.permute.xlu0 %10319
  %10321 = vrot.lane.b32.xlu0 %v6812, 104
  %v10322 = vpop.permute.xlu0 %10321
  %10323 = vrot.lane.b32.xlu0 %v6813, 104
  %v10324 = vpop.permute.xlu0 %10323
  %10325 = vrot.lane.b32.xlu0 %v6814, 104
  %v10326 = vpop.permute.xlu0 %10325
  %10327 = vrot.lane.b32.xlu0 %v6815, 104
  %v10328 = vpop.permute.xlu0 %10327
  %10329 = vrot.lane.b32.xlu0 %v6816, 104
  %v10330 = vpop.permute.xlu0 %10329
  %10331 = vrot.lane.b32.xlu0 %v6817, 104
  %v10332 = vpop.permute.xlu0 %10331
  %10333 = vrot.lane.b32.xlu0 %v6757, 72
  %v10334 = vpop.permute.xlu0 %10333
  %10335 = vrot.lane.b32.xlu0 %v6762, 72
  %v10336 = vpop.permute.xlu0 %10335
  %10337 = vrot.lane.b32.xlu0 %v6767, 72
  %v10338 = vpop.permute.xlu0 %10337
  %10339 = vrot.lane.b32.xlu0 %v6772, 72
  %v10340 = vpop.permute.xlu0 %10339
  %10341 = vrot.lane.b32.xlu0 %v6777, 72
  %v10342 = vpop.permute.xlu0 %10341
  %10343 = vrot.lane.b32.xlu0 %v6782, 72
  %v10344 = vpop.permute.xlu0 %10343
  %10345 = vrot.lane.b32.xlu0 %v6787, 72
  %v10346 = vpop.permute.xlu0 %10345
  %10347 = vrot.lane.b32.xlu0 %v6792, 72
  %v10348 = vpop.permute.xlu0 %10347
  %10349 = vrot.lane.b32.xlu0 %v6797, 72
  %v10350 = vpop.permute.xlu0 %10349
  %v10351 = vsel %vm958, %v10316, 0
  %v10353 = vsel %vm958, %v10318, 0
  %v10355 = vsel %vm958, %v10320, 0
  %v10357 = vsel %vm958, %v10322, 0
  %v10359 = vsel %vm958, %v10324, 0
  %v10361 = vsel %vm958, %v10326, 0
  %v10363 = vsel %vm958, %v10328, 0
  %v10365 = vsel %vm958, %v10330, 0
  %v10367 = vsel %vm958, %v10332, 0
  %v10369 = vsel %vm958, %v10334, 0
  %v10371 = vsel %vm958, %v10336, 0
  %v10373 = vsel %vm958, %v10338, 0
  %v10375 = vsel %vm958, %v10340, 0
  %v10377 = vsel %vm958, %v10342, 0
  %v10379 = vsel %vm958, %v10344, 0
  %v10381 = vsel %vm958, %v10346, 0
  %v10383 = vsel %vm958, %v10348, 0
  %v10385 = vsel %vm958, %v10350, 0
  %10387 = vmatprep.subr.mxu0 0.0
  %10388 = vmatpush1.xpose.msra.mxu0 0.0
  %10389 = vmatprep.subr.mxu0 0.0
  %10390 = vmatpush1.xpose.msra.mxu0 0.0
  %10391 = vmatprep.subr.mxu0 0.0
  %10392 = vmatpush1.xpose.msra.mxu0 0.0
  %10393 = vmatprep.subr.mxu0 0.0
  %10394 = vmatpush1.xpose.msra.mxu0 0.0
  %10395 = vmatprep.subr.mxu0 0.0
  %10396 = vmatpush1.xpose.msra.mxu0 0.0
  %10397 = vmatprep.subr.mxu0 0.0
  %10398 = vmatpush1.xpose.msra.mxu0 0.0
  %10399 = vmatprep.subr.mxu0 0.0
  %10400 = vmatpush1.xpose.msra.mxu0 0.0
  %10401 = vmatprep.subr.mxu0 0.0
  %10402 = vmatpush1.xpose.msra.mxu0 %v10385
  %10403 = vmatprep.subr.mxu0 0.0
  %10404 = vmatpush1.xpose.msra.mxu0 %v10383
  %10405 = vmatprep.subr.mxu0 0.0
  %10406 = vmatpush1.xpose.msra.mxu0 %v10381
  %10407 = vmatprep.subr.mxu0 0.0
  %10408 = vmatpush1.xpose.msra.mxu0 %v10379
  %10409 = vmatprep.subr.mxu0 0.0
  %10410 = vmatpush1.xpose.msra.mxu0 %v10377
  %10411 = vmatprep.subr.mxu0 0.0
  %10412 = vmatpush1.xpose.msra.mxu0 %v10375
  %10413 = vmatprep.subr.mxu0 0.0
  %10414 = vmatpush1.xpose.msra.mxu0 %v10373
  %10415 = vmatprep.subr.mxu0 0.0
  %10416 = vmatpush1.xpose.msra.mxu0 %v10371
  %10417 = vmatprep.subr.mxu0 0.0
  %10418 = vmatpush1.xpose.msra.mxu0 %v10369
  %10419 = vmatprep.subr.mxu0 0.0
  %10420 = vmatpush2.xpose.msra.mxu0 0.0
  %10421 = vmatprep.subr.mxu0 0.0
  %10422 = vmatpush2.xpose.msra.mxu0 0.0
  %10423 = vmatprep.subr.mxu0 0.0
  %10424 = vmatpush2.xpose.msra.mxu0 0.0
  %10425 = vmatprep.subr.mxu0 0.0
  %10426 = vmatpush2.xpose.msra.mxu0 0.0
  %10427 = vmatprep.subr.mxu0 0.0
  %10428 = vmatpush2.xpose.msra.mxu0 0.0
  %10429 = vmatprep.subr.mxu0 0.0
  %10430 = vmatpush2.xpose.msra.mxu0 0.0
  %10431 = vmatprep.subr.mxu0 0.0
  %10432 = vmatpush2.xpose.msra.mxu0 0.0
  %10433 = vmatprep.subr.mxu0 0.0
  %10434 = vmatpush2.xpose.msra.mxu0 0.0
  %10435 = vmatprep.subr.mxu0 0.0
  %10436 = vmatpush2.xpose.msra.mxu0 0.0
  %10437 = vmatprep.subr.mxu0 0.0
  %10438 = vmatpush2.xpose.msra.mxu0 0.0
  %10439 = vmatprep.subr.mxu0 0.0
  %10440 = vmatpush2.xpose.msra.mxu0 0.0
  %10441 = vmatprep.subr.mxu0 0.0
  %10442 = vmatpush2.xpose.msra.mxu0 0.0
  %10443 = vmatprep.subr.mxu0 0.0
  %10444 = vmatpush2.xpose.msra.mxu0 0.0
  %10445 = vmatprep.subr.mxu0 0.0
  %10446 = vmatpush2.xpose.msra.mxu0 0.0
  %10447 = vmatprep.subr.mxu0 0.0
  %10448 = vmatpush2.xpose.msra.mxu0 0.0
  %10449 = vmatprep.subr.mxu0 0.0
  %10450 = vmatpush2.xpose.msra.mxu0 0.0
  %10451 = vmatprep.mubr.f32.mxu0 0.0
  %10452 = vmatmul.mubr.f32.gmra.mxu0 %v10351
  %v10453 = vpop.f32.mrf.mxu0
  %v10454 = vadd.f32 %v385, %v10453
  %v10455 = vpop.f32.mrf.mxu0
  %10456 = vmatprep.mubr.f32.mxu0 0.0
  %10457 = vmatmul.mubr.f32.gmra.mxu0 %v10353
  %v10458 = vpop.f32.mrf.mxu0
  %v10459 = vadd.f32 %v385, %v10458
  %v10460 = vpop.f32.mrf.mxu0
  %10461 = vmatprep.mubr.f32.mxu0 0.0
  %10462 = vmatmul.mubr.f32.gmra.mxu0 %v10355
  %v10463 = vpop.f32.mrf.mxu0
  %v10464 = vadd.f32 %v385, %v10463
  %v10465 = vpop.f32.mrf.mxu0
  %10466 = vmatprep.mubr.f32.mxu0 0.0
  %10467 = vmatmul.mubr.f32.gmra.mxu0 %v10357
  %v10468 = vpop.f32.mrf.mxu0
  %v10469 = vadd.f32 %v385, %v10468
  %v10470 = vpop.f32.mrf.mxu0
  %10471 = vmatprep.mubr.f32.mxu0 0.0
  %10472 = vmatmul.mubr.f32.gmra.mxu0 %v10359
  %v10473 = vpop.f32.mrf.mxu0
  %v10474 = vadd.f32 %v385, %v10473
  %v10475 = vpop.f32.mrf.mxu0
  %10476 = vmatprep.mubr.f32.mxu0 0.0
  %10477 = vmatmul.mubr.f32.gmra.mxu0 %v10361
  %v10478 = vpop.f32.mrf.mxu0
  %v10479 = vadd.f32 %v385, %v10478
  %v10480 = vpop.f32.mrf.mxu0
  %10481 = vmatprep.mubr.f32.mxu0 0.0
  %10482 = vmatmul.mubr.f32.gmra.mxu0 %v10363
  %v10483 = vpop.f32.mrf.mxu0
  %v10484 = vadd.f32 %v385, %v10483
  %v10485 = vpop.f32.mrf.mxu0
  %10486 = vmatprep.mubr.f32.mxu0 0.0
  %10487 = vmatmul.mubr.f32.gmra.mxu0 %v10365
  %v10488 = vpop.f32.mrf.mxu0
  %v10489 = vadd.f32 %v385, %v10488
  %v10490 = vpop.f32.mrf.mxu0
  %10491 = vmatprep.mubr.f32.mxu0 0.0
  %10492 = vmatmul.mubr.f32.gmra.mxu0 %v10367
  %v10493 = vpop.f32.mrf.mxu0
  %v10494 = vadd.f32 %v385, %v10493
  %v10495 = vpop.f32.mrf.mxu0
  %10496 = vdwg.mxu0
  %v10497 = vsel %vm1296, %v10272, -inf
  %10498 = vmax.xlane.f32.xlu0 %v10497
  %v10499 = vpop.xlane.xlu0 %10498
  %v10500 = vsel %vm1296, %v10277, -inf
  %10501 = vmax.xlane.f32.xlu0 %v10500
  %v10502 = vpop.xlane.xlu0 %10501
  %v10503 = vsel %vm1296, %v10282, -inf
  %10504 = vmax.xlane.f32.xlu0 %v10503
  %v10505 = vpop.xlane.xlu0 %10504
  %v10506 = vsel %vm1296, %v10287, -inf
  %10507 = vmax.xlane.f32.xlu0 %v10506
  %v10508 = vpop.xlane.xlu0 %10507
  %v10509 = vsel %vm1296, %v10292, -inf
  %10510 = vmax.xlane.f32.xlu0 %v10509
  %v10511 = vpop.xlane.xlu0 %10510
  %v10512 = vsel %vm1296, %v10297, -inf
  %10513 = vmax.xlane.f32.xlu0 %v10512
  %v10514 = vpop.xlane.xlu0 %10513
  %v10515 = vsel %vm1296, %v10302, -inf
  %10516 = vmax.xlane.f32.xlu0 %v10515
  %v10517 = vpop.xlane.xlu0 %10516
  %v10518 = vsel %vm1296, %v10307, -inf
  %10519 = vmax.xlane.f32.xlu0 %v10518
  %v10520 = vpop.xlane.xlu0 %10519
  %v10521 = vsel %vm1296, %v10312, -inf
  %10522 = vmax.xlane.f32.xlu0 %v10521
  %v10523 = vpop.xlane.xlu0 %10522
  %v10524 = vsel %vm1296, %v10454, -inf
  %10525 = vmax.xlane.f32.xlu0 %v10524
  %v10526 = vpop.xlane.xlu0 %10525
  %v10527 = vsel %vm1296, %v10459, -inf
  %10528 = vmax.xlane.f32.xlu0 %v10527
  %v10529 = vpop.xlane.xlu0 %10528
  %v10530 = vsel %vm1296, %v10464, -inf
  %10531 = vmax.xlane.f32.xlu0 %v10530
  %v10532 = vpop.xlane.xlu0 %10531
  %v10533 = vsel %vm1296, %v10469, -inf
  %10534 = vmax.xlane.f32.xlu0 %v10533
  %v10535 = vpop.xlane.xlu0 %10534
  %v10536 = vsel %vm1296, %v10474, -inf
  %10537 = vmax.xlane.f32.xlu0 %v10536
  %v10538 = vpop.xlane.xlu0 %10537
  %v10539 = vsel %vm1296, %v10479, -inf
  %10540 = vmax.xlane.f32.xlu0 %v10539
  %v10541 = vpop.xlane.xlu0 %10540
  %v10542 = vsel %vm1296, %v10484, -inf
  %10543 = vmax.xlane.f32.xlu0 %v10542
  %v10544 = vpop.xlane.xlu0 %10543
  %v10545 = vsel %vm1296, %v10489, -inf
  %10546 = vmax.xlane.f32.xlu0 %v10545
  %v10547 = vpop.xlane.xlu0 %10546
  %v10548 = vsel %vm1296, %v10494, -inf
  %10549 = vmax.xlane.f32.xlu0 %v10548
  %v10550 = vpop.xlane.xlu0 %10549
  %v10551 = vsub.f32 %v10272, %v10499
  %v10552 = vsub.f32 %v10277, %v10502
  %v10553 = vsub.f32 %v10282, %v10505
  %v10554 = vsub.f32 %v10287, %v10508
  %v10555 = vsub.f32 %v10292, %v10511
  %v10556 = vsub.f32 %v10297, %v10514
  %v10557 = vsub.f32 %v10302, %v10517
  %v10558 = vsub.f32 %v10307, %v10520
  %v10559 = vsub.f32 %v10312, %v10523
  %v10560 = vsub.f32 %v10454, %v10526
  %v10561 = vsub.f32 %v10459, %v10529
  %v10562 = vsub.f32 %v10464, %v10532
  %v10563 = vsub.f32 %v10469, %v10535
  %v10564 = vsub.f32 %v10474, %v10538
  %v10565 = vsub.f32 %v10479, %v10541
  %v10566 = vsub.f32 %v10484, %v10544
  %v10567 = vsub.f32 %v10489, %v10547
  %v10568 = vsub.f32 %v10494, %v10550
  %v10569 = vmul.f32 %v10551, 1.442695
  %v10570 = vpow.pop %v10569
  %v10571 = vmul.f32 %v10552, 1.442695
  %v10572 = vpow.pop %v10571
  %v10573 = vmul.f32 %v10553, 1.442695
  %v10574 = vpow.pop %v10573
  %v10575 = vmul.f32 %v10554, 1.442695
  %v10576 = vpow.pop %v10575
  %v10577 = vmul.f32 %v10555, 1.442695
  %v10578 = vpow.pop %v10577
  %v10579 = vmul.f32 %v10556, 1.442695
  %v10580 = vpow.pop %v10579
  %v10581 = vmul.f32 %v10557, 1.442695
  %v10582 = vpow.pop %v10581
  %v10583 = vmul.f32 %v10558, 1.442695
  %v10584 = vpow.pop %v10583
  %v10585 = vmul.f32 %v10559, 1.442695
  %v10586 = vpow.pop %v10585
  %v10587 = vmul.f32 %v10560, 1.442695
  %v10588 = vpow.pop %v10587
  %v10589 = vmul.f32 %v10561, 1.442695
  %v10590 = vpow.pop %v10589
  %v10591 = vmul.f32 %v10562, 1.442695
  %v10592 = vpow.pop %v10591
  %v10593 = vmul.f32 %v10563, 1.442695
  %v10594 = vpow.pop %v10593
  %v10595 = vmul.f32 %v10564, 1.442695
  %v10596 = vpow.pop %v10595
  %v10597 = vmul.f32 %v10565, 1.442695
  %v10598 = vpow.pop %v10597
  %v10599 = vmul.f32 %v10566, 1.442695
  %v10600 = vpow.pop %v10599
  %v10601 = vmul.f32 %v10567, 1.442695
  %v10602 = vpow.pop %v10601
  %v10603 = vmul.f32 %v10568, 1.442695
  %v10604 = vpow.pop %v10603
  %v10605 = vsel %vm1296, %v10570, 0.0
  %10606 = vadd.xlane.f32.xlu0 %v10605
  %v10607 = vpop.xlane.xlu0 %10606
  %v10608 = vsel %vm1296, %v10572, 0.0
  %10609 = vadd.xlane.f32.xlu0 %v10608
  %v10610 = vpop.xlane.xlu0 %10609
  %v10611 = vsel %vm1296, %v10574, 0.0
  %10612 = vadd.xlane.f32.xlu0 %v10611
  %v10613 = vpop.xlane.xlu0 %10612
  %v10614 = vsel %vm1296, %v10576, 0.0
  %10615 = vadd.xlane.f32.xlu0 %v10614
  %v10616 = vpop.xlane.xlu0 %10615
  %v10617 = vsel %vm1296, %v10578, 0.0
  %10618 = vadd.xlane.f32.xlu0 %v10617
  %v10619 = vpop.xlane.xlu0 %10618
  %v10620 = vsel %vm1296, %v10580, 0.0
  %10621 = vadd.xlane.f32.xlu0 %v10620
  %v10622 = vpop.xlane.xlu0 %10621
  %v10623 = vsel %vm1296, %v10582, 0.0
  %10624 = vadd.xlane.f32.xlu0 %v10623
  %v10625 = vpop.xlane.xlu0 %10624
  %v10626 = vsel %vm1296, %v10584, 0.0
  %10627 = vadd.xlane.f32.xlu0 %v10626
  %v10628 = vpop.xlane.xlu0 %10627
  %v10629 = vsel %vm1296, %v10586, 0.0
  %10630 = vadd.xlane.f32.xlu0 %v10629
  %v10631 = vpop.xlane.xlu0 %10630
  %v10632 = vsel %vm1296, %v10588, 0.0
  %10633 = vadd.xlane.f32.xlu0 %v10632
  %v10634 = vpop.xlane.xlu0 %10633
  %v10635 = vsel %vm1296, %v10590, 0.0
  %10636 = vadd.xlane.f32.xlu0 %v10635
  %v10637 = vpop.xlane.xlu0 %10636
  %v10638 = vsel %vm1296, %v10592, 0.0
  %10639 = vadd.xlane.f32.xlu0 %v10638
  %v10640 = vpop.xlane.xlu0 %10639
  %v10641 = vsel %vm1296, %v10594, 0.0
  %10642 = vadd.xlane.f32.xlu0 %v10641
  %v10643 = vpop.xlane.xlu0 %10642
  %v10644 = vsel %vm1296, %v10596, 0.0
  %10645 = vadd.xlane.f32.xlu0 %v10644
  %v10646 = vpop.xlane.xlu0 %10645
  %v10647 = vsel %vm1296, %v10598, 0.0
  %10648 = vadd.xlane.f32.xlu0 %v10647
  %v10649 = vpop.xlane.xlu0 %10648
  %v10650 = vsel %vm1296, %v10600, 0.0
  %10651 = vadd.xlane.f32.xlu0 %v10650
  %v10652 = vpop.xlane.xlu0 %10651
  %v10653 = vsel %vm1296, %v10602, 0.0
  %10654 = vadd.xlane.f32.xlu0 %v10653
  %v10655 = vpop.xlane.xlu0 %10654
  %v10656 = vsel %vm1296, %v10604, 0.0
  %10657 = vadd.xlane.f32.xlu0 %v10656
  %v10658 = vpop.xlane.xlu0 %10657
  %v10659 = vrcp.pop %v10607
  %v10660 = vrcp.pop %v10610
  %v10661 = vrcp.pop %v10613
  %v10662 = vrcp.pop %v10616
  %v10663 = vrcp.pop %v10619
  %v10664 = vrcp.pop %v10622
  %v10665 = vrcp.pop %v10625
  %v10666 = vrcp.pop %v10628
  %v10667 = vrcp.pop %v10631
  %v10668 = vrcp.pop %v10634
  %v10669 = vrcp.pop %v10637
  %v10670 = vrcp.pop %v10640
  %v10671 = vrcp.pop %v10643
  %v10672 = vrcp.pop %v10646
  %v10673 = vrcp.pop %v10649
  %v10674 = vrcp.pop %v10652
  %v10675 = vrcp.pop %v10655
  %v10676 = vrcp.pop %v10658
  %v10677 = vmul.f32 %v10570, %v10659
  %v10678 = vmul.f32 %v10572, %v10660
  %v10679 = vmul.f32 %v10574, %v10661
  %v10680 = vmul.f32 %v10576, %v10662
  %v10681 = vmul.f32 %v10578, %v10663
  %v10682 = vmul.f32 %v10580, %v10664
  %v10683 = vmul.f32 %v10582, %v10665
  %v10684 = vmul.f32 %v10584, %v10666
  %v10685 = vmul.f32 %v10586, %v10667
  %v10686 = vmul.f32 %v10588, %v10668
  %v10687 = vmul.f32 %v10590, %v10669
  %v10688 = vmul.f32 %v10592, %v10670
  %v10689 = vmul.f32 %v10594, %v10671
  %v10690 = vmul.f32 %v10596, %v10672
  %v10691 = vmul.f32 %v10598, %v10673
  %v10692 = vmul.f32 %v10600, %v10674
  %v10693 = vmul.f32 %v10602, %v10675
  %v10694 = vmul.f32 %v10604, %v10676
  %10695 = vrot.lane.b32.xlu0 %v6712, 40
  %v10696 = vpop.permute.xlu0 %10695
  %10697 = vrot.lane.b32.xlu0 %v6717, 40
  %v10698 = vpop.permute.xlu0 %10697
  %10699 = vrot.lane.b32.xlu0 %v6722, 40
  %v10700 = vpop.permute.xlu0 %10699
  %10701 = vrot.lane.b32.xlu0 %v6727, 40
  %v10702 = vpop.permute.xlu0 %10701
  %10703 = vrot.lane.b32.xlu0 %v6732, 40
  %v10704 = vpop.permute.xlu0 %10703
  %10705 = vrot.lane.b32.xlu0 %v6737, 40
  %v10706 = vpop.permute.xlu0 %10705
  %10707 = vrot.lane.b32.xlu0 %v6742, 40
  %v10708 = vpop.permute.xlu0 %10707
  %10709 = vrot.lane.b32.xlu0 %v6747, 40
  %v10710 = vpop.permute.xlu0 %10709
  %10711 = vrot.lane.b32.xlu0 %v6752, 40
  %v10712 = vpop.permute.xlu0 %10711
  %v10723 = vsel %vm1296, %v10677, 0
  %v10726 = vsel %vm1296, %v10678, 0
  %v10729 = vsel %vm1296, %v10679, 0
  %v10732 = vsel %vm1296, %v10680, 0
  %v10735 = vsel %vm1296, %v10681, 0
  %v10738 = vsel %vm1296, %v10682, 0
  %v10741 = vsel %vm1296, %v10683, 0
  %v10744 = vsel %vm1296, %v10684, 0
  %v10747 = vsel %vm1296, %v10685, 0
  %10749 = vmatprep.subr.mxu0 0.0
  %10750 = vmatpush1.msra.mxu0 0.0
  %10751 = vmatprep.subr.mxu0 0.0
  %10752 = vmatpush1.msra.mxu0 0.0
  %10753 = vmatprep.subr.mxu0 0.0
  %10754 = vmatpush1.msra.mxu0 0.0
  %10755 = vmatprep.subr.mxu0 0.0
  %10756 = vmatpush1.msra.mxu0 0.0
  %10757 = vmatprep.subr.mxu0 0.0
  %10758 = vmatpush1.msra.mxu0 0.0
  %10759 = vmatprep.subr.mxu0 0.0
  %10760 = vmatpush1.msra.mxu0 0.0
  %10761 = vmatprep.subr.mxu0 0.0
  %10762 = vmatpush1.msra.mxu0 0.0
  %10763 = vmatprep.subr.mxu0 0.0
  %10764 = vmatpush1.msra.mxu0 %v10712
  %10765 = vmatprep.subr.mxu0 0.0
  %10766 = vmatpush1.msra.mxu0 %v10710
  %10767 = vmatprep.subr.mxu0 0.0
  %10768 = vmatpush1.msra.mxu0 %v10708
  %10769 = vmatprep.subr.mxu0 0.0
  %10770 = vmatpush1.msra.mxu0 %v10706
  %10771 = vmatprep.subr.mxu0 0.0
  %10772 = vmatpush1.msra.mxu0 %v10704
  %10773 = vmatprep.subr.mxu0 0.0
  %10774 = vmatpush1.msra.mxu0 %v10702
  %10775 = vmatprep.subr.mxu0 0.0
  %10776 = vmatpush1.msra.mxu0 %v10700
  %10777 = vmatprep.subr.mxu0 0.0
  %10778 = vmatpush1.msra.mxu0 %v10698
  %10779 = vmatprep.subr.mxu0 0.0
  %10780 = vmatpush1.msra.mxu0 %v10696
  %10781 = vmatprep.subr.mxu0 0.0
  %10782 = vmatpush2.msra.mxu0 0.0
  %10783 = vmatprep.subr.mxu0 0.0
  %10784 = vmatpush2.msra.mxu0 0.0
  %10785 = vmatprep.subr.mxu0 0.0
  %10786 = vmatpush2.msra.mxu0 0.0
  %10787 = vmatprep.subr.mxu0 0.0
  %10788 = vmatpush2.msra.mxu0 0.0
  %10789 = vmatprep.subr.mxu0 0.0
  %10790 = vmatpush2.msra.mxu0 0.0
  %10791 = vmatprep.subr.mxu0 0.0
  %10792 = vmatpush2.msra.mxu0 0.0
  %10793 = vmatprep.subr.mxu0 0.0
  %10794 = vmatpush2.msra.mxu0 0.0
  %10795 = vmatprep.subr.mxu0 0.0
  %10796 = vmatpush2.msra.mxu0 0.0
  %10797 = vmatprep.subr.mxu0 0.0
  %10798 = vmatpush2.msra.mxu0 0.0
  %10799 = vmatprep.subr.mxu0 0.0
  %10800 = vmatpush2.msra.mxu0 0.0
  %10801 = vmatprep.subr.mxu0 0.0
  %10802 = vmatpush2.msra.mxu0 0.0
  %10803 = vmatprep.subr.mxu0 0.0
  %10804 = vmatpush2.msra.mxu0 0.0
  %10805 = vmatprep.subr.mxu0 0.0
  %10806 = vmatpush2.msra.mxu0 0.0
  %10807 = vmatprep.subr.mxu0 0.0
  %10808 = vmatpush2.msra.mxu0 0.0
  %10809 = vmatprep.subr.mxu0 0.0
  %10810 = vmatpush2.msra.mxu0 0.0
  %10811 = vmatprep.subr.mxu0 0.0
  %10812 = vmatpush2.msra.mxu0 0.0
  %10813 = vmatprep.mubr.f32.mxu0 0.0
  %10814 = vmatmul.mubr.f32.gmra.mxu0 %v10723
  %v10815 = vpop.f32.mrf.mxu0
  %v10816 = vadd.f32 0.0, %v10815
  %v10817 = vpop.f32.mrf.mxu0
  %10818 = vmatprep.mubr.f32.mxu0 0.0
  %10819 = vmatmul.mubr.f32.gmra.mxu0 %v10726
  %v10820 = vpop.f32.mrf.mxu0
  %v10821 = vadd.f32 0.0, %v10820
  %v10822 = vpop.f32.mrf.mxu0
  %10823 = vmatprep.mubr.f32.mxu0 0.0
  %10824 = vmatmul.mubr.f32.gmra.mxu0 %v10729
  %v10825 = vpop.f32.mrf.mxu0
  %v10826 = vadd.f32 0.0, %v10825
  %v10827 = vpop.f32.mrf.mxu0
  %10828 = vmatprep.mubr.f32.mxu0 0.0
  %10829 = vmatmul.mubr.f32.gmra.mxu0 %v10732
  %v10830 = vpop.f32.mrf.mxu0
  %v10831 = vadd.f32 0.0, %v10830
  %v10832 = vpop.f32.mrf.mxu0
  %10833 = vmatprep.mubr.f32.mxu0 0.0
  %10834 = vmatmul.mubr.f32.gmra.mxu0 %v10735
  %v10835 = vpop.f32.mrf.mxu0
  %v10836 = vadd.f32 0.0, %v10835
  %v10837 = vpop.f32.mrf.mxu0
  %10838 = vmatprep.mubr.f32.mxu0 0.0
  %10839 = vmatmul.mubr.f32.gmra.mxu0 %v10738
  %v10840 = vpop.f32.mrf.mxu0
  %v10841 = vadd.f32 0.0, %v10840
  %v10842 = vpop.f32.mrf.mxu0
  %10843 = vmatprep.mubr.f32.mxu0 0.0
  %10844 = vmatmul.mubr.f32.gmra.mxu0 %v10741
  %v10845 = vpop.f32.mrf.mxu0
  %v10846 = vadd.f32 0.0, %v10845
  %v10847 = vpop.f32.mrf.mxu0
  %10848 = vmatprep.mubr.f32.mxu0 0.0
  %10849 = vmatmul.mubr.f32.gmra.mxu0 %v10744
  %v10850 = vpop.f32.mrf.mxu0
  %v10851 = vadd.f32 0.0, %v10850
  %v10852 = vpop.f32.mrf.mxu0
  %10853 = vmatprep.mubr.f32.mxu0 0.0
  %10854 = vmatmul.mubr.f32.gmra.mxu0 %v10747
  %v10855 = vpop.f32.mrf.mxu0
  %v10856 = vadd.f32 0.0, %v10855
  %v10857 = vpop.f32.mrf.mxu0
  %10858 = vdwg.mxu0
  %10859 = vrot.lane.b32.xlu0 %v6757, 40
  %v10860 = vpop.permute.xlu0 %10859
  %10861 = vrot.lane.b32.xlu0 %v6762, 40
  %v10862 = vpop.permute.xlu0 %10861
  %10863 = vrot.lane.b32.xlu0 %v6767, 40
  %v10864 = vpop.permute.xlu0 %10863
  %10865 = vrot.lane.b32.xlu0 %v6772, 40
  %v10866 = vpop.permute.xlu0 %10865
  %10867 = vrot.lane.b32.xlu0 %v6777, 40
  %v10868 = vpop.permute.xlu0 %10867
  %10869 = vrot.lane.b32.xlu0 %v6782, 40
  %v10870 = vpop.permute.xlu0 %10869
  %10871 = vrot.lane.b32.xlu0 %v6787, 40
  %v10872 = vpop.permute.xlu0 %10871
  %10873 = vrot.lane.b32.xlu0 %v6792, 40
  %v10874 = vpop.permute.xlu0 %10873
  %10875 = vrot.lane.b32.xlu0 %v6797, 40
  %v10876 = vpop.permute.xlu0 %10875
  %v10887 = vsel %vm1296, %v10686, 0
  %v10890 = vsel %vm1296, %v10687, 0
  %v10893 = vsel %vm1296, %v10688, 0
  %v10896 = vsel %vm1296, %v10689, 0
  %v10899 = vsel %vm1296, %v10690, 0
  %v10902 = vsel %vm1296, %v10691, 0
  %v10905 = vsel %vm1296, %v10692, 0
  %v10908 = vsel %vm1296, %v10693, 0
  %v10911 = vsel %vm1296, %v10694, 0
  %10913 = vmatprep.subr.mxu0 0.0
  %10914 = vmatpush1.msra.mxu0 0.0
  %10915 = vmatprep.subr.mxu0 0.0
  %10916 = vmatpush1.msra.mxu0 0.0
  %10917 = vmatprep.subr.mxu0 0.0
  %10918 = vmatpush1.msra.mxu0 0.0
  %10919 = vmatprep.subr.mxu0 0.0
  %10920 = vmatpush1.msra.mxu0 0.0
  %10921 = vmatprep.subr.mxu0 0.0
  %10922 = vmatpush1.msra.mxu0 0.0
  %10923 = vmatprep.subr.mxu0 0.0
  %10924 = vmatpush1.msra.mxu0 0.0
  %10925 = vmatprep.subr.mxu0 0.0
  %10926 = vmatpush1.msra.mxu0 0.0
  %10927 = vmatprep.subr.mxu0 0.0
  %10928 = vmatpush1.msra.mxu0 %v10876
  %10929 = vmatprep.subr.mxu0 0.0
  %10930 = vmatpush1.msra.mxu0 %v10874
  %10931 = vmatprep.subr.mxu0 0.0
  %10932 = vmatpush1.msra.mxu0 %v10872
  %10933 = vmatprep.subr.mxu0 0.0
  %10934 = vmatpush1.msra.mxu0 %v10870
  %10935 = vmatprep.subr.mxu0 0.0
  %10936 = vmatpush1.msra.mxu0 %v10868
  %10937 = vmatprep.subr.mxu0 0.0
  %10938 = vmatpush1.msra.mxu0 %v10866
  %10939 = vmatprep.subr.mxu0 0.0
  %10940 = vmatpush1.msra.mxu0 %v10864
  %10941 = vmatprep.subr.mxu0 0.0
  %10942 = vmatpush1.msra.mxu0 %v10862
  %10943 = vmatprep.subr.mxu0 0.0
  %10944 = vmatpush1.msra.mxu0 %v10860
  %10945 = vmatprep.subr.mxu0 0.0
  %10946 = vmatpush2.msra.mxu0 0.0
  %10947 = vmatprep.subr.mxu0 0.0
  %10948 = vmatpush2.msra.mxu0 0.0
  %10949 = vmatprep.subr.mxu0 0.0
  %10950 = vmatpush2.msra.mxu0 0.0
  %10951 = vmatprep.subr.mxu0 0.0
  %10952 = vmatpush2.msra.mxu0 0.0
  %10953 = vmatprep.subr.mxu0 0.0
  %10954 = vmatpush2.msra.mxu0 0.0
  %10955 = vmatprep.subr.mxu0 0.0
  %10956 = vmatpush2.msra.mxu0 0.0
  %10957 = vmatprep.subr.mxu0 0.0
  %10958 = vmatpush2.msra.mxu0 0.0
  %10959 = vmatprep.subr.mxu0 0.0
  %10960 = vmatpush2.msra.mxu0 0.0
  %10961 = vmatprep.subr.mxu0 0.0
  %10962 = vmatpush2.msra.mxu0 0.0
  %10963 = vmatprep.subr.mxu0 0.0
  %10964 = vmatpush2.msra.mxu0 0.0
  %10965 = vmatprep.subr.mxu0 0.0
  %10966 = vmatpush2.msra.mxu0 0.0
  %10967 = vmatprep.subr.mxu0 0.0
  %10968 = vmatpush2.msra.mxu0 0.0
  %10969 = vmatprep.subr.mxu0 0.0
  %10970 = vmatpush2.msra.mxu0 0.0
  %10971 = vmatprep.subr.mxu0 0.0
  %10972 = vmatpush2.msra.mxu0 0.0
  %10973 = vmatprep.subr.mxu0 0.0
  %10974 = vmatpush2.msra.mxu0 0.0
  %10975 = vmatprep.subr.mxu0 0.0
  %10976 = vmatpush2.msra.mxu0 0.0
  %10977 = vmatprep.mubr.f32.mxu0 0.0
  %10978 = vmatmul.mubr.f32.gmra.mxu0 %v10887
  %v10979 = vpop.f32.mrf.mxu0
  %v10980 = vadd.f32 0.0, %v10979
  %v10981 = vpop.f32.mrf.mxu0
  %10982 = vmatprep.mubr.f32.mxu0 0.0
  %10983 = vmatmul.mubr.f32.gmra.mxu0 %v10890
  %v10984 = vpop.f32.mrf.mxu0
  %v10985 = vadd.f32 0.0, %v10984
  %v10986 = vpop.f32.mrf.mxu0
  %10987 = vmatprep.mubr.f32.mxu0 0.0
  %10988 = vmatmul.mubr.f32.gmra.mxu0 %v10893
  %v10989 = vpop.f32.mrf.mxu0
  %v10990 = vadd.f32 0.0, %v10989
  %v10991 = vpop.f32.mrf.mxu0
  %10992 = vmatprep.mubr.f32.mxu0 0.0
  %10993 = vmatmul.mubr.f32.gmra.mxu0 %v10896
  %v10994 = vpop.f32.mrf.mxu0
  %v10995 = vadd.f32 0.0, %v10994
  %v10996 = vpop.f32.mrf.mxu0
  %10997 = vmatprep.mubr.f32.mxu0 0.0
  %10998 = vmatmul.mubr.f32.gmra.mxu0 %v10899
  %v10999 = vpop.f32.mrf.mxu0
  %v11000 = vadd.f32 0.0, %v10999
  %v11001 = vpop.f32.mrf.mxu0
  %11002 = vmatprep.mubr.f32.mxu0 0.0
  %11003 = vmatmul.mubr.f32.gmra.mxu0 %v10902
  %v11004 = vpop.f32.mrf.mxu0
  %v11005 = vadd.f32 0.0, %v11004
  %v11006 = vpop.f32.mrf.mxu0
  %11007 = vmatprep.mubr.f32.mxu0 0.0
  %11008 = vmatmul.mubr.f32.gmra.mxu0 %v10905
  %v11009 = vpop.f32.mrf.mxu0
  %v11010 = vadd.f32 0.0, %v11009
  %v11011 = vpop.f32.mrf.mxu0
  %11012 = vmatprep.mubr.f32.mxu0 0.0
  %11013 = vmatmul.mubr.f32.gmra.mxu0 %v10908
  %v11014 = vpop.f32.mrf.mxu0
  %v11015 = vadd.f32 0.0, %v11014
  %v11016 = vpop.f32.mrf.mxu0
  %11017 = vmatprep.mubr.f32.mxu0 0.0
  %11018 = vmatmul.mubr.f32.gmra.mxu0 %v10911
  %v11019 = vpop.f32.mrf.mxu0
  %v11020 = vadd.f32 0.0, %v11019
  %v11021 = vpop.f32.mrf.mxu0
  %11022 = vdwg.mxu0
  %v11024 = vsel %vm958, %v10816, 0
  %v11027 = vsel %vm958, %v10821, 0
  %v11030 = vsel %vm958, %v10826, 0
  %v11033 = vsel %vm958, %v10831, 0
  %v11036 = vsel %vm958, %v10836, 0
  %v11039 = vsel %vm958, %v10841, 0
  %v11042 = vsel %vm958, %v10846, 0
  %v11045 = vsel %vm958, %v10851, 0
  %v11048 = vsel %vm958, %v10856, 0
  %v11051 = vsel %vm958, %v10980, 0
  %v11054 = vsel %vm958, %v10985, 0
  %v11057 = vsel %vm958, %v10990, 0
  %v11060 = vsel %vm958, %v10995, 0
  %v11063 = vsel %vm958, %v11000, 0
  %v11066 = vsel %vm958, %v11005, 0
  %v11069 = vsel %vm958, %v11010, 0
  %v11072 = vsel %vm958, %v11015, 0
  %v11075 = vsel %vm958, %v11020, 0
  %11077 = vmatprep.subr.mxu0 0.0
  %11078 = vmatpush1.msra.mxu0 0.0
  %11079 = vmatprep.subr.mxu0 0.0
  %11080 = vmatpush1.msra.mxu0 0.0
  %11081 = vmatprep.subr.mxu0 0.0
  %11082 = vmatpush1.msra.mxu0 0.0
  %11083 = vmatprep.subr.mxu0 0.0
  %11084 = vmatpush1.msra.mxu0 0.0
  %11085 = vmatprep.subr.mxu0 0.0
  %11086 = vmatpush1.msra.mxu0 0.0
  %11087 = vmatprep.subr.mxu0 0.0
  %11088 = vmatpush1.msra.mxu0 0.0
  %11089 = vmatprep.subr.mxu0 0.0
  %11090 = vmatpush1.msra.mxu0 0.0
  %11091 = vmatprep.subr.mxu0 0.0
  %11092 = vmatpush1.msra.mxu0 0.0
  %11093 = vmatprep.subr.mxu0 0.0
  %11094 = vmatpush1.msra.mxu0 0.0
  %11095 = vmatprep.subr.mxu0 0.0
  %11096 = vmatpush1.msra.mxu0 0.0
  %11097 = vmatprep.subr.mxu0 0.0
  %11098 = vmatpush1.msra.mxu0 0.0
  %11099 = vmatprep.subr.mxu0 0.0
  %11100 = vmatpush1.msra.mxu0 0.0
  %11101 = vmatprep.subr.mxu0 0.0
  %11102 = vmatpush1.msra.mxu0 0.0
  %11103 = vmatprep.subr.mxu0 0.0
  %11104 = vmatpush1.msra.mxu0 0.0
  %11105 = vmatprep.subr.mxu0 0.0
  %11106 = vmatpush1.msra.mxu0 0.0
  %11107 = vmatprep.subr.mxu0 0.0
  %11108 = vmatpush1.msra.mxu0 %v6280
  %11109 = vmatprep.subr.mxu0 0.0
  %11110 = vmatpush2.msra.mxu0 0.0
  %11111 = vmatprep.subr.mxu0 0.0
  %11112 = vmatpush2.msra.mxu0 0.0
  %11113 = vmatprep.subr.mxu0 0.0
  %11114 = vmatpush2.msra.mxu0 0.0
  %11115 = vmatprep.subr.mxu0 0.0
  %11116 = vmatpush2.msra.mxu0 0.0
  %11117 = vmatprep.subr.mxu0 0.0
  %11118 = vmatpush2.msra.mxu0 0.0
  %11119 = vmatprep.subr.mxu0 0.0
  %11120 = vmatpush2.msra.mxu0 0.0
  %11121 = vmatprep.subr.mxu0 0.0
  %11122 = vmatpush2.msra.mxu0 0.0
  %11123 = vmatprep.subr.mxu0 0.0
  %11124 = vmatpush2.msra.mxu0 0.0
  %11125 = vmatprep.subr.mxu0 0.0
  %11126 = vmatpush2.msra.mxu0 0.0
  %11127 = vmatprep.subr.mxu0 0.0
  %11128 = vmatpush2.msra.mxu0 0.0
  %11129 = vmatprep.subr.mxu0 0.0
  %11130 = vmatpush2.msra.mxu0 0.0
  %11131 = vmatprep.subr.mxu0 0.0
  %11132 = vmatpush2.msra.mxu0 0.0
  %11133 = vmatprep.subr.mxu0 0.0
  %11134 = vmatpush2.msra.mxu0 0.0
  %11135 = vmatprep.subr.mxu0 0.0
  %11136 = vmatpush2.msra.mxu0 0.0
  %11137 = vmatprep.subr.mxu0 0.0
  %11138 = vmatpush2.msra.mxu0 0.0
  %11139 = vmatprep.subr.mxu0 0.0
  %11140 = vmatpush2.msra.mxu0 0.0
  %11141 = vmatprep.mubr.f32.mxu0 0.0
  %11142 = vmatmul.mubr.f32.gmra.mxu0 %v11024
  %v11143 = vpop.f32.mrf.mxu0
  %v11144 = vadd.f32 0.0, %v11143
  %v11145 = vpop.f32.mrf.mxu0
  %11146 = vmatprep.mubr.f32.mxu0 0.0
  %11147 = vmatmul.mubr.f32.gmra.mxu0 %v11027
  %v11148 = vpop.f32.mrf.mxu0
  %v11149 = vadd.f32 0.0, %v11148
  %v11150 = vpop.f32.mrf.mxu0
  %11151 = vmatprep.mubr.f32.mxu0 0.0
  %11152 = vmatmul.mubr.f32.gmra.mxu0 %v11030
  %v11153 = vpop.f32.mrf.mxu0
  %v11154 = vadd.f32 0.0, %v11153
  %v11155 = vpop.f32.mrf.mxu0
  %11156 = vmatprep.mubr.f32.mxu0 0.0
  %11157 = vmatmul.mubr.f32.gmra.mxu0 %v11033
  %v11158 = vpop.f32.mrf.mxu0
  %v11159 = vadd.f32 0.0, %v11158
  %v11160 = vpop.f32.mrf.mxu0
  %11161 = vmatprep.mubr.f32.mxu0 0.0
  %11162 = vmatmul.mubr.f32.gmra.mxu0 %v11036
  %v11163 = vpop.f32.mrf.mxu0
  %v11164 = vadd.f32 0.0, %v11163
  %v11165 = vpop.f32.mrf.mxu0
  %11166 = vmatprep.mubr.f32.mxu0 0.0
  %11167 = vmatmul.mubr.f32.gmra.mxu0 %v11039
  %v11168 = vpop.f32.mrf.mxu0
  %v11169 = vadd.f32 0.0, %v11168
  %v11170 = vpop.f32.mrf.mxu0
  %11171 = vmatprep.mubr.f32.mxu0 0.0
  %11172 = vmatmul.mubr.f32.gmra.mxu0 %v11042
  %v11173 = vpop.f32.mrf.mxu0
  %v11174 = vadd.f32 0.0, %v11173
  %v11175 = vpop.f32.mrf.mxu0
  %11176 = vmatprep.mubr.f32.mxu0 0.0
  %11177 = vmatmul.mubr.f32.gmra.mxu0 %v11045
  %v11178 = vpop.f32.mrf.mxu0
  %v11179 = vadd.f32 0.0, %v11178
  %v11180 = vpop.f32.mrf.mxu0
  %11181 = vmatprep.mubr.f32.mxu0 0.0
  %11182 = vmatmul.mubr.f32.gmra.mxu0 %v11048
  %v11183 = vpop.f32.mrf.mxu0
  %v11184 = vadd.f32 0.0, %v11183
  %v11185 = vpop.f32.mrf.mxu0
  %11186 = vmatprep.mubr.f32.mxu0 0.0
  %11187 = vmatmul.mubr.f32.gmra.mxu0 %v11051
  %v11188 = vpop.f32.mrf.mxu0
  %v11189 = vadd.f32 0.0, %v11188
  %v11190 = vpop.f32.mrf.mxu0
  %11191 = vmatprep.mubr.f32.mxu0 0.0
  %11192 = vmatmul.mubr.f32.gmra.mxu0 %v11054
  %v11193 = vpop.f32.mrf.mxu0
  %v11194 = vadd.f32 0.0, %v11193
  %v11195 = vpop.f32.mrf.mxu0
  %11196 = vmatprep.mubr.f32.mxu0 0.0
  %11197 = vmatmul.mubr.f32.gmra.mxu0 %v11057
  %v11198 = vpop.f32.mrf.mxu0
  %v11199 = vadd.f32 0.0, %v11198
  %v11200 = vpop.f32.mrf.mxu0
  %11201 = vmatprep.mubr.f32.mxu0 0.0
  %11202 = vmatmul.mubr.f32.gmra.mxu0 %v11060
  %v11203 = vpop.f32.mrf.mxu0
  %v11204 = vadd.f32 0.0, %v11203
  %v11205 = vpop.f32.mrf.mxu0
  %11206 = vmatprep.mubr.f32.mxu0 0.0
  %11207 = vmatmul.mubr.f32.gmra.mxu0 %v11063
  %v11208 = vpop.f32.mrf.mxu0
  %v11209 = vadd.f32 0.0, %v11208
  %v11210 = vpop.f32.mrf.mxu0
  %11211 = vmatprep.mubr.f32.mxu0 0.0
  %11212 = vmatmul.mubr.f32.gmra.mxu0 %v11066
  %v11213 = vpop.f32.mrf.mxu0
  %v11214 = vadd.f32 0.0, %v11213
  %v11215 = vpop.f32.mrf.mxu0
  %11216 = vmatprep.mubr.f32.mxu0 0.0
  %11217 = vmatmul.mubr.f32.gmra.mxu0 %v11069
  %v11218 = vpop.f32.mrf.mxu0
  %v11219 = vadd.f32 0.0, %v11218
  %v11220 = vpop.f32.mrf.mxu0
  %11221 = vmatprep.mubr.f32.mxu0 0.0
  %11222 = vmatmul.mubr.f32.gmra.mxu0 %v11072
  %v11223 = vpop.f32.mrf.mxu0
  %v11224 = vadd.f32 0.0, %v11223
  %v11225 = vpop.f32.mrf.mxu0
  %11226 = vmatprep.mubr.f32.mxu0 0.0
  %11227 = vmatmul.mubr.f32.gmra.mxu0 %v11075
  %v11228 = vpop.f32.mrf.mxu0
  %v11229 = vadd.f32 0.0, %v11228
  %v11230 = vpop.f32.mrf.mxu0
  %11231 = vdwg.mxu0
  %v11232 = vadd.f32 %v10115, %v11144
  %v11233 = vadd.f32 %v10116, %v11149
  %v11234 = vadd.f32 %v10117, %v11154
  %v11235 = vadd.f32 %v10118, %v11159
  %v11236 = vadd.f32 %v10119, %v11164
  %v11237 = vadd.f32 %v10120, %v11169
  %v11238 = vadd.f32 %v10121, %v11174
  %v11239 = vadd.f32 %v10122, %v11179
  %v11240 = vadd.f32 %v10123, %v11184
  %v11241 = vadd.f32 %v10124, %v11189
  %v11242 = vadd.f32 %v10125, %v11194
  %v11243 = vadd.f32 %v10126, %v11199
  %v11244 = vadd.f32 %v10127, %v11204
  %v11245 = vadd.f32 %v10128, %v11209
  %v11246 = vadd.f32 %v10129, %v11214
  %v11247 = vadd.f32 %v10130, %v11219
  %v11248 = vadd.f32 %v10131, %v11224
  %v11249 = vadd.f32 %v10132, %v11229
  %v11250 = vadd.f32 %v6245, %v11232
  %v11251 = vadd.f32 %v6246, %v11233
  %v11252 = vadd.f32 %v6247, %v11234
  %v11253 = vadd.f32 %v6248, %v11235
  %v11254 = vadd.f32 %v6249, %v11236
  %v11255 = vadd.f32 %v6250, %v11237
  %v11256 = vadd.f32 %v6251, %v11238
  %v11257 = vadd.f32 %v6252, %v11239
  %v11258 = vadd.f32 %v6253, %v11240
  %v11259 = vadd.f32 %v6254, %v11241
  %v11260 = vadd.f32 %v6255, %v11242
  %v11261 = vadd.f32 %v6256, %v11243
  %v11262 = vadd.f32 %v6257, %v11244
  %v11263 = vadd.f32 %v6258, %v11245
  %v11264 = vadd.f32 %v6259, %v11246
  %v11265 = vadd.f32 %v6260, %v11247
  %v11266 = vadd.f32 %v6261, %v11248
  %v11267 = vadd.f32 %v6262, %v11249
  %v11269 = vlaneseq
  %v11270 = vshrl.u32 %v11269, 7
  %v11271 = vsub.s32 0, %v11270
  %v11272 = vrot.slane %v6282, %v11271
  %v11274 = vadd.f32 %v11250, %v11272
  %v11275 = vadd.f32 %v11251, %v11272
  %v11276 = vadd.f32 %v11252, %v11272
  %v11277 = vadd.f32 %v11253, %v11272
  %v11278 = vadd.f32 %v11254, %v11272
  %v11279 = vadd.f32 %v11255, %v11272
  %v11280 = vadd.f32 %v11256, %v11272
  %v11281 = vadd.f32 %v11257, %v11272
  %v11282 = vadd.f32 %v11258, %v11272
  %v11283 = vadd.f32 %v11259, %v11272
  %v11284 = vadd.f32 %v11260, %v11272
  %v11285 = vadd.f32 %v11261, %v11272
  %v11286 = vadd.f32 %v11262, %v11272
  %v11287 = vadd.f32 %v11263, %v11272
  %v11288 = vadd.f32 %v11264, %v11272
  %v11289 = vadd.f32 %v11265, %v11272
  %v11290 = vadd.f32 %v11266, %v11272
  %v11291 = vadd.f32 %v11267, %v11272
  %v11292 = vsel %vm301, %v11274, 0.0
  %11293 = vadd.xlane.f32.xlu0 %v11292
  %v11294 = vpop.xlane.xlu0 %11293
  %v11295 = vsel %vm301, %v11275, 0.0
  %11296 = vadd.xlane.f32.xlu0 %v11295
  %v11297 = vpop.xlane.xlu0 %11296
  %v11298 = vsel %vm301, %v11276, 0.0
  %11299 = vadd.xlane.f32.xlu0 %v11298
  %v11300 = vpop.xlane.xlu0 %11299
  %v11301 = vsel %vm301, %v11277, 0.0
  %11302 = vadd.xlane.f32.xlu0 %v11301
  %v11303 = vpop.xlane.xlu0 %11302
  %v11304 = vsel %vm301, %v11278, 0.0
  %11305 = vadd.xlane.f32.xlu0 %v11304
  %v11306 = vpop.xlane.xlu0 %11305
  %v11307 = vsel %vm301, %v11279, 0.0
  %11308 = vadd.xlane.f32.xlu0 %v11307
  %v11309 = vpop.xlane.xlu0 %11308
  %v11310 = vsel %vm301, %v11280, 0.0
  %11311 = vadd.xlane.f32.xlu0 %v11310
  %v11312 = vpop.xlane.xlu0 %11311
  %v11313 = vsel %vm301, %v11281, 0.0
  %11314 = vadd.xlane.f32.xlu0 %v11313
  %v11315 = vpop.xlane.xlu0 %11314
  %v11316 = vsel %vm301, %v11282, 0.0
  %11317 = vadd.xlane.f32.xlu0 %v11316
  %v11318 = vpop.xlane.xlu0 %11317
  %v11319 = vsel %vm301, %v11283, 0.0
  %11320 = vadd.xlane.f32.xlu0 %v11319
  %v11321 = vpop.xlane.xlu0 %11320
  %v11322 = vsel %vm301, %v11284, 0.0
  %11323 = vadd.xlane.f32.xlu0 %v11322
  %v11324 = vpop.xlane.xlu0 %11323
  %v11325 = vsel %vm301, %v11285, 0.0
  %11326 = vadd.xlane.f32.xlu0 %v11325
  %v11327 = vpop.xlane.xlu0 %11326
  %v11328 = vsel %vm301, %v11286, 0.0
  %11329 = vadd.xlane.f32.xlu0 %v11328
  %v11330 = vpop.xlane.xlu0 %11329
  %v11331 = vsel %vm301, %v11287, 0.0
  %11332 = vadd.xlane.f32.xlu0 %v11331
  %v11333 = vpop.xlane.xlu0 %11332
  %v11334 = vsel %vm301, %v11288, 0.0
  %11335 = vadd.xlane.f32.xlu0 %v11334
  %v11336 = vpop.xlane.xlu0 %11335
  %v11337 = vsel %vm301, %v11289, 0.0
  %11338 = vadd.xlane.f32.xlu0 %v11337
  %v11339 = vpop.xlane.xlu0 %11338
  %v11340 = vsel %vm301, %v11290, 0.0
  %11341 = vadd.xlane.f32.xlu0 %v11340
  %v11342 = vpop.xlane.xlu0 %11341
  %v11343 = vsel %vm301, %v11291, 0.0
  %11344 = vadd.xlane.f32.xlu0 %v11343
  %v11345 = vpop.xlane.xlu0 %11344
  %v11346 = vmul.f32 %v11294, %v475
  %v11347 = vmul.f32 %v11297, %v475
  %v11348 = vmul.f32 %v11300, %v475
  %v11349 = vmul.f32 %v11303, %v475
  %v11350 = vmul.f32 %v11306, %v475
  %v11351 = vmul.f32 %v11309, %v475
  %v11352 = vmul.f32 %v11312, %v475
  %v11353 = vmul.f32 %v11315, %v475
  %v11354 = vmul.f32 %v11318, %v475
  %v11355 = vmul.f32 %v11321, %v475
  %v11356 = vmul.f32 %v11324, %v475
  %v11357 = vmul.f32 %v11327, %v475
  %v11358 = vmul.f32 %v11330, %v475
  %v11359 = vmul.f32 %v11333, %v475
  %v11360 = vmul.f32 %v11336, %v475
  %v11361 = vmul.f32 %v11339, %v475
  %v11362 = vmul.f32 %v11342, %v475
  %v11363 = vmul.f32 %v11345, %v475
  %v11364 = vsub.f32 %v11274, %v11346
  %v11365 = vsub.f32 %v11275, %v11347
  %v11366 = vsub.f32 %v11276, %v11348
  %v11367 = vsub.f32 %v11277, %v11349
  %v11368 = vsub.f32 %v11278, %v11350
  %v11369 = vsub.f32 %v11279, %v11351
  %v11370 = vsub.f32 %v11280, %v11352
  %v11371 = vsub.f32 %v11281, %v11353
  %v11372 = vsub.f32 %v11282, %v11354
  %v11373 = vsub.f32 %v11283, %v11355
  %v11374 = vsub.f32 %v11284, %v11356
  %v11375 = vsub.f32 %v11285, %v11357
  %v11376 = vsub.f32 %v11286, %v11358
  %v11377 = vsub.f32 %v11287, %v11359
  %v11378 = vsub.f32 %v11288, %v11360
  %v11379 = vsub.f32 %v11289, %v11361
  %v11380 = vsub.f32 %v11290, %v11362
  %v11381 = vsub.f32 %v11291, %v11363
  %v11382 = vmul.f32 %v11364, %v11364
  %v11383 = vmul.f32 %v11365, %v11365
  %v11384 = vmul.f32 %v11366, %v11366
  %v11385 = vmul.f32 %v11367, %v11367
  %v11386 = vmul.f32 %v11368, %v11368
  %v11387 = vmul.f32 %v11369, %v11369
  %v11388 = vmul.f32 %v11370, %v11370
  %v11389 = vmul.f32 %v11371, %v11371
  %v11390 = vmul.f32 %v11372, %v11372
  %v11391 = vmul.f32 %v11373, %v11373
  %v11392 = vmul.f32 %v11374, %v11374
  %v11393 = vmul.f32 %v11375, %v11375
  %v11394 = vmul.f32 %v11376, %v11376
  %v11395 = vmul.f32 %v11377, %v11377
  %v11396 = vmul.f32 %v11378, %v11378
  %v11397 = vmul.f32 %v11379, %v11379
  %v11398 = vmul.f32 %v11380, %v11380
  %v11399 = vmul.f32 %v11381, %v11381
  %v11400 = vsel %vm301, %v11382, 0.0
  %11401 = vadd.xlane.f32.xlu0 %v11400
  %v11402 = vpop.xlane.xlu0 %11401
  %v11403 = vsel %vm301, %v11383, 0.0
  %11404 = vadd.xlane.f32.xlu0 %v11403
  %v11405 = vpop.xlane.xlu0 %11404
  %v11406 = vsel %vm301, %v11384, 0.0
  %11407 = vadd.xlane.f32.xlu0 %v11406
  %v11408 = vpop.xlane.xlu0 %11407
  %v11409 = vsel %vm301, %v11385, 0.0
  %11410 = vadd.xlane.f32.xlu0 %v11409
  %v11411 = vpop.xlane.xlu0 %11410
  %v11412 = vsel %vm301, %v11386, 0.0
  %11413 = vadd.xlane.f32.xlu0 %v11412
  %v11414 = vpop.xlane.xlu0 %11413
  %v11415 = vsel %vm301, %v11387, 0.0
  %11416 = vadd.xlane.f32.xlu0 %v11415
  %v11417 = vpop.xlane.xlu0 %11416
  %v11418 = vsel %vm301, %v11388, 0.0
  %11419 = vadd.xlane.f32.xlu0 %v11418
  %v11420 = vpop.xlane.xlu0 %11419
  %v11421 = vsel %vm301, %v11389, 0.0
  %11422 = vadd.xlane.f32.xlu0 %v11421
  %v11423 = vpop.xlane.xlu0 %11422
  %v11424 = vsel %vm301, %v11390, 0.0
  %11425 = vadd.xlane.f32.xlu0 %v11424
  %v11426 = vpop.xlane.xlu0 %11425
  %v11427 = vsel %vm301, %v11391, 0.0
  %11428 = vadd.xlane.f32.xlu0 %v11427
  %v11429 = vpop.xlane.xlu0 %11428
  %v11430 = vsel %vm301, %v11392, 0.0
  %11431 = vadd.xlane.f32.xlu0 %v11430
  %v11432 = vpop.xlane.xlu0 %11431
  %v11433 = vsel %vm301, %v11393, 0.0
  %11434 = vadd.xlane.f32.xlu0 %v11433
  %v11435 = vpop.xlane.xlu0 %11434
  %v11436 = vsel %vm301, %v11394, 0.0
  %11437 = vadd.xlane.f32.xlu0 %v11436
  %v11438 = vpop.xlane.xlu0 %11437
  %v11439 = vsel %vm301, %v11395, 0.0
  %11440 = vadd.xlane.f32.xlu0 %v11439
  %v11441 = vpop.xlane.xlu0 %11440
  %v11442 = vsel %vm301, %v11396, 0.0
  %11443 = vadd.xlane.f32.xlu0 %v11442
  %v11444 = vpop.xlane.xlu0 %11443
  %v11445 = vsel %vm301, %v11397, 0.0
  %11446 = vadd.xlane.f32.xlu0 %v11445
  %v11447 = vpop.xlane.xlu0 %11446
  %v11448 = vsel %vm301, %v11398, 0.0
  %11449 = vadd.xlane.f32.xlu0 %v11448
  %v11450 = vpop.xlane.xlu0 %11449
  %v11451 = vsel %vm301, %v11399, 0.0
  %11452 = vadd.xlane.f32.xlu0 %v11451
  %v11453 = vpop.xlane.xlu0 %11452
  %v11454 = vmul.f32 %v11402, %v475
  %v11455 = vmul.f32 %v11405, %v475
  %v11456 = vmul.f32 %v11408, %v475
  %v11457 = vmul.f32 %v11411, %v475
  %v11458 = vmul.f32 %v11414, %v475
  %v11459 = vmul.f32 %v11417, %v475
  %v11460 = vmul.f32 %v11420, %v475
  %v11461 = vmul.f32 %v11423, %v475
  %v11462 = vmul.f32 %v11426, %v475
  %v11463 = vmul.f32 %v11429, %v475
  %v11464 = vmul.f32 %v11432, %v475
  %v11465 = vmul.f32 %v11435, %v475
  %v11466 = vmul.f32 %v11438, %v475
  %v11467 = vmul.f32 %v11441, %v475
  %v11468 = vmul.f32 %v11444, %v475
  %v11469 = vmul.f32 %v11447, %v475
  %v11470 = vmul.f32 %v11450, %v475
  %v11471 = vmul.f32 %v11453, %v475
  %v11472 = vadd.f32 %v11454, 1e-05
  %v11473 = vadd.f32 %v11455, 1e-05
  %v11474 = vadd.f32 %v11456, 1e-05
  %v11475 = vadd.f32 %v11457, 1e-05
  %v11476 = vadd.f32 %v11458, 1e-05
  %v11477 = vadd.f32 %v11459, 1e-05
  %v11478 = vadd.f32 %v11460, 1e-05
  %v11479 = vadd.f32 %v11461, 1e-05
  %v11480 = vadd.f32 %v11462, 1e-05
  %v11481 = vadd.f32 %v11463, 1e-05
  %v11482 = vadd.f32 %v11464, 1e-05
  %v11483 = vadd.f32 %v11465, 1e-05
  %v11484 = vadd.f32 %v11466, 1e-05
  %v11485 = vadd.f32 %v11467, 1e-05
  %v11486 = vadd.f32 %v11468, 1e-05
  %v11487 = vadd.f32 %v11469, 1e-05
  %v11488 = vadd.f32 %v11470, 1e-05
  %v11489 = vadd.f32 %v11471, 1e-05
  %v11490 = vrsqrt.pop %v11472
  %v11491 = vrsqrt.pop %v11473
  %v11492 = vrsqrt.pop %v11474
  %v11493 = vrsqrt.pop %v11475
  %v11494 = vrsqrt.pop %v11476
  %v11495 = vrsqrt.pop %v11477
  %v11496 = vrsqrt.pop %v11478
  %v11497 = vrsqrt.pop %v11479
  %v11498 = vrsqrt.pop %v11480
  %v11499 = vrsqrt.pop %v11481
  %v11500 = vrsqrt.pop %v11482
  %v11501 = vrsqrt.pop %v11483
  %v11502 = vrsqrt.pop %v11484
  %v11503 = vrsqrt.pop %v11485
  %v11504 = vrsqrt.pop %v11486
  %v11505 = vrsqrt.pop %v11487
  %v11506 = vrsqrt.pop %v11488
  %v11507 = vrsqrt.pop %v11489
  %v11508 = vmul.f32 %v11364, %v11490
  %v11509 = vmul.f32 %v11365, %v11491
  %v11510 = vmul.f32 %v11366, %v11492
  %v11511 = vmul.f32 %v11367, %v11493
  %v11512 = vmul.f32 %v11368, %v11494
  %v11513 = vmul.f32 %v11369, %v11495
  %v11514 = vmul.f32 %v11370, %v11496
  %v11515 = vmul.f32 %v11371, %v11497
  %v11516 = vmul.f32 %v11372, %v11498
  %v11517 = vmul.f32 %v11373, %v11499
  %v11518 = vmul.f32 %v11374, %v11500
  %v11519 = vmul.f32 %v11375, %v11501
  %v11520 = vmul.f32 %v11376, %v11502
  %v11521 = vmul.f32 %v11377, %v11503
  %v11522 = vmul.f32 %v11378, %v11504
  %v11523 = vmul.f32 %v11379, %v11505
  %v11524 = vmul.f32 %v11380, %v11506
  %v11525 = vmul.f32 %v11381, %v11507
  %v11527 = vlaneseq
  %v11528 = vshrl.u32 %v11527, 7
  %v11529 = vsub.s32 0, %v11528
  %v11530 = vrot.slane %v6268, %v11529
  %v11532 = vmul.f32 %v11508, %v11530
  %v11533 = vmul.f32 %v11509, %v11530
  %v11534 = vmul.f32 %v11510, %v11530
  %v11535 = vmul.f32 %v11511, %v11530
  %v11536 = vmul.f32 %v11512, %v11530
  %v11537 = vmul.f32 %v11513, %v11530
  %v11538 = vmul.f32 %v11514, %v11530
  %v11539 = vmul.f32 %v11515, %v11530
  %v11540 = vmul.f32 %v11516, %v11530
  %v11541 = vmul.f32 %v11517, %v11530
  %v11542 = vmul.f32 %v11518, %v11530
  %v11543 = vmul.f32 %v11519, %v11530
  %v11544 = vmul.f32 %v11520, %v11530
  %v11545 = vmul.f32 %v11521, %v11530
  %v11546 = vmul.f32 %v11522, %v11530
  %v11547 = vmul.f32 %v11523, %v11530
  %v11548 = vmul.f32 %v11524, %v11530
  %v11549 = vmul.f32 %v11525, %v11530
  %v11551 = vlaneseq
  %v11552 = vshrl.u32 %v11551, 7
  %v11553 = vsub.s32 0, %v11552
  %v11554 = vrot.slane %v6270, %v11553
  %v11556 = vadd.f32 %v11532, %v11554
  %v11557 = vadd.f32 %v11533, %v11554
  %v11558 = vadd.f32 %v11534, %v11554
  %v11559 = vadd.f32 %v11535, %v11554
  %v11560 = vadd.f32 %v11536, %v11554
  %v11561 = vadd.f32 %v11537, %v11554
  %v11562 = vadd.f32 %v11538, %v11554
  %v11563 = vadd.f32 %v11539, %v11554
  %v11564 = vadd.f32 %v11540, %v11554
  %v11565 = vadd.f32 %v11541, %v11554
  %v11566 = vadd.f32 %v11542, %v11554
  %v11567 = vadd.f32 %v11543, %v11554
  %v11568 = vadd.f32 %v11544, %v11554
  %v11569 = vadd.f32 %v11545, %v11554
  %v11570 = vadd.f32 %v11546, %v11554
  %v11571 = vadd.f32 %v11547, %v11554
  %v11572 = vadd.f32 %v11548, %v11554
  %v11573 = vadd.f32 %v11549, %v11554
  %v11575 = vlaneseq
  %v11576 = vshrl.u32 %v11575, 7
  %v11577 = vsub.s32 0, %v11576
  %v11578 = vrot.slane %v6289, %v11577
  %v11581 = vsel %vm301, %v11556, 0
  %v11584 = vsel %vm301, %v11557, 0
  %v11587 = vsel %vm301, %v11558, 0
  %v11590 = vsel %vm301, %v11559, 0
  %v11593 = vsel %vm301, %v11560, 0
  %v11596 = vsel %vm301, %v11561, 0
  %v11599 = vsel %vm301, %v11562, 0
  %v11602 = vsel %vm301, %v11563, 0
  %v11605 = vsel %vm301, %v11564, 0
  %v11608 = vsel %vm301, %v11565, 0
  %v11611 = vsel %vm301, %v11566, 0
  %v11614 = vsel %vm301, %v11567, 0
  %v11617 = vsel %vm301, %v11568, 0
  %v11620 = vsel %vm301, %v11569, 0
  %v11623 = vsel %vm301, %v11570, 0
  %v11626 = vsel %vm301, %v11571, 0
  %v11629 = vsel %vm301, %v11572, 0
  %v11632 = vsel %vm301, %v11573, 0
  %11634 = vmatprep.subr.mxu0 0.0
  %11635 = vmatpush1.msra.mxu0 0.0
  %11636 = vmatprep.subr.mxu0 0.0
  %11637 = vmatpush1.msra.mxu0 0.0
  %11638 = vmatprep.subr.mxu0 0.0
  %11639 = vmatpush1.msra.mxu0 0.0
  %11640 = vmatprep.subr.mxu0 0.0
  %11641 = vmatpush1.msra.mxu0 0.0
  %11642 = vmatprep.subr.mxu0 0.0
  %11643 = vmatpush1.msra.mxu0 0.0
  %11644 = vmatprep.subr.mxu0 0.0
  %11645 = vmatpush1.msra.mxu0 0.0
  %11646 = vmatprep.subr.mxu0 0.0
  %11647 = vmatpush1.msra.mxu0 0.0
  %11648 = vmatprep.subr.mxu0 0.0
  %11649 = vmatpush1.msra.mxu0 0.0
  %11650 = vmatprep.subr.mxu0 0.0
  %11651 = vmatpush1.msra.mxu0 0.0
  %11652 = vmatprep.subr.mxu0 0.0
  %11653 = vmatpush1.msra.mxu0 0.0
  %11654 = vmatprep.subr.mxu0 0.0
  %11655 = vmatpush1.msra.mxu0 0.0
  %11656 = vmatprep.subr.mxu0 0.0
  %11657 = vmatpush1.msra.mxu0 0.0
  %11658 = vmatprep.subr.mxu0 0.0
  %11659 = vmatpush1.msra.mxu0 %v6287
  %11660 = vmatprep.subr.mxu0 0.0
  %11661 = vmatpush1.msra.mxu0 %v6286
  %11662 = vmatprep.subr.mxu0 0.0
  %11663 = vmatpush1.msra.mxu0 %v6285
  %11664 = vmatprep.subr.mxu0 0.0
  %11665 = vmatpush1.msra.mxu0 %v6284
  %11666 = vmatprep.subr.mxu0 0.0
  %11667 = vmatpush2.msra.mxu0 0.0
  %11668 = vmatprep.subr.mxu0 0.0
  %11669 = vmatpush2.msra.mxu0 0.0
  %11670 = vmatprep.subr.mxu0 0.0
  %11671 = vmatpush2.msra.mxu0 0.0
  %11672 = vmatprep.subr.mxu0 0.0
  %11673 = vmatpush2.msra.mxu0 0.0
  %11674 = vmatprep.subr.mxu0 0.0
  %11675 = vmatpush2.msra.mxu0 0.0
  %11676 = vmatprep.subr.mxu0 0.0
  %11677 = vmatpush2.msra.mxu0 0.0
  %11678 = vmatprep.subr.mxu0 0.0
  %11679 = vmatpush2.msra.mxu0 0.0
  %11680 = vmatprep.subr.mxu0 0.0
  %11681 = vmatpush2.msra.mxu0 0.0
  %11682 = vmatprep.subr.mxu0 0.0
  %11683 = vmatpush2.msra.mxu0 0.0
  %11684 = vmatprep.subr.mxu0 0.0
  %11685 = vmatpush2.msra.mxu0 0.0
  %11686 = vmatprep.subr.mxu0 0.0
  %11687 = vmatpush2.msra.mxu0 0.0
  %11688 = vmatprep.subr.mxu0 0.0
  %11689 = vmatpush2.msra.mxu0 0.0
  %11690 = vmatprep.subr.mxu0 0.0
  %11691 = vmatpush2.msra.mxu0 0.0
  %11692 = vmatprep.subr.mxu0 0.0
  %11693 = vmatpush2.msra.mxu0 0.0
  %11694 = vmatprep.subr.mxu0 0.0
  %11695 = vmatpush2.msra.mxu0 0.0
  %11696 = vmatprep.subr.mxu0 0.0
  %11697 = vmatpush2.msra.mxu0 0.0
  %11698 = vmatprep.mubr.f32.mxu0 0.0
  %11699 = vmatmul.mubr.f32.gmra.mxu0 %v11581
  %v11700 = vpop.f32.mrf.mxu0
  %v11701 = vadd.f32 %v11578, %v11700
  %v11702 = vpop.f32.mrf.mxu0
  %11703 = vmatprep.mubr.f32.mxu0 0.0
  %11704 = vmatmul.mubr.f32.gmra.mxu0 %v11584
  %v11705 = vpop.f32.mrf.mxu0
  %v11706 = vadd.f32 %v11578, %v11705
  %v11707 = vpop.f32.mrf.mxu0
  %11708 = vmatprep.mubr.f32.mxu0 0.0
  %11709 = vmatmul.mubr.f32.gmra.mxu0 %v11587
  %v11710 = vpop.f32.mrf.mxu0
  %v11711 = vadd.f32 %v11578, %v11710
  %v11712 = vpop.f32.mrf.mxu0
  %11713 = vmatprep.mubr.f32.mxu0 0.0
  %11714 = vmatmul.mubr.f32.gmra.mxu0 %v11590
  %v11715 = vpop.f32.mrf.mxu0
  %v11716 = vadd.f32 %v11578, %v11715
  %v11717 = vpop.f32.mrf.mxu0
  %11718 = vmatprep.mubr.f32.mxu0 0.0
  %11719 = vmatmul.mubr.f32.gmra.mxu0 %v11593
  %v11720 = vpop.f32.mrf.mxu0
  %v11721 = vadd.f32 %v11578, %v11720
  %v11722 = vpop.f32.mrf.mxu0
  %11723 = vmatprep.mubr.f32.mxu0 0.0
  %11724 = vmatmul.mubr.f32.gmra.mxu0 %v11596
  %v11725 = vpop.f32.mrf.mxu0
  %v11726 = vadd.f32 %v11578, %v11725
  %v11727 = vpop.f32.mrf.mxu0
  %11728 = vmatprep.mubr.f32.mxu0 0.0
  %11729 = vmatmul.mubr.f32.gmra.mxu0 %v11599
  %v11730 = vpop.f32.mrf.mxu0
  %v11731 = vadd.f32 %v11578, %v11730
  %v11732 = vpop.f32.mrf.mxu0
  %11733 = vmatprep.mubr.f32.mxu0 0.0
  %11734 = vmatmul.mubr.f32.gmra.mxu0 %v11602
  %v11735 = vpop.f32.mrf.mxu0
  %v11736 = vadd.f32 %v11578, %v11735
  %v11737 = vpop.f32.mrf.mxu0
  %11738 = vmatprep.mubr.f32.mxu0 0.0
  %11739 = vmatmul.mubr.f32.gmra.mxu0 %v11605
  %v11740 = vpop.f32.mrf.mxu0
  %v11741 = vadd.f32 %v11578, %v11740
  %v11742 = vpop.f32.mrf.mxu0
  %11743 = vmatprep.mubr.f32.mxu0 0.0
  %11744 = vmatmul.mubr.f32.gmra.mxu0 %v11608
  %v11745 = vpop.f32.mrf.mxu0
  %v11746 = vadd.f32 %v11578, %v11745
  %v11747 = vpop.f32.mrf.mxu0
  %11748 = vmatprep.mubr.f32.mxu0 0.0
  %11749 = vmatmul.mubr.f32.gmra.mxu0 %v11611
  %v11750 = vpop.f32.mrf.mxu0
  %v11751 = vadd.f32 %v11578, %v11750
  %v11752 = vpop.f32.mrf.mxu0
  %11753 = vmatprep.mubr.f32.mxu0 0.0
  %11754 = vmatmul.mubr.f32.gmra.mxu0 %v11614
  %v11755 = vpop.f32.mrf.mxu0
  %v11756 = vadd.f32 %v11578, %v11755
  %v11757 = vpop.f32.mrf.mxu0
  %11758 = vmatprep.mubr.f32.mxu0 0.0
  %11759 = vmatmul.mubr.f32.gmra.mxu0 %v11617
  %v11760 = vpop.f32.mrf.mxu0
  %v11761 = vadd.f32 %v11578, %v11760
  %v11762 = vpop.f32.mrf.mxu0
  %11763 = vmatprep.mubr.f32.mxu0 0.0
  %11764 = vmatmul.mubr.f32.gmra.mxu0 %v11620
  %v11765 = vpop.f32.mrf.mxu0
  %v11766 = vadd.f32 %v11578, %v11765
  %v11767 = vpop.f32.mrf.mxu0
  %11768 = vmatprep.mubr.f32.mxu0 0.0
  %11769 = vmatmul.mubr.f32.gmra.mxu0 %v11623
  %v11770 = vpop.f32.mrf.mxu0
  %v11771 = vadd.f32 %v11578, %v11770
  %v11772 = vpop.f32.mrf.mxu0
  %11773 = vmatprep.mubr.f32.mxu0 0.0
  %11774 = vmatmul.mubr.f32.gmra.mxu0 %v11626
  %v11775 = vpop.f32.mrf.mxu0
  %v11776 = vadd.f32 %v11578, %v11775
  %v11777 = vpop.f32.mrf.mxu0
  %11778 = vmatprep.mubr.f32.mxu0 0.0
  %11779 = vmatmul.mubr.f32.gmra.mxu0 %v11629
  %v11780 = vpop.f32.mrf.mxu0
  %v11781 = vadd.f32 %v11578, %v11780
  %v11782 = vpop.f32.mrf.mxu0
  %11783 = vmatprep.mubr.f32.mxu0 0.0
  %11784 = vmatmul.mubr.f32.gmra.mxu0 %v11632
  %v11785 = vpop.f32.mrf.mxu0
  %v11786 = vadd.f32 %v11578, %v11785
  %v11787 = vpop.f32.mrf.mxu0
  %11788 = vdwg.mxu0
  %v11789 = vmul.f32 %v11701, 0.5
  %v11790 = vmul.f32 %v11706, 0.5
  %v11791 = vmul.f32 %v11711, 0.5
  %v11792 = vmul.f32 %v11716, 0.5
  %v11793 = vmul.f32 %v11721, 0.5
  %v11794 = vmul.f32 %v11726, 0.5
  %v11795 = vmul.f32 %v11731, 0.5
  %v11796 = vmul.f32 %v11736, 0.5
  %v11797 = vmul.f32 %v11741, 0.5
  %v11798 = vmul.f32 %v11746, 0.5
  %v11799 = vmul.f32 %v11751, 0.5
  %v11800 = vmul.f32 %v11756, 0.5
  %v11801 = vmul.f32 %v11761, 0.5
  %v11802 = vmul.f32 %v11766, 0.5
  %v11803 = vmul.f32 %v11771, 0.5
  %v11804 = vmul.f32 %v11776, 0.5
  %v11805 = vmul.f32 %v11781, 0.5
  %v11806 = vmul.f32 %v11786, 0.5
  %v11807 = vmul.f32 %v11701, 0.044715
  %v11808 = vmul.f32 %v11706, 0.044715
  %v11809 = vmul.f32 %v11711, 0.044715
  %v11810 = vmul.f32 %v11716, 0.044715
  %v11811 = vmul.f32 %v11721, 0.044715
  %v11812 = vmul.f32 %v11726, 0.044715
  %v11813 = vmul.f32 %v11731, 0.044715
  %v11814 = vmul.f32 %v11736, 0.044715
  %v11815 = vmul.f32 %v11741, 0.044715
  %v11816 = vmul.f32 %v11746, 0.044715
  %v11817 = vmul.f32 %v11751, 0.044715
  %v11818 = vmul.f32 %v11756, 0.044715
  %v11819 = vmul.f32 %v11761, 0.044715
  %v11820 = vmul.f32 %v11766, 0.044715
  %v11821 = vmul.f32 %v11771, 0.044715
  %v11822 = vmul.f32 %v11776, 0.044715
  %v11823 = vmul.f32 %v11781, 0.044715
  %v11824 = vmul.f32 %v11786, 0.044715
  %v11825 = vmul.f32 %v11807, %v11701
  %v11826 = vmul.f32 %v11808, %v11706
  %v11827 = vmul.f32 %v11809, %v11711
  %v11828 = vmul.f32 %v11810, %v11716
  %v11829 = vmul.f32 %v11811, %v11721
  %v11830 = vmul.f32 %v11812, %v11726
  %v11831 = vmul.f32 %v11813, %v11731
  %v11832 = vmul.f32 %v11814, %v11736
  %v11833 = vmul.f32 %v11815, %v11741
  %v11834 = vmul.f32 %v11816, %v11746
  %v11835 = vmul.f32 %v11817, %v11751
  %v11836 = vmul.f32 %v11818, %v11756
  %v11837 = vmul.f32 %v11819, %v11761
  %v11838 = vmul.f32 %v11820, %v11766
  %v11839 = vmul.f32 %v11821, %v11771
  %v11840 = vmul.f32 %v11822, %v11776
  %v11841 = vmul.f32 %v11823, %v11781
  %v11842 = vmul.f32 %v11824, %v11786
  %v11843 = vmul.f32 %v11825, %v11701
  %v11844 = vmul.f32 %v11826, %v11706
  %v11845 = vmul.f32 %v11827, %v11711
  %v11846 = vmul.f32 %v11828, %v11716
  %v11847 = vmul.f32 %v11829, %v11721
  %v11848 = vmul.f32 %v11830, %v11726
  %v11849 = vmul.f32 %v11831, %v11731
  %v11850 = vmul.f32 %v11832, %v11736
  %v11851 = vmul.f32 %v11833, %v11741
  %v11852 = vmul.f32 %v11834, %v11746
  %v11853 = vmul.f32 %v11835, %v11751
  %v11854 = vmul.f32 %v11836, %v11756
  %v11855 = vmul.f32 %v11837, %v11761
  %v11856 = vmul.f32 %v11838, %v11766
  %v11857 = vmul.f32 %v11839, %v11771
  %v11858 = vmul.f32 %v11840, %v11776
  %v11859 = vmul.f32 %v11841, %v11781
  %v11860 = vmul.f32 %v11842, %v11786
  %v11861 = vadd.f32 %v11701, %v11843
  %v11862 = vadd.f32 %v11706, %v11844
  %v11863 = vadd.f32 %v11711, %v11845
  %v11864 = vadd.f32 %v11716, %v11846
  %v11865 = vadd.f32 %v11721, %v11847
  %v11866 = vadd.f32 %v11726, %v11848
  %v11867 = vadd.f32 %v11731, %v11849
  %v11868 = vadd.f32 %v11736, %v11850
  %v11869 = vadd.f32 %v11741, %v11851
  %v11870 = vadd.f32 %v11746, %v11852
  %v11871 = vadd.f32 %v11751, %v11853
  %v11872 = vadd.f32 %v11756, %v11854
  %v11873 = vadd.f32 %v11761, %v11855
  %v11874 = vadd.f32 %v11766, %v11856
  %v11875 = vadd.f32 %v11771, %v11857
  %v11876 = vadd.f32 %v11776, %v11858
  %v11877 = vadd.f32 %v11781, %v11859
  %v11878 = vadd.f32 %v11786, %v11860
  %v11879 = vmul.f32 %v11861, 0.7978846
  %v11880 = vmul.f32 %v11862, 0.7978846
  %v11881 = vmul.f32 %v11863, 0.7978846
  %v11882 = vmul.f32 %v11864, 0.7978846
  %v11883 = vmul.f32 %v11865, 0.7978846
  %v11884 = vmul.f32 %v11866, 0.7978846
  %v11885 = vmul.f32 %v11867, 0.7978846
  %v11886 = vmul.f32 %v11868, 0.7978846
  %v11887 = vmul.f32 %v11869, 0.7978846
  %v11888 = vmul.f32 %v11870, 0.7978846
  %v11889 = vmul.f32 %v11871, 0.7978846
  %v11890 = vmul.f32 %v11872, 0.7978846
  %v11891 = vmul.f32 %v11873, 0.7978846
  %v11892 = vmul.f32 %v11874, 0.7978846
  %v11893 = vmul.f32 %v11875, 0.7978846
  %v11894 = vmul.f32 %v11876, 0.7978846
  %v11895 = vmul.f32 %v11877, 0.7978846
  %v11896 = vmul.f32 %v11878, 0.7978846
  %v11897 = vtanh.pop %v11879
  %v11898 = vtanh.pop %v11880
  %v11899 = vtanh.pop %v11881
  %v11900 = vtanh.pop %v11882
  %v11901 = vtanh.pop %v11883
  %v11902 = vtanh.pop %v11884
  %v11903 = vtanh.pop %v11885
  %v11904 = vtanh.pop %v11886
  %v11905 = vtanh.pop %v11887
  %v11906 = vtanh.pop %v11888
  %v11907 = vtanh.pop %v11889
  %v11908 = vtanh.pop %v11890
  %v11909 = vtanh.pop %v11891
  %v11910 = vtanh.pop %v11892
  %v11911 = vtanh.pop %v11893
  %v11912 = vtanh.pop %v11894
  %v11913 = vtanh.pop %v11895
  %v11914 = vtanh.pop %v11896
  %v11915 = vadd.f32 %v11897, 1.0
  %v11916 = vadd.f32 %v11898, 1.0
  %v11917 = vadd.f32 %v11899, 1.0
  %v11918 = vadd.f32 %v11900, 1.0
  %v11919 = vadd.f32 %v11901, 1.0
  %v11920 = vadd.f32 %v11902, 1.0
  %v11921 = vadd.f32 %v11903, 1.0
  %v11922 = vadd.f32 %v11904, 1.0
  %v11923 = vadd.f32 %v11905, 1.0
  %v11924 = vadd.f32 %v11906, 1.0
  %v11925 = vadd.f32 %v11907, 1.0
  %v11926 = vadd.f32 %v11908, 1.0
  %v11927 = vadd.f32 %v11909, 1.0
  %v11928 = vadd.f32 %v11910, 1.0
  %v11929 = vadd.f32 %v11911, 1.0
  %v11930 = vadd.f32 %v11912, 1.0
  %v11931 = vadd.f32 %v11913, 1.0
  %v11932 = vadd.f32 %v11914, 1.0
  %v11933 = vmul.f32 %v11789, %v11915
  %v11934 = vmul.f32 %v11790, %v11916
  %v11935 = vmul.f32 %v11791, %v11917
  %v11936 = vmul.f32 %v11792, %v11918
  %v11937 = vmul.f32 %v11793, %v11919
  %v11938 = vmul.f32 %v11794, %v11920
  %v11939 = vmul.f32 %v11795, %v11921
  %v11940 = vmul.f32 %v11796, %v11922
  %v11941 = vmul.f32 %v11797, %v11923
  %v11942 = vmul.f32 %v11798, %v11924
  %v11943 = vmul.f32 %v11799, %v11925
  %v11944 = vmul.f32 %v11800, %v11926
  %v11945 = vmul.f32 %v11801, %v11927
  %v11946 = vmul.f32 %v11802, %v11928
  %v11947 = vmul.f32 %v11803, %v11929
  %v11948 = vmul.f32 %v11804, %v11930
  %v11949 = vmul.f32 %v11805, %v11931
  %v11950 = vmul.f32 %v11806, %v11932
  %11951 = vmatprep.subr.mxu0 0.0
  %11952 = vmatpush1.msra.mxu0 %v6306
  %11953 = vmatprep.subr.mxu0 0.0
  %11954 = vmatpush1.msra.mxu0 %v6305
  %11955 = vmatprep.subr.mxu0 0.0
  %11956 = vmatpush1.msra.mxu0 %v6304
  %11957 = vmatprep.subr.mxu0 0.0
  %11958 = vmatpush1.msra.mxu0 %v6303
  %11959 = vmatprep.subr.mxu0 0.0
  %11960 = vmatpush1.msra.mxu0 %v6302
  %11961 = vmatprep.subr.mxu0 0.0
  %11962 = vmatpush1.msra.mxu0 %v6301
  %11963 = vmatprep.subr.mxu0 0.0
  %11964 = vmatpush1.msra.mxu0 %v6300
  %11965 = vmatprep.subr.mxu0 0.0
  %11966 = vmatpush1.msra.mxu0 %v6299
  %11967 = vmatprep.subr.mxu0 0.0
  %11968 = vmatpush1.msra.mxu0 %v6298
  %11969 = vmatprep.subr.mxu0 0.0
  %11970 = vmatpush1.msra.mxu0 %v6297
  %11971 = vmatprep.subr.mxu0 0.0
  %11972 = vmatpush1.msra.mxu0 %v6296
  %11973 = vmatprep.subr.mxu0 0.0
  %11974 = vmatpush1.msra.mxu0 %v6295
  %11975 = vmatprep.subr.mxu0 0.0
  %11976 = vmatpush1.msra.mxu0 %v6294
  %11977 = vmatprep.subr.mxu0 0.0
  %11978 = vmatpush1.msra.mxu0 %v6293
  %11979 = vmatprep.subr.mxu0 0.0
  %11980 = vmatpush1.msra.mxu0 %v6292
  %11981 = vmatprep.subr.mxu0 0.0
  %11982 = vmatpush1.msra.mxu0 %v6291
  %11983 = vmatprep.subr.mxu0 0.0
  %11984 = vmatpush2.msra.mxu0 0.0
  %11985 = vmatprep.subr.mxu0 0.0
  %11986 = vmatpush2.msra.mxu0 0.0
  %11987 = vmatprep.subr.mxu0 0.0
  %11988 = vmatpush2.msra.mxu0 0.0
  %11989 = vmatprep.subr.mxu0 0.0
  %11990 = vmatpush2.msra.mxu0 0.0
  %11991 = vmatprep.subr.mxu0 0.0
  %11992 = vmatpush2.msra.mxu0 0.0
  %11993 = vmatprep.subr.mxu0 0.0
  %11994 = vmatpush2.msra.mxu0 0.0
  %11995 = vmatprep.subr.mxu0 0.0
  %11996 = vmatpush2.msra.mxu0 0.0
  %11997 = vmatprep.subr.mxu0 0.0
  %11998 = vmatpush2.msra.mxu0 0.0
  %11999 = vmatprep.subr.mxu0 0.0
  %12000 = vmatpush2.msra.mxu0 0.0
  %12001 = vmatprep.subr.mxu0 0.0
  %12002 = vmatpush2.msra.mxu0 0.0
  %12003 = vmatprep.subr.mxu0 0.0
  %12004 = vmatpush2.msra.mxu0 0.0
  %12005 = vmatprep.subr.mxu0 0.0
  %12006 = vmatpush2.msra.mxu0 0.0
  %12007 = vmatprep.subr.mxu0 0.0
  %12008 = vmatpush2.msra.mxu0 0.0
  %12009 = vmatprep.subr.mxu0 0.0
  %12010 = vmatpush2.msra.mxu0 0.0
  %12011 = vmatprep.subr.mxu0 0.0
  %12012 = vmatpush2.msra.mxu0 0.0
  %12013 = vmatprep.subr.mxu0 0.0
  %12014 = vmatpush2.msra.mxu0 0.0
  %12015 = vmatprep.mubr.f32.mxu0 0.0
  %12016 = vmatmul.mubr.f32.gmra.mxu0 %v11933
  %v12017 = vpop.f32.mrf.mxu0
  %v12018 = vpop.f32.mrf.mxu0
  %12019 = vmatprep.mubr.f32.mxu0 0.0
  %12020 = vmatmul.mubr.f32.gmra.mxu0 %v11934
  %v12021 = vpop.f32.mrf.mxu0
  %v12022 = vpop.f32.mrf.mxu0
  %12023 = vmatprep.mubr.f32.mxu0 0.0
  %12024 = vmatmul.mubr.f32.gmra.mxu0 %v11935
  %v12025 = vpop.f32.mrf.mxu0
  %v12026 = vpop.f32.mrf.mxu0
  %12027 = vmatprep.mubr.f32.mxu0 0.0
  %12028 = vmatmul.mubr.f32.gmra.mxu0 %v11936
  %v12029 = vpop.f32.mrf.mxu0
  %v12030 = vpop.f32.mrf.mxu0
  %12031 = vmatprep.mubr.f32.mxu0 0.0
  %12032 = vmatmul.mubr.f32.gmra.mxu0 %v11937
  %v12033 = vpop.f32.mrf.mxu0
  %v12034 = vpop.f32.mrf.mxu0
  %12035 = vmatprep.mubr.f32.mxu0 0.0
  %12036 = vmatmul.mubr.f32.gmra.mxu0 %v11938
  %v12037 = vpop.f32.mrf.mxu0
  %v12038 = vpop.f32.mrf.mxu0
  %12039 = vmatprep.mubr.f32.mxu0 0.0
  %12040 = vmatmul.mubr.f32.gmra.mxu0 %v11939
  %v12041 = vpop.f32.mrf.mxu0
  %v12042 = vpop.f32.mrf.mxu0
  %12043 = vmatprep.mubr.f32.mxu0 0.0
  %12044 = vmatmul.mubr.f32.gmra.mxu0 %v11940
  %v12045 = vpop.f32.mrf.mxu0
  %v12046 = vpop.f32.mrf.mxu0
  %12047 = vmatprep.mubr.f32.mxu0 0.0
  %12048 = vmatmul.mubr.f32.gmra.mxu0 %v11941
  %v12049 = vpop.f32.mrf.mxu0
  %v12050 = vadd.f32 0.0, %v12049
  %v12051 = vpop.f32.mrf.mxu0
  %12052 = vmatprep.mubr.f32.mxu0 0.0
  %12053 = vmatmul.mubr.f32.gmra.mxu0 %v11942
  %v12054 = vpop.f32.mrf.mxu0
  %v12055 = vpop.f32.mrf.mxu0
  %12056 = vmatprep.mubr.f32.mxu0 0.0
  %12057 = vmatmul.mubr.f32.gmra.mxu0 %v11943
  %v12058 = vpop.f32.mrf.mxu0
  %v12059 = vpop.f32.mrf.mxu0
  %12060 = vmatprep.mubr.f32.mxu0 0.0
  %12061 = vmatmul.mubr.f32.gmra.mxu0 %v11944
  %v12062 = vpop.f32.mrf.mxu0
  %v12063 = vpop.f32.mrf.mxu0
  %12064 = vmatprep.mubr.f32.mxu0 0.0
  %12065 = vmatmul.mubr.f32.gmra.mxu0 %v11945
  %v12066 = vpop.f32.mrf.mxu0
  %v12067 = vpop.f32.mrf.mxu0
  %12068 = vmatprep.mubr.f32.mxu0 0.0
  %12069 = vmatmul.mubr.f32.gmra.mxu0 %v11946
  %v12070 = vpop.f32.mrf.mxu0
  %v12071 = vpop.f32.mrf.mxu0
  %12072 = vmatprep.mubr.f32.mxu0 0.0
  %12073 = vmatmul.mubr.f32.gmra.mxu0 %v11947
  %v12074 = vpop.f32.mrf.mxu0
  %v12075 = vpop.f32.mrf.mxu0
  %12076 = vmatprep.mubr.f32.mxu0 0.0
  %12077 = vmatmul.mubr.f32.gmra.mxu0 %v11948
  %v12078 = vpop.f32.mrf.mxu0
  %v12079 = vpop.f32.mrf.mxu0
  %12080 = vmatprep.mubr.f32.mxu0 0.0
  %12081 = vmatmul.mubr.f32.gmra.mxu0 %v11949
  %v12082 = vpop.f32.mrf.mxu0
  %v12083 = vpop.f32.mrf.mxu0
  %12084 = vmatprep.mubr.f32.mxu0 0.0
  %12085 = vmatmul.mubr.f32.gmra.mxu0 %v11950
  %v12086 = vpop.f32.mrf.mxu0
  %v12087 = vadd.f32 0.0, %v12086
  %v12088 = vpop.f32.mrf.mxu0
  %12089 = vdwg.mxu0
  %v12090 = vadd.f32 %v11282, %v12050
  %v12091 = vadd.f32 %v11291, %v12087
  %v12093 = vlaneseq
  %v12094 = vshrl.u32 %v12093, 7
  %v12095 = vsub.s32 0, %v12094
  %v12096 = vrot.slane %v6308, %v12095
  %v12098 = vadd.f32 %v12090, %v12096
  %v12099 = vadd.f32 %v12091, %v12096
  %v12100 = vld [vmem:[%s18] sm:$0x1]
  %v12101 = vld [vmem:[%s19] sm:$0x1]
  %v12102 = vsel %vm301, %v12098, 0.0
  %12103 = vadd.xlane.f32.xlu0 %v12102
  %v12104 = vpop.xlane.xlu0 %12103
  %v12105 = vsel %vm301, %v12099, 0.0
  %12106 = vadd.xlane.f32.xlu0 %v12105
  %v12107 = vpop.xlane.xlu0 %12106
  %v12108 = vmul.f32 %v12104, %v475
  %v12109 = vmul.f32 %v12107, %v475
  %v12110 = vsub.f32 %v12098, %v12108
  %v12111 = vsub.f32 %v12099, %v12109
  %v12112 = vmul.f32 %v12110, %v12110
  %v12113 = vmul.f32 %v12111, %v12111
  %v12114 = vsel %vm301, %v12112, 0.0
  %12115 = vadd.xlane.f32.xlu0 %v12114
  %v12116 = vpop.xlane.xlu0 %12115
  %v12117 = vsel %vm301, %v12113, 0.0
  %12118 = vadd.xlane.f32.xlu0 %v12117
  %v12119 = vpop.xlane.xlu0 %12118
  %v12120 = vmul.f32 %v12116, %v475
  %v12121 = vmul.f32 %v12119, %v475
  %v12122 = vadd.f32 %v12120, 1e-05
  %v12123 = vadd.f32 %v12121, 1e-05
  %v12124 = vrsqrt.pop %v12122
  %v12125 = vrsqrt.pop %v12123
  %v12126 = vmul.f32 %v12110, %v12124
  %v12127 = vmul.f32 %v12111, %v12125
  %v12129 = vlaneseq
  %v12130 = vshrl.u32 %v12129, 7
  %v12131 = vsub.s32 0, %v12130
  %v12132 = vrot.slane %v12100, %v12131
  %v12134 = vmul.f32 %v12126, %v12132
  %v12135 = vmul.f32 %v12127, %v12132
  %v12137 = vlaneseq
  %v12138 = vshrl.u32 %v12137, 7
  %v12139 = vsub.s32 0, %v12138
  %v12140 = vrot.slane %v12101, %v12139
  %v12142 = vadd.f32 %v12134, %v12140
  %v12143 = vadd.f32 %v12135, %v12140
  %v12144 = vmul.f32 %v12142, %v12142
  %v12145 = vmul.f32 %v12143, %v12143
  %v12146 = vsel %vm301, %v12144, 0.0
  %12147 = vadd.xlane.f32.xlu0 %v12146
  %v12148 = vpop.xlane.xlu0 %12147
  %v12149 = vsel %vm301, %v12145, 0.0
  %12150 = vadd.xlane.f32.xlu0 %v12149
  %v12151 = vpop.xlane.xlu0 %12150
  %v12152 = vrsqrt.pop %v12148
  %v12153 = vmul.f32 %v12148, %v12152
  %vm12154 = vcmp.eq.f32.partialorder %v12148, inf
  %v12155 = vsel %vm12154, %v12148, %v12153
  %vm12156 = vcmp.eq.f32.partialorder %v12148, 0.0
  %v12157 = vand.u32 %v12148, 2147483648
  %v12158 = vsel %vm12156, %v12157, %v12155
  %v12159 = vrsqrt.pop %v12151
  %v12160 = vmul.f32 %v12151, %v12159
  %vm12161 = vcmp.eq.f32.partialorder %v12151, inf
  %v12162 = vsel %vm12161, %v12151, %v12160
  %vm12163 = vcmp.eq.f32.partialorder %v12151, 0.0
  %v12164 = vand.u32 %v12151, 2147483648
  %v12165 = vsel %vm12163, %v12164, %v12162
  %v12166 = vmax.f32 %v12158, 1e-12
  %v12167 = vmax.f32 %v12165, 1e-12
  %v12168 = vrcp.pop %v12166
  %v12169 = vrcp.pop %v12167
  %v12170 = vmul.f32 %v12142, %v12168
  %v12171 = vmul.f32 %v12143, %v12169
  %v12172 = vld [vmem:[%s20] sm:$0xff]
  %v12173 = vld [vmem:[%s20 + $0x8] sm:$0xff]
  %v12174 = vld [vmem:[%s20 + $0x10] sm:$0xff]
  %v12175 = vld [vmem:[%s20 + $0x18] sm:$0xff]
  %v12176 = vld [vmem:[%s21] sm:$0x1]
  %v12178 = vlaneseq
  %v12179 = vshrl.u32 %v12178, 7
  %v12180 = vsub.s32 0, %v12179
  %v12181 = vrot.slane %v12176, %v12180
  %v12184 = vsel %vm301, %v12170, 0
  %v12187 = vsel %vm301, %v12171, 0
  %12189 = vmatprep.subr.mxu0 0.0
  %12190 = vmatpush1.msra.mxu0 0.0
  %12191 = vmatprep.subr.mxu0 0.0
  %12192 = vmatpush1.msra.mxu0 0.0
  %12193 = vmatprep.subr.mxu0 0.0
  %12194 = vmatpush1.msra.mxu0 0.0
  %12195 = vmatprep.subr.mxu0 0.0
  %12196 = vmatpush1.msra.mxu0 0.0
  %12197 = vmatprep.subr.mxu0 0.0
  %12198 = vmatpush1.msra.mxu0 0.0
  %12199 = vmatprep.subr.mxu0 0.0
  %12200 = vmatpush1.msra.mxu0 0.0
  %12201 = vmatprep.subr.mxu0 0.0
  %12202 = vmatpush1.msra.mxu0 0.0
  %12203 = vmatprep.subr.mxu0 0.0
  %12204 = vmatpush1.msra.mxu0 0.0
  %12205 = vmatprep.subr.mxu0 0.0
  %12206 = vmatpush1.msra.mxu0 0.0
  %12207 = vmatprep.subr.mxu0 0.0
  %12208 = vmatpush1.msra.mxu0 0.0
  %12209 = vmatprep.subr.mxu0 0.0
  %12210 = vmatpush1.msra.mxu0 0.0
  %12211 = vmatprep.subr.mxu0 0.0
  %12212 = vmatpush1.msra.mxu0 0.0
  %12213 = vmatprep.subr.mxu0 0.0
  %12214 = vmatpush1.msra.mxu0 %v12175
  %12215 = vmatprep.subr.mxu0 0.0
  %12216 = vmatpush1.msra.mxu0 %v12174
  %12217 = vmatprep.subr.mxu0 0.0
  %12218 = vmatpush1.msra.mxu0 %v12173
  %12219 = vmatprep.subr.mxu0 0.0
  %12220 = vmatpush1.msra.mxu0 %v12172
  %12221 = vmatprep.subr.mxu0 0.0
  %12222 = vmatpush2.msra.mxu0 0.0
  %12223 = vmatprep.subr.mxu0 0.0
  %12224 = vmatpush2.msra.mxu0 0.0
  %12225 = vmatprep.subr.mxu0 0.0
  %12226 = vmatpush2.msra.mxu0 0.0
  %12227 = vmatprep.subr.mxu0 0.0
  %12228 = vmatpush2.msra.mxu0 0.0
  %12229 = vmatprep.subr.mxu0 0.0
  %12230 = vmatpush2.msra.mxu0 0.0
  %12231 = vmatprep.subr.mxu0 0.0
  %12232 = vmatpush2.msra.mxu0 0.0
  %12233 = vmatprep.subr.mxu0 0.0
  %12234 = vmatpush2.msra.mxu0 0.0
  %12235 = vmatprep.subr.mxu0 0.0
  %12236 = vmatpush2.msra.mxu0 0.0
  %12237 = vmatprep.subr.mxu0 0.0
  %12238 = vmatpush2.msra.mxu0 0.0
  %12239 = vmatprep.subr.mxu0 0.0
  %12240 = vmatpush2.msra.mxu0 0.0
  %12241 = vmatprep.subr.mxu0 0.0
  %12242 = vmatpush2.msra.mxu0 0.0
  %12243 = vmatprep.subr.mxu0 0.0
  %12244 = vmatpush2.msra.mxu0 0.0
  %12245 = vmatprep.subr.mxu0 0.0
  %12246 = vmatpush2.msra.mxu0 0.0
  %12247 = vmatprep.subr.mxu0 0.0
  %12248 = vmatpush2.msra.mxu0 0.0
  %12249 = vmatprep.subr.mxu0 0.0
  %12250 = vmatpush2.msra.mxu0 0.0
  %12251 = vmatprep.subr.mxu0 0.0
  %12252 = vmatpush2.msra.mxu0 0.0
  %12253 = vmatprep.mubr.f32.mxu0 0.0
  %12254 = vmatmul.mubr.f32.gmra.mxu0 %v12184
  %v12255 = vpop.f32.mrf.mxu0
  %v12256 = vadd.f32 %v12181, %v12255
  %v12257 = vpop.f32.mrf.mxu0
  %12258 = vmatprep.mubr.f32.mxu0 0.0
  %12259 = vmatmul.mubr.f32.gmra.mxu0 %v12187
  %v12260 = vpop.f32.mrf.mxu0
  %v12261 = vadd.f32 %v12181, %v12260
  %v12262 = vpop.f32.mrf.mxu0
  %12263 = vdwg.mxu0
  %12264 = vst [vmem:[%s22] sm:$0xff] %v12256
  %12265 = vst [vmem:[%s22 + $0x8] sm:$0xff] %v12261
  // Predicated region
  $region90: #{vit_classifier_forward.1} parent=0 // pred_check
    _
  $region91: #{vit_classifier_forward.1} parent=0 // pred_check_branch
    %12267 = sbr.rel (0) target = $region93
  $region92: #{vit_classifier_forward.1} parent=0 // pred_region
    _
  $region93: #{vit_classifier_forward.1} parent=0 // pred_fallthru
    _
  // Predicated region
  $region94: #{vit_classifier_forward.1} parent=0 // pred_check
    _
  $region95: #{vit_classifier_forward.1} parent=0 // pred_check_branch
    %12269 = sbr.rel (0) target = $region97
  $region96: #{vit_classifier_forward.1} parent=0 // pred_region
    _
  $region97: #{vit_classifier_forward.1} parent=0 // pred_fallthru
    _

</llo_original>
